<compile_context>
chip_gen: v7x
topology: tpu7x:2x2x1
jax: 0.10.0
libtpu: 0.0.40
codegen_flags: <defaults>
</compile_context>

<pallas_src>
import functools

import jax
import jax.numpy as jnp
import numpy as np
from jax.experimental import pallas as pl
from jax.experimental.pallas import tpu as pltpu

LANE = 128


def _round_up(x, m):
    return (x + m - 1) // m * m


# ---------------------------- Pallas kernel ----------------------------

def _dense_layer_kernel(xp_ref, mask_ref, scale_ref, shift_ref, w_ref, b_ref, o_ref,
                        *, wp, row_align):
    """Fused BN(eval)+ReLU+Conv3x3+bias for one (image, row-tile) grid point.

    xp_ref     : (L, Cin) f32   zero-padded NHWC activation, flattened row-major over
                                padded rows/cols (L = (H+3)*(W+2)), full image slab.
    mask_ref   : (L, 1)  f32    1.0 on interior pixels, 0.0 on the zero-padding ring.
    scale/shift: (1, Cin) f32   folded eval-mode BatchNorm.
    w_ref      : (9, Cin, Cout_pad) bf16  per-tap weights (tap index = ky*3 + kx).
    b_ref      : (1, Cout_pad) f32.
    o_ref      : (TH*Wp, Cout_pad) f32  output rows in padded-column layout
                                (the Wp-W garbage columns are sliced off in JAX).
    """
    rows_out = o_ref.shape[0]            # TH * Wp
    rows_in = rows_out + 3 * wp          # (TH + 3) * Wp : halo for the 3x3 taps
    start = pl.multiple_of(pl.program_id(1) * rows_out, row_align)

    win = xp_ref[pl.ds(start, rows_in), :]        # (rows_in, Cin) f32
    msk = mask_ref[pl.ds(start, rows_in), :]      # (rows_in, 1)  f32

    # Folded BatchNorm + ReLU in f32 (VPU filler under the MXU), then re-zero the
    # padding ring so SAME-conv semantics match zero-padding of the *post*-activation.
    a = jnp.maximum(win * scale_ref[...] + shift_ref[...], 0.0) * msk
    a = a.astype(jnp.bfloat16)                    # MXU-native input width

    # Accumulator starts at the (broadcast) bias -> no separate bias add at the end.
    acc = jnp.broadcast_to(b_ref[...], (rows_out, o_ref.shape[1])).astype(jnp.float32)
    for ky in range(3):
        for kx in range(3):
            off = ky * wp + kx                    # flattened-index shift of this tap
            lhs = a[off:off + rows_out, :]        # (rows_out, Cin) bf16
            acc = acc + jnp.dot(lhs, w_ref[ky * 3 + kx],
                                preferred_element_type=jnp.float32)
    o_ref[...] = acc.astype(o_ref.dtype)


# ---------------------------- per-layer wrapper ----------------------------

def dense_layer_conv(x, p, *, tile_rows=8):
    """BN(eval)+ReLU+Conv3x3(SAME)+bias for one DenseNet layer.  x: (N,H,W,Cin) f32."""
    N, H, W, Cin = x.shape
    Wp = W + 2
    cout_pad = p["w9"].shape[-1]
    cout = p["w_hwio"].shape[-1]

    # Row-tile height: needs to evenly divide H and give 8-aligned output tiles;
    # otherwise fall back to a single tile spanning the whole image.
    TH = tile_rows
    if H % TH != 0 or (TH * Wp) % 8 != 0:
        TH = H
    RT = H // TH
    row_align = 8 if (TH * Wp) % 8 == 0 else 1

    # Zero-pad: 1 top / 1 left / 1 right / 2 bottom.  The extra bottom row lets every
    # 3x3 tap of every output row-tile be a pure in-bounds shift of the flattened slab.
    xp = jnp.pad(x, ((0, 0), (1, 2), (1, 1), (0, 0)))
    L = (H + 3) * Wp
    xp2 = xp.reshape(N, L, Cin)

    # Interior mask (constant under jit): 1 on real pixels, 0 on the padding ring.
    r = jnp.arange(H + 3)[:, None]
    c = jnp.arange(Wp)[None, :]
    mask2 = (((r >= 1) & (r <= H) & (c >= 1) & (c <= W))
             .astype(jnp.float32).reshape(L, 1))

    flops = 2 * N * (H * Wp) * (9 * Cin) * cout_pad
    bytes_accessed = (N * L * Cin * 4 + L * 4 + 2 * Cin * 4
                      + 9 * Cin * cout_pad * 2 + cout_pad * 4
                      + N * H * Wp * cout_pad * 4)

    out = pl.pallas_call(
        functools.partial(_dense_layer_kernel, wp=Wp, row_align=row_align),
        out_shape=jax.ShapeDtypeStruct((N, H * Wp, cout_pad), jnp.float32),
        grid=(N, RT),
        in_specs=[
            pl.BlockSpec((None, L, Cin), lambda n, rt: (n, 0, 0)),      # per-image slab
            pl.BlockSpec((L, 1), lambda n, rt: (0, 0)),                 # padding mask
            pl.BlockSpec((1, Cin), lambda n, rt: (0, 0)),               # BN scale
            pl.BlockSpec((1, Cin), lambda n, rt: (0, 0)),               # BN shift
            pl.BlockSpec((9, Cin, cout_pad), lambda n, rt: (0, 0, 0)),  # tap weights
            pl.BlockSpec((1, cout_pad), lambda n, rt: (0, 0)),          # bias
        ],
        out_specs=pl.BlockSpec((None, TH * Wp, cout_pad), lambda n, rt: (n, rt, 0)),
        compiler_params=pltpu.CompilerParams(
            dimension_semantics=("parallel", "parallel")),
        cost_estimate=pl.CostEstimate(flops=flops, transcendentals=0,
                                      bytes_accessed=bytes_accessed),
    )(xp2, mask2, p["scale"], p["shift"], p["w9"], p["bias_pad"])

    # Drop the padded columns and the lane-padding output channels.
    return out.reshape(N, H, Wp, cout_pad)[:, :, :W, :cout]


# ---------------------------- DenseBlock forward ----------------------------

def dense_block_forward(x_nchw, params):
    x = jnp.transpose(x_nchw, (0, 2, 3, 1))                 # NHWC (channels in lanes)
    inp = x
    for p in params:
        out = dense_layer_conv(inp, p)
        # TODO(synk): nn.Dropout(0.5) is identity in eval/inference mode (no RNG applied).
        inp = jnp.concatenate([inp, out], axis=-1)          # running concat (O(L) copies)
    return jnp.transpose(inp, (0, 3, 1, 2))                 # back to NCHW


# ---------------------------- params & reference ----------------------------

def init_params(key, channels_in, growth_rate, num_layers, eps=1e-5):
    params = []
    c = channels_in
    cout_pad = max(LANE, _round_up(growth_rate, LANE))
    for l in range(num_layers):
        keys = jax.random.split(jax.random.fold_in(key, l), 6)
        gamma = jax.random.uniform(keys[0], (c,), jnp.float32, 0.5, 1.5)
        beta = 0.1 * jax.random.normal(keys[1], (c,), jnp.float32)
        rmean = 0.1 * jax.random.normal(keys[2], (c,), jnp.float32)
        rvar = jax.random.uniform(keys[3], (c,), jnp.float32, 0.5, 1.5)
        # Fold eval-mode BatchNorm into scale/shift.
        scale = gamma / jnp.sqrt(rvar + eps)
        shift = beta - rmean * scale
        fan_in = c * 9
        w = jax.random.normal(keys[4], (growth_rate, c, 3, 3), jnp.float32) / np.sqrt(fan_in)
        bias = jax.random.uniform(keys[5], (growth_rate,), jnp.float32, -1.0, 1.0) / np.sqrt(fan_in)
        w_hwio = jnp.transpose(w, (2, 3, 1, 0))             # (3, 3, Cin, Cout)
        # Per-tap weights (tap = ky*3+kx), bf16, Cout padded to a lane-dense 128 multiple.
        w9 = jnp.zeros((9, c, cout_pad), jnp.bfloat16)
        w9 = w9.at[:, :, :growth_rate].set(
            w_hwio.reshape(9, c, growth_rate).astype(jnp.bfloat16))
        bias_pad = jnp.zeros((1, cout_pad), jnp.float32).at[0, :growth_rate].set(bias)
        params.append(dict(scale=scale.reshape(1, c), shift=shift.reshape(1, c),
                           w9=w9, bias_pad=bias_pad,
                           w_hwio=w_hwio, bias=bias))
        c += growth_rate
    return params


def ref_forward(x_nchw, params):
    # Pure-JAX reference with the same numerics (f32 BN+ReLU, bf16 conv inputs,
    # f32 accumulation) so the comparison tolerance can stay tight.
    x = jnp.transpose(x_nchw, (0, 2, 3, 1))
    inp = x
    for p in params:
        a = jnp.maximum(inp * p["scale"].reshape(-1) + p["shift"].reshape(-1), 0.0)
        out = jax.lax.conv_general_dilated(
            a.astype(jnp.bfloat16), p["w_hwio"].astype(jnp.bfloat16),
            window_strides=(1, 1), padding="SAME",
            dimension_numbers=("NHWC", "HWIO", "NHWC"),
            preferred_element_type=jnp.float32) + p["bias"]
        inp = jnp.concatenate([inp, out], axis=-1)
    return jnp.transpose(inp, (0, 3, 1, 2))


if __name__ == "__main__":
    key = jax.random.PRNGKey(0)
    channels_in, growth_rate, num_layers = 4, 4, 3
    N, H, W = 2, 16, 16

    x = jax.random.normal(jax.random.fold_in(key, 123), (N, channels_in, H, W), jnp.float32)
    params = init_params(key, channels_in, growth_rate, num_layers)

    fwd = jax.jit(dense_block_forward)
    y = jax.block_until_ready(fwd(x, params))
    y_ref = jax.block_until_ready(ref_forward(x, params))

    assert y.shape == (N, channels_in + growth_rate * num_layers, H, W)
    np.testing.assert_allclose(np.asarray(y), np.asarray(y_ref), rtol=2e-3, atol=2e-3)
    print("KERNEL_OK")
</pallas_src>

<mosaic_0001>
module attributes {stable_mosaic.version = 11 : i64} {
  func.func @_dense_layer_kernel(%arg0: i32, %arg1: i32, %arg2: memref<1x342x4xf32, #tpu.memory_space<vmem>>, %arg3: memref<342x1xf32, #tpu.memory_space<vmem>>, %arg4: memref<1x4xf32, #tpu.memory_space<vmem>>, %arg5: memref<1x4xf32, #tpu.memory_space<vmem>>, %arg6: memref<9x4x128xbf16, #tpu.memory_space<vmem>>, %arg7: memref<1x128xf32, #tpu.memory_space<vmem>>, %arg8: memref<1x144x128xf32, #tpu.memory_space<vmem>>) attributes {dimension_semantics = [#tpu.dimension_semantics<parallel>, #tpu.dimension_semantics<parallel>], iteration_bounds = array<i64: 2, 2>, scalar_prefetch = 0 : i64, scratch_operands = 0 : i64, tpu.core_type = #tpu.core_type<tc>, window_params = [{transform_indices = @transform_0, window_bounds = array<i64: 1, 342, 4>}, {pipeline_mode = #tpu.pipeline_mode<synchronous>, transform_indices = @transform_1, window_bounds = array<i64: 342, 1>}, {pipeline_mode = #tpu.pipeline_mode<synchronous>, transform_indices = @transform_2, window_bounds = array<i64: 1, 4>}, {pipeline_mode = #tpu.pipeline_mode<synchronous>, transform_indices = @transform_3, window_bounds = array<i64: 1, 4>}, {pipeline_mode = #tpu.pipeline_mode<synchronous>, transform_indices = @transform_4, window_bounds = array<i64: 9, 4, 128>}, {pipeline_mode = #tpu.pipeline_mode<synchronous>, transform_indices = @transform_5, window_bounds = array<i64: 1, 128>}, {transform_indices = @transform_6, window_bounds = array<i64: 1, 144, 128>}]} {
    %c144_i32 = arith.constant 144 : i32
    %0 = arith.muli %arg1, %c144_i32 : i32
    %1 = tpu.assume_multiple %0, 8 : i32
    %c0 = arith.constant 0 : index
    %2 = arith.index_cast %1 : i32 to index
    %c0_0 = arith.constant 0 : index
    %3 = vector.load %arg2[%c0, %2, %c0_0] : memref<1x342x4xf32, #tpu.memory_space<vmem>>, vector<1x198x4xf32>
    %4 = vector.shape_cast %3 : vector<1x198x4xf32> to vector<198x4xf32>
    %5 = arith.index_cast %1 : i32 to index
    %c0_1 = arith.constant 0 : index
    %6 = vector.load %arg3[%5, %c0_1] : memref<342x1xf32, #tpu.memory_space<vmem>>, vector<198x1xf32>
    %c0_2 = arith.constant 0 : index
    %c0_3 = arith.constant 0 : index
    %7 = vector.load %arg4[%c0_2, %c0_3] : memref<1x4xf32, #tpu.memory_space<vmem>>, vector<1x4xf32>
    %8 = vector.broadcast %7 : vector<1x4xf32> to vector<198x4xf32>
    %9 = arith.mulf %4, %8 : vector<198x4xf32>
    %c0_4 = arith.constant 0 : index
    %c0_5 = arith.constant 0 : index
    %10 = vector.load %arg5[%c0_4, %c0_5] : memref<1x4xf32, #tpu.memory_space<vmem>>, vector<1x4xf32>
    %11 = vector.broadcast %10 : vector<1x4xf32> to vector<198x4xf32>
    %12 = arith.addf %9, %11 : vector<198x4xf32>
    %cst = arith.constant 0.000000e+00 : f32
    %13 = vector.broadcast %cst : f32 to vector<198x4xf32>
    %14 = arith.maximumf %12, %13 : vector<198x4xf32>
    %15 = vector.broadcast %6 : vector<198x1xf32> to vector<198x4xf32>
    %16 = arith.mulf %14, %15 : vector<198x4xf32>
    %17 = arith.truncf %16 : vector<198x4xf32> to vector<198x4xbf16>
    %c0_6 = arith.constant 0 : index
    %c0_7 = arith.constant 0 : index
    %18 = vector.load %arg7[%c0_6, %c0_7] : memref<1x128xf32, #tpu.memory_space<vmem>>, vector<1x128xf32>
    %19 = vector.shape_cast %18 : vector<1x128xf32> to vector<1x128xf32>
    %20 = vector.broadcast %19 : vector<1x128xf32> to vector<144x128xf32>
    %21 = vector.extract_strided_slice %17 {offsets = [0, 0], sizes = [144, 4], strides = [1, 1]} : vector<198x4xbf16> to vector<144x4xbf16>
    %c0_8 = arith.constant 0 : index
    %c0_9 = arith.constant 0 : index
    %c0_10 = arith.constant 0 : index
    %22 = vector.load %arg6[%c0_8, %c0_9, %c0_10] : memref<9x4x128xbf16, #tpu.memory_space<vmem>>, vector<1x4x128xbf16>
    %23 = vector.shape_cast %22 : vector<1x4x128xbf16> to vector<4x128xbf16>
    %cst_11 = arith.constant dense<0.000000e+00> : vector<144x128xf32>
    %24 = tpu.matmul %21, %23, %cst_11 {dimension_numbers = #tpu.dot_dimension_numbers<[1], [0], [0], [1], [0, 0, 1, 1], [], []>} : vector<144x4xbf16>, vector<4x128xbf16>, vector<144x128xf32> -> vector<144x128xf32>
    %25 = arith.addf %20, %24 : vector<144x128xf32>
    %26 = vector.extract_strided_slice %17 {offsets = [1, 0], sizes = [144, 4], strides = [1, 1]} : vector<198x4xbf16> to vector<144x4xbf16>
    %c1 = arith.constant 1 : index
    %c0_12 = arith.constant 0 : index
    %c0_13 = arith.constant 0 : index
    %27 = vector.load %arg6[%c1, %c0_12, %c0_13] : memref<9x4x128xbf16, #tpu.memory_space<vmem>>, vector<1x4x128xbf16>
    %28 = vector.shape_cast %27 : vector<1x4x128xbf16> to vector<4x128xbf16>
    %cst_14 = arith.constant dense<0.000000e+00> : vector<144x128xf32>
    %29 = tpu.matmul %26, %28, %cst_14 {dimension_numbers = #tpu.dot_dimension_numbers<[1], [0], [0], [1], [0, 0, 1, 1], [], []>} : vector<144x4xbf16>, vector<4x128xbf16>, vector<144x128xf32> -> vector<144x128xf32>
    %30 = arith.addf %25, %29 : vector<144x128xf32>
    %31 = vector.extract_strided_slice %17 {offsets = [2, 0], sizes = [144, 4], strides = [1, 1]} : vector<198x4xbf16> to vector<144x4xbf16>
    %c2 = arith.constant 2 : index
    %c0_15 = arith.constant 0 : index
    %c0_16 = arith.constant 0 : index
    %32 = vector.load %arg6[%c2, %c0_15, %c0_16] : memref<9x4x128xbf16, #tpu.memory_space<vmem>>, vector<1x4x128xbf16>
    %33 = vector.shape_cast %32 : vector<1x4x128xbf16> to vector<4x128xbf16>
    %cst_17 = arith.constant dense<0.000000e+00> : vector<144x128xf32>
    %34 = tpu.matmul %31, %33, %cst_17 {dimension_numbers = #tpu.dot_dimension_numbers<[1], [0], [0], [1], [0, 0, 1, 1], [], []>} : vector<144x4xbf16>, vector<4x128xbf16>, vector<144x128xf32> -> vector<144x128xf32>
    %35 = arith.addf %30, %34 : vector<144x128xf32>
    %36 = vector.extract_strided_slice %17 {offsets = [18, 0], sizes = [144, 4], strides = [1, 1]} : vector<198x4xbf16> to vector<144x4xbf16>
    %c3 = arith.constant 3 : index
    %c0_18 = arith.constant 0 : index
    %c0_19 = arith.constant 0 : index
    %37 = vector.load %arg6[%c3, %c0_18, %c0_19] : memref<9x4x128xbf16, #tpu.memory_space<vmem>>, vector<1x4x128xbf16>
    %38 = vector.shape_cast %37 : vector<1x4x128xbf16> to vector<4x128xbf16>
    %cst_20 = arith.constant dense<0.000000e+00> : vector<144x128xf32>
    %39 = tpu.matmul %36, %38, %cst_20 {dimension_numbers = #tpu.dot_dimension_numbers<[1], [0], [0], [1], [0, 0, 1, 1], [], []>} : vector<144x4xbf16>, vector<4x128xbf16>, vector<144x128xf32> -> vector<144x128xf32>
    %40 = arith.addf %35, %39 : vector<144x128xf32>
    %41 = vector.extract_strided_slice %17 {offsets = [19, 0], sizes = [144, 4], strides = [1, 1]} : vector<198x4xbf16> to vector<144x4xbf16>
    %c4 = arith.constant 4 : index
    %c0_21 = arith.constant 0 : index
    %c0_22 = arith.constant 0 : index
    %42 = vector.load %arg6[%c4, %c0_21, %c0_22] : memref<9x4x128xbf16, #tpu.memory_space<vmem>>, vector<1x4x128xbf16>
    %43 = vector.shape_cast %42 : vector<1x4x128xbf16> to vector<4x128xbf16>
    %cst_23 = arith.constant dense<0.000000e+00> : vector<144x128xf32>
    %44 = tpu.matmul %41, %43, %cst_23 {dimension_numbers = #tpu.dot_dimension_numbers<[1], [0], [0], [1], [0, 0, 1, 1], [], []>} : vector<144x4xbf16>, vector<4x128xbf16>, vector<144x128xf32> -> vector<144x128xf32>
    %45 = arith.addf %40, %44 : vector<144x128xf32>
    %46 = vector.extract_strided_slice %17 {offsets = [20, 0], sizes = [144, 4], strides = [1, 1]} : vector<198x4xbf16> to vector<144x4xbf16>
    %c5 = arith.constant 5 : index
    %c0_24 = arith.constant 0 : index
    %c0_25 = arith.constant 0 : index
    %47 = vector.load %arg6[%c5, %c0_24, %c0_25] : memref<9x4x128xbf16, #tpu.memory_space<vmem>>, vector<1x4x128xbf16>
    %48 = vector.shape_cast %47 : vector<1x4x128xbf16> to vector<4x128xbf16>
    %cst_26 = arith.constant dense<0.000000e+00> : vector<144x128xf32>
    %49 = tpu.matmul %46, %48, %cst_26 {dimension_numbers = #tpu.dot_dimension_numbers<[1], [0], [0], [1], [0, 0, 1, 1], [], []>} : vector<144x4xbf16>, vector<4x128xbf16>, vector<144x128xf32> -> vector<144x128xf32>
    %50 = arith.addf %45, %49 : vector<144x128xf32>
    %51 = vector.extract_strided_slice %17 {offsets = [36, 0], sizes = [144, 4], strides = [1, 1]} : vector<198x4xbf16> to vector<144x4xbf16>
    %c6 = arith.constant 6 : index
    %c0_27 = arith.constant 0 : index
    %c0_28 = arith.constant 0 : index
    %52 = vector.load %arg6[%c6, %c0_27, %c0_28] : memref<9x4x128xbf16, #tpu.memory_space<vmem>>, vector<1x4x128xbf16>
    %53 = vector.shape_cast %52 : vector<1x4x128xbf16> to vector<4x128xbf16>
    %cst_29 = arith.constant dense<0.000000e+00> : vector<144x128xf32>
    %54 = tpu.matmul %51, %53, %cst_29 {dimension_numbers = #tpu.dot_dimension_numbers<[1], [0], [0], [1], [0, 0, 1, 1], [], []>} : vector<144x4xbf16>, vector<4x128xbf16>, vector<144x128xf32> -> vector<144x128xf32>
    %55 = arith.addf %50, %54 : vector<144x128xf32>
    %56 = vector.extract_strided_slice %17 {offsets = [37, 0], sizes = [144, 4], strides = [1, 1]} : vector<198x4xbf16> to vector<144x4xbf16>
    %c7 = arith.constant 7 : index
    %c0_30 = arith.constant 0 : index
    %c0_31 = arith.constant 0 : index
    %57 = vector.load %arg6[%c7, %c0_30, %c0_31] : memref<9x4x128xbf16, #tpu.memory_space<vmem>>, vector<1x4x128xbf16>
    %58 = vector.shape_cast %57 : vector<1x4x128xbf16> to vector<4x128xbf16>
    %cst_32 = arith.constant dense<0.000000e+00> : vector<144x128xf32>
    %59 = tpu.matmul %56, %58, %cst_32 {dimension_numbers = #tpu.dot_dimension_numbers<[1], [0], [0], [1], [0, 0, 1, 1], [], []>} : vector<144x4xbf16>, vector<4x128xbf16>, vector<144x128xf32> -> vector<144x128xf32>
    %60 = arith.addf %55, %59 : vector<144x128xf32>
    %61 = vector.extract_strided_slice %17 {offsets = [38, 0], sizes = [144, 4], strides = [1, 1]} : vector<198x4xbf16> to vector<144x4xbf16>
    %c8 = arith.constant 8 : index
    %c0_33 = arith.constant 0 : index
    %c0_34 = arith.constant 0 : index
    %62 = vector.load %arg6[%c8, %c0_33, %c0_34] : memref<9x4x128xbf16, #tpu.memory_space<vmem>>, vector<1x4x128xbf16>
    %63 = vector.shape_cast %62 : vector<1x4x128xbf16> to vector<4x128xbf16>
    %cst_35 = arith.constant dense<0.000000e+00> : vector<144x128xf32>
    %64 = tpu.matmul %61, %63, %cst_35 {dimension_numbers = #tpu.dot_dimension_numbers<[1], [0], [0], [1], [0, 0, 1, 1], [], []>} : vector<144x4xbf16>, vector<4x128xbf16>, vector<144x128xf32> -> vector<144x128xf32>
    %65 = arith.addf %60, %64 : vector<144x128xf32>
    %c0_36 = arith.constant 0 : index
    %c0_37 = arith.constant 0 : index
    %c0_38 = arith.constant 0 : index
    %66 = vector.load %arg8[%c0_36, %c0_37, %c0_38] : memref<1x144x128xf32, #tpu.memory_space<vmem>>, vector<1x144x128xf32>
    %67 = vector.shape_cast %66 : vector<1x144x128xf32> to vector<144x128xf32>
    %68 = vector.shape_cast %65 : vector<144x128xf32> to vector<1x144x128xf32>
    tpu.vector_store %arg8[%c0_36, %c0_37, %c0_38], %68 {strides = array<i32>} : memref<1x144x128xf32, #tpu.memory_space<vmem>>, vector<1x144x128xf32>,
    return
  }
  func.func @transform_0(%arg0: i32, %arg1: i32) -> (i32, i32, i32) {
    %c0_i32 = arith.constant 0 : i32
    %c0_i32_0 = arith.constant 0 : i32
    %c0_i32_1 = arith.constant 0 : i32
    return %arg0, %c0_i32, %c0_i32_0 : i32, i32, i32
  }
  func.func @transform_1(%arg0: i32, %arg1: i32) -> (i32, i32) {
    %c0_i32 = arith.constant 0 : i32
    %c0_i32_0 = arith.constant 0 : i32
    %c0_i32_1 = arith.constant 0 : i32
    return %c0_i32, %c0_i32_0 : i32, i32
  }
  func.func @transform_2(%arg0: i32, %arg1: i32) -> (i32, i32) {
    %c0_i32 = arith.constant 0 : i32
    %c0_i32_0 = arith.constant 0 : i32
    %c0_i32_1 = arith.constant 0 : i32
    return %c0_i32, %c0_i32_0 : i32, i32
  }
  func.func @transform_3(%arg0: i32, %arg1: i32) -> (i32, i32) {
    %c0_i32 = arith.constant 0 : i32
    %c0_i32_0 = arith.constant 0 : i32
    %c0_i32_1 = arith.constant 0 : i32
    return %c0_i32, %c0_i32_0 : i32, i32
  }
  func.func @transform_4(%arg0: i32, %arg1: i32) -> (i32, i32, i32) {
    %c0_i32 = arith.constant 0 : i32
    %c0_i32_0 = arith.constant 0 : i32
    %c0_i32_1 = arith.constant 0 : i32
    %c0_i32_2 = arith.constant 0 : i32
    return %c0_i32, %c0_i32_0, %c0_i32_1 : i32, i32, i32
  }
  func.func @transform_5(%arg0: i32, %arg1: i32) -> (i32, i32) {
    %c0_i32 = arith.constant 0 : i32
    %c0_i32_0 = arith.constant 0 : i32
    %c0_i32_1 = arith.constant 0 : i32
    return %c0_i32, %c0_i32_0 : i32, i32
  }
  func.func @transform_6(%arg0: i32, %arg1: i32) -> (i32, i32, i32) {
    %c0_i32 = arith.constant 0 : i32
    %c0_i32_0 = arith.constant 0 : i32
    return %arg0, %arg1, %c0_i32 : i32, i32, i32
  }
}

module attributes {stable_mosaic.version = 11 : i64} {
  func.func @_dense_layer_kernel(%arg0: i32, %arg1: i32, %arg2: memref<1x342x8xf32, #tpu.memory_space<vmem>>, %arg3: memref<342x1xf32, #tpu.memory_space<vmem>>, %arg4: memref<1x8xf32, #tpu.memory_space<vmem>>, %arg5: memref<1x8xf32, #tpu.memory_space<vmem>>, %arg6: memref<9x8x128xbf16, #tpu.memory_space<vmem>>, %arg7: memref<1x128xf32, #tpu.memory_space<vmem>>, %arg8: memref<1x144x128xf32, #tpu.memory_space<vmem>>) attributes {dimension_semantics = [#tpu.dimension_semantics<parallel>, #tpu.dimension_semantics<parallel>], iteration_bounds = array<i64: 2, 2>, scalar_prefetch = 0 : i64, scratch_operands = 0 : i64, tpu.core_type = #tpu.core_type<tc>, window_params = [{transform_indices = @transform_0, window_bounds = array<i64: 1, 342, 8>}, {pipeline_mode = #tpu.pipeline_mode<synchronous>, transform_indices = @transform_1, window_bounds = array<i64: 342, 1>}, {pipeline_mode = #tpu.pipeline_mode<synchronous>, transform_indices = @transform_2, window_bounds = array<i64: 1, 8>}, {pipeline_mode = #tpu.pipeline_mode<synchronous>, transform_indices = @transform_3, window_bounds = array<i64: 1, 8>}, {pipeline_mode = #tpu.pipeline_mode<synchronous>, transform_indices = @transform_4, window_bounds = array<i64: 9, 8, 128>}, {pipeline_mode = #tpu.pipeline_mode<synchronous>, transform_indices = @transform_5, window_bounds = array<i64: 1, 128>}, {transform_indices = @transform_6, window_bounds = array<i64: 1, 144, 128>}]} {
    %c144_i32 = arith.constant 144 : i32
    %0 = arith.muli %arg1, %c144_i32 : i32
    %1 = tpu.assume_multiple %0, 8 : i32
    %c0 = arith.constant 0 : index
    %2 = arith.index_cast %1 : i32 to index
    %c0_0 = arith.constant 0 : index
    %3 = vector.load %arg2[%c0, %2, %c0_0] : memref<1x342x8xf32, #tpu.memory_space<vmem>>, vector<1x198x8xf32>
    %4 = vector.shape_cast %3 : vector<1x198x8xf32> to vector<198x8xf32>
    %5 = arith.index_cast %1 : i32 to index
    %c0_1 = arith.constant 0 : index
    %6 = vector.load %arg3[%5, %c0_1] : memref<342x1xf32, #tpu.memory_space<vmem>>, vector<198x1xf32>
    %c0_2 = arith.constant 0 : index
    %c0_3 = arith.constant 0 : index
    %7 = vector.load %arg4[%c0_2, %c0_3] : memref<1x8xf32, #tpu.memory_space<vmem>>, vector<1x8xf32>
    %8 = vector.broadcast %7 : vector<1x8xf32> to vector<198x8xf32>
    %9 = arith.mulf %4, %8 : vector<198x8xf32>
    %c0_4 = arith.constant 0 : index
    %c0_5 = arith.constant 0 : index
    %10 = vector.load %arg5[%c0_4, %c0_5] : memref<1x8xf32, #tpu.memory_space<vmem>>, vector<1x8xf32>
    %11 = vector.broadcast %10 : vector<1x8xf32> to vector<198x8xf32>
    %12 = arith.addf %9, %11 : vector<198x8xf32>
    %cst = arith.constant 0.000000e+00 : f32
    %13 = vector.broadcast %cst : f32 to vector<198x8xf32>
    %14 = arith.maximumf %12, %13 : vector<198x8xf32>
    %15 = vector.broadcast %6 : vector<198x1xf32> to vector<198x8xf32>
    %16 = arith.mulf %14, %15 : vector<198x8xf32>
    %17 = arith.truncf %16 : vector<198x8xf32> to vector<198x8xbf16>
    %c0_6 = arith.constant 0 : index
    %c0_7 = arith.constant 0 : index
    %18 = vector.load %arg7[%c0_6, %c0_7] : memref<1x128xf32, #tpu.memory_space<vmem>>, vector<1x128xf32>
    %19 = vector.shape_cast %18 : vector<1x128xf32> to vector<1x128xf32>
    %20 = vector.broadcast %19 : vector<1x128xf32> to vector<144x128xf32>
    %21 = vector.extract_strided_slice %17 {offsets = [0, 0], sizes = [144, 8], strides = [1, 1]} : vector<198x8xbf16> to vector<144x8xbf16>
    %c0_8 = arith.constant 0 : index
    %c0_9 = arith.constant 0 : index
    %c0_10 = arith.constant 0 : index
    %22 = vector.load %arg6[%c0_8, %c0_9, %c0_10] : memref<9x8x128xbf16, #tpu.memory_space<vmem>>, vector<1x8x128xbf16>
    %23 = vector.shape_cast %22 : vector<1x8x128xbf16> to vector<8x128xbf16>
    %cst_11 = arith.constant dense<0.000000e+00> : vector<144x128xf32>
    %24 = tpu.matmul %21, %23, %cst_11 {dimension_numbers = #tpu.dot_dimension_numbers<[1], [0], [0], [1], [0, 0, 1, 1], [], []>} : vector<144x8xbf16>, vector<8x128xbf16>, vector<144x128xf32> -> vector<144x128xf32>
    %25 = arith.addf %20, %24 : vector<144x128xf32>
    %26 = vector.extract_strided_slice %17 {offsets = [1, 0], sizes = [144, 8], strides = [1, 1]} : vector<198x8xbf16> to vector<144x8xbf16>
    %c1 = arith.constant 1 : index
    %c0_12 = arith.constant 0 : index
    %c0_13 = arith.constant 0 : index
    %27 = vector.load %arg6[%c1, %c0_12, %c0_13] : memref<9x8x128xbf16, #tpu.memory_space<vmem>>, vector<1x8x128xbf16>
    %28 = vector.shape_cast %27 : vector<1x8x128xbf16> to vector<8x128xbf16>
    %cst_14 = arith.constant dense<0.000000e+00> : vector<144x128xf32>
    %29 = tpu.matmul %26, %28, %cst_14 {dimension_numbers = #tpu.dot_dimension_numbers<[1], [0], [0], [1], [0, 0, 1, 1], [], []>} : vector<144x8xbf16>, vector<8x128xbf16>, vector<144x128xf32> -> vector<144x128xf32>
    %30 = arith.addf %25, %29 : vector<144x128xf32>
    %31 = vector.extract_strided_slice %17 {offsets = [2, 0], sizes = [144, 8], strides = [1, 1]} : vector<198x8xbf16> to vector<144x8xbf16>
    %c2 = arith.constant 2 : index
    %c0_15 = arith.constant 0 : index
    %c0_16 = arith.constant 0 : index
    %32 = vector.load %arg6[%c2, %c0_15, %c0_16] : memref<9x8x128xbf16, #tpu.memory_space<vmem>>, vector<1x8x128xbf16>
    %33 = vector.shape_cast %32 : vector<1x8x128xbf16> to vector<8x128xbf16>
    %cst_17 = arith.constant dense<0.000000e+00> : vector<144x128xf32>
    %34 = tpu.matmul %31, %33, %cst_17 {dimension_numbers = #tpu.dot_dimension_numbers<[1], [0], [0], [1], [0, 0, 1, 1], [], []>} : vector<144x8xbf16>, vector<8x128xbf16>, vector<144x128xf32> -> vector<144x128xf32>
    %35 = arith.addf %30, %34 : vector<144x128xf32>
    %36 = vector.extract_strided_slice %17 {offsets = [18, 0], sizes = [144, 8], strides = [1, 1]} : vector<198x8xbf16> to vector<144x8xbf16>
    %c3 = arith.constant 3 : index
    %c0_18 = arith.constant 0 : index
    %c0_19 = arith.constant 0 : index
    %37 = vector.load %arg6[%c3, %c0_18, %c0_19] : memref<9x8x128xbf16, #tpu.memory_space<vmem>>, vector<1x8x128xbf16>
    %38 = vector.shape_cast %37 : vector<1x8x128xbf16> to vector<8x128xbf16>
    %cst_20 = arith.constant dense<0.000000e+00> : vector<144x128xf32>
    %39 = tpu.matmul %36, %38, %cst_20 {dimension_numbers = #tpu.dot_dimension_numbers<[1], [0], [0], [1], [0, 0, 1, 1], [], []>} : vector<144x8xbf16>, vector<8x128xbf16>, vector<144x128xf32> -> vector<144x128xf32>
    %40 = arith.addf %35, %39 : vector<144x128xf32>
    %41 = vector.extract_strided_slice %17 {offsets = [19, 0], sizes = [144, 8], strides = [1, 1]} : vector<198x8xbf16> to vector<144x8xbf16>
    %c4 = arith.constant 4 : index
    %c0_21 = arith.constant 0 : index
    %c0_22 = arith.constant 0 : index
    %42 = vector.load %arg6[%c4, %c0_21, %c0_22] : memref<9x8x128xbf16, #tpu.memory_space<vmem>>, vector<1x8x128xbf16>
    %43 = vector.shape_cast %42 : vector<1x8x128xbf16> to vector<8x128xbf16>
    %cst_23 = arith.constant dense<0.000000e+00> : vector<144x128xf32>
    %44 = tpu.matmul %41, %43, %cst_23 {dimension_numbers = #tpu.dot_dimension_numbers<[1], [0], [0], [1], [0, 0, 1, 1], [], []>} : vector<144x8xbf16>, vector<8x128xbf16>, vector<144x128xf32> -> vector<144x128xf32>
    %45 = arith.addf %40, %44 : vector<144x128xf32>
    %46 = vector.extract_strided_slice %17 {offsets = [20, 0], sizes = [144, 8], strides = [1, 1]} : vector<198x8xbf16> to vector<144x8xbf16>
    %c5 = arith.constant 5 : index
    %c0_24 = arith.constant 0 : index
    %c0_25 = arith.constant 0 : index
    %47 = vector.load %arg6[%c5, %c0_24, %c0_25] : memref<9x8x128xbf16, #tpu.memory_space<vmem>>, vector<1x8x128xbf16>
    %48 = vector.shape_cast %47 : vector<1x8x128xbf16> to vector<8x128xbf16>
    %cst_26 = arith.constant dense<0.000000e+00> : vector<144x128xf32>
    %49 = tpu.matmul %46, %48, %cst_26 {dimension_numbers = #tpu.dot_dimension_numbers<[1], [0], [0], [1], [0, 0, 1, 1], [], []>} : vector<144x8xbf16>, vector<8x128xbf16>, vector<144x128xf32> -> vector<144x128xf32>
    %50 = arith.addf %45, %49 : vector<144x128xf32>
    %51 = vector.extract_strided_slice %17 {offsets = [36, 0], sizes = [144, 8], strides = [1, 1]} : vector<198x8xbf16> to vector<144x8xbf16>
    %c6 = arith.constant 6 : index
    %c0_27 = arith.constant 0 : index
    %c0_28 = arith.constant 0 : index
    %52 = vector.load %arg6[%c6, %c0_27, %c0_28] : memref<9x8x128xbf16, #tpu.memory_space<vmem>>, vector<1x8x128xbf16>
    %53 = vector.shape_cast %52 : vector<1x8x128xbf16> to vector<8x128xbf16>
    %cst_29 = arith.constant dense<0.000000e+00> : vector<144x128xf32>
    %54 = tpu.matmul %51, %53, %cst_29 {dimension_numbers = #tpu.dot_dimension_numbers<[1], [0], [0], [1], [0, 0, 1, 1], [], []>} : vector<144x8xbf16>, vector<8x128xbf16>, vector<144x128xf32> -> vector<144x128xf32>
    %55 = arith.addf %50, %54 : vector<144x128xf32>
    %56 = vector.extract_strided_slice %17 {offsets = [37, 0], sizes = [144, 8], strides = [1, 1]} : vector<198x8xbf16> to vector<144x8xbf16>
    %c7 = arith.constant 7 : index
    %c0_30 = arith.constant 0 : index
    %c0_31 = arith.constant 0 : index
    %57 = vector.load %arg6[%c7, %c0_30, %c0_31] : memref<9x8x128xbf16, #tpu.memory_space<vmem>>, vector<1x8x128xbf16>
    %58 = vector.shape_cast %57 : vector<1x8x128xbf16> to vector<8x128xbf16>
    %cst_32 = arith.constant dense<0.000000e+00> : vector<144x128xf32>
    %59 = tpu.matmul %56, %58, %cst_32 {dimension_numbers = #tpu.dot_dimension_numbers<[1], [0], [0], [1], [0, 0, 1, 1], [], []>} : vector<144x8xbf16>, vector<8x128xbf16>, vector<144x128xf32> -> vector<144x128xf32>
    %60 = arith.addf %55, %59 : vector<144x128xf32>
    %61 = vector.extract_strided_slice %17 {offsets = [38, 0], sizes = [144, 8], strides = [1, 1]} : vector<198x8xbf16> to vector<144x8xbf16>
    %c8 = arith.constant 8 : index
    %c0_33 = arith.constant 0 : index
    %c0_34 = arith.constant 0 : index
    %62 = vector.load %arg6[%c8, %c0_33, %c0_34] : memref<9x8x128xbf16, #tpu.memory_space<vmem>>, vector<1x8x128xbf16>
    %63 = vector.shape_cast %62 : vector<1x8x128xbf16> to vector<8x128xbf16>
    %cst_35 = arith.constant dense<0.000000e+00> : vector<144x128xf32>
    %64 = tpu.matmul %61, %63, %cst_35 {dimension_numbers = #tpu.dot_dimension_numbers<[1], [0], [0], [1], [0, 0, 1, 1], [], []>} : vector<144x8xbf16>, vector<8x128xbf16>, vector<144x128xf32> -> vector<144x128xf32>
    %65 = arith.addf %60, %64 : vector<144x128xf32>
    %c0_36 = arith.constant 0 : index
    %c0_37 = arith.constant 0 : index
    %c0_38 = arith.constant 0 : index
    %66 = vector.load %arg8[%c0_36, %c0_37, %c0_38] : memref<1x144x128xf32, #tpu.memory_space<vmem>>, vector<1x144x128xf32>
    %67 = vector.shape_cast %66 : vector<1x144x128xf32> to vector<144x128xf32>
    %68 = vector.shape_cast %65 : vector<144x128xf32> to vector<1x144x128xf32>
    tpu.vector_store %arg8[%c0_36, %c0_37, %c0_38], %68 {strides = array<i32>} : memref<1x144x128xf32, #tpu.memory_space<vmem>>, vector<1x144x128xf32>,
    return
  }
  func.func @transform_0(%arg0: i32, %arg1: i32) -> (i32, i32, i32) {
    %c0_i32 = arith.constant 0 : i32
    %c0_i32_0 = arith.constant 0 : i32
    %c0_i32_1 = arith.constant 0 : i32
    return %arg0, %c0_i32, %c0_i32_0 : i32, i32, i32
  }
  func.func @transform_1(%arg0: i32, %arg1: i32) -> (i32, i32) {
    %c0_i32 = arith.constant 0 : i32
    %c0_i32_0 = arith.constant 0 : i32
    %c0_i32_1 = arith.constant 0 : i32
    return %c0_i32, %c0_i32_0 : i32, i32
  }
  func.func @transform_2(%arg0: i32, %arg1: i32) -> (i32, i32) {
    %c0_i32 = arith.constant 0 : i32
    %c0_i32_0 = arith.constant 0 : i32
    %c0_i32_1 = arith.constant 0 : i32
    return %c0_i32, %c0_i32_0 : i32, i32
  }
  func.func @transform_3(%arg0: i32, %arg1: i32) -> (i32, i32) {
    %c0_i32 = arith.constant 0 : i32
    %c0_i32_0 = arith.constant 0 : i32
    %c0_i32_1 = arith.constant 0 : i32
    return %c0_i32, %c0_i32_0 : i32, i32
  }
  func.func @transform_4(%arg0: i32, %arg1: i32) -> (i32, i32, i32) {
    %c0_i32 = arith.constant 0 : i32
    %c0_i32_0 = arith.constant 0 : i32
    %c0_i32_1 = arith.constant 0 : i32
    %c0_i32_2 = arith.constant 0 : i32
    return %c0_i32, %c0_i32_0, %c0_i32_1 : i32, i32, i32
  }
  func.func @transform_5(%arg0: i32, %arg1: i32) -> (i32, i32) {
    %c0_i32 = arith.constant 0 : i32
    %c0_i32_0 = arith.constant 0 : i32
    %c0_i32_1 = arith.constant 0 : i32
    return %c0_i32, %c0_i32_0 : i32, i32
  }
  func.func @transform_6(%arg0: i32, %arg1: i32) -> (i32, i32, i32) {
    %c0_i32 = arith.constant 0 : i32
    %c0_i32_0 = arith.constant 0 : i32
    return %arg0, %arg1, %c0_i32 : i32, i32, i32
  }
}

module attributes {stable_mosaic.version = 11 : i64} {
  func.func @_dense_layer_kernel(%arg0: i32, %arg1: i32, %arg2: memref<1x342x12xf32, #tpu.memory_space<vmem>>, %arg3: memref<342x1xf32, #tpu.memory_space<vmem>>, %arg4: memref<1x12xf32, #tpu.memory_space<vmem>>, %arg5: memref<1x12xf32, #tpu.memory_space<vmem>>, %arg6: memref<9x12x128xbf16, #tpu.memory_space<vmem>>, %arg7: memref<1x128xf32, #tpu.memory_space<vmem>>, %arg8: memref<1x144x128xf32, #tpu.memory_space<vmem>>) attributes {dimension_semantics = [#tpu.dimension_semantics<parallel>, #tpu.dimension_semantics<parallel>], iteration_bounds = array<i64: 2, 2>, scalar_prefetch = 0 : i64, scratch_operands = 0 : i64, tpu.core_type = #tpu.core_type<tc>, window_params = [{transform_indices = @transform_0, window_bounds = array<i64: 1, 342, 12>}, {pipeline_mode = #tpu.pipeline_mode<synchronous>, transform_indices = @transform_1, window_bounds = array<i64: 342, 1>}, {pipeline_mode = #tpu.pipeline_mode<synchronous>, transform_indices = @transform_2, window_bounds = array<i64: 1, 12>}, {pipeline_mode = #tpu.pipeline_mode<synchronous>, transform_indices = @transform_3, window_bounds = array<i64: 1, 12>}, {pipeline_mode = #tpu.pipeline_mode<synchronous>, transform_indices = @transform_4, window_bounds = array<i64: 9, 12, 128>}, {pipeline_mode = #tpu.pipeline_mode<synchronous>, transform_indices = @transform_5, window_bounds = array<i64: 1, 128>}, {transform_indices = @transform_6, window_bounds = array<i64: 1, 144, 128>}]} {
    %c144_i32 = arith.constant 144 : i32
    %0 = arith.muli %arg1, %c144_i32 : i32
    %1 = tpu.assume_multiple %0, 8 : i32
    %c0 = arith.constant 0 : index
    %2 = arith.index_cast %1 : i32 to index
    %c0_0 = arith.constant 0 : index
    %3 = vector.load %arg2[%c0, %2, %c0_0] : memref<1x342x12xf32, #tpu.memory_space<vmem>>, vector<1x198x12xf32>
    %4 = vector.shape_cast %3 : vector<1x198x12xf32> to vector<198x12xf32>
    %5 = arith.index_cast %1 : i32 to index
    %c0_1 = arith.constant 0 : index
    %6 = vector.load %arg3[%5, %c0_1] : memref<342x1xf32, #tpu.memory_space<vmem>>, vector<198x1xf32>
    %c0_2 = arith.constant 0 : index
    %c0_3 = arith.constant 0 : index
    %7 = vector.load %arg4[%c0_2, %c0_3] : memref<1x12xf32, #tpu.memory_space<vmem>>, vector<1x12xf32>
    %8 = vector.broadcast %7 : vector<1x12xf32> to vector<198x12xf32>
    %9 = arith.mulf %4, %8 : vector<198x12xf32>
    %c0_4 = arith.constant 0 : index
    %c0_5 = arith.constant 0 : index
    %10 = vector.load %arg5[%c0_4, %c0_5] : memref<1x12xf32, #tpu.memory_space<vmem>>, vector<1x12xf32>
    %11 = vector.broadcast %10 : vector<1x12xf32> to vector<198x12xf32>
    %12 = arith.addf %9, %11 : vector<198x12xf32>
    %cst = arith.constant 0.000000e+00 : f32
    %13 = vector.broadcast %cst : f32 to vector<198x12xf32>
    %14 = arith.maximumf %12, %13 : vector<198x12xf32>
    %15 = vector.broadcast %6 : vector<198x1xf32> to vector<198x12xf32>
    %16 = arith.mulf %14, %15 : vector<198x12xf32>
    %17 = arith.truncf %16 : vector<198x12xf32> to vector<198x12xbf16>
    %c0_6 = arith.constant 0 : index
    %c0_7 = arith.constant 0 : index
    %18 = vector.load %arg7[%c0_6, %c0_7] : memref<1x128xf32, #tpu.memory_space<vmem>>, vector<1x128xf32>
    %19 = vector.shape_cast %18 : vector<1x128xf32> to vector<1x128xf32>
    %20 = vector.broadcast %19 : vector<1x128xf32> to vector<144x128xf32>
    %21 = vector.extract_strided_slice %17 {offsets = [0, 0], sizes = [144, 12], strides = [1, 1]} : vector<198x12xbf16> to vector<144x12xbf16>
    %c0_8 = arith.constant 0 : index
    %c0_9 = arith.constant 0 : index
    %c0_10 = arith.constant 0 : index
    %22 = vector.load %arg6[%c0_8, %c0_9, %c0_10] : memref<9x12x128xbf16, #tpu.memory_space<vmem>>, vector<1x12x128xbf16>
    %23 = vector.shape_cast %22 : vector<1x12x128xbf16> to vector<12x128xbf16>
    %cst_11 = arith.constant dense<0.000000e+00> : vector<144x128xf32>
    %24 = tpu.matmul %21, %23, %cst_11 {dimension_numbers = #tpu.dot_dimension_numbers<[1], [0], [0], [1], [0, 0, 1, 1], [], []>} : vector<144x12xbf16>, vector<12x128xbf16>, vector<144x128xf32> -> vector<144x128xf32>
    %25 = arith.addf %20, %24 : vector<144x128xf32>
    %26 = vector.extract_strided_slice %17 {offsets = [1, 0], sizes = [144, 12], strides = [1, 1]} : vector<198x12xbf16> to vector<144x12xbf16>
    %c1 = arith.constant 1 : index
    %c0_12 = arith.constant 0 : index
    %c0_13 = arith.constant 0 : index
    %27 = vector.load %arg6[%c1, %c0_12, %c0_13] : memref<9x12x128xbf16, #tpu.memory_space<vmem>>, vector<1x12x128xbf16>
    %28 = vector.shape_cast %27 : vector<1x12x128xbf16> to vector<12x128xbf16>
    %cst_14 = arith.constant dense<0.000000e+00> : vector<144x128xf32>
    %29 = tpu.matmul %26, %28, %cst_14 {dimension_numbers = #tpu.dot_dimension_numbers<[1], [0], [0], [1], [0, 0, 1, 1], [], []>} : vector<144x12xbf16>, vector<12x128xbf16>, vector<144x128xf32> -> vector<144x128xf32>
    %30 = arith.addf %25, %29 : vector<144x128xf32>
    %31 = vector.extract_strided_slice %17 {offsets = [2, 0], sizes = [144, 12], strides = [1, 1]} : vector<198x12xbf16> to vector<144x12xbf16>
    %c2 = arith.constant 2 : index
    %c0_15 = arith.constant 0 : index
    %c0_16 = arith.constant 0 : index
    %32 = vector.load %arg6[%c2, %c0_15, %c0_16] : memref<9x12x128xbf16, #tpu.memory_space<vmem>>, vector<1x12x128xbf16>
    %33 = vector.shape_cast %32 : vector<1x12x128xbf16> to vector<12x128xbf16>
    %cst_17 = arith.constant dense<0.000000e+00> : vector<144x128xf32>
    %34 = tpu.matmul %31, %33, %cst_17 {dimension_numbers = #tpu.dot_dimension_numbers<[1], [0], [0], [1], [0, 0, 1, 1], [], []>} : vector<144x12xbf16>, vector<12x128xbf16>, vector<144x128xf32> -> vector<144x128xf32>
    %35 = arith.addf %30, %34 : vector<144x128xf32>
    %36 = vector.extract_strided_slice %17 {offsets = [18, 0], sizes = [144, 12], strides = [1, 1]} : vector<198x12xbf16> to vector<144x12xbf16>
    %c3 = arith.constant 3 : index
    %c0_18 = arith.constant 0 : index
    %c0_19 = arith.constant 0 : index
    %37 = vector.load %arg6[%c3, %c0_18, %c0_19] : memref<9x12x128xbf16, #tpu.memory_space<vmem>>, vector<1x12x128xbf16>
    %38 = vector.shape_cast %37 : vector<1x12x128xbf16> to vector<12x128xbf16>
    %cst_20 = arith.constant dense<0.000000e+00> : vector<144x128xf32>
    %39 = tpu.matmul %36, %38, %cst_20 {dimension_numbers = #tpu.dot_dimension_numbers<[1], [0], [0], [1], [0, 0, 1, 1], [], []>} : vector<144x12xbf16>, vector<12x128xbf16>, vector<144x128xf32> -> vector<144x128xf32>
    %40 = arith.addf %35, %39 : vector<144x128xf32>
    %41 = vector.extract_strided_slice %17 {offsets = [19, 0], sizes = [144, 12], strides = [1, 1]} : vector<198x12xbf16> to vector<144x12xbf16>
    %c4 = arith.constant 4 : index
    %c0_21 = arith.constant 0 : index
    %c0_22 = arith.constant 0 : index
    %42 = vector.load %arg6[%c4, %c0_21, %c0_22] : memref<9x12x128xbf16, #tpu.memory_space<vmem>>, vector<1x12x128xbf16>
    %43 = vector.shape_cast %42 : vector<1x12x128xbf16> to vector<12x128xbf16>
    %cst_23 = arith.constant dense<0.000000e+00> : vector<144x128xf32>
    %44 = tpu.matmul %41, %43, %cst_23 {dimension_numbers = #tpu.dot_dimension_numbers<[1], [0], [0], [1], [0, 0, 1, 1], [], []>} : vector<144x12xbf16>, vector<12x128xbf16>, vector<144x128xf32> -> vector<144x128xf32>
    %45 = arith.addf %40, %44 : vector<144x128xf32>
    %46 = vector.extract_strided_slice %17 {offsets = [20, 0], sizes = [144, 12], strides = [1, 1]} : vector<198x12xbf16> to vector<144x12xbf16>
    %c5 = arith.constant 5 : index
    %c0_24 = arith.constant 0 : index
    %c0_25 = arith.constant 0 : index
    %47 = vector.load %arg6[%c5, %c0_24, %c0_25] : memref<9x12x128xbf16, #tpu.memory_space<vmem>>, vector<1x12x128xbf16>
    %48 = vector.shape_cast %47 : vector<1x12x128xbf16> to vector<12x128xbf16>
    %cst_26 = arith.constant dense<0.000000e+00> : vector<144x128xf32>
    %49 = tpu.matmul %46, %48, %cst_26 {dimension_numbers = #tpu.dot_dimension_numbers<[1], [0], [0], [1], [0, 0, 1, 1], [], []>} : vector<144x12xbf16>, vector<12x128xbf16>, vector<144x128xf32> -> vector<144x128xf32>
    %50 = arith.addf %45, %49 : vector<144x128xf32>
    %51 = vector.extract_strided_slice %17 {offsets = [36, 0], sizes = [144, 12], strides = [1, 1]} : vector<198x12xbf16> to vector<144x12xbf16>
    %c6 = arith.constant 6 : index
    %c0_27 = arith.constant 0 : index
    %c0_28 = arith.constant 0 : index
    %52 = vector.load %arg6[%c6, %c0_27, %c0_28] : memref<9x12x128xbf16, #tpu.memory_space<vmem>>, vector<1x12x128xbf16>
    %53 = vector.shape_cast %52 : vector<1x12x128xbf16> to vector<12x128xbf16>
    %cst_29 = arith.constant dense<0.000000e+00> : vector<144x128xf32>
    %54 = tpu.matmul %51, %53, %cst_29 {dimension_numbers = #tpu.dot_dimension_numbers<[1], [0], [0], [1], [0, 0, 1, 1], [], []>} : vector<144x12xbf16>, vector<12x128xbf16>, vector<144x128xf32> -> vector<144x128xf32>
    %55 = arith.addf %50, %54 : vector<144x128xf32>
    %56 = vector.extract_strided_slice %17 {offsets = [37, 0], sizes = [144, 12], strides = [1, 1]} : vector<198x12xbf16> to vector<144x12xbf16>
    %c7 = arith.constant 7 : index
    %c0_30 = arith.constant 0 : index
    %c0_31 = arith.constant 0 : index
    %57 = vector.load %arg6[%c7, %c0_30, %c0_31] : memref<9x12x128xbf16, #tpu.memory_space<vmem>>, vector<1x12x128xbf16>
    %58 = vector.shape_cast %57 : vector<1x12x128xbf16> to vector<12x128xbf16>
    %cst_32 = arith.constant dense<0.000000e+00> : vector<144x128xf32>
    %59 = tpu.matmul %56, %58, %cst_32 {dimension_numbers = #tpu.dot_dimension_numbers<[1], [0], [0], [1], [0, 0, 1, 1], [], []>} : vector<144x12xbf16>, vector<12x128xbf16>, vector<144x128xf32> -> vector<144x128xf32>
    %60 = arith.addf %55, %59 : vector<144x128xf32>
    %61 = vector.extract_strided_slice %17 {offsets = [38, 0], sizes = [144, 12], strides = [1, 1]} : vector<198x12xbf16> to vector<144x12xbf16>
    %c8 = arith.constant 8 : index
    %c0_33 = arith.constant 0 : index
    %c0_34 = arith.constant 0 : index
    %62 = vector.load %arg6[%c8, %c0_33, %c0_34] : memref<9x12x128xbf16, #tpu.memory_space<vmem>>, vector<1x12x128xbf16>
    %63 = vector.shape_cast %62 : vector<1x12x128xbf16> to vector<12x128xbf16>
    %cst_35 = arith.constant dense<0.000000e+00> : vector<144x128xf32>
    %64 = tpu.matmul %61, %63, %cst_35 {dimension_numbers = #tpu.dot_dimension_numbers<[1], [0], [0], [1], [0, 0, 1, 1], [], []>} : vector<144x12xbf16>, vector<12x128xbf16>, vector<144x128xf32> -> vector<144x128xf32>
    %65 = arith.addf %60, %64 : vector<144x128xf32>
    %c0_36 = arith.constant 0 : index
    %c0_37 = arith.constant 0 : index
    %c0_38 = arith.constant 0 : index
    %66 = vector.load %arg8[%c0_36, %c0_37, %c0_38] : memref<1x144x128xf32, #tpu.memory_space<vmem>>, vector<1x144x128xf32>
    %67 = vector.shape_cast %66 : vector<1x144x128xf32> to vector<144x128xf32>
    %68 = vector.shape_cast %65 : vector<144x128xf32> to vector<1x144x128xf32>
    tpu.vector_store %arg8[%c0_36, %c0_37, %c0_38], %68 {strides = array<i32>} : memref<1x144x128xf32, #tpu.memory_space<vmem>>, vector<1x144x128xf32>,
    return
  }
  func.func @transform_0(%arg0: i32, %arg1: i32) -> (i32, i32, i32) {
    %c0_i32 = arith.constant 0 : i32
    %c0_i32_0 = arith.constant 0 : i32
    %c0_i32_1 = arith.constant 0 : i32
    return %arg0, %c0_i32, %c0_i32_0 : i32, i32, i32
  }
  func.func @transform_1(%arg0: i32, %arg1: i32) -> (i32, i32) {
    %c0_i32 = arith.constant 0 : i32
    %c0_i32_0 = arith.constant 0 : i32
    %c0_i32_1 = arith.constant 0 : i32
    return %c0_i32, %c0_i32_0 : i32, i32
  }
  func.func @transform_2(%arg0: i32, %arg1: i32) -> (i32, i32) {
    %c0_i32 = arith.constant 0 : i32
    %c0_i32_0 = arith.constant 0 : i32
    %c0_i32_1 = arith.constant 0 : i32
    return %c0_i32, %c0_i32_0 : i32, i32
  }
  func.func @transform_3(%arg0: i32, %arg1: i32) -> (i32, i32) {
    %c0_i32 = arith.constant 0 : i32
    %c0_i32_0 = arith.constant 0 : i32
    %c0_i32_1 = arith.constant 0 : i32
    return %c0_i32, %c0_i32_0 : i32, i32
  }
  func.func @transform_4(%arg0: i32, %arg1: i32) -> (i32, i32, i32) {
    %c0_i32 = arith.constant 0 : i32
    %c0_i32_0 = arith.constant 0 : i32
    %c0_i32_1 = arith.constant 0 : i32
    %c0_i32_2 = arith.constant 0 : i32
    return %c0_i32, %c0_i32_0, %c0_i32_1 : i32, i32, i32
  }
  func.func @transform_5(%arg0: i32, %arg1: i32) -> (i32, i32) {
    %c0_i32 = arith.constant 0 : i32
    %c0_i32_0 = arith.constant 0 : i32
    %c0_i32_1 = arith.constant 0 : i32
    return %c0_i32, %c0_i32_0 : i32, i32
  }
  func.func @transform_6(%arg0: i32, %arg1: i32) -> (i32, i32, i32) {
    %c0_i32 = arith.constant 0 : i32
    %c0_i32_0 = arith.constant 0 : i32
    return %arg0, %arg1, %c0_i32 : i32, i32, i32
  }
}

</mosaic_0001>

<llo_original>
// kernel: dense_block_forward.3
$region0: #{dense_block_forward.3}
  #allocation0 [shape = 'u32[]', space=smem, size = 0x4, offset = 0x4, fixed_abs, tag = 'smem constant byte address 0x4 - core index']
  #allocation1 [shape = 'u32[144,128]{1,0:T(1,128)}', space=vmem, size = 0x12000, scoped, tag = 'internal scratch']
  %s0 = inlined_call_operand.vmem [shape: f32[2,342,4], index: 0, kind: input, shape index: {}]
  %s1 = inlined_call_operand.vmem [shape: f32[342,1], index: 1, kind: input, shape index: {}]
  %s2 = inlined_call_operand.vmem [shape: f32[1,4], index: 2, kind: input, shape index: {}]
  %s3 = inlined_call_operand.vmem [shape: f32[1,4], index: 3, kind: input, shape index: {}]
  %s4 = inlined_call_operand.vmem [shape: bf16[9,4,128], index: 4, kind: input, shape index: {}]
  %s5 = inlined_call_operand.vmem [shape: f32[1,128], index: 5, kind: input, shape index: {}]
  %s6 = inlined_call_operand.vmem [shape: f32[2,288,128], index: 6, kind: output, shape index: {}]
  %s7 = sld [smem:[#allocation0]]
  $region57: #{dense_block_forward.3} parent=0
    _
  %s9 = ssub.s32 1, %s7
  %s10 = scalar_select 0, %s9, %s7
  loop: start=0, step=1, limit=6
  $region2: #{dense_block_forward.3} parent=0 // loop_pre_header
    _
  $region3: #{dense_block_forward.3} parent=0 // loop_header
    %s12 = sphi 0, %s16
    %p13 = scmp.ge.s32.totalorder %s12, 6
    %s19 = sphi 0, %s31
    %s20 = sphi 0, %s27
    %s21 = sphi 0, %s19
    %s22 = sphi 0, %s20
    %s23 = sphi 0, %s21
    %s24 = sphi 0, %s22
    %s34 = sphi 0, %s36
    %s37 = sphi 0, %s34
    %s38 = sphi 0, %s37
    %s54 = sphi 0, %s38
    %s58 = sphi 0, %s58
    %s60 = sphi 0, %s58
    %s61 = sphi 0, %s60
    %s75 = sphi 0, %s61
    %s79 = sphi 0, %s79
    %s81 = sphi 0, %s79
    %s82 = sphi 0, %s81
    %s96 = sphi 0, %s82
    %s100 = sphi 0, %s100
    %s102 = sphi 0, %s100
    %s103 = sphi 0, %s102
    %s117 = sphi 0, %s103
    %s121 = sphi 0, %s121
    %s123 = sphi 0, %s121
    %s124 = sphi 0, %s123
    %s138 = sphi 0, %s124
    %s142 = sphi 0, %s142
    %s144 = sphi 0, %s142
    %s145 = sphi 0, %s144
    %s159 = sphi 0, %s145
    %s167 = sphi 0, %s169
    %s170 = sphi 0, %s167
    %s171 = sphi 0, %s170
    %s187 = sphi 0, %s171
  $region4: #{dense_block_forward.3} parent=0 // loop_header_branch
    %15 = sbr.rel (%p13) target = $region8
  $region5: #{dense_block_forward.3} parent=0 // loop_body
    %s17 = ssub.s32 %s12, 1
    %s18 = ssub.s32 %s12, 2
    %s25 = sadd.s32 1, %s20
    %p26 = scmp.ge.s32.totalorder %s25, 2
    %s27 = scalar_select %p26, 0, %s25
    %s28 = sadd.s32 1, %s19
    %s29 = scalar_select %p26, %s28, %s19
    %p30 = scmp.ge.s32.totalorder %s29, 2
    %s31 = scalar_select %p30, 0, %s29
    %s32 = ssub.s32 %s19, %s31
    %p33 = scmp.eq.s32.totalorder %s32, 0
    %s35 = sadd.s32 %s34, 1
    %s36 = scalar_select %p33, %s34, %s35
    %p39 = pneg %p33
    %p40 = scmp.eq.s32.totalorder %s12, 3
    %p41 = por %p39, %p40
    %p42 = scmp.ne.s32.totalorder %s34, %s37
    %p43 = scmp.eq.s32.totalorder %s12, 0
    %p44 = por %p42, %p43
    %p45 = scmp.ne.s32.totalorder %s34, %s37
    %p46 = scmp.eq.s32.totalorder %s17, 3
    %p47 = por %p45, %p46
    %p48 = scmp.ne.s32.totalorder %s37, %s38
    %p49 = scmp.eq.s32.totalorder %s17, 0
    %p50 = por %p48, %p49
    %p51 = scmp.ne.s32.totalorder %s37, %s38
    %p52 = scmp.eq.s32.totalorder %s18, 3
    %p53 = por %p51, %p52
    %p55 = scmp.ne.s32.totalorder %s38, %s54
    %p56 = scmp.eq.s32.totalorder %s18, 0
    %p57 = por %p55, %p56
    %s59 = sadd.s32 %s58, 1
    %p62 = scmp.eq.s32.totalorder %s12, 3
    %p63 = scmp.ne.s32.totalorder %s58, %s60
    %p64 = scmp.eq.s32.totalorder %s12, 0
    %p65 = por %p63, %p64
    %p66 = scmp.ne.s32.totalorder %s58, %s60
    %p67 = scmp.eq.s32.totalorder %s17, 3
    %p68 = por %p66, %p67
    %p69 = scmp.ne.s32.totalorder %s60, %s61
    %p70 = scmp.eq.s32.totalorder %s17, 0
    %p71 = por %p69, %p70
    %p72 = scmp.ne.s32.totalorder %s60, %s61
    %p73 = scmp.eq.s32.totalorder %s18, 3
    %p74 = por %p72, %p73
    %p76 = scmp.ne.s32.totalorder %s61, %s75
    %p77 = scmp.eq.s32.totalorder %s18, 0
    %p78 = por %p76, %p77
    %s80 = sadd.s32 %s79, 1
    %p83 = scmp.eq.s32.totalorder %s12, 3
    %p84 = scmp.ne.s32.totalorder %s79, %s81
    %p85 = scmp.eq.s32.totalorder %s12, 0
    %p86 = por %p84, %p85
    %p87 = scmp.ne.s32.totalorder %s79, %s81
    %p88 = scmp.eq.s32.totalorder %s17, 3
    %p89 = por %p87, %p88
    %p90 = scmp.ne.s32.totalorder %s81, %s82
    %p91 = scmp.eq.s32.totalorder %s17, 0
    %p92 = por %p90, %p91
    %p93 = scmp.ne.s32.totalorder %s81, %s82
    %p94 = scmp.eq.s32.totalorder %s18, 3
    %p95 = por %p93, %p94
    %p97 = scmp.ne.s32.totalorder %s82, %s96
    %p98 = scmp.eq.s32.totalorder %s18, 0
    %p99 = por %p97, %p98
    %s101 = sadd.s32 %s100, 1
    %p104 = scmp.eq.s32.totalorder %s12, 3
    %p105 = scmp.ne.s32.totalorder %s100, %s102
    %p106 = scmp.eq.s32.totalorder %s12, 0
    %p107 = por %p105, %p106
    %p108 = scmp.ne.s32.totalorder %s100, %s102
    %p109 = scmp.eq.s32.totalorder %s17, 3
    %p110 = por %p108, %p109
    %p111 = scmp.ne.s32.totalorder %s102, %s103
    %p112 = scmp.eq.s32.totalorder %s17, 0
    %p113 = por %p111, %p112
    %p114 = scmp.ne.s32.totalorder %s102, %s103
    %p115 = scmp.eq.s32.totalorder %s18, 3
    %p116 = por %p114, %p115
    %p118 = scmp.ne.s32.totalorder %s103, %s117
    %p119 = scmp.eq.s32.totalorder %s18, 0
    %p120 = por %p118, %p119
    %s122 = sadd.s32 %s121, 1
    %p125 = scmp.eq.s32.totalorder %s12, 3
    %p126 = scmp.ne.s32.totalorder %s121, %s123
    %p127 = scmp.eq.s32.totalorder %s12, 0
    %p128 = por %p126, %p127
    %p129 = scmp.ne.s32.totalorder %s121, %s123
    %p130 = scmp.eq.s32.totalorder %s17, 3
    %p131 = por %p129, %p130
    %p132 = scmp.ne.s32.totalorder %s123, %s124
    %p133 = scmp.eq.s32.totalorder %s17, 0
    %p134 = por %p132, %p133
    %p135 = scmp.ne.s32.totalorder %s123, %s124
    %p136 = scmp.eq.s32.totalorder %s18, 3
    %p137 = por %p135, %p136
    %p139 = scmp.ne.s32.totalorder %s124, %s138
    %p140 = scmp.eq.s32.totalorder %s18, 0
    %p141 = por %p139, %p140
    %s143 = sadd.s32 %s142, 1
    %p146 = scmp.eq.s32.totalorder %s12, 3
    %p147 = scmp.ne.s32.totalorder %s142, %s144
    %p148 = scmp.eq.s32.totalorder %s12, 0
    %p149 = por %p147, %p148
    %p150 = scmp.ne.s32.totalorder %s142, %s144
    %p151 = scmp.eq.s32.totalorder %s17, 3
    %p152 = por %p150, %p151
    %p153 = scmp.ne.s32.totalorder %s144, %s145
    %p154 = scmp.eq.s32.totalorder %s17, 0
    %p155 = por %p153, %p154
    %p156 = scmp.ne.s32.totalorder %s144, %s145
    %p157 = scmp.eq.s32.totalorder %s18, 3
    %p158 = por %p156, %p157
    %p160 = scmp.ne.s32.totalorder %s145, %s159
    %p161 = scmp.eq.s32.totalorder %s18, 0
    %p162 = por %p160, %p161
    %s163 = ssub.s32 %s19, %s31
    %s164 = ssub.s32 %s20, %s27
    %s165 = sor.u32 %s163, %s164
    %p166 = scmp.eq.s32.totalorder %s165, 0
    %s168 = sadd.s32 %s167, 1
    %s169 = scalar_select %p166, %s167, %s168
    %p172 = pneg %p166
    %p173 = scmp.eq.s32.totalorder %s12, 3
    %p174 = por %p172, %p173
    %p175 = scmp.ne.s32.totalorder %s167, %s170
    %p176 = scmp.eq.s32.totalorder %s12, 0
    %p177 = por %p175, %p176
    %p178 = scmp.ne.s32.totalorder %s167, %s170
    %p179 = scmp.eq.s32.totalorder %s17, 3
    %p180 = por %p178, %p179
    %p181 = scmp.ne.s32.totalorder %s170, %s171
    %p182 = scmp.eq.s32.totalorder %s17, 0
    %p183 = por %p181, %p182
    %p184 = scmp.ne.s32.totalorder %s170, %s171
    %p185 = scmp.eq.s32.totalorder %s18, 3
    %p186 = por %p184, %p185
    %p188 = scmp.ne.s32.totalorder %s171, %s187
    %p189 = scmp.eq.s32.totalorder %s18, 0
    %p190 = por %p188, %p189
    %p191 = scmp.le.s32.totalorder 1, %s12
    %p192 = scmp.lt.s32.totalorder %s12, 5
    %p193 = pnand %p191, %p192
    %p194 = pneg %p193
    // Predicated region
    $region9: #{dense_block_forward.3} parent=5 // pred_check
      _
    $region10: #{dense_block_forward.3} parent=5 // pred_check_branch
      %196 = sbr.rel (%p193) target = $region12
    $region11: #{dense_block_forward.3} parent=5 // pred_region
      %s197 = ssub.s32 %s12, 1
      // Predicated region
      $region13: #{dense_block_forward.3} parent=11 // pred_check
        %p198 = pneg %p71
      $region14: #{dense_block_forward.3} parent=11 // pred_check_branch
        %200 = sbr.rel (%p198) target = $region16
      $region15: #{dense_block_forward.3} parent=11 // pred_region
        _
      $region16: #{dense_block_forward.3} parent=11 // pred_fallthru
        _
      // Predicated region
      $region17: #{dense_block_forward.3} parent=11 // pred_check
        %p201 = pneg %p92
      $region18: #{dense_block_forward.3} parent=11 // pred_check_branch
        %203 = sbr.rel (%p201) target = $region20
      $region19: #{dense_block_forward.3} parent=11 // pred_region
        _
      $region20: #{dense_block_forward.3} parent=11 // pred_fallthru
        _
      // Predicated region
      $region21: #{dense_block_forward.3} parent=11 // pred_check
        %p204 = pneg %p113
      $region22: #{dense_block_forward.3} parent=11 // pred_check_branch
        %206 = sbr.rel (%p204) target = $region24
      $region23: #{dense_block_forward.3} parent=11 // pred_region
        _
      $region24: #{dense_block_forward.3} parent=11 // pred_fallthru
        _
      // Predicated region
      $region25: #{dense_block_forward.3} parent=11 // pred_check
        %p207 = pneg %p134
      $region26: #{dense_block_forward.3} parent=11 // pred_check_branch
        %209 = sbr.rel (%p207) target = $region28
      $region27: #{dense_block_forward.3} parent=11 // pred_region
        _
      $region28: #{dense_block_forward.3} parent=11 // pred_fallthru
        _
      // Predicated region
      $region29: #{dense_block_forward.3} parent=11 // pred_check
        %p210 = pneg %p155
      $region30: #{dense_block_forward.3} parent=11 // pred_check_branch
        %212 = sbr.rel (%p210) target = $region32
      $region31: #{dense_block_forward.3} parent=11 // pred_region
        _
      $region32: #{dense_block_forward.3} parent=11 // pred_fallthru
        _
    $region12: #{dense_block_forward.3} parent=5 // pred_fallthru
      _
    %p213 = scmp.lt.s32.totalorder %s12, 4
    // Predicated region
    $region33: #{dense_block_forward.3} parent=5 // pred_check
      %p214 = pneg %p213
    $region34: #{dense_block_forward.3} parent=5 // pred_check_branch
      %216 = sbr.rel (%p214) target = $region36
    $region35: #{dense_block_forward.3} parent=5 // pred_region
      // Predicated region
      $region37: #{dense_block_forward.3} parent=35 // pred_check
        %p217 = pneg %p44
      $region38: #{dense_block_forward.3} parent=35 // pred_check_branch
        %219 = sbr.rel (%p217) target = $region40
      $region39: #{dense_block_forward.3} parent=35 // pred_region
        %p220 = scmp.lt.s32.totalorder %s19, 1
        %s221 = scalar_select %p220, %s19, 1
        %s222 = smul.addr %s221, 43
        %s223 = smul.addr %s222, 8
        %s224 = scalar_lea.vmem %s0, %s223
      $region40: #{dense_block_forward.3} parent=35 // pred_fallthru
        _
    $region36: #{dense_block_forward.3} parent=5 // pred_fallthru
      _
    %p225 = scmp.le.s32.totalorder 1, %s12
    %p226 = scmp.lt.s32.totalorder %s12, 5
    %p227 = pnand %p225, %p226
    %p228 = pneg %p227
    // Predicated region
    $region41: #{dense_block_forward.3} parent=5 // pred_check
      _
    $region42: #{dense_block_forward.3} parent=5 // pred_check_branch
      %230 = sbr.rel (%p227) target = $region44
    $region43: #{dense_block_forward.3} parent=5 // pred_region
      %s231 = ssub.s32 %s12, 1
      %p232 = scmp.lt.s32.totalorder %s21, 1
      %s233 = scalar_select %p232, %s21, 1
      %s234 = smul.addr %s233, 43
      %s235 = smul.addr %s234, 8
      %s236 = scalar_lea.vmem %s0, %s235
      %p237 = pneg %p50
      %p238 = pneg %p47
      %p239 = pneg %p71
      %p240 = pneg %p68
      %p241 = pneg %p92
      %p242 = pneg %p89
      %p243 = pneg %p113
      %p244 = pneg %p110
      %p245 = pneg %p134
      %p246 = pneg %p131
      %p247 = pneg %p155
      %p248 = pneg %p152
      %p249 = pneg %p183
      %p250 = pneg %p180
      %s251 = smul.u32 18, %s22
      %p252 = scmp.lt.s32.totalorder %s21, 1
      %s253 = scalar_select %p252, %s21, 1
      %p254 = scmp.lt.s32.totalorder %s251, 35
      %s255 = scalar_select %p254, %s251, 35
      %s256 = smul.addr %s253, 36
      %s257 = sadd.s32 %s255, %s256
      %s258 = smul.addr %s257, 8
      %s259 = scalar_lea.vmem %s6, %s258
      %p260 = scmp.lt.s32.totalorder %s21, 1
      %s261 = scalar_select %p260, %s21, 1
      %s262 = smul.addr %s261, 43
      %s263 = smul.addr %s262, 8
      %s264 = scalar_lea.vmem %s0, %s263
      %s265 = smul.u32 18, %s22
      %p266 = scmp.lt.s32.totalorder %s21, 1
      %s267 = scalar_select %p266, %s21, 1
      %p268 = scmp.lt.s32.totalorder %s265, 35
      %s269 = scalar_select %p268, %s265, 35
      %s270 = smul.addr %s267, 36
      %s271 = sadd.s32 %s269, %s270
      %s272 = smul.addr %s271, 8
      %s273 = scalar_lea.vmem %s6, %s272
      %s274 = smul.u32 18, %s22
      %s276 = smul.u32 %s22, 144
      %s277 = scalar_lea.vmem %s264, %s276
      %v278 = vld [vmem:[%s277] sm:$0xff]
      %v279 = vld [vmem:[%s277 + $0x8] sm:$0xff]
      %v280 = vld [vmem:[%s277 + $0x10] sm:$0xff]
      %v281 = vld [vmem:[%s277 + $0x18] sm:$0xff]
      %v282 = vld [vmem:[%s277 + $0x20] sm:$0xff]
      %v283 = vld [vmem:[%s277 + $0x28] sm:$0xff]
      %v284 = vld [vmem:[%s277 + $0x30] sm:$0xff]
      %v285 = vld [vmem:[%s277 + $0x38] sm:$0xff]
      %v286 = vld [vmem:[%s277 + $0x40] sm:$0xff]
      %v287 = vld [vmem:[%s277 + $0x48] sm:$0xff]
      %v288 = vld [vmem:[%s277 + $0x50] sm:$0xff]
      %v289 = vld [vmem:[%s277 + $0x58] sm:$0xff]
      %v290 = vld [vmem:[%s277 + $0x60] sm:$0xff]
      %v291 = vld [vmem:[%s277 + $0x68] sm:$0xff]
      %v292 = vld [vmem:[%s277 + $0x70] sm:$0xff]
      %v293 = vld [vmem:[%s277 + $0x78] sm:$0xff]
      %v294 = vld [vmem:[%s277 + $0x80] sm:$0xff]
      %v295 = vld [vmem:[%s277 + $0x88] sm:$0xff]
      %v296 = vld [vmem:[%s277 + $0x90] sm:$0xff]
      %v297 = vld [vmem:[%s277 + $0x98] sm:$0xff]
      %v298 = vld [vmem:[%s277 + $0xa0] sm:$0xff]
      %v299 = vld [vmem:[%s277 + $0xa8] sm:$0xff]
      %v300 = vld [vmem:[%s277 + $0xb0] sm:$0xff]
      %v301 = vld [vmem:[%s277 + $0xb8] sm:$0xff]
      %s302 = scalar_lea.vmem %s1, %s276
      %v303 = vld [vmem:[%s302] sm:$0xff]
      %v304 = vld [vmem:[%s302 + $0x8] sm:$0xff]
      %v305 = vld [vmem:[%s302 + $0x10] sm:$0xff]
      %v306 = vld [vmem:[%s302 + $0x18] sm:$0xff]
      %v307 = vld [vmem:[%s302 + $0x20] sm:$0xff]
      %v308 = vld [vmem:[%s302 + $0x28] sm:$0xff]
      %v309 = vld [vmem:[%s302 + $0x30] sm:$0xff]
      %v310 = vld [vmem:[%s302 + $0x38] sm:$0xff]
      %v311 = vld [vmem:[%s302 + $0x40] sm:$0xff]
      %v312 = vld [vmem:[%s302 + $0x48] sm:$0xff]
      %v313 = vld [vmem:[%s302 + $0x50] sm:$0xff]
      %v314 = vld [vmem:[%s302 + $0x58] sm:$0xff]
      %v315 = vld [vmem:[%s302 + $0x60] sm:$0xff]
      %v316 = vld [vmem:[%s302 + $0x68] sm:$0xff]
      %v317 = vld [vmem:[%s302 + $0x70] sm:$0xff]
      %v318 = vld [vmem:[%s302 + $0x78] sm:$0xff]
      %v319 = vld [vmem:[%s302 + $0x80] sm:$0xff]
      %v320 = vld [vmem:[%s302 + $0x88] sm:$0xff]
      %v321 = vld [vmem:[%s302 + $0x90] sm:$0xff]
      %v322 = vld [vmem:[%s302 + $0x98] sm:$0xff]
      %v323 = vld [vmem:[%s302 + $0xa0] sm:$0xff]
      %v324 = vld [vmem:[%s302 + $0xa8] sm:$0xff]
      %v325 = vld [vmem:[%s302 + $0xb0] sm:$0xff]
      %v326 = vld [vmem:[%s302 + $0xb8] sm:$0xff]
      %v327 = vld [vmem:[%s2] sm:$0x1]
      %v329 = vlaneseq
      %v330 = vshrl.u32 %v329, 7
      %v331 = vsub.s32 0, %v330
      %v332 = vrot.slane %v327, %v331
      %v334 = vmul.f32 %v278, %v332
      %v335 = vmul.f32 %v279, %v332
      %v336 = vmul.f32 %v280, %v332
      %v337 = vmul.f32 %v281, %v332
      %v338 = vmul.f32 %v282, %v332
      %v339 = vmul.f32 %v283, %v332
      %v340 = vmul.f32 %v284, %v332
      %v341 = vmul.f32 %v285, %v332
      %v342 = vmul.f32 %v286, %v332
      %v343 = vmul.f32 %v287, %v332
      %v344 = vmul.f32 %v288, %v332
      %v345 = vmul.f32 %v289, %v332
      %v346 = vmul.f32 %v290, %v332
      %v347 = vmul.f32 %v291, %v332
      %v348 = vmul.f32 %v292, %v332
      %v349 = vmul.f32 %v293, %v332
      %v350 = vmul.f32 %v294, %v332
      %v351 = vmul.f32 %v295, %v332
      %v352 = vmul.f32 %v296, %v332
      %v353 = vmul.f32 %v297, %v332
      %v354 = vmul.f32 %v298, %v332
      %v355 = vmul.f32 %v299, %v332
      %v356 = vmul.f32 %v300, %v332
      %v357 = vmul.f32 %v301, %v332
      %v358 = vld [vmem:[%s3] sm:$0x1]
      %v360 = vlaneseq
      %v361 = vshrl.u32 %v360, 7
      %v362 = vsub.s32 0, %v361
      %v363 = vrot.slane %v358, %v362
      %v365 = vadd.f32 %v334, %v363
      %v366 = vadd.f32 %v335, %v363
      %v367 = vadd.f32 %v336, %v363
      %v368 = vadd.f32 %v337, %v363
      %v369 = vadd.f32 %v338, %v363
      %v370 = vadd.f32 %v339, %v363
      %v371 = vadd.f32 %v340, %v363
      %v372 = vadd.f32 %v341, %v363
      %v373 = vadd.f32 %v342, %v363
      %v374 = vadd.f32 %v343, %v363
      %v375 = vadd.f32 %v344, %v363
      %v376 = vadd.f32 %v345, %v363
      %v377 = vadd.f32 %v346, %v363
      %v378 = vadd.f32 %v347, %v363
      %v379 = vadd.f32 %v348, %v363
      %v380 = vadd.f32 %v349, %v363
      %v381 = vadd.f32 %v350, %v363
      %v382 = vadd.f32 %v351, %v363
      %v383 = vadd.f32 %v352, %v363
      %v384 = vadd.f32 %v353, %v363
      %v385 = vadd.f32 %v354, %v363
      %v386 = vadd.f32 %v355, %v363
      %v387 = vadd.f32 %v356, %v363
      %v388 = vadd.f32 %v357, %v363
      %v389 = vmax.f32 %v365, 0.0
      %v390 = vmax.f32 %v366, 0.0
      %v391 = vmax.f32 %v367, 0.0
      %v392 = vmax.f32 %v368, 0.0
      %v393 = vmax.f32 %v369, 0.0
      %v394 = vmax.f32 %v370, 0.0
      %v395 = vmax.f32 %v371, 0.0
      %v396 = vmax.f32 %v372, 0.0
      %v397 = vmax.f32 %v373, 0.0
      %v398 = vmax.f32 %v374, 0.0
      %v399 = vmax.f32 %v375, 0.0
      %v400 = vmax.f32 %v376, 0.0
      %v401 = vmax.f32 %v377, 0.0
      %v402 = vmax.f32 %v378, 0.0
      %v403 = vmax.f32 %v379, 0.0
      %v404 = vmax.f32 %v380, 0.0
      %v405 = vmax.f32 %v381, 0.0
      %v406 = vmax.f32 %v382, 0.0
      %v407 = vmax.f32 %v383, 0.0
      %v408 = vmax.f32 %v384, 0.0
      %v409 = vmax.f32 %v385, 0.0
      %v410 = vmax.f32 %v386, 0.0
      %v411 = vmax.f32 %v387, 0.0
      %v412 = vmax.f32 %v388, 0.0
      %414 = vset.pattern.permute.xlu0 0
      %415 = vperm.xlu0 %414, %v303
      %v416 = vpop.permute.xlu0 %415
      %419 = vset.pattern.permute.xlu0 0
      %420 = vperm.xlu0 %419, %v304
      %v421 = vpop.permute.xlu0 %420
      %424 = vset.pattern.permute.xlu0 0
      %425 = vperm.xlu0 %424, %v305
      %v426 = vpop.permute.xlu0 %425
      %429 = vset.pattern.permute.xlu0 0
      %430 = vperm.xlu0 %429, %v306
      %v431 = vpop.permute.xlu0 %430
      %434 = vset.pattern.permute.xlu0 0
      %435 = vperm.xlu0 %434, %v307
      %v436 = vpop.permute.xlu0 %435
      %439 = vset.pattern.permute.xlu0 0
      %440 = vperm.xlu0 %439, %v308
      %v441 = vpop.permute.xlu0 %440
      %444 = vset.pattern.permute.xlu0 0
      %445 = vperm.xlu0 %444, %v309
      %v446 = vpop.permute.xlu0 %445
      %449 = vset.pattern.permute.xlu0 0
      %450 = vperm.xlu0 %449, %v310
      %v451 = vpop.permute.xlu0 %450
      %454 = vset.pattern.permute.xlu0 0
      %455 = vperm.xlu0 %454, %v311
      %v456 = vpop.permute.xlu0 %455
      %459 = vset.pattern.permute.xlu0 0
      %460 = vperm.xlu0 %459, %v312
      %v461 = vpop.permute.xlu0 %460
      %464 = vset.pattern.permute.xlu0 0
      %465 = vperm.xlu0 %464, %v313
      %v466 = vpop.permute.xlu0 %465
      %469 = vset.pattern.permute.xlu0 0
      %470 = vperm.xlu0 %469, %v314
      %v471 = vpop.permute.xlu0 %470
      %474 = vset.pattern.permute.xlu0 0
      %475 = vperm.xlu0 %474, %v315
      %v476 = vpop.permute.xlu0 %475
      %479 = vset.pattern.permute.xlu0 0
      %480 = vperm.xlu0 %479, %v316
      %v481 = vpop.permute.xlu0 %480
      %484 = vset.pattern.permute.xlu0 0
      %485 = vperm.xlu0 %484, %v317
      %v486 = vpop.permute.xlu0 %485
      %489 = vset.pattern.permute.xlu0 0
      %490 = vperm.xlu0 %489, %v318
      %v491 = vpop.permute.xlu0 %490
      %494 = vset.pattern.permute.xlu0 0
      %495 = vperm.xlu0 %494, %v319
      %v496 = vpop.permute.xlu0 %495
      %499 = vset.pattern.permute.xlu0 0
      %500 = vperm.xlu0 %499, %v320
      %v501 = vpop.permute.xlu0 %500
      %504 = vset.pattern.permute.xlu0 0
      %505 = vperm.xlu0 %504, %v321
      %v506 = vpop.permute.xlu0 %505
      %509 = vset.pattern.permute.xlu0 0
      %510 = vperm.xlu0 %509, %v322
      %v511 = vpop.permute.xlu0 %510
      %514 = vset.pattern.permute.xlu0 0
      %515 = vperm.xlu0 %514, %v323
      %v516 = vpop.permute.xlu0 %515
      %519 = vset.pattern.permute.xlu0 0
      %520 = vperm.xlu0 %519, %v324
      %v521 = vpop.permute.xlu0 %520
      %524 = vset.pattern.permute.xlu0 0
      %525 = vperm.xlu0 %524, %v325
      %v526 = vpop.permute.xlu0 %525
      %529 = vset.pattern.permute.xlu0 0
      %530 = vperm.xlu0 %529, %v326
      %v531 = vpop.permute.xlu0 %530
      %v533 = vmul.f32 %v389, %v416
      %v534 = vmul.f32 %v390, %v421
      %v535 = vmul.f32 %v391, %v426
      %v536 = vmul.f32 %v392, %v431
      %v537 = vmul.f32 %v393, %v436
      %v538 = vmul.f32 %v394, %v441
      %v539 = vmul.f32 %v395, %v446
      %v540 = vmul.f32 %v396, %v451
      %v541 = vmul.f32 %v397, %v456
      %v542 = vmul.f32 %v398, %v461
      %v543 = vmul.f32 %v399, %v466
      %v544 = vmul.f32 %v400, %v471
      %v545 = vmul.f32 %v401, %v476
      %v546 = vmul.f32 %v402, %v481
      %v547 = vmul.f32 %v403, %v486
      %v548 = vmul.f32 %v404, %v491
      %v549 = vmul.f32 %v405, %v496
      %v550 = vmul.f32 %v406, %v501
      %v551 = vmul.f32 %v407, %v506
      %v552 = vmul.f32 %v408, %v511
      %v553 = vmul.f32 %v409, %v516
      %v554 = vmul.f32 %v410, %v521
      %v555 = vmul.f32 %v411, %v526
      %v556 = vmul.f32 %v412, %v531
      %v557 = vpack.c.bf16 %v534, %v533
      %v558 = vpack.c.bf16 %v536, %v535
      %v559 = vpack.c.bf16 %v538, %v537
      %v560 = vpack.c.bf16 %v540, %v539
      %v561 = vpack.c.bf16 %v542, %v541
      %v562 = vpack.c.bf16 %v544, %v543
      %v563 = vpack.c.bf16 %v546, %v545
      %v564 = vpack.c.bf16 %v548, %v547
      %v565 = vpack.c.bf16 %v550, %v549
      %v566 = vpack.c.bf16 %v552, %v551
      %v567 = vpack.c.bf16 %v554, %v553
      %v568 = vpack.c.bf16 %v556, %v555
      %v569 = vld [vmem:[%s5] sm:$0x1]
      %v571 = vlaneseq
      %v572 = vshrl.u32 %v571, 7
      %v573 = vsub.s32 0, %v572
      %v574 = vrot.slane %v569, %v573
      %v576 = vld [vmem:[%s4] sm:$0x3]
      %vm577 = vcmask 31744
      %v579 = vsel %vm577, %v557, 0
      %v582 = vsel %vm577, %v558, 0
      %v585 = vsel %vm577, %v559, 0
      %v588 = vsel %vm577, %v560, 0
      %v591 = vsel %vm577, %v561, 0
      %v594 = vsel %vm577, %v562, 0
      %v597 = vsel %vm577, %v563, 0
      %v600 = vsel %vm577, %v564, 0
      %v603 = vsel %vm577, %v565, 0
      %vm605 = vcmask 1041408
      %v607 = vsel %vm605, %v576, 0
      %609 = vmatprep.subr.bf16.mxu0 0
      %610 = vmatpush1.bf16.msra.mxu0 %v607
      %611 = vmatprep.subr.bf16.mxu0 0
      %612 = vmatpush1.bf16.msra.mxu0 0
      %613 = vmatprep.subr.bf16.mxu0 0
      %614 = vmatpush1.bf16.msra.mxu0 0
      %615 = vmatprep.subr.bf16.mxu0 0
      %616 = vmatpush1.bf16.msra.mxu0 0
      %617 = vmatprep.subr.bf16.mxu0 0
      %618 = vmatpush1.bf16.msra.mxu0 0
      %619 = vmatprep.subr.bf16.mxu0 0
      %620 = vmatpush1.bf16.msra.mxu0 0
      %621 = vmatprep.subr.bf16.mxu0 0
      %622 = vmatpush1.bf16.msra.mxu0 0
      %623 = vmatprep.subr.bf16.mxu0 0
      %624 = vmatpush1.bf16.msra.mxu0 0
      %625 = vmatprep.subr.bf16.mxu0 0
      %626 = vmatpush1.bf16.msra.mxu0 0
      %627 = vmatprep.subr.bf16.mxu0 0
      %628 = vmatpush1.bf16.msra.mxu0 0
      %629 = vmatprep.subr.bf16.mxu0 0
      %630 = vmatpush1.bf16.msra.mxu0 0
      %631 = vmatprep.subr.bf16.mxu0 0
      %632 = vmatpush1.bf16.msra.mxu0 0
      %633 = vmatprep.subr.bf16.mxu0 0
      %634 = vmatpush1.bf16.msra.mxu0 0
      %635 = vmatprep.subr.bf16.mxu0 0
      %636 = vmatpush1.bf16.msra.mxu0 0
      %637 = vmatprep.subr.bf16.mxu0 0
      %638 = vmatpush1.bf16.msra.mxu0 0
      %639 = vmatprep.subr.bf16.mxu0 0
      %640 = vmatpush1.bf16.msra.mxu0 0
      %641 = vmatprep.mubr.bf16.mxu0 0
      %642 = vmatmul.mubr.bf16.gmra.mrb[0].mxu0 %v579
      %v643 = vpop.f32.mrb[0].mxu0
      %v644 = vadd.f32 0.0, %v643
      %v645 = vpop.f32.mrb[0].mxu0
      %v646 = vpop.f32.mrb[0].mxu0
      %v647 = vadd.f32 0.0, %v646
      %v648 = vpop.f32.mrb[0].mxu0
      %649 = vmatprep.mubr.bf16.mxu0 0
      %650 = vmatmul.mubr.bf16.gmra.mrb[0].mxu0 %v582
      %v651 = vpop.f32.mrb[0].mxu0
      %v652 = vadd.f32 0.0, %v651
      %v653 = vpop.f32.mrb[0].mxu0
      %v654 = vpop.f32.mrb[0].mxu0
      %v655 = vadd.f32 0.0, %v654
      %v656 = vpop.f32.mrb[0].mxu0
      %657 = vmatprep.mubr.bf16.mxu0 0
      %658 = vmatmul.mubr.bf16.gmra.mrb[0].mxu0 %v585
      %v659 = vpop.f32.mrb[0].mxu0
      %v660 = vadd.f32 0.0, %v659
      %v661 = vpop.f32.mrb[0].mxu0
      %v662 = vpop.f32.mrb[0].mxu0
      %v663 = vadd.f32 0.0, %v662
      %v664 = vpop.f32.mrb[0].mxu0
      %665 = vmatprep.mubr.bf16.mxu0 0
      %666 = vmatmul.mubr.bf16.gmra.mrb[0].mxu0 %v588
      %v667 = vpop.f32.mrb[0].mxu0
      %v668 = vadd.f32 0.0, %v667
      %v669 = vpop.f32.mrb[0].mxu0
      %v670 = vpop.f32.mrb[0].mxu0
      %v671 = vadd.f32 0.0, %v670
      %v672 = vpop.f32.mrb[0].mxu0
      %673 = vmatprep.mubr.bf16.mxu0 0
      %674 = vmatmul.mubr.bf16.gmra.mrb[0].mxu0 %v591
      %v675 = vpop.f32.mrb[0].mxu0
      %v676 = vadd.f32 0.0, %v675
      %v677 = vpop.f32.mrb[0].mxu0
      %v678 = vpop.f32.mrb[0].mxu0
      %v679 = vadd.f32 0.0, %v678
      %v680 = vpop.f32.mrb[0].mxu0
      %681 = vmatprep.mubr.bf16.mxu0 0
      %682 = vmatmul.mubr.bf16.gmra.mrb[0].mxu0 %v594
      %v683 = vpop.f32.mrb[0].mxu0
      %v684 = vadd.f32 0.0, %v683
      %v685 = vpop.f32.mrb[0].mxu0
      %v686 = vpop.f32.mrb[0].mxu0
      %v687 = vadd.f32 0.0, %v686
      %v688 = vpop.f32.mrb[0].mxu0
      %689 = vmatprep.mubr.bf16.mxu0 0
      %690 = vmatmul.mubr.bf16.gmra.mrb[0].mxu0 %v597
      %v691 = vpop.f32.mrb[0].mxu0
      %v692 = vadd.f32 0.0, %v691
      %v693 = vpop.f32.mrb[0].mxu0
      %v694 = vpop.f32.mrb[0].mxu0
      %v695 = vadd.f32 0.0, %v694
      %v696 = vpop.f32.mrb[0].mxu0
      %697 = vmatprep.mubr.bf16.mxu0 0
      %698 = vmatmul.mubr.bf16.gmra.mrb[0].mxu0 %v600
      %v699 = vpop.f32.mrb[0].mxu0
      %v700 = vadd.f32 0.0, %v699
      %v701 = vpop.f32.mrb[0].mxu0
      %v702 = vpop.f32.mrb[0].mxu0
      %v703 = vadd.f32 0.0, %v702
      %v704 = vpop.f32.mrb[0].mxu0
      %705 = vmatprep.mubr.bf16.mxu0 0
      %706 = vmatmul.mubr.bf16.gmra.mrb[0].mxu0 %v603
      %v707 = vpop.f32.mrb[0].mxu0
      %v708 = vadd.f32 0.0, %v707
      %v709 = vpop.f32.mrb[0].mxu0
      %v710 = vpop.f32.mrb[0].mxu0
      %v711 = vadd.f32 0.0, %v710
      %v712 = vpop.f32.mrb[0].mxu0
      %713 = vdwg.mxu0
      %v714 = vadd.f32 %v574, %v644
      %v715 = vadd.f32 %v574, %v647
      %v716 = vadd.f32 %v574, %v652
      %v717 = vadd.f32 %v574, %v655
      %v718 = vadd.f32 %v574, %v660
      %v719 = vadd.f32 %v574, %v663
      %v720 = vadd.f32 %v574, %v668
      %v721 = vadd.f32 %v574, %v671
      %v722 = vadd.f32 %v574, %v676
      %v723 = vadd.f32 %v574, %v679
      %v724 = vadd.f32 %v574, %v684
      %v725 = vadd.f32 %v574, %v687
      %v726 = vadd.f32 %v574, %v692
      %v727 = vadd.f32 %v574, %v695
      %v728 = vadd.f32 %v574, %v700
      %v729 = vadd.f32 %v574, %v703
      %v730 = vadd.f32 %v574, %v708
      %v731 = vadd.f32 %v574, %v711
      %s732 = scalar_lea.vmem %s4, 2
      %v733 = vld [vmem:[%s732] sm:$0x3]
      %vm734 = vsmask.f32 7424
      %v735 = vshrl.u32 %v557, 16
      %v737 = vshll.u32 %v557, 16
      %v739 = vrot.slane %v737, 1
      %v740 = vor.u32 %v735, %v739
      %v741 = vshll.u32 %v558, 16
      %v743 = vrot.slane %v741, 1
      %v744 = vsel %vm734, %v740, %v743
      %v745 = vshrl.u32 %v558, 16
      %v747 = vor.u32 %v745, %v743
      %v748 = vshll.u32 %v559, 16
      %v750 = vrot.slane %v748, 1
      %v751 = vsel %vm734, %v747, %v750
      %v752 = vshrl.u32 %v559, 16
      %v754 = vor.u32 %v752, %v750
      %v755 = vshll.u32 %v560, 16
      %v757 = vrot.slane %v755, 1
      %v758 = vsel %vm734, %v754, %v757
      %v759 = vshrl.u32 %v560, 16
      %v761 = vor.u32 %v759, %v757
      %v762 = vshll.u32 %v561, 16
      %v764 = vrot.slane %v762, 1
      %v765 = vsel %vm734, %v761, %v764
      %v766 = vshrl.u32 %v561, 16
      %v768 = vor.u32 %v766, %v764
      %v769 = vshll.u32 %v562, 16
      %v771 = vrot.slane %v769, 1
      %v772 = vsel %vm734, %v768, %v771
      %v773 = vshrl.u32 %v562, 16
      %v775 = vor.u32 %v773, %v771
      %v776 = vshll.u32 %v563, 16
      %v778 = vrot.slane %v776, 1
      %v779 = vsel %vm734, %v775, %v778
      %v780 = vshrl.u32 %v563, 16
      %v782 = vor.u32 %v780, %v778
      %v783 = vshll.u32 %v564, 16
      %v785 = vrot.slane %v783, 1
      %v786 = vsel %vm734, %v782, %v785
      %v787 = vshrl.u32 %v564, 16
      %v789 = vor.u32 %v787, %v785
      %v790 = vshll.u32 %v565, 16
      %v792 = vrot.slane %v790, 1
      %v793 = vsel %vm734, %v789, %v792
      %v794 = vshrl.u32 %v565, 16
      %v796 = vor.u32 %v794, %v792
      %v798 = vshll.u32 %v566, 16
      %v800 = vrot.slane %v798, 1
      %v801 = vsel %vm734, %v796, %v800
      %v803 = vsel %vm577, %v744, 0
      %v806 = vsel %vm577, %v751, 0
      %v809 = vsel %vm577, %v758, 0
      %v812 = vsel %vm577, %v765, 0
      %v815 = vsel %vm577, %v772, 0
      %v818 = vsel %vm577, %v779, 0
      %v821 = vsel %vm577, %v786, 0
      %v824 = vsel %vm577, %v793, 0
      %v827 = vsel %vm577, %v801, 0
      %v830 = vsel %vm605, %v733, 0
      %832 = vmatprep.subr.bf16.mxu0 0
      %833 = vmatpush1.bf16.msra.mxu0 %v830
      %834 = vmatprep.subr.bf16.mxu0 0
      %835 = vmatpush1.bf16.msra.mxu0 0
      %836 = vmatprep.subr.bf16.mxu0 0
      %837 = vmatpush1.bf16.msra.mxu0 0
      %838 = vmatprep.subr.bf16.mxu0 0
      %839 = vmatpush1.bf16.msra.mxu0 0
      %840 = vmatprep.subr.bf16.mxu0 0
      %841 = vmatpush1.bf16.msra.mxu0 0
      %842 = vmatprep.subr.bf16.mxu0 0
      %843 = vmatpush1.bf16.msra.mxu0 0
      %844 = vmatprep.subr.bf16.mxu0 0
      %845 = vmatpush1.bf16.msra.mxu0 0
      %846 = vmatprep.subr.bf16.mxu0 0
      %847 = vmatpush1.bf16.msra.mxu0 0
      %848 = vmatprep.subr.bf16.mxu0 0
      %849 = vmatpush1.bf16.msra.mxu0 0
      %850 = vmatprep.subr.bf16.mxu0 0
      %851 = vmatpush1.bf16.msra.mxu0 0
      %852 = vmatprep.subr.bf16.mxu0 0
      %853 = vmatpush1.bf16.msra.mxu0 0
      %854 = vmatprep.subr.bf16.mxu0 0
      %855 = vmatpush1.bf16.msra.mxu0 0
      %856 = vmatprep.subr.bf16.mxu0 0
      %857 = vmatpush1.bf16.msra.mxu0 0
      %858 = vmatprep.subr.bf16.mxu0 0
      %859 = vmatpush1.bf16.msra.mxu0 0
      %860 = vmatprep.subr.bf16.mxu0 0
      %861 = vmatpush1.bf16.msra.mxu0 0
      %862 = vmatprep.subr.bf16.mxu0 0
      %863 = vmatpush1.bf16.msra.mxu0 0
      %864 = vmatprep.mubr.bf16.mxu0 0
      %865 = vmatmul.mubr.bf16.gmra.mrb[0].mxu0 %v803
      %v866 = vpop.f32.mrb[0].mxu0
      %v867 = vadd.f32 0.0, %v866
      %v868 = vpop.f32.mrb[0].mxu0
      %v869 = vpop.f32.mrb[0].mxu0
      %v870 = vadd.f32 0.0, %v869
      %v871 = vpop.f32.mrb[0].mxu0
      %872 = vmatprep.mubr.bf16.mxu0 0
      %873 = vmatmul.mubr.bf16.gmra.mrb[0].mxu0 %v806
      %v874 = vpop.f32.mrb[0].mxu0
      %v875 = vadd.f32 0.0, %v874
      %v876 = vpop.f32.mrb[0].mxu0
      %v877 = vpop.f32.mrb[0].mxu0
      %v878 = vadd.f32 0.0, %v877
      %v879 = vpop.f32.mrb[0].mxu0
      %880 = vmatprep.mubr.bf16.mxu0 0
      %881 = vmatmul.mubr.bf16.gmra.mrb[0].mxu0 %v809
      %v882 = vpop.f32.mrb[0].mxu0
      %v883 = vadd.f32 0.0, %v882
      %v884 = vpop.f32.mrb[0].mxu0
      %v885 = vpop.f32.mrb[0].mxu0
      %v886 = vadd.f32 0.0, %v885
      %v887 = vpop.f32.mrb[0].mxu0
      %888 = vmatprep.mubr.bf16.mxu0 0
      %889 = vmatmul.mubr.bf16.gmra.mrb[0].mxu0 %v812
      %v890 = vpop.f32.mrb[0].mxu0
      %v891 = vadd.f32 0.0, %v890
      %v892 = vpop.f32.mrb[0].mxu0
      %v893 = vpop.f32.mrb[0].mxu0
      %v894 = vadd.f32 0.0, %v893
      %v895 = vpop.f32.mrb[0].mxu0
      %896 = vmatprep.mubr.bf16.mxu0 0
      %897 = vmatmul.mubr.bf16.gmra.mrb[0].mxu0 %v815
      %v898 = vpop.f32.mrb[0].mxu0
      %v899 = vadd.f32 0.0, %v898
      %v900 = vpop.f32.mrb[0].mxu0
      %v901 = vpop.f32.mrb[0].mxu0
      %v902 = vadd.f32 0.0, %v901
      %v903 = vpop.f32.mrb[0].mxu0
      %904 = vmatprep.mubr.bf16.mxu0 0
      %905 = vmatmul.mubr.bf16.gmra.mrb[0].mxu0 %v818
      %v906 = vpop.f32.mrb[0].mxu0
      %v907 = vadd.f32 0.0, %v906
      %v908 = vpop.f32.mrb[0].mxu0
      %v909 = vpop.f32.mrb[0].mxu0
      %v910 = vadd.f32 0.0, %v909
      %v911 = vpop.f32.mrb[0].mxu0
      %912 = vmatprep.mubr.bf16.mxu0 0
      %913 = vmatmul.mubr.bf16.gmra.mrb[0].mxu0 %v821
      %v914 = vpop.f32.mrb[0].mxu0
      %v915 = vadd.f32 0.0, %v914
      %v916 = vpop.f32.mrb[0].mxu0
      %v917 = vpop.f32.mrb[0].mxu0
      %v918 = vadd.f32 0.0, %v917
      %v919 = vpop.f32.mrb[0].mxu0
      %920 = vmatprep.mubr.bf16.mxu0 0
      %921 = vmatmul.mubr.bf16.gmra.mrb[0].mxu0 %v824
      %v922 = vpop.f32.mrb[0].mxu0
      %v923 = vadd.f32 0.0, %v922
      %v924 = vpop.f32.mrb[0].mxu0
      %v925 = vpop.f32.mrb[0].mxu0
      %v926 = vadd.f32 0.0, %v925
      %v927 = vpop.f32.mrb[0].mxu0
      %928 = vmatprep.mubr.bf16.mxu0 0
      %929 = vmatmul.mubr.bf16.gmra.mrb[0].mxu0 %v827
      %v930 = vpop.f32.mrb[0].mxu0
      %v931 = vadd.f32 0.0, %v930
      %v932 = vpop.f32.mrb[0].mxu0
      %v933 = vpop.f32.mrb[0].mxu0
      %v934 = vadd.f32 0.0, %v933
      %v935 = vpop.f32.mrb[0].mxu0
      %936 = vdwg.mxu0
      %v937 = vadd.f32 %v714, %v867
      %v938 = vadd.f32 %v715, %v870
      %v939 = vadd.f32 %v716, %v875
      %v940 = vadd.f32 %v717, %v878
      %v941 = vadd.f32 %v718, %v883
      %v942 = vadd.f32 %v719, %v886
      %v943 = vadd.f32 %v720, %v891
      %v944 = vadd.f32 %v721, %v894
      %v945 = vadd.f32 %v722, %v899
      %v946 = vadd.f32 %v723, %v902
      %v947 = vadd.f32 %v724, %v907
      %v948 = vadd.f32 %v725, %v910
      %v949 = vadd.f32 %v726, %v915
      %v950 = vadd.f32 %v727, %v918
      %v951 = vadd.f32 %v728, %v923
      %v952 = vadd.f32 %v729, %v926
      %v953 = vadd.f32 %v730, %v931
      %v954 = vadd.f32 %v731, %v934
      %s955 = scalar_lea.vmem %s4, 4
      %v956 = vld [vmem:[%s955] sm:$0x3]
      %vm967 = vcmask 1046528
      %v968 = vrot.slane %v557, 1
      %v969 = vrot.slane %v558, 1
      %v970 = vsel %vm967, %v968, %v969
      %v971 = vrot.slane %v559, 1
      %v972 = vsel %vm967, %v969, %v971
      %v973 = vrot.slane %v560, 1
      %v974 = vsel %vm967, %v971, %v973
      %v975 = vrot.slane %v561, 1
      %v976 = vsel %vm967, %v973, %v975
      %v977 = vrot.slane %v562, 1
      %v978 = vsel %vm967, %v975, %v977
      %v979 = vrot.slane %v563, 1
      %v980 = vsel %vm967, %v977, %v979
      %v981 = vrot.slane %v564, 1
      %v982 = vsel %vm967, %v979, %v981
      %v983 = vrot.slane %v565, 1
      %v984 = vsel %vm967, %v981, %v983
      %v985 = vrot.slane %v566, 1
      %v986 = vsel %vm967, %v983, %v985
      %v988 = vsel %vm577, %v970, 0
      %v991 = vsel %vm577, %v972, 0
      %v994 = vsel %vm577, %v974, 0
      %v997 = vsel %vm577, %v976, 0
      %v1000 = vsel %vm577, %v978, 0
      %v1003 = vsel %vm577, %v980, 0
      %v1006 = vsel %vm577, %v982, 0
      %v1009 = vsel %vm577, %v984, 0
      %v1012 = vsel %vm577, %v986, 0
      %v1015 = vsel %vm605, %v956, 0
      %1017 = vmatprep.subr.bf16.mxu0 0
      %1018 = vmatpush1.bf16.msra.mxu0 %v1015
      %1019 = vmatprep.subr.bf16.mxu0 0
      %1020 = vmatpush1.bf16.msra.mxu0 0
      %1021 = vmatprep.subr.bf16.mxu0 0
      %1022 = vmatpush1.bf16.msra.mxu0 0
      %1023 = vmatprep.subr.bf16.mxu0 0
      %1024 = vmatpush1.bf16.msra.mxu0 0
      %1025 = vmatprep.subr.bf16.mxu0 0
      %1026 = vmatpush1.bf16.msra.mxu0 0
      %1027 = vmatprep.subr.bf16.mxu0 0
      %1028 = vmatpush1.bf16.msra.mxu0 0
      %1029 = vmatprep.subr.bf16.mxu0 0
      %1030 = vmatpush1.bf16.msra.mxu0 0
      %1031 = vmatprep.subr.bf16.mxu0 0
      %1032 = vmatpush1.bf16.msra.mxu0 0
      %1033 = vmatprep.subr.bf16.mxu0 0
      %1034 = vmatpush1.bf16.msra.mxu0 0
      %1035 = vmatprep.subr.bf16.mxu0 0
      %1036 = vmatpush1.bf16.msra.mxu0 0
      %1037 = vmatprep.subr.bf16.mxu0 0
      %1038 = vmatpush1.bf16.msra.mxu0 0
      %1039 = vmatprep.subr.bf16.mxu0 0
      %1040 = vmatpush1.bf16.msra.mxu0 0
      %1041 = vmatprep.subr.bf16.mxu0 0
      %1042 = vmatpush1.bf16.msra.mxu0 0
      %1043 = vmatprep.subr.bf16.mxu0 0
      %1044 = vmatpush1.bf16.msra.mxu0 0
      %1045 = vmatprep.subr.bf16.mxu0 0
      %1046 = vmatpush1.bf16.msra.mxu0 0
      %1047 = vmatprep.subr.bf16.mxu0 0
      %1048 = vmatpush1.bf16.msra.mxu0 0
      %1049 = vmatprep.mubr.bf16.mxu0 0
      %1050 = vmatmul.mubr.bf16.gmra.mrb[0].mxu0 %v988
      %v1051 = vpop.f32.mrb[0].mxu0
      %v1052 = vadd.f32 0.0, %v1051
      %v1053 = vpop.f32.mrb[0].mxu0
      %v1054 = vpop.f32.mrb[0].mxu0
      %v1055 = vadd.f32 0.0, %v1054
      %v1056 = vpop.f32.mrb[0].mxu0
      %1057 = vmatprep.mubr.bf16.mxu0 0
      %1058 = vmatmul.mubr.bf16.gmra.mrb[0].mxu0 %v991
      %v1059 = vpop.f32.mrb[0].mxu0
      %v1060 = vadd.f32 0.0, %v1059
      %v1061 = vpop.f32.mrb[0].mxu0
      %v1062 = vpop.f32.mrb[0].mxu0
      %v1063 = vadd.f32 0.0, %v1062
      %v1064 = vpop.f32.mrb[0].mxu0
      %1065 = vmatprep.mubr.bf16.mxu0 0
      %1066 = vmatmul.mubr.bf16.gmra.mrb[0].mxu0 %v994
      %v1067 = vpop.f32.mrb[0].mxu0
      %v1068 = vadd.f32 0.0, %v1067
      %v1069 = vpop.f32.mrb[0].mxu0
      %v1070 = vpop.f32.mrb[0].mxu0
      %v1071 = vadd.f32 0.0, %v1070
      %v1072 = vpop.f32.mrb[0].mxu0
      %1073 = vmatprep.mubr.bf16.mxu0 0
      %1074 = vmatmul.mubr.bf16.gmra.mrb[0].mxu0 %v997
      %v1075 = vpop.f32.mrb[0].mxu0
      %v1076 = vadd.f32 0.0, %v1075
      %v1077 = vpop.f32.mrb[0].mxu0
      %v1078 = vpop.f32.mrb[0].mxu0
      %v1079 = vadd.f32 0.0, %v1078
      %v1080 = vpop.f32.mrb[0].mxu0
      %1081 = vmatprep.mubr.bf16.mxu0 0
      %1082 = vmatmul.mubr.bf16.gmra.mrb[0].mxu0 %v1000
      %v1083 = vpop.f32.mrb[0].mxu0
      %v1084 = vadd.f32 0.0, %v1083
      %v1085 = vpop.f32.mrb[0].mxu0
      %v1086 = vpop.f32.mrb[0].mxu0
      %v1087 = vadd.f32 0.0, %v1086
      %v1088 = vpop.f32.mrb[0].mxu0
      %1089 = vmatprep.mubr.bf16.mxu0 0
      %1090 = vmatmul.mubr.bf16.gmra.mrb[0].mxu0 %v1003
      %v1091 = vpop.f32.mrb[0].mxu0
      %v1092 = vadd.f32 0.0, %v1091
      %v1093 = vpop.f32.mrb[0].mxu0
      %v1094 = vpop.f32.mrb[0].mxu0
      %v1095 = vadd.f32 0.0, %v1094
      %v1096 = vpop.f32.mrb[0].mxu0
      %1097 = vmatprep.mubr.bf16.mxu0 0
      %1098 = vmatmul.mubr.bf16.gmra.mrb[0].mxu0 %v1006
      %v1099 = vpop.f32.mrb[0].mxu0
      %v1100 = vadd.f32 0.0, %v1099
      %v1101 = vpop.f32.mrb[0].mxu0
      %v1102 = vpop.f32.mrb[0].mxu0
      %v1103 = vadd.f32 0.0, %v1102
      %v1104 = vpop.f32.mrb[0].mxu0
      %1105 = vmatprep.mubr.bf16.mxu0 0
      %1106 = vmatmul.mubr.bf16.gmra.mrb[0].mxu0 %v1009
      %v1107 = vpop.f32.mrb[0].mxu0
      %v1108 = vadd.f32 0.0, %v1107
      %v1109 = vpop.f32.mrb[0].mxu0
      %v1110 = vpop.f32.mrb[0].mxu0
      %v1111 = vadd.f32 0.0, %v1110
      %v1112 = vpop.f32.mrb[0].mxu0
      %1113 = vmatprep.mubr.bf16.mxu0 0
      %1114 = vmatmul.mubr.bf16.gmra.mrb[0].mxu0 %v1012
      %v1115 = vpop.f32.mrb[0].mxu0
      %v1116 = vadd.f32 0.0, %v1115
      %v1117 = vpop.f32.mrb[0].mxu0
      %v1118 = vpop.f32.mrb[0].mxu0
      %v1119 = vadd.f32 0.0, %v1118
      %v1120 = vpop.f32.mrb[0].mxu0
      %1121 = vdwg.mxu0
      %v1122 = vadd.f32 %v937, %v1052
      %v1123 = vadd.f32 %v938, %v1055
      %v1124 = vadd.f32 %v939, %v1060
      %v1125 = vadd.f32 %v940, %v1063
      %v1126 = vadd.f32 %v941, %v1068
      %v1127 = vadd.f32 %v942, %v1071
      %v1128 = vadd.f32 %v943, %v1076
      %v1129 = vadd.f32 %v944, %v1079
      %v1130 = vadd.f32 %v945, %v1084
      %v1131 = vadd.f32 %v946, %v1087
      %v1132 = vadd.f32 %v947, %v1092
      %v1133 = vadd.f32 %v948, %v1095
      %v1134 = vadd.f32 %v949, %v1100
      %v1135 = vadd.f32 %v950, %v1103
      %v1136 = vadd.f32 %v951, %v1108
      %v1137 = vadd.f32 %v952, %v1111
      %v1138 = vadd.f32 %v953, %v1116
      %v1139 = vadd.f32 %v954, %v1119
      %s1140 = scalar_lea.vmem %s4, 6
      %v1141 = vld [vmem:[%s1140] sm:$0x3]
      %v1143 = vrot.slane %v567, 1
      %v1144 = vsel %vm967, %v985, %v1143
      %v1146 = vsel %vm577, %v1144, 0
      %v1149 = vsel %vm605, %v1141, 0
      %1151 = vmatprep.subr.bf16.mxu0 0
      %1152 = vmatpush1.bf16.msra.mxu0 %v1149
      %1153 = vmatprep.subr.bf16.mxu0 0
      %1154 = vmatpush1.bf16.msra.mxu0 0
      %1155 = vmatprep.subr.bf16.mxu0 0
      %1156 = vmatpush1.bf16.msra.mxu0 0
      %1157 = vmatprep.subr.bf16.mxu0 0
      %1158 = vmatpush1.bf16.msra.mxu0 0
      %1159 = vmatprep.subr.bf16.mxu0 0
      %1160 = vmatpush1.bf16.msra.mxu0 0
      %1161 = vmatprep.subr.bf16.mxu0 0
      %1162 = vmatpush1.bf16.msra.mxu0 0
      %1163 = vmatprep.subr.bf16.mxu0 0
      %1164 = vmatpush1.bf16.msra.mxu0 0
      %1165 = vmatprep.subr.bf16.mxu0 0
      %1166 = vmatpush1.bf16.msra.mxu0 0
      %1167 = vmatprep.subr.bf16.mxu0 0
      %1168 = vmatpush1.bf16.msra.mxu0 0
      %1169 = vmatprep.subr.bf16.mxu0 0
      %1170 = vmatpush1.bf16.msra.mxu0 0
      %1171 = vmatprep.subr.bf16.mxu0 0
      %1172 = vmatpush1.bf16.msra.mxu0 0
      %1173 = vmatprep.subr.bf16.mxu0 0
      %1174 = vmatpush1.bf16.msra.mxu0 0
      %1175 = vmatprep.subr.bf16.mxu0 0
      %1176 = vmatpush1.bf16.msra.mxu0 0
      %1177 = vmatprep.subr.bf16.mxu0 0
      %1178 = vmatpush1.bf16.msra.mxu0 0
      %1179 = vmatprep.subr.bf16.mxu0 0
      %1180 = vmatpush1.bf16.msra.mxu0 0
      %1181 = vmatprep.subr.bf16.mxu0 0
      %1182 = vmatpush1.bf16.msra.mxu0 0
      %1183 = vmatprep.mubr.bf16.mxu0 0
      %1184 = vmatmul.mubr.bf16.gmra.mrb[0].mxu0 %v991
      %v1185 = vpop.f32.mrb[0].mxu0
      %v1186 = vadd.f32 0.0, %v1185
      %v1187 = vpop.f32.mrb[0].mxu0
      %v1188 = vpop.f32.mrb[0].mxu0
      %v1189 = vadd.f32 0.0, %v1188
      %v1190 = vpop.f32.mrb[0].mxu0
      %1191 = vmatprep.mubr.bf16.mxu0 0
      %1192 = vmatmul.mubr.bf16.gmra.mrb[0].mxu0 %v994
      %v1193 = vpop.f32.mrb[0].mxu0
      %v1194 = vadd.f32 0.0, %v1193
      %v1195 = vpop.f32.mrb[0].mxu0
      %v1196 = vpop.f32.mrb[0].mxu0
      %v1197 = vadd.f32 0.0, %v1196
      %v1198 = vpop.f32.mrb[0].mxu0
      %1199 = vmatprep.mubr.bf16.mxu0 0
      %1200 = vmatmul.mubr.bf16.gmra.mrb[0].mxu0 %v997
      %v1201 = vpop.f32.mrb[0].mxu0
      %v1202 = vadd.f32 0.0, %v1201
      %v1203 = vpop.f32.mrb[0].mxu0
      %v1204 = vpop.f32.mrb[0].mxu0
      %v1205 = vadd.f32 0.0, %v1204
      %v1206 = vpop.f32.mrb[0].mxu0
      %1207 = vmatprep.mubr.bf16.mxu0 0
      %1208 = vmatmul.mubr.bf16.gmra.mrb[0].mxu0 %v1000
      %v1209 = vpop.f32.mrb[0].mxu0
      %v1210 = vadd.f32 0.0, %v1209
      %v1211 = vpop.f32.mrb[0].mxu0
      %v1212 = vpop.f32.mrb[0].mxu0
      %v1213 = vadd.f32 0.0, %v1212
      %v1214 = vpop.f32.mrb[0].mxu0
      %1215 = vmatprep.mubr.bf16.mxu0 0
      %1216 = vmatmul.mubr.bf16.gmra.mrb[0].mxu0 %v1003
      %v1217 = vpop.f32.mrb[0].mxu0
      %v1218 = vadd.f32 0.0, %v1217
      %v1219 = vpop.f32.mrb[0].mxu0
      %v1220 = vpop.f32.mrb[0].mxu0
      %v1221 = vadd.f32 0.0, %v1220
      %v1222 = vpop.f32.mrb[0].mxu0
      %1223 = vmatprep.mubr.bf16.mxu0 0
      %1224 = vmatmul.mubr.bf16.gmra.mrb[0].mxu0 %v1006
      %v1225 = vpop.f32.mrb[0].mxu0
      %v1226 = vadd.f32 0.0, %v1225
      %v1227 = vpop.f32.mrb[0].mxu0
      %v1228 = vpop.f32.mrb[0].mxu0
      %v1229 = vadd.f32 0.0, %v1228
      %v1230 = vpop.f32.mrb[0].mxu0
      %1231 = vmatprep.mubr.bf16.mxu0 0
      %1232 = vmatmul.mubr.bf16.gmra.mrb[0].mxu0 %v1009
      %v1233 = vpop.f32.mrb[0].mxu0
      %v1234 = vadd.f32 0.0, %v1233
      %v1235 = vpop.f32.mrb[0].mxu0
      %v1236 = vpop.f32.mrb[0].mxu0
      %v1237 = vadd.f32 0.0, %v1236
      %v1238 = vpop.f32.mrb[0].mxu0
      %1239 = vmatprep.mubr.bf16.mxu0 0
      %1240 = vmatmul.mubr.bf16.gmra.mrb[0].mxu0 %v1012
      %v1241 = vpop.f32.mrb[0].mxu0
      %v1242 = vadd.f32 0.0, %v1241
      %v1243 = vpop.f32.mrb[0].mxu0
      %v1244 = vpop.f32.mrb[0].mxu0
      %v1245 = vadd.f32 0.0, %v1244
      %v1246 = vpop.f32.mrb[0].mxu0
      %1247 = vmatprep.mubr.bf16.mxu0 0
      %1248 = vmatmul.mubr.bf16.gmra.mrb[0].mxu0 %v1146
      %v1249 = vpop.f32.mrb[0].mxu0
      %v1250 = vadd.f32 0.0, %v1249
      %v1251 = vpop.f32.mrb[0].mxu0
      %v1252 = vpop.f32.mrb[0].mxu0
      %v1253 = vadd.f32 0.0, %v1252
      %v1254 = vpop.f32.mrb[0].mxu0
      %1255 = vdwg.mxu0
      %v1256 = vadd.f32 %v1122, %v1186
      %v1257 = vadd.f32 %v1123, %v1189
      %v1258 = vadd.f32 %v1124, %v1194
      %v1259 = vadd.f32 %v1125, %v1197
      %v1260 = vadd.f32 %v1126, %v1202
      %v1261 = vadd.f32 %v1127, %v1205
      %v1262 = vadd.f32 %v1128, %v1210
      %v1263 = vadd.f32 %v1129, %v1213
      %v1264 = vadd.f32 %v1130, %v1218
      %v1265 = vadd.f32 %v1131, %v1221
      %v1266 = vadd.f32 %v1132, %v1226
      %v1267 = vadd.f32 %v1133, %v1229
      %v1268 = vadd.f32 %v1134, %v1234
      %v1269 = vadd.f32 %v1135, %v1237
      %v1270 = vadd.f32 %v1136, %v1242
      %v1271 = vadd.f32 %v1137, %v1245
      %v1272 = vadd.f32 %v1138, %v1250
      %v1273 = vadd.f32 %v1139, %v1253
      %s1274 = scalar_lea.vmem %s4, 8
      %v1275 = vld [vmem:[%s1274] sm:$0x3]
      %vm1276 = vsmask.f32 6400
      %v1277 = vrot.slane %v745, 1
      %v1278 = vrot.slane %v741, 2
      %v1279 = vor.u32 %v1277, %v1278
      %v1280 = vrot.slane %v752, 1
      %v1281 = vrot.slane %v748, 2
      %v1282 = vor.u32 %v1280, %v1281
      %v1283 = vsel %vm1276, %v1279, %v1282
      %v1284 = vrot.slane %v759, 1
      %v1285 = vrot.slane %v755, 2
      %v1286 = vor.u32 %v1284, %v1285
      %v1287 = vsel %vm1276, %v1282, %v1286
      %v1288 = vrot.slane %v766, 1
      %v1289 = vrot.slane %v762, 2
      %v1290 = vor.u32 %v1288, %v1289
      %v1291 = vsel %vm1276, %v1286, %v1290
      %v1292 = vrot.slane %v773, 1
      %v1293 = vrot.slane %v769, 2
      %v1294 = vor.u32 %v1292, %v1293
      %v1295 = vsel %vm1276, %v1290, %v1294
      %v1296 = vrot.slane %v780, 1
      %v1297 = vrot.slane %v776, 2
      %v1298 = vor.u32 %v1296, %v1297
      %v1299 = vsel %vm1276, %v1294, %v1298
      %v1300 = vrot.slane %v787, 1
      %v1301 = vrot.slane %v783, 2
      %v1302 = vor.u32 %v1300, %v1301
      %v1303 = vsel %vm1276, %v1298, %v1302
      %v1304 = vrot.slane %v794, 1
      %v1305 = vrot.slane %v790, 2
      %v1306 = vor.u32 %v1304, %v1305
      %v1307 = vsel %vm1276, %v1302, %v1306
      %v1308 = vshrl.u32 %v566, 16
      %v1310 = vrot.slane %v1308, 1
      %v1311 = vrot.slane %v798, 2
      %v1312 = vor.u32 %v1310, %v1311
      %v1313 = vsel %vm1276, %v1306, %v1312
      %v1315 = vshrl.u32 %v567, 16
      %v1317 = vrot.slane %v1315, 1
      %v1318 = vshll.u32 %v567, 16
      %v1320 = vrot.slane %v1318, 2
      %v1321 = vor.u32 %v1317, %v1320
      %v1322 = vsel %vm1276, %v1312, %v1321
      %v1324 = vsel %vm577, %v1283, 0
      %v1327 = vsel %vm577, %v1287, 0
      %v1330 = vsel %vm577, %v1291, 0
      %v1333 = vsel %vm577, %v1295, 0
      %v1336 = vsel %vm577, %v1299, 0
      %v1339 = vsel %vm577, %v1303, 0
      %v1342 = vsel %vm577, %v1307, 0
      %v1345 = vsel %vm577, %v1313, 0
      %v1348 = vsel %vm577, %v1322, 0
      %v1351 = vsel %vm605, %v1275, 0
      %1353 = vmatprep.subr.bf16.mxu0 0
      %1354 = vmatpush1.bf16.msra.mxu0 %v1351
      %1355 = vmatprep.subr.bf16.mxu0 0
      %1356 = vmatpush1.bf16.msra.mxu0 0
      %1357 = vmatprep.subr.bf16.mxu0 0
      %1358 = vmatpush1.bf16.msra.mxu0 0
      %1359 = vmatprep.subr.bf16.mxu0 0
      %1360 = vmatpush1.bf16.msra.mxu0 0
      %1361 = vmatprep.subr.bf16.mxu0 0
      %1362 = vmatpush1.bf16.msra.mxu0 0
      %1363 = vmatprep.subr.bf16.mxu0 0
      %1364 = vmatpush1.bf16.msra.mxu0 0
      %1365 = vmatprep.subr.bf16.mxu0 0
      %1366 = vmatpush1.bf16.msra.mxu0 0
      %1367 = vmatprep.subr.bf16.mxu0 0
      %1368 = vmatpush1.bf16.msra.mxu0 0
      %1369 = vmatprep.subr.bf16.mxu0 0
      %1370 = vmatpush1.bf16.msra.mxu0 0
      %1371 = vmatprep.subr.bf16.mxu0 0
      %1372 = vmatpush1.bf16.msra.mxu0 0
      %1373 = vmatprep.subr.bf16.mxu0 0
      %1374 = vmatpush1.bf16.msra.mxu0 0
      %1375 = vmatprep.subr.bf16.mxu0 0
      %1376 = vmatpush1.bf16.msra.mxu0 0
      %1377 = vmatprep.subr.bf16.mxu0 0
      %1378 = vmatpush1.bf16.msra.mxu0 0
      %1379 = vmatprep.subr.bf16.mxu0 0
      %1380 = vmatpush1.bf16.msra.mxu0 0
      %1381 = vmatprep.subr.bf16.mxu0 0
      %1382 = vmatpush1.bf16.msra.mxu0 0
      %1383 = vmatprep.subr.bf16.mxu0 0
      %1384 = vmatpush1.bf16.msra.mxu0 0
      %1385 = vmatprep.mubr.bf16.mxu0 0
      %1386 = vmatmul.mubr.bf16.gmra.mrb[0].mxu0 %v1324
      %v1387 = vpop.f32.mrb[0].mxu0
      %v1388 = vadd.f32 0.0, %v1387
      %v1389 = vpop.f32.mrb[0].mxu0
      %v1390 = vpop.f32.mrb[0].mxu0
      %v1391 = vadd.f32 0.0, %v1390
      %v1392 = vpop.f32.mrb[0].mxu0
      %1393 = vmatprep.mubr.bf16.mxu0 0
      %1394 = vmatmul.mubr.bf16.gmra.mrb[0].mxu0 %v1327
      %v1395 = vpop.f32.mrb[0].mxu0
      %v1396 = vadd.f32 0.0, %v1395
      %v1397 = vpop.f32.mrb[0].mxu0
      %v1398 = vpop.f32.mrb[0].mxu0
      %v1399 = vadd.f32 0.0, %v1398
      %v1400 = vpop.f32.mrb[0].mxu0
      %1401 = vmatprep.mubr.bf16.mxu0 0
      %1402 = vmatmul.mubr.bf16.gmra.mrb[0].mxu0 %v1330
      %v1403 = vpop.f32.mrb[0].mxu0
      %v1404 = vadd.f32 0.0, %v1403
      %v1405 = vpop.f32.mrb[0].mxu0
      %v1406 = vpop.f32.mrb[0].mxu0
      %v1407 = vadd.f32 0.0, %v1406
      %v1408 = vpop.f32.mrb[0].mxu0
      %1409 = vmatprep.mubr.bf16.mxu0 0
      %1410 = vmatmul.mubr.bf16.gmra.mrb[0].mxu0 %v1333
      %v1411 = vpop.f32.mrb[0].mxu0
      %v1412 = vadd.f32 0.0, %v1411
      %v1413 = vpop.f32.mrb[0].mxu0
      %v1414 = vpop.f32.mrb[0].mxu0
      %v1415 = vadd.f32 0.0, %v1414
      %v1416 = vpop.f32.mrb[0].mxu0
      %1417 = vmatprep.mubr.bf16.mxu0 0
      %1418 = vmatmul.mubr.bf16.gmra.mrb[0].mxu0 %v1336
      %v1419 = vpop.f32.mrb[0].mxu0
      %v1420 = vadd.f32 0.0, %v1419
      %v1421 = vpop.f32.mrb[0].mxu0
      %v1422 = vpop.f32.mrb[0].mxu0
      %v1423 = vadd.f32 0.0, %v1422
      %v1424 = vpop.f32.mrb[0].mxu0
      %1425 = vmatprep.mubr.bf16.mxu0 0
      %1426 = vmatmul.mubr.bf16.gmra.mrb[0].mxu0 %v1339
      %v1427 = vpop.f32.mrb[0].mxu0
      %v1428 = vadd.f32 0.0, %v1427
      %v1429 = vpop.f32.mrb[0].mxu0
      %v1430 = vpop.f32.mrb[0].mxu0
      %v1431 = vadd.f32 0.0, %v1430
      %v1432 = vpop.f32.mrb[0].mxu0
      %1433 = vmatprep.mubr.bf16.mxu0 0
      %1434 = vmatmul.mubr.bf16.gmra.mrb[0].mxu0 %v1342
      %v1435 = vpop.f32.mrb[0].mxu0
      %v1436 = vadd.f32 0.0, %v1435
      %v1437 = vpop.f32.mrb[0].mxu0
      %v1438 = vpop.f32.mrb[0].mxu0
      %v1439 = vadd.f32 0.0, %v1438
      %v1440 = vpop.f32.mrb[0].mxu0
      %1441 = vmatprep.mubr.bf16.mxu0 0
      %1442 = vmatmul.mubr.bf16.gmra.mrb[0].mxu0 %v1345
      %v1443 = vpop.f32.mrb[0].mxu0
      %v1444 = vadd.f32 0.0, %v1443
      %v1445 = vpop.f32.mrb[0].mxu0
      %v1446 = vpop.f32.mrb[0].mxu0
      %v1447 = vadd.f32 0.0, %v1446
      %v1448 = vpop.f32.mrb[0].mxu0
      %1449 = vmatprep.mubr.bf16.mxu0 0
      %1450 = vmatmul.mubr.bf16.gmra.mrb[0].mxu0 %v1348
      %v1451 = vpop.f32.mrb[0].mxu0
      %v1452 = vadd.f32 0.0, %v1451
      %v1453 = vpop.f32.mrb[0].mxu0
      %v1454 = vpop.f32.mrb[0].mxu0
      %v1455 = vadd.f32 0.0, %v1454
      %v1456 = vpop.f32.mrb[0].mxu0
      %1457 = vdwg.mxu0
      %v1458 = vadd.f32 %v1256, %v1388
      %v1459 = vadd.f32 %v1257, %v1391
      %v1460 = vadd.f32 %v1258, %v1396
      %v1461 = vadd.f32 %v1259, %v1399
      %v1462 = vadd.f32 %v1260, %v1404
      %v1463 = vadd.f32 %v1261, %v1407
      %v1464 = vadd.f32 %v1262, %v1412
      %v1465 = vadd.f32 %v1263, %v1415
      %v1466 = vadd.f32 %v1264, %v1420
      %v1467 = vadd.f32 %v1265, %v1423
      %v1468 = vadd.f32 %v1266, %v1428
      %v1469 = vadd.f32 %v1267, %v1431
      %v1470 = vadd.f32 %v1268, %v1436
      %v1471 = vadd.f32 %v1269, %v1439
      %v1472 = vadd.f32 %v1270, %v1444
      %v1473 = vadd.f32 %v1271, %v1447
      %v1474 = vadd.f32 %v1272, %v1452
      %v1475 = vadd.f32 %v1273, %v1455
      %s1476 = scalar_lea.vmem %s4, 10
      %v1477 = vld [vmem:[%s1476] sm:$0x3]
      %vm1478 = vcmask 1045504
      %v1479 = vrot.slane %v558, 2
      %v1480 = vrot.slane %v559, 2
      %v1481 = vsel %vm1478, %v1479, %v1480
      %v1482 = vrot.slane %v560, 2
      %v1483 = vsel %vm1478, %v1480, %v1482
      %v1484 = vrot.slane %v561, 2
      %v1485 = vsel %vm1478, %v1482, %v1484
      %v1486 = vrot.slane %v562, 2
      %v1487 = vsel %vm1478, %v1484, %v1486
      %v1488 = vrot.slane %v563, 2
      %v1489 = vsel %vm1478, %v1486, %v1488
      %v1490 = vrot.slane %v564, 2
      %v1491 = vsel %vm1478, %v1488, %v1490
      %v1492 = vrot.slane %v565, 2
      %v1493 = vsel %vm1478, %v1490, %v1492
      %v1494 = vrot.slane %v566, 2
      %v1495 = vsel %vm1478, %v1492, %v1494
      %v1496 = vrot.slane %v567, 2
      %v1497 = vsel %vm1478, %v1494, %v1496
      %v1499 = vsel %vm577, %v1481, 0
      %v1502 = vsel %vm577, %v1483, 0
      %v1505 = vsel %vm577, %v1485, 0
      %v1508 = vsel %vm577, %v1487, 0
      %v1511 = vsel %vm577, %v1489, 0
      %v1514 = vsel %vm577, %v1491, 0
      %v1517 = vsel %vm577, %v1493, 0
      %v1520 = vsel %vm577, %v1495, 0
      %v1523 = vsel %vm577, %v1497, 0
      %v1526 = vsel %vm605, %v1477, 0
      %1528 = vmatprep.subr.bf16.mxu0 0
      %1529 = vmatpush1.bf16.msra.mxu0 %v1526
      %1530 = vmatprep.subr.bf16.mxu0 0
      %1531 = vmatpush1.bf16.msra.mxu0 0
      %1532 = vmatprep.subr.bf16.mxu0 0
      %1533 = vmatpush1.bf16.msra.mxu0 0
      %1534 = vmatprep.subr.bf16.mxu0 0
      %1535 = vmatpush1.bf16.msra.mxu0 0
      %1536 = vmatprep.subr.bf16.mxu0 0
      %1537 = vmatpush1.bf16.msra.mxu0 0
      %1538 = vmatprep.subr.bf16.mxu0 0
      %1539 = vmatpush1.bf16.msra.mxu0 0
      %1540 = vmatprep.subr.bf16.mxu0 0
      %1541 = vmatpush1.bf16.msra.mxu0 0
      %1542 = vmatprep.subr.bf16.mxu0 0
      %1543 = vmatpush1.bf16.msra.mxu0 0
      %1544 = vmatprep.subr.bf16.mxu0 0
      %1545 = vmatpush1.bf16.msra.mxu0 0
      %1546 = vmatprep.subr.bf16.mxu0 0
      %1547 = vmatpush1.bf16.msra.mxu0 0
      %1548 = vmatprep.subr.bf16.mxu0 0
      %1549 = vmatpush1.bf16.msra.mxu0 0
      %1550 = vmatprep.subr.bf16.mxu0 0
      %1551 = vmatpush1.bf16.msra.mxu0 0
      %1552 = vmatprep.subr.bf16.mxu0 0
      %1553 = vmatpush1.bf16.msra.mxu0 0
      %1554 = vmatprep.subr.bf16.mxu0 0
      %1555 = vmatpush1.bf16.msra.mxu0 0
      %1556 = vmatprep.subr.bf16.mxu0 0
      %1557 = vmatpush1.bf16.msra.mxu0 0
      %1558 = vmatprep.subr.bf16.mxu0 0
      %1559 = vmatpush1.bf16.msra.mxu0 0
      %1560 = vmatprep.mubr.bf16.mxu0 0
      %1561 = vmatmul.mubr.bf16.gmra.mrb[0].mxu0 %v1499
      %v1562 = vpop.f32.mrb[0].mxu0
      %v1563 = vadd.f32 0.0, %v1562
      %v1564 = vpop.f32.mrb[0].mxu0
      %v1565 = vpop.f32.mrb[0].mxu0
      %v1566 = vadd.f32 0.0, %v1565
      %v1567 = vpop.f32.mrb[0].mxu0
      %1568 = vmatprep.mubr.bf16.mxu0 0
      %1569 = vmatmul.mubr.bf16.gmra.mrb[0].mxu0 %v1502
      %v1570 = vpop.f32.mrb[0].mxu0
      %v1571 = vadd.f32 0.0, %v1570
      %v1572 = vpop.f32.mrb[0].mxu0
      %v1573 = vpop.f32.mrb[0].mxu0
      %v1574 = vadd.f32 0.0, %v1573
      %v1575 = vpop.f32.mrb[0].mxu0
      %1576 = vmatprep.mubr.bf16.mxu0 0
      %1577 = vmatmul.mubr.bf16.gmra.mrb[0].mxu0 %v1505
      %v1578 = vpop.f32.mrb[0].mxu0
      %v1579 = vadd.f32 0.0, %v1578
      %v1580 = vpop.f32.mrb[0].mxu0
      %v1581 = vpop.f32.mrb[0].mxu0
      %v1582 = vadd.f32 0.0, %v1581
      %v1583 = vpop.f32.mrb[0].mxu0
      %1584 = vmatprep.mubr.bf16.mxu0 0
      %1585 = vmatmul.mubr.bf16.gmra.mrb[0].mxu0 %v1508
      %v1586 = vpop.f32.mrb[0].mxu0
      %v1587 = vadd.f32 0.0, %v1586
      %v1588 = vpop.f32.mrb[0].mxu0
      %v1589 = vpop.f32.mrb[0].mxu0
      %v1590 = vadd.f32 0.0, %v1589
      %v1591 = vpop.f32.mrb[0].mxu0
      %1592 = vmatprep.mubr.bf16.mxu0 0
      %1593 = vmatmul.mubr.bf16.gmra.mrb[0].mxu0 %v1511
      %v1594 = vpop.f32.mrb[0].mxu0
      %v1595 = vadd.f32 0.0, %v1594
      %v1596 = vpop.f32.mrb[0].mxu0
      %v1597 = vpop.f32.mrb[0].mxu0
      %v1598 = vadd.f32 0.0, %v1597
      %v1599 = vpop.f32.mrb[0].mxu0
      %1600 = vmatprep.mubr.bf16.mxu0 0
      %1601 = vmatmul.mubr.bf16.gmra.mrb[0].mxu0 %v1514
      %v1602 = vpop.f32.mrb[0].mxu0
      %v1603 = vadd.f32 0.0, %v1602
      %v1604 = vpop.f32.mrb[0].mxu0
      %v1605 = vpop.f32.mrb[0].mxu0
      %v1606 = vadd.f32 0.0, %v1605
      %v1607 = vpop.f32.mrb[0].mxu0
      %1608 = vmatprep.mubr.bf16.mxu0 0
      %1609 = vmatmul.mubr.bf16.gmra.mrb[0].mxu0 %v1517
      %v1610 = vpop.f32.mrb[0].mxu0
      %v1611 = vadd.f32 0.0, %v1610
      %v1612 = vpop.f32.mrb[0].mxu0
      %v1613 = vpop.f32.mrb[0].mxu0
      %v1614 = vadd.f32 0.0, %v1613
      %v1615 = vpop.f32.mrb[0].mxu0
      %1616 = vmatprep.mubr.bf16.mxu0 0
      %1617 = vmatmul.mubr.bf16.gmra.mrb[0].mxu0 %v1520
      %v1618 = vpop.f32.mrb[0].mxu0
      %v1619 = vadd.f32 0.0, %v1618
      %v1620 = vpop.f32.mrb[0].mxu0
      %v1621 = vpop.f32.mrb[0].mxu0
      %v1622 = vadd.f32 0.0, %v1621
      %v1623 = vpop.f32.mrb[0].mxu0
      %1624 = vmatprep.mubr.bf16.mxu0 0
      %1625 = vmatmul.mubr.bf16.gmra.mrb[0].mxu0 %v1523
      %v1626 = vpop.f32.mrb[0].mxu0
      %v1627 = vadd.f32 0.0, %v1626
      %v1628 = vpop.f32.mrb[0].mxu0
      %v1629 = vpop.f32.mrb[0].mxu0
      %v1630 = vadd.f32 0.0, %v1629
      %v1631 = vpop.f32.mrb[0].mxu0
      %1632 = vdwg.mxu0
      %v1633 = vadd.f32 %v1458, %v1563
      %v1634 = vadd.f32 %v1459, %v1566
      %v1635 = vadd.f32 %v1460, %v1571
      %v1636 = vadd.f32 %v1461, %v1574
      %v1637 = vadd.f32 %v1462, %v1579
      %v1638 = vadd.f32 %v1463, %v1582
      %v1639 = vadd.f32 %v1464, %v1587
      %v1640 = vadd.f32 %v1465, %v1590
      %v1641 = vadd.f32 %v1466, %v1595
      %v1642 = vadd.f32 %v1467, %v1598
      %v1643 = vadd.f32 %v1468, %v1603
      %v1644 = vadd.f32 %v1469, %v1606
      %v1645 = vadd.f32 %v1470, %v1611
      %v1646 = vadd.f32 %v1471, %v1614
      %v1647 = vadd.f32 %v1472, %v1619
      %v1648 = vadd.f32 %v1473, %v1622
      %v1649 = vadd.f32 %v1474, %v1627
      %v1650 = vadd.f32 %v1475, %v1630
      %s1651 = scalar_lea.vmem %s4, 12
      %v1652 = vld [vmem:[%s1651] sm:$0x3]
      %v1654 = vrot.slane %v568, 2
      %v1655 = vsel %vm1478, %v1496, %v1654
      %v1657 = vsel %vm577, %v1655, 0
      %v1660 = vsel %vm605, %v1652, 0
      %1662 = vmatprep.subr.bf16.mxu0 0
      %1663 = vmatpush1.bf16.msra.mxu0 %v1660
      %1664 = vmatprep.subr.bf16.mxu0 0
      %1665 = vmatpush1.bf16.msra.mxu0 0
      %1666 = vmatprep.subr.bf16.mxu0 0
      %1667 = vmatpush1.bf16.msra.mxu0 0
      %1668 = vmatprep.subr.bf16.mxu0 0
      %1669 = vmatpush1.bf16.msra.mxu0 0
      %1670 = vmatprep.subr.bf16.mxu0 0
      %1671 = vmatpush1.bf16.msra.mxu0 0
      %1672 = vmatprep.subr.bf16.mxu0 0
      %1673 = vmatpush1.bf16.msra.mxu0 0
      %1674 = vmatprep.subr.bf16.mxu0 0
      %1675 = vmatpush1.bf16.msra.mxu0 0
      %1676 = vmatprep.subr.bf16.mxu0 0
      %1677 = vmatpush1.bf16.msra.mxu0 0
      %1678 = vmatprep.subr.bf16.mxu0 0
      %1679 = vmatpush1.bf16.msra.mxu0 0
      %1680 = vmatprep.subr.bf16.mxu0 0
      %1681 = vmatpush1.bf16.msra.mxu0 0
      %1682 = vmatprep.subr.bf16.mxu0 0
      %1683 = vmatpush1.bf16.msra.mxu0 0
      %1684 = vmatprep.subr.bf16.mxu0 0
      %1685 = vmatpush1.bf16.msra.mxu0 0
      %1686 = vmatprep.subr.bf16.mxu0 0
      %1687 = vmatpush1.bf16.msra.mxu0 0
      %1688 = vmatprep.subr.bf16.mxu0 0
      %1689 = vmatpush1.bf16.msra.mxu0 0
      %1690 = vmatprep.subr.bf16.mxu0 0
      %1691 = vmatpush1.bf16.msra.mxu0 0
      %1692 = vmatprep.subr.bf16.mxu0 0
      %1693 = vmatpush1.bf16.msra.mxu0 0
      %1694 = vmatprep.mubr.bf16.mxu0 0
      %1695 = vmatmul.mubr.bf16.gmra.mrb[0].mxu0 %v1502
      %v1696 = vpop.f32.mrb[0].mxu0
      %v1697 = vadd.f32 0.0, %v1696
      %v1698 = vpop.f32.mrb[0].mxu0
      %v1699 = vpop.f32.mrb[0].mxu0
      %v1700 = vadd.f32 0.0, %v1699
      %v1701 = vpop.f32.mrb[0].mxu0
      %1702 = vmatprep.mubr.bf16.mxu0 0
      %1703 = vmatmul.mubr.bf16.gmra.mrb[0].mxu0 %v1505
      %v1704 = vpop.f32.mrb[0].mxu0
      %v1705 = vadd.f32 0.0, %v1704
      %v1706 = vpop.f32.mrb[0].mxu0
      %v1707 = vpop.f32.mrb[0].mxu0
      %v1708 = vadd.f32 0.0, %v1707
      %v1709 = vpop.f32.mrb[0].mxu0
      %1710 = vmatprep.mubr.bf16.mxu0 0
      %1711 = vmatmul.mubr.bf16.gmra.mrb[0].mxu0 %v1508
      %v1712 = vpop.f32.mrb[0].mxu0
      %v1713 = vadd.f32 0.0, %v1712
      %v1714 = vpop.f32.mrb[0].mxu0
      %v1715 = vpop.f32.mrb[0].mxu0
      %v1716 = vadd.f32 0.0, %v1715
      %v1717 = vpop.f32.mrb[0].mxu0
      %1718 = vmatprep.mubr.bf16.mxu0 0
      %1719 = vmatmul.mubr.bf16.gmra.mrb[0].mxu0 %v1511
      %v1720 = vpop.f32.mrb[0].mxu0
      %v1721 = vadd.f32 0.0, %v1720
      %v1722 = vpop.f32.mrb[0].mxu0
      %v1723 = vpop.f32.mrb[0].mxu0
      %v1724 = vadd.f32 0.0, %v1723
      %v1725 = vpop.f32.mrb[0].mxu0
      %1726 = vmatprep.mubr.bf16.mxu0 0
      %1727 = vmatmul.mubr.bf16.gmra.mrb[0].mxu0 %v1514
      %v1728 = vpop.f32.mrb[0].mxu0
      %v1729 = vadd.f32 0.0, %v1728
      %v1730 = vpop.f32.mrb[0].mxu0
      %v1731 = vpop.f32.mrb[0].mxu0
      %v1732 = vadd.f32 0.0, %v1731
      %v1733 = vpop.f32.mrb[0].mxu0
      %1734 = vmatprep.mubr.bf16.mxu0 0
      %1735 = vmatmul.mubr.bf16.gmra.mrb[0].mxu0 %v1517
      %v1736 = vpop.f32.mrb[0].mxu0
      %v1737 = vadd.f32 0.0, %v1736
      %v1738 = vpop.f32.mrb[0].mxu0
      %v1739 = vpop.f32.mrb[0].mxu0
      %v1740 = vadd.f32 0.0, %v1739
      %v1741 = vpop.f32.mrb[0].mxu0
      %1742 = vmatprep.mubr.bf16.mxu0 0
      %1743 = vmatmul.mubr.bf16.gmra.mrb[0].mxu0 %v1520
      %v1744 = vpop.f32.mrb[0].mxu0
      %v1745 = vadd.f32 0.0, %v1744
      %v1746 = vpop.f32.mrb[0].mxu0
      %v1747 = vpop.f32.mrb[0].mxu0
      %v1748 = vadd.f32 0.0, %v1747
      %v1749 = vpop.f32.mrb[0].mxu0
      %1750 = vmatprep.mubr.bf16.mxu0 0
      %1751 = vmatmul.mubr.bf16.gmra.mrb[0].mxu0 %v1523
      %v1752 = vpop.f32.mrb[0].mxu0
      %v1753 = vadd.f32 0.0, %v1752
      %v1754 = vpop.f32.mrb[0].mxu0
      %v1755 = vpop.f32.mrb[0].mxu0
      %v1756 = vadd.f32 0.0, %v1755
      %v1757 = vpop.f32.mrb[0].mxu0
      %1758 = vmatprep.mubr.bf16.mxu0 0
      %1759 = vmatmul.mubr.bf16.gmra.mrb[0].mxu0 %v1657
      %v1760 = vpop.f32.mrb[0].mxu0
      %v1761 = vadd.f32 0.0, %v1760
      %v1762 = vpop.f32.mrb[0].mxu0
      %v1763 = vpop.f32.mrb[0].mxu0
      %v1764 = vadd.f32 0.0, %v1763
      %v1765 = vpop.f32.mrb[0].mxu0
      %1766 = vdwg.mxu0
      %v1767 = vadd.f32 %v1633, %v1697
      %v1768 = vadd.f32 %v1634, %v1700
      %v1769 = vadd.f32 %v1635, %v1705
      %v1770 = vadd.f32 %v1636, %v1708
      %v1771 = vadd.f32 %v1637, %v1713
      %v1772 = vadd.f32 %v1638, %v1716
      %v1773 = vadd.f32 %v1639, %v1721
      %v1774 = vadd.f32 %v1640, %v1724
      %v1775 = vadd.f32 %v1641, %v1729
      %v1776 = vadd.f32 %v1642, %v1732
      %v1777 = vadd.f32 %v1643, %v1737
      %v1778 = vadd.f32 %v1644, %v1740
      %v1779 = vadd.f32 %v1645, %v1745
      %v1780 = vadd.f32 %v1646, %v1748
      %v1781 = vadd.f32 %v1647, %v1753
      %v1782 = vadd.f32 %v1648, %v1756
      %v1783 = vadd.f32 %v1649, %v1761
      %v1784 = vadd.f32 %v1650, %v1764
      %s1785 = scalar_lea.vmem %s4, 14
      %v1786 = vld [vmem:[%s1785] sm:$0x3]
      %vm1787 = vsmask.f32 5376
      %v1788 = vrot.slane %v752, 2
      %v1789 = vrot.slane %v748, 3
      %v1790 = vor.u32 %v1788, %v1789
      %v1791 = vrot.slane %v759, 2
      %v1792 = vrot.slane %v755, 3
      %v1793 = vor.u32 %v1791, %v1792
      %v1794 = vsel %vm1787, %v1790, %v1793
      %v1795 = vrot.slane %v766, 2
      %v1796 = vrot.slane %v762, 3
      %v1797 = vor.u32 %v1795, %v1796
      %v1798 = vsel %vm1787, %v1793, %v1797
      %v1799 = vrot.slane %v773, 2
      %v1800 = vrot.slane %v769, 3
      %v1801 = vor.u32 %v1799, %v1800
      %v1802 = vsel %vm1787, %v1797, %v1801
      %v1803 = vrot.slane %v780, 2
      %v1804 = vrot.slane %v776, 3
      %v1805 = vor.u32 %v1803, %v1804
      %v1806 = vsel %vm1787, %v1801, %v1805
      %v1807 = vrot.slane %v787, 2
      %v1808 = vrot.slane %v783, 3
      %v1809 = vor.u32 %v1807, %v1808
      %v1810 = vsel %vm1787, %v1805, %v1809
      %v1811 = vrot.slane %v794, 2
      %v1812 = vrot.slane %v790, 3
      %v1813 = vor.u32 %v1811, %v1812
      %v1814 = vsel %vm1787, %v1809, %v1813
      %v1815 = vrot.slane %v1308, 2
      %v1816 = vrot.slane %v798, 3
      %v1817 = vor.u32 %v1815, %v1816
      %v1818 = vsel %vm1787, %v1813, %v1817
      %v1819 = vrot.slane %v1315, 2
      %v1820 = vrot.slane %v1318, 3
      %v1821 = vor.u32 %v1819, %v1820
      %v1822 = vsel %vm1787, %v1817, %v1821
      %v1824 = vshrl.u32 %v568, 16
      %v1826 = vrot.slane %v1824, 2
      %v1827 = vshll.u32 %v568, 16
      %v1829 = vrot.slane %v1827, 3
      %v1830 = vor.u32 %v1826, %v1829
      %v1831 = vsel %vm1787, %v1821, %v1830
      %v1833 = vsel %vm577, %v1794, 0
      %v1836 = vsel %vm577, %v1798, 0
      %v1839 = vsel %vm577, %v1802, 0
      %v1842 = vsel %vm577, %v1806, 0
      %v1845 = vsel %vm577, %v1810, 0
      %v1848 = vsel %vm577, %v1814, 0
      %v1851 = vsel %vm577, %v1818, 0
      %v1854 = vsel %vm577, %v1822, 0
      %v1857 = vsel %vm577, %v1831, 0
      %v1860 = vsel %vm605, %v1786, 0
      %1862 = vmatprep.subr.bf16.mxu0 0
      %1863 = vmatpush1.bf16.msra.mxu0 %v1860
      %1864 = vmatprep.subr.bf16.mxu0 0
      %1865 = vmatpush1.bf16.msra.mxu0 0
      %1866 = vmatprep.subr.bf16.mxu0 0
      %1867 = vmatpush1.bf16.msra.mxu0 0
      %1868 = vmatprep.subr.bf16.mxu0 0
      %1869 = vmatpush1.bf16.msra.mxu0 0
      %1870 = vmatprep.subr.bf16.mxu0 0
      %1871 = vmatpush1.bf16.msra.mxu0 0
      %1872 = vmatprep.subr.bf16.mxu0 0
      %1873 = vmatpush1.bf16.msra.mxu0 0
      %1874 = vmatprep.subr.bf16.mxu0 0
      %1875 = vmatpush1.bf16.msra.mxu0 0
      %1876 = vmatprep.subr.bf16.mxu0 0
      %1877 = vmatpush1.bf16.msra.mxu0 0
      %1878 = vmatprep.subr.bf16.mxu0 0
      %1879 = vmatpush1.bf16.msra.mxu0 0
      %1880 = vmatprep.subr.bf16.mxu0 0
      %1881 = vmatpush1.bf16.msra.mxu0 0
      %1882 = vmatprep.subr.bf16.mxu0 0
      %1883 = vmatpush1.bf16.msra.mxu0 0
      %1884 = vmatprep.subr.bf16.mxu0 0
      %1885 = vmatpush1.bf16.msra.mxu0 0
      %1886 = vmatprep.subr.bf16.mxu0 0
      %1887 = vmatpush1.bf16.msra.mxu0 0
      %1888 = vmatprep.subr.bf16.mxu0 0
      %1889 = vmatpush1.bf16.msra.mxu0 0
      %1890 = vmatprep.subr.bf16.mxu0 0
      %1891 = vmatpush1.bf16.msra.mxu0 0
      %1892 = vmatprep.subr.bf16.mxu0 0
      %1893 = vmatpush1.bf16.msra.mxu0 0
      %1894 = vmatprep.mubr.bf16.mxu0 0
      %1895 = vmatmul.mubr.bf16.gmra.mrb[0].mxu0 %v1833
      %v1896 = vpop.f32.mrb[0].mxu0
      %v1897 = vadd.f32 0.0, %v1896
      %v1898 = vpop.f32.mrb[0].mxu0
      %v1899 = vpop.f32.mrb[0].mxu0
      %v1900 = vadd.f32 0.0, %v1899
      %v1901 = vpop.f32.mrb[0].mxu0
      %1902 = vmatprep.mubr.bf16.mxu0 0
      %1903 = vmatmul.mubr.bf16.gmra.mrb[0].mxu0 %v1836
      %v1904 = vpop.f32.mrb[0].mxu0
      %v1905 = vadd.f32 0.0, %v1904
      %v1906 = vpop.f32.mrb[0].mxu0
      %v1907 = vpop.f32.mrb[0].mxu0
      %v1908 = vadd.f32 0.0, %v1907
      %v1909 = vpop.f32.mrb[0].mxu0
      %1910 = vmatprep.mubr.bf16.mxu0 0
      %1911 = vmatmul.mubr.bf16.gmra.mrb[0].mxu0 %v1839
      %v1912 = vpop.f32.mrb[0].mxu0
      %v1913 = vadd.f32 0.0, %v1912
      %v1914 = vpop.f32.mrb[0].mxu0
      %v1915 = vpop.f32.mrb[0].mxu0
      %v1916 = vadd.f32 0.0, %v1915
      %v1917 = vpop.f32.mrb[0].mxu0
      %1918 = vmatprep.mubr.bf16.mxu0 0
      %1919 = vmatmul.mubr.bf16.gmra.mrb[0].mxu0 %v1842
      %v1920 = vpop.f32.mrb[0].mxu0
      %v1921 = vadd.f32 0.0, %v1920
      %v1922 = vpop.f32.mrb[0].mxu0
      %v1923 = vpop.f32.mrb[0].mxu0
      %v1924 = vadd.f32 0.0, %v1923
      %v1925 = vpop.f32.mrb[0].mxu0
      %1926 = vmatprep.mubr.bf16.mxu0 0
      %1927 = vmatmul.mubr.bf16.gmra.mrb[0].mxu0 %v1845
      %v1928 = vpop.f32.mrb[0].mxu0
      %v1929 = vadd.f32 0.0, %v1928
      %v1930 = vpop.f32.mrb[0].mxu0
      %v1931 = vpop.f32.mrb[0].mxu0
      %v1932 = vadd.f32 0.0, %v1931
      %v1933 = vpop.f32.mrb[0].mxu0
      %1934 = vmatprep.mubr.bf16.mxu0 0
      %1935 = vmatmul.mubr.bf16.gmra.mrb[0].mxu0 %v1848
      %v1936 = vpop.f32.mrb[0].mxu0
      %v1937 = vadd.f32 0.0, %v1936
      %v1938 = vpop.f32.mrb[0].mxu0
      %v1939 = vpop.f32.mrb[0].mxu0
      %v1940 = vadd.f32 0.0, %v1939
      %v1941 = vpop.f32.mrb[0].mxu0
      %1942 = vmatprep.mubr.bf16.mxu0 0
      %1943 = vmatmul.mubr.bf16.gmra.mrb[0].mxu0 %v1851
      %v1944 = vpop.f32.mrb[0].mxu0
      %v1945 = vadd.f32 0.0, %v1944
      %v1946 = vpop.f32.mrb[0].mxu0
      %v1947 = vpop.f32.mrb[0].mxu0
      %v1948 = vadd.f32 0.0, %v1947
      %v1949 = vpop.f32.mrb[0].mxu0
      %1950 = vmatprep.mubr.bf16.mxu0 0
      %1951 = vmatmul.mubr.bf16.gmra.mrb[0].mxu0 %v1854
      %v1952 = vpop.f32.mrb[0].mxu0
      %v1953 = vadd.f32 0.0, %v1952
      %v1954 = vpop.f32.mrb[0].mxu0
      %v1955 = vpop.f32.mrb[0].mxu0
      %v1956 = vadd.f32 0.0, %v1955
      %v1957 = vpop.f32.mrb[0].mxu0
      %1958 = vmatprep.mubr.bf16.mxu0 0
      %1959 = vmatmul.mubr.bf16.gmra.mrb[0].mxu0 %v1857
      %v1960 = vpop.f32.mrb[0].mxu0
      %v1961 = vadd.f32 0.0, %v1960
      %v1962 = vpop.f32.mrb[0].mxu0
      %v1963 = vpop.f32.mrb[0].mxu0
      %v1964 = vadd.f32 0.0, %v1963
      %v1965 = vpop.f32.mrb[0].mxu0
      %1966 = vdwg.mxu0
      %v1967 = vadd.f32 %v1767, %v1897
      %v1968 = vadd.f32 %v1768, %v1900
      %v1969 = vadd.f32 %v1769, %v1905
      %v1970 = vadd.f32 %v1770, %v1908
      %v1971 = vadd.f32 %v1771, %v1913
      %v1972 = vadd.f32 %v1772, %v1916
      %v1973 = vadd.f32 %v1773, %v1921
      %v1974 = vadd.f32 %v1774, %v1924
      %v1975 = vadd.f32 %v1775, %v1929
      %v1976 = vadd.f32 %v1776, %v1932
      %v1977 = vadd.f32 %v1777, %v1937
      %v1978 = vadd.f32 %v1778, %v1940
      %v1979 = vadd.f32 %v1779, %v1945
      %v1980 = vadd.f32 %v1780, %v1948
      %v1981 = vadd.f32 %v1781, %v1953
      %v1982 = vadd.f32 %v1782, %v1956
      %v1983 = vadd.f32 %v1783, %v1961
      %v1984 = vadd.f32 %v1784, %v1964
      %s1985 = scalar_lea.vmem %s4, 16
      %v1986 = vld [vmem:[%s1985] sm:$0x3]
      %vm1987 = vcmask 1044480
      %v1988 = vrot.slane %v559, 3
      %v1989 = vrot.slane %v560, 3
      %v1990 = vsel %vm1987, %v1988, %v1989
      %v1991 = vrot.slane %v561, 3
      %v1992 = vsel %vm1987, %v1989, %v1991
      %v1993 = vrot.slane %v562, 3
      %v1994 = vsel %vm1987, %v1991, %v1993
      %v1995 = vrot.slane %v563, 3
      %v1996 = vsel %vm1987, %v1993, %v1995
      %v1997 = vrot.slane %v564, 3
      %v1998 = vsel %vm1987, %v1995, %v1997
      %v1999 = vrot.slane %v565, 3
      %v2000 = vsel %vm1987, %v1997, %v1999
      %v2001 = vrot.slane %v566, 3
      %v2002 = vsel %vm1987, %v1999, %v2001
      %v2003 = vrot.slane %v567, 3
      %v2004 = vsel %vm1987, %v2001, %v2003
      %v2005 = vrot.slane %v568, 3
      %v2006 = vsel %vm1987, %v2003, %v2005
      %v2008 = vsel %vm577, %v1990, 0
      %v2011 = vsel %vm577, %v1992, 0
      %v2014 = vsel %vm577, %v1994, 0
      %v2017 = vsel %vm577, %v1996, 0
      %v2020 = vsel %vm577, %v1998, 0
      %v2023 = vsel %vm577, %v2000, 0
      %v2026 = vsel %vm577, %v2002, 0
      %v2029 = vsel %vm577, %v2004, 0
      %v2032 = vsel %vm577, %v2006, 0
      %v2035 = vsel %vm605, %v1986, 0
      %2037 = vmatprep.subr.bf16.mxu0 0
      %2038 = vmatpush1.bf16.msra.mxu0 %v2035
      %2039 = vmatprep.subr.bf16.mxu0 0
      %2040 = vmatpush1.bf16.msra.mxu0 0
      %2041 = vmatprep.subr.bf16.mxu0 0
      %2042 = vmatpush1.bf16.msra.mxu0 0
      %2043 = vmatprep.subr.bf16.mxu0 0
      %2044 = vmatpush1.bf16.msra.mxu0 0
      %2045 = vmatprep.subr.bf16.mxu0 0
      %2046 = vmatpush1.bf16.msra.mxu0 0
      %2047 = vmatprep.subr.bf16.mxu0 0
      %2048 = vmatpush1.bf16.msra.mxu0 0
      %2049 = vmatprep.subr.bf16.mxu0 0
      %2050 = vmatpush1.bf16.msra.mxu0 0
      %2051 = vmatprep.subr.bf16.mxu0 0
      %2052 = vmatpush1.bf16.msra.mxu0 0
      %2053 = vmatprep.subr.bf16.mxu0 0
      %2054 = vmatpush1.bf16.msra.mxu0 0
      %2055 = vmatprep.subr.bf16.mxu0 0
      %2056 = vmatpush1.bf16.msra.mxu0 0
      %2057 = vmatprep.subr.bf16.mxu0 0
      %2058 = vmatpush1.bf16.msra.mxu0 0
      %2059 = vmatprep.subr.bf16.mxu0 0
      %2060 = vmatpush1.bf16.msra.mxu0 0
      %2061 = vmatprep.subr.bf16.mxu0 0
      %2062 = vmatpush1.bf16.msra.mxu0 0
      %2063 = vmatprep.subr.bf16.mxu0 0
      %2064 = vmatpush1.bf16.msra.mxu0 0
      %2065 = vmatprep.subr.bf16.mxu0 0
      %2066 = vmatpush1.bf16.msra.mxu0 0
      %2067 = vmatprep.subr.bf16.mxu0 0
      %2068 = vmatpush1.bf16.msra.mxu0 0
      %2069 = vmatprep.mubr.bf16.mxu0 0
      %2070 = vmatmul.mubr.bf16.gmra.mrb[0].mxu0 %v2008
      %v2071 = vpop.f32.mrb[0].mxu0
      %v2072 = vadd.f32 0.0, %v2071
      %v2073 = vpop.f32.mrb[0].mxu0
      %v2074 = vpop.f32.mrb[0].mxu0
      %v2075 = vadd.f32 0.0, %v2074
      %v2076 = vpop.f32.mrb[0].mxu0
      %2077 = vmatprep.mubr.bf16.mxu0 0
      %2078 = vmatmul.mubr.bf16.gmra.mrb[0].mxu0 %v2011
      %v2079 = vpop.f32.mrb[0].mxu0
      %v2080 = vadd.f32 0.0, %v2079
      %v2081 = vpop.f32.mrb[0].mxu0
      %v2082 = vpop.f32.mrb[0].mxu0
      %v2083 = vadd.f32 0.0, %v2082
      %v2084 = vpop.f32.mrb[0].mxu0
      %2085 = vmatprep.mubr.bf16.mxu0 0
      %2086 = vmatmul.mubr.bf16.gmra.mrb[0].mxu0 %v2014
      %v2087 = vpop.f32.mrb[0].mxu0
      %v2088 = vadd.f32 0.0, %v2087
      %v2089 = vpop.f32.mrb[0].mxu0
      %v2090 = vpop.f32.mrb[0].mxu0
      %v2091 = vadd.f32 0.0, %v2090
      %v2092 = vpop.f32.mrb[0].mxu0
      %2093 = vmatprep.mubr.bf16.mxu0 0
      %2094 = vmatmul.mubr.bf16.gmra.mrb[0].mxu0 %v2017
      %v2095 = vpop.f32.mrb[0].mxu0
      %v2096 = vadd.f32 0.0, %v2095
      %v2097 = vpop.f32.mrb[0].mxu0
      %v2098 = vpop.f32.mrb[0].mxu0
      %v2099 = vadd.f32 0.0, %v2098
      %v2100 = vpop.f32.mrb[0].mxu0
      %2101 = vmatprep.mubr.bf16.mxu0 0
      %2102 = vmatmul.mubr.bf16.gmra.mrb[0].mxu0 %v2020
      %v2103 = vpop.f32.mrb[0].mxu0
      %v2104 = vadd.f32 0.0, %v2103
      %v2105 = vpop.f32.mrb[0].mxu0
      %v2106 = vpop.f32.mrb[0].mxu0
      %v2107 = vadd.f32 0.0, %v2106
      %v2108 = vpop.f32.mrb[0].mxu0
      %2109 = vmatprep.mubr.bf16.mxu0 0
      %2110 = vmatmul.mubr.bf16.gmra.mrb[0].mxu0 %v2023
      %v2111 = vpop.f32.mrb[0].mxu0
      %v2112 = vadd.f32 0.0, %v2111
      %v2113 = vpop.f32.mrb[0].mxu0
      %v2114 = vpop.f32.mrb[0].mxu0
      %v2115 = vadd.f32 0.0, %v2114
      %v2116 = vpop.f32.mrb[0].mxu0
      %2117 = vmatprep.mubr.bf16.mxu0 0
      %2118 = vmatmul.mubr.bf16.gmra.mrb[0].mxu0 %v2026
      %v2119 = vpop.f32.mrb[0].mxu0
      %v2120 = vadd.f32 0.0, %v2119
      %v2121 = vpop.f32.mrb[0].mxu0
      %v2122 = vpop.f32.mrb[0].mxu0
      %v2123 = vadd.f32 0.0, %v2122
      %v2124 = vpop.f32.mrb[0].mxu0
      %2125 = vmatprep.mubr.bf16.mxu0 0
      %2126 = vmatmul.mubr.bf16.gmra.mrb[0].mxu0 %v2029
      %v2127 = vpop.f32.mrb[0].mxu0
      %v2128 = vadd.f32 0.0, %v2127
      %v2129 = vpop.f32.mrb[0].mxu0
      %v2130 = vpop.f32.mrb[0].mxu0
      %v2131 = vadd.f32 0.0, %v2130
      %v2132 = vpop.f32.mrb[0].mxu0
      %2133 = vmatprep.mubr.bf16.mxu0 0
      %2134 = vmatmul.mubr.bf16.gmra.mrb[0].mxu0 %v2032
      %v2135 = vpop.f32.mrb[0].mxu0
      %v2136 = vadd.f32 0.0, %v2135
      %v2137 = vpop.f32.mrb[0].mxu0
      %v2138 = vpop.f32.mrb[0].mxu0
      %v2139 = vadd.f32 0.0, %v2138
      %v2140 = vpop.f32.mrb[0].mxu0
      %2141 = vdwg.mxu0
      %v2142 = vadd.f32 %v1967, %v2072
      %v2143 = vadd.f32 %v1968, %v2075
      %v2144 = vadd.f32 %v1969, %v2080
      %v2145 = vadd.f32 %v1970, %v2083
      %v2146 = vadd.f32 %v1971, %v2088
      %v2147 = vadd.f32 %v1972, %v2091
      %v2148 = vadd.f32 %v1973, %v2096
      %v2149 = vadd.f32 %v1974, %v2099
      %v2150 = vadd.f32 %v1975, %v2104
      %v2151 = vadd.f32 %v1976, %v2107
      %v2152 = vadd.f32 %v1977, %v2112
      %v2153 = vadd.f32 %v1978, %v2115
      %v2154 = vadd.f32 %v1979, %v2120
      %v2155 = vadd.f32 %v1980, %v2123
      %v2156 = vadd.f32 %v1981, %v2128
      %v2157 = vadd.f32 %v1982, %v2131
      %v2158 = vadd.f32 %v1983, %v2136
      %v2159 = vadd.f32 %v1984, %v2139
      %2160 = vst [vmem:[%s273] sm:$0xff] %v2142
      %2161 = vst [vmem:[%s273 + $0x8] sm:$0xff] %v2143
      %2162 = vst [vmem:[%s273 + $0x10] sm:$0xff] %v2144
      %2163 = vst [vmem:[%s273 + $0x18] sm:$0xff] %v2145
      %2164 = vst [vmem:[%s273 + $0x20] sm:$0xff] %v2146
      %2165 = vst [vmem:[%s273 + $0x28] sm:$0xff] %v2147
      %2166 = vst [vmem:[%s273 + $0x30] sm:$0xff] %v2148
      %2167 = vst [vmem:[%s273 + $0x38] sm:$0xff] %v2149
      %2168 = vst [vmem:[%s273 + $0x40] sm:$0xff] %v2150
      %2169 = vst [vmem:[%s273 + $0x48] sm:$0xff] %v2151
      %2170 = vst [vmem:[%s273 + $0x50] sm:$0xff] %v2152
      %2171 = vst [vmem:[%s273 + $0x58] sm:$0xff] %v2153
      %2172 = vst [vmem:[%s273 + $0x60] sm:$0xff] %v2154
      %2173 = vst [vmem:[%s273 + $0x68] sm:$0xff] %v2155
      %2174 = vst [vmem:[%s273 + $0x70] sm:$0xff] %v2156
      %2175 = vst [vmem:[%s273 + $0x78] sm:$0xff] %v2157
      %2176 = vst [vmem:[%s273 + $0x80] sm:$0xff] %v2158
      %2177 = vst [vmem:[%s273 + $0x88] sm:$0xff] %v2159
      %s2178 = smul.u32 18, %s22
      %p2179 = scmp.lt.s32.totalorder %s21, 1
      %s2180 = scalar_select %p2179, %s21, 1
      %p2181 = scmp.lt.s32.totalorder %s2178, 35
      %s2182 = scalar_select %p2181, %s2178, 35
      %s2183 = smul.addr %s2180, 36
      %s2184 = sadd.s32 %s2182, %s2183
      %s2185 = smul.addr %s2184, 8
      %s2186 = scalar_lea.vmem %s6, %s2185
      // Predicated region
      $region45: #{dense_block_forward.3} parent=43 // pred_check
        %p2187 = pneg %p180
      $region46: #{dense_block_forward.3} parent=43 // pred_check_branch
        %2189 = sbr.rel (%p2187) target = $region48
      $region47: #{dense_block_forward.3} parent=43 // pred_region
        %s2190 = smul.u32 18, %s22
      $region48: #{dense_block_forward.3} parent=43 // pred_fallthru
        _
    $region44: #{dense_block_forward.3} parent=5 // pred_fallthru
      _
    %p2191 = scmp.le.s32.totalorder 2, %s12
    // Predicated region
    $region49: #{dense_block_forward.3} parent=5 // pred_check
      %p2192 = pneg %p2191
    $region50: #{dense_block_forward.3} parent=5 // pred_check_branch
      %2194 = sbr.rel (%p2192) target = $region52
    $region51: #{dense_block_forward.3} parent=5 // pred_region
      %s2195 = ssub.s32 %s12, 2
      // Predicated region
      $region53: #{dense_block_forward.3} parent=51 // pred_check
        %p2196 = pneg %p186
      $region54: #{dense_block_forward.3} parent=51 // pred_check_branch
        %2198 = sbr.rel (%p2196) target = $region56
      $region55: #{dense_block_forward.3} parent=51 // pred_region
        %s2199 = smul.u32 18, %s24
        %p2200 = scmp.lt.s32.totalorder %s23, 1
        %s2201 = scalar_select %p2200, %s23, 1
        %p2202 = scmp.lt.s32.totalorder %s2199, 35
        %s2203 = scalar_select %p2202, %s2199, 35
        %s2204 = smul.addr %s2201, 36
        %s2205 = sadd.s32 %s2203, %s2204
        %s2206 = smul.addr %s2205, 8
        %s2207 = scalar_lea.vmem %s6, %s2206
      $region56: #{dense_block_forward.3} parent=51 // pred_fallthru
        _
    $region52: #{dense_block_forward.3} parent=5 // pred_fallthru
      _
  $region6: #{dense_block_forward.3} parent=0 // loop_footer
    %s16 = sadd.s32 1, %s12
  $region7: #{dense_block_forward.3} parent=0 // loop_footer_branch
    %11 = sbr.rel target = $region3
  $region8: #{dense_block_forward.3} parent=0 // loop_exit
    _

// kernel: dense_block_forward.4
$region0: #{dense_block_forward.4}
  #allocation0 [shape = 'u32[]', space=smem, size = 0x4, offset = 0x4, fixed_abs, tag = 'smem constant byte address 0x4 - core index']
  #allocation1 [shape = 'u32[144,128]{1,0:T(1,128)}', space=vmem, size = 0x12000, scoped, tag = 'internal scratch']
  %s0 = inlined_call_operand.vmem [shape: f32[2,342,8], index: 0, kind: input, shape index: {}]
  %s1 = inlined_call_operand.vmem [shape: f32[342,1], index: 1, kind: input, shape index: {}]
  %s2 = inlined_call_operand.vmem [shape: f32[1,8], index: 2, kind: input, shape index: {}]
  %s3 = inlined_call_operand.vmem [shape: f32[1,8], index: 3, kind: input, shape index: {}]
  %s4 = inlined_call_operand.vmem [shape: bf16[9,8,128], index: 4, kind: input, shape index: {}]
  %s5 = inlined_call_operand.vmem [shape: f32[1,128], index: 5, kind: input, shape index: {}]
  %s6 = inlined_call_operand.vmem [shape: f32[2,288,128], index: 6, kind: output, shape index: {}]
  %s7 = sld [smem:[#allocation0]]
  $region57: #{dense_block_forward.4} parent=0
    _
  %s9 = ssub.s32 1, %s7
  %s10 = scalar_select 0, %s9, %s7
  loop: start=0, step=1, limit=6
  $region2: #{dense_block_forward.4} parent=0 // loop_pre_header
    _
  $region3: #{dense_block_forward.4} parent=0 // loop_header
    %s12 = sphi 0, %s16
    %p13 = scmp.ge.s32.totalorder %s12, 6
    %s19 = sphi 0, %s31
    %s20 = sphi 0, %s27
    %s21 = sphi 0, %s19
    %s22 = sphi 0, %s20
    %s23 = sphi 0, %s21
    %s24 = sphi 0, %s22
    %s34 = sphi 0, %s36
    %s37 = sphi 0, %s34
    %s38 = sphi 0, %s37
    %s54 = sphi 0, %s38
    %s58 = sphi 0, %s58
    %s60 = sphi 0, %s58
    %s61 = sphi 0, %s60
    %s75 = sphi 0, %s61
    %s79 = sphi 0, %s79
    %s81 = sphi 0, %s79
    %s82 = sphi 0, %s81
    %s96 = sphi 0, %s82
    %s100 = sphi 0, %s100
    %s102 = sphi 0, %s100
    %s103 = sphi 0, %s102
    %s117 = sphi 0, %s103
    %s121 = sphi 0, %s121
    %s123 = sphi 0, %s121
    %s124 = sphi 0, %s123
    %s138 = sphi 0, %s124
    %s142 = sphi 0, %s142
    %s144 = sphi 0, %s142
    %s145 = sphi 0, %s144
    %s159 = sphi 0, %s145
    %s167 = sphi 0, %s169
    %s170 = sphi 0, %s167
    %s171 = sphi 0, %s170
    %s187 = sphi 0, %s171
  $region4: #{dense_block_forward.4} parent=0 // loop_header_branch
    %15 = sbr.rel (%p13) target = $region8
  $region5: #{dense_block_forward.4} parent=0 // loop_body
    %s17 = ssub.s32 %s12, 1
    %s18 = ssub.s32 %s12, 2
    %s25 = sadd.s32 1, %s20
    %p26 = scmp.ge.s32.totalorder %s25, 2
    %s27 = scalar_select %p26, 0, %s25
    %s28 = sadd.s32 1, %s19
    %s29 = scalar_select %p26, %s28, %s19
    %p30 = scmp.ge.s32.totalorder %s29, 2
    %s31 = scalar_select %p30, 0, %s29
    %s32 = ssub.s32 %s19, %s31
    %p33 = scmp.eq.s32.totalorder %s32, 0
    %s35 = sadd.s32 %s34, 1
    %s36 = scalar_select %p33, %s34, %s35
    %p39 = pneg %p33
    %p40 = scmp.eq.s32.totalorder %s12, 3
    %p41 = por %p39, %p40
    %p42 = scmp.ne.s32.totalorder %s34, %s37
    %p43 = scmp.eq.s32.totalorder %s12, 0
    %p44 = por %p42, %p43
    %p45 = scmp.ne.s32.totalorder %s34, %s37
    %p46 = scmp.eq.s32.totalorder %s17, 3
    %p47 = por %p45, %p46
    %p48 = scmp.ne.s32.totalorder %s37, %s38
    %p49 = scmp.eq.s32.totalorder %s17, 0
    %p50 = por %p48, %p49
    %p51 = scmp.ne.s32.totalorder %s37, %s38
    %p52 = scmp.eq.s32.totalorder %s18, 3
    %p53 = por %p51, %p52
    %p55 = scmp.ne.s32.totalorder %s38, %s54
    %p56 = scmp.eq.s32.totalorder %s18, 0
    %p57 = por %p55, %p56
    %s59 = sadd.s32 %s58, 1
    %p62 = scmp.eq.s32.totalorder %s12, 3
    %p63 = scmp.ne.s32.totalorder %s58, %s60
    %p64 = scmp.eq.s32.totalorder %s12, 0
    %p65 = por %p63, %p64
    %p66 = scmp.ne.s32.totalorder %s58, %s60
    %p67 = scmp.eq.s32.totalorder %s17, 3
    %p68 = por %p66, %p67
    %p69 = scmp.ne.s32.totalorder %s60, %s61
    %p70 = scmp.eq.s32.totalorder %s17, 0
    %p71 = por %p69, %p70
    %p72 = scmp.ne.s32.totalorder %s60, %s61
    %p73 = scmp.eq.s32.totalorder %s18, 3
    %p74 = por %p72, %p73
    %p76 = scmp.ne.s32.totalorder %s61, %s75
    %p77 = scmp.eq.s32.totalorder %s18, 0
    %p78 = por %p76, %p77
    %s80 = sadd.s32 %s79, 1
    %p83 = scmp.eq.s32.totalorder %s12, 3
    %p84 = scmp.ne.s32.totalorder %s79, %s81
    %p85 = scmp.eq.s32.totalorder %s12, 0
    %p86 = por %p84, %p85
    %p87 = scmp.ne.s32.totalorder %s79, %s81
    %p88 = scmp.eq.s32.totalorder %s17, 3
    %p89 = por %p87, %p88
    %p90 = scmp.ne.s32.totalorder %s81, %s82
    %p91 = scmp.eq.s32.totalorder %s17, 0
    %p92 = por %p90, %p91
    %p93 = scmp.ne.s32.totalorder %s81, %s82
    %p94 = scmp.eq.s32.totalorder %s18, 3
    %p95 = por %p93, %p94
    %p97 = scmp.ne.s32.totalorder %s82, %s96
    %p98 = scmp.eq.s32.totalorder %s18, 0
    %p99 = por %p97, %p98
    %s101 = sadd.s32 %s100, 1
    %p104 = scmp.eq.s32.totalorder %s12, 3
    %p105 = scmp.ne.s32.totalorder %s100, %s102
    %p106 = scmp.eq.s32.totalorder %s12, 0
    %p107 = por %p105, %p106
    %p108 = scmp.ne.s32.totalorder %s100, %s102
    %p109 = scmp.eq.s32.totalorder %s17, 3
    %p110 = por %p108, %p109
    %p111 = scmp.ne.s32.totalorder %s102, %s103
    %p112 = scmp.eq.s32.totalorder %s17, 0
    %p113 = por %p111, %p112
    %p114 = scmp.ne.s32.totalorder %s102, %s103
    %p115 = scmp.eq.s32.totalorder %s18, 3
    %p116 = por %p114, %p115
    %p118 = scmp.ne.s32.totalorder %s103, %s117
    %p119 = scmp.eq.s32.totalorder %s18, 0
    %p120 = por %p118, %p119
    %s122 = sadd.s32 %s121, 1
    %p125 = scmp.eq.s32.totalorder %s12, 3
    %p126 = scmp.ne.s32.totalorder %s121, %s123
    %p127 = scmp.eq.s32.totalorder %s12, 0
    %p128 = por %p126, %p127
    %p129 = scmp.ne.s32.totalorder %s121, %s123
    %p130 = scmp.eq.s32.totalorder %s17, 3
    %p131 = por %p129, %p130
    %p132 = scmp.ne.s32.totalorder %s123, %s124
    %p133 = scmp.eq.s32.totalorder %s17, 0
    %p134 = por %p132, %p133
    %p135 = scmp.ne.s32.totalorder %s123, %s124
    %p136 = scmp.eq.s32.totalorder %s18, 3
    %p137 = por %p135, %p136
    %p139 = scmp.ne.s32.totalorder %s124, %s138
    %p140 = scmp.eq.s32.totalorder %s18, 0
    %p141 = por %p139, %p140
    %s143 = sadd.s32 %s142, 1
    %p146 = scmp.eq.s32.totalorder %s12, 3
    %p147 = scmp.ne.s32.totalorder %s142, %s144
    %p148 = scmp.eq.s32.totalorder %s12, 0
    %p149 = por %p147, %p148
    %p150 = scmp.ne.s32.totalorder %s142, %s144
    %p151 = scmp.eq.s32.totalorder %s17, 3
    %p152 = por %p150, %p151
    %p153 = scmp.ne.s32.totalorder %s144, %s145
    %p154 = scmp.eq.s32.totalorder %s17, 0
    %p155 = por %p153, %p154
    %p156 = scmp.ne.s32.totalorder %s144, %s145
    %p157 = scmp.eq.s32.totalorder %s18, 3
    %p158 = por %p156, %p157
    %p160 = scmp.ne.s32.totalorder %s145, %s159
    %p161 = scmp.eq.s32.totalorder %s18, 0
    %p162 = por %p160, %p161
    %s163 = ssub.s32 %s19, %s31
    %s164 = ssub.s32 %s20, %s27
    %s165 = sor.u32 %s163, %s164
    %p166 = scmp.eq.s32.totalorder %s165, 0
    %s168 = sadd.s32 %s167, 1
    %s169 = scalar_select %p166, %s167, %s168
    %p172 = pneg %p166
    %p173 = scmp.eq.s32.totalorder %s12, 3
    %p174 = por %p172, %p173
    %p175 = scmp.ne.s32.totalorder %s167, %s170
    %p176 = scmp.eq.s32.totalorder %s12, 0
    %p177 = por %p175, %p176
    %p178 = scmp.ne.s32.totalorder %s167, %s170
    %p179 = scmp.eq.s32.totalorder %s17, 3
    %p180 = por %p178, %p179
    %p181 = scmp.ne.s32.totalorder %s170, %s171
    %p182 = scmp.eq.s32.totalorder %s17, 0
    %p183 = por %p181, %p182
    %p184 = scmp.ne.s32.totalorder %s170, %s171
    %p185 = scmp.eq.s32.totalorder %s18, 3
    %p186 = por %p184, %p185
    %p188 = scmp.ne.s32.totalorder %s171, %s187
    %p189 = scmp.eq.s32.totalorder %s18, 0
    %p190 = por %p188, %p189
    %p191 = scmp.le.s32.totalorder 1, %s12
    %p192 = scmp.lt.s32.totalorder %s12, 5
    %p193 = pnand %p191, %p192
    %p194 = pneg %p193
    // Predicated region
    $region9: #{dense_block_forward.4} parent=5 // pred_check
      _
    $region10: #{dense_block_forward.4} parent=5 // pred_check_branch
      %196 = sbr.rel (%p193) target = $region12
    $region11: #{dense_block_forward.4} parent=5 // pred_region
      %s197 = ssub.s32 %s12, 1
      // Predicated region
      $region13: #{dense_block_forward.4} parent=11 // pred_check
        %p198 = pneg %p71
      $region14: #{dense_block_forward.4} parent=11 // pred_check_branch
        %200 = sbr.rel (%p198) target = $region16
      $region15: #{dense_block_forward.4} parent=11 // pred_region
        _
      $region16: #{dense_block_forward.4} parent=11 // pred_fallthru
        _
      // Predicated region
      $region17: #{dense_block_forward.4} parent=11 // pred_check
        %p201 = pneg %p92
      $region18: #{dense_block_forward.4} parent=11 // pred_check_branch
        %203 = sbr.rel (%p201) target = $region20
      $region19: #{dense_block_forward.4} parent=11 // pred_region
        _
      $region20: #{dense_block_forward.4} parent=11 // pred_fallthru
        _
      // Predicated region
      $region21: #{dense_block_forward.4} parent=11 // pred_check
        %p204 = pneg %p113
      $region22: #{dense_block_forward.4} parent=11 // pred_check_branch
        %206 = sbr.rel (%p204) target = $region24
      $region23: #{dense_block_forward.4} parent=11 // pred_region
        _
      $region24: #{dense_block_forward.4} parent=11 // pred_fallthru
        _
      // Predicated region
      $region25: #{dense_block_forward.4} parent=11 // pred_check
        %p207 = pneg %p134
      $region26: #{dense_block_forward.4} parent=11 // pred_check_branch
        %209 = sbr.rel (%p207) target = $region28
      $region27: #{dense_block_forward.4} parent=11 // pred_region
        _
      $region28: #{dense_block_forward.4} parent=11 // pred_fallthru
        _
      // Predicated region
      $region29: #{dense_block_forward.4} parent=11 // pred_check
        %p210 = pneg %p155
      $region30: #{dense_block_forward.4} parent=11 // pred_check_branch
        %212 = sbr.rel (%p210) target = $region32
      $region31: #{dense_block_forward.4} parent=11 // pred_region
        _
      $region32: #{dense_block_forward.4} parent=11 // pred_fallthru
        _
    $region12: #{dense_block_forward.4} parent=5 // pred_fallthru
      _
    %p213 = scmp.lt.s32.totalorder %s12, 4
    // Predicated region
    $region33: #{dense_block_forward.4} parent=5 // pred_check
      %p214 = pneg %p213
    $region34: #{dense_block_forward.4} parent=5 // pred_check_branch
      %216 = sbr.rel (%p214) target = $region36
    $region35: #{dense_block_forward.4} parent=5 // pred_region
      // Predicated region
      $region37: #{dense_block_forward.4} parent=35 // pred_check
        %p217 = pneg %p44
      $region38: #{dense_block_forward.4} parent=35 // pred_check_branch
        %219 = sbr.rel (%p217) target = $region40
      $region39: #{dense_block_forward.4} parent=35 // pred_region
        %p220 = scmp.lt.s32.totalorder %s19, 1
        %s221 = scalar_select %p220, %s19, 1
        %s222 = smul.addr %s221, 43
        %s223 = smul.addr %s222, 8
        %s224 = scalar_lea.vmem %s0, %s223
      $region40: #{dense_block_forward.4} parent=35 // pred_fallthru
        _
    $region36: #{dense_block_forward.4} parent=5 // pred_fallthru
      _
    %p225 = scmp.le.s32.totalorder 1, %s12
    %p226 = scmp.lt.s32.totalorder %s12, 5
    %p227 = pnand %p225, %p226
    %p228 = pneg %p227
    // Predicated region
    $region41: #{dense_block_forward.4} parent=5 // pred_check
      _
    $region42: #{dense_block_forward.4} parent=5 // pred_check_branch
      %230 = sbr.rel (%p227) target = $region44
    $region43: #{dense_block_forward.4} parent=5 // pred_region
      %s231 = ssub.s32 %s12, 1
      %p232 = scmp.lt.s32.totalorder %s21, 1
      %s233 = scalar_select %p232, %s21, 1
      %s234 = smul.addr %s233, 43
      %s235 = smul.addr %s234, 8
      %s236 = scalar_lea.vmem %s0, %s235
      %p237 = pneg %p50
      %p238 = pneg %p47
      %p239 = pneg %p71
      %p240 = pneg %p68
      %p241 = pneg %p92
      %p242 = pneg %p89
      %p243 = pneg %p113
      %p244 = pneg %p110
      %p245 = pneg %p134
      %p246 = pneg %p131
      %p247 = pneg %p155
      %p248 = pneg %p152
      %p249 = pneg %p183
      %p250 = pneg %p180
      %s251 = smul.u32 18, %s22
      %p252 = scmp.lt.s32.totalorder %s21, 1
      %s253 = scalar_select %p252, %s21, 1
      %p254 = scmp.lt.s32.totalorder %s251, 35
      %s255 = scalar_select %p254, %s251, 35
      %s256 = smul.addr %s253, 36
      %s257 = sadd.s32 %s255, %s256
      %s258 = smul.addr %s257, 8
      %s259 = scalar_lea.vmem %s6, %s258
      %p260 = scmp.lt.s32.totalorder %s21, 1
      %s261 = scalar_select %p260, %s21, 1
      %s262 = smul.addr %s261, 43
      %s263 = smul.addr %s262, 8
      %s264 = scalar_lea.vmem %s0, %s263
      %s265 = smul.u32 18, %s22
      %p266 = scmp.lt.s32.totalorder %s21, 1
      %s267 = scalar_select %p266, %s21, 1
      %p268 = scmp.lt.s32.totalorder %s265, 35
      %s269 = scalar_select %p268, %s265, 35
      %s270 = smul.addr %s267, 36
      %s271 = sadd.s32 %s269, %s270
      %s272 = smul.addr %s271, 8
      %s273 = scalar_lea.vmem %s6, %s272
      %s274 = smul.u32 18, %s22
      %s276 = smul.u32 %s22, 144
      %s277 = scalar_lea.vmem %s264, %s276
      %v278 = vld [vmem:[%s277] sm:$0xff]
      %v279 = vld [vmem:[%s277 + $0x8] sm:$0xff]
      %v280 = vld [vmem:[%s277 + $0x10] sm:$0xff]
      %v281 = vld [vmem:[%s277 + $0x18] sm:$0xff]
      %v282 = vld [vmem:[%s277 + $0x20] sm:$0xff]
      %v283 = vld [vmem:[%s277 + $0x28] sm:$0xff]
      %v284 = vld [vmem:[%s277 + $0x30] sm:$0xff]
      %v285 = vld [vmem:[%s277 + $0x38] sm:$0xff]
      %v286 = vld [vmem:[%s277 + $0x40] sm:$0xff]
      %v287 = vld [vmem:[%s277 + $0x48] sm:$0xff]
      %v288 = vld [vmem:[%s277 + $0x50] sm:$0xff]
      %v289 = vld [vmem:[%s277 + $0x58] sm:$0xff]
      %v290 = vld [vmem:[%s277 + $0x60] sm:$0xff]
      %v291 = vld [vmem:[%s277 + $0x68] sm:$0xff]
      %v292 = vld [vmem:[%s277 + $0x70] sm:$0xff]
      %v293 = vld [vmem:[%s277 + $0x78] sm:$0xff]
      %v294 = vld [vmem:[%s277 + $0x80] sm:$0xff]
      %v295 = vld [vmem:[%s277 + $0x88] sm:$0xff]
      %v296 = vld [vmem:[%s277 + $0x90] sm:$0xff]
      %v297 = vld [vmem:[%s277 + $0x98] sm:$0xff]
      %v298 = vld [vmem:[%s277 + $0xa0] sm:$0xff]
      %v299 = vld [vmem:[%s277 + $0xa8] sm:$0xff]
      %v300 = vld [vmem:[%s277 + $0xb0] sm:$0xff]
      %v301 = vld [vmem:[%s277 + $0xb8] sm:$0xff]
      %s302 = scalar_lea.vmem %s1, %s276
      %v303 = vld [vmem:[%s302] sm:$0xff]
      %v304 = vld [vmem:[%s302 + $0x8] sm:$0xff]
      %v305 = vld [vmem:[%s302 + $0x10] sm:$0xff]
      %v306 = vld [vmem:[%s302 + $0x18] sm:$0xff]
      %v307 = vld [vmem:[%s302 + $0x20] sm:$0xff]
      %v308 = vld [vmem:[%s302 + $0x28] sm:$0xff]
      %v309 = vld [vmem:[%s302 + $0x30] sm:$0xff]
      %v310 = vld [vmem:[%s302 + $0x38] sm:$0xff]
      %v311 = vld [vmem:[%s302 + $0x40] sm:$0xff]
      %v312 = vld [vmem:[%s302 + $0x48] sm:$0xff]
      %v313 = vld [vmem:[%s302 + $0x50] sm:$0xff]
      %v314 = vld [vmem:[%s302 + $0x58] sm:$0xff]
      %v315 = vld [vmem:[%s302 + $0x60] sm:$0xff]
      %v316 = vld [vmem:[%s302 + $0x68] sm:$0xff]
      %v317 = vld [vmem:[%s302 + $0x70] sm:$0xff]
      %v318 = vld [vmem:[%s302 + $0x78] sm:$0xff]
      %v319 = vld [vmem:[%s302 + $0x80] sm:$0xff]
      %v320 = vld [vmem:[%s302 + $0x88] sm:$0xff]
      %v321 = vld [vmem:[%s302 + $0x90] sm:$0xff]
      %v322 = vld [vmem:[%s302 + $0x98] sm:$0xff]
      %v323 = vld [vmem:[%s302 + $0xa0] sm:$0xff]
      %v324 = vld [vmem:[%s302 + $0xa8] sm:$0xff]
      %v325 = vld [vmem:[%s302 + $0xb0] sm:$0xff]
      %v326 = vld [vmem:[%s302 + $0xb8] sm:$0xff]
      %v327 = vld [vmem:[%s2] sm:$0x1]
      %v329 = vlaneseq
      %v330 = vshrl.u32 %v329, 7
      %v331 = vsub.s32 0, %v330
      %v332 = vrot.slane %v327, %v331
      %v334 = vmul.f32 %v278, %v332
      %v335 = vmul.f32 %v279, %v332
      %v336 = vmul.f32 %v280, %v332
      %v337 = vmul.f32 %v281, %v332
      %v338 = vmul.f32 %v282, %v332
      %v339 = vmul.f32 %v283, %v332
      %v340 = vmul.f32 %v284, %v332
      %v341 = vmul.f32 %v285, %v332
      %v342 = vmul.f32 %v286, %v332
      %v343 = vmul.f32 %v287, %v332
      %v344 = vmul.f32 %v288, %v332
      %v345 = vmul.f32 %v289, %v332
      %v346 = vmul.f32 %v290, %v332
      %v347 = vmul.f32 %v291, %v332
      %v348 = vmul.f32 %v292, %v332
      %v349 = vmul.f32 %v293, %v332
      %v350 = vmul.f32 %v294, %v332
      %v351 = vmul.f32 %v295, %v332
      %v352 = vmul.f32 %v296, %v332
      %v353 = vmul.f32 %v297, %v332
      %v354 = vmul.f32 %v298, %v332
      %v355 = vmul.f32 %v299, %v332
      %v356 = vmul.f32 %v300, %v332
      %v357 = vmul.f32 %v301, %v332
      %v358 = vld [vmem:[%s3] sm:$0x1]
      %v360 = vlaneseq
      %v361 = vshrl.u32 %v360, 7
      %v362 = vsub.s32 0, %v361
      %v363 = vrot.slane %v358, %v362
      %v365 = vadd.f32 %v334, %v363
      %v366 = vadd.f32 %v335, %v363
      %v367 = vadd.f32 %v336, %v363
      %v368 = vadd.f32 %v337, %v363
      %v369 = vadd.f32 %v338, %v363
      %v370 = vadd.f32 %v339, %v363
      %v371 = vadd.f32 %v340, %v363
      %v372 = vadd.f32 %v341, %v363
      %v373 = vadd.f32 %v342, %v363
      %v374 = vadd.f32 %v343, %v363
      %v375 = vadd.f32 %v344, %v363
      %v376 = vadd.f32 %v345, %v363
      %v377 = vadd.f32 %v346, %v363
      %v378 = vadd.f32 %v347, %v363
      %v379 = vadd.f32 %v348, %v363
      %v380 = vadd.f32 %v349, %v363
      %v381 = vadd.f32 %v350, %v363
      %v382 = vadd.f32 %v351, %v363
      %v383 = vadd.f32 %v352, %v363
      %v384 = vadd.f32 %v353, %v363
      %v385 = vadd.f32 %v354, %v363
      %v386 = vadd.f32 %v355, %v363
      %v387 = vadd.f32 %v356, %v363
      %v388 = vadd.f32 %v357, %v363
      %v389 = vmax.f32 %v365, 0.0
      %v390 = vmax.f32 %v366, 0.0
      %v391 = vmax.f32 %v367, 0.0
      %v392 = vmax.f32 %v368, 0.0
      %v393 = vmax.f32 %v369, 0.0
      %v394 = vmax.f32 %v370, 0.0
      %v395 = vmax.f32 %v371, 0.0
      %v396 = vmax.f32 %v372, 0.0
      %v397 = vmax.f32 %v373, 0.0
      %v398 = vmax.f32 %v374, 0.0
      %v399 = vmax.f32 %v375, 0.0
      %v400 = vmax.f32 %v376, 0.0
      %v401 = vmax.f32 %v377, 0.0
      %v402 = vmax.f32 %v378, 0.0
      %v403 = vmax.f32 %v379, 0.0
      %v404 = vmax.f32 %v380, 0.0
      %v405 = vmax.f32 %v381, 0.0
      %v406 = vmax.f32 %v382, 0.0
      %v407 = vmax.f32 %v383, 0.0
      %v408 = vmax.f32 %v384, 0.0
      %v409 = vmax.f32 %v385, 0.0
      %v410 = vmax.f32 %v386, 0.0
      %v411 = vmax.f32 %v387, 0.0
      %v412 = vmax.f32 %v388, 0.0
      %414 = vset.pattern.permute.xlu0 0
      %415 = vperm.xlu0 %414, %v303
      %v416 = vpop.permute.xlu0 %415
      %419 = vset.pattern.permute.xlu0 0
      %420 = vperm.xlu0 %419, %v304
      %v421 = vpop.permute.xlu0 %420
      %424 = vset.pattern.permute.xlu0 0
      %425 = vperm.xlu0 %424, %v305
      %v426 = vpop.permute.xlu0 %425
      %429 = vset.pattern.permute.xlu0 0
      %430 = vperm.xlu0 %429, %v306
      %v431 = vpop.permute.xlu0 %430
      %434 = vset.pattern.permute.xlu0 0
      %435 = vperm.xlu0 %434, %v307
      %v436 = vpop.permute.xlu0 %435
      %439 = vset.pattern.permute.xlu0 0
      %440 = vperm.xlu0 %439, %v308
      %v441 = vpop.permute.xlu0 %440
      %444 = vset.pattern.permute.xlu0 0
      %445 = vperm.xlu0 %444, %v309
      %v446 = vpop.permute.xlu0 %445
      %449 = vset.pattern.permute.xlu0 0
      %450 = vperm.xlu0 %449, %v310
      %v451 = vpop.permute.xlu0 %450
      %454 = vset.pattern.permute.xlu0 0
      %455 = vperm.xlu0 %454, %v311
      %v456 = vpop.permute.xlu0 %455
      %459 = vset.pattern.permute.xlu0 0
      %460 = vperm.xlu0 %459, %v312
      %v461 = vpop.permute.xlu0 %460
      %464 = vset.pattern.permute.xlu0 0
      %465 = vperm.xlu0 %464, %v313
      %v466 = vpop.permute.xlu0 %465
      %469 = vset.pattern.permute.xlu0 0
      %470 = vperm.xlu0 %469, %v314
      %v471 = vpop.permute.xlu0 %470
      %474 = vset.pattern.permute.xlu0 0
      %475 = vperm.xlu0 %474, %v315
      %v476 = vpop.permute.xlu0 %475
      %479 = vset.pattern.permute.xlu0 0
      %480 = vperm.xlu0 %479, %v316
      %v481 = vpop.permute.xlu0 %480
      %484 = vset.pattern.permute.xlu0 0
      %485 = vperm.xlu0 %484, %v317
      %v486 = vpop.permute.xlu0 %485
      %489 = vset.pattern.permute.xlu0 0
      %490 = vperm.xlu0 %489, %v318
      %v491 = vpop.permute.xlu0 %490
      %494 = vset.pattern.permute.xlu0 0
      %495 = vperm.xlu0 %494, %v319
      %v496 = vpop.permute.xlu0 %495
      %499 = vset.pattern.permute.xlu0 0
      %500 = vperm.xlu0 %499, %v320
      %v501 = vpop.permute.xlu0 %500
      %504 = vset.pattern.permute.xlu0 0
      %505 = vperm.xlu0 %504, %v321
      %v506 = vpop.permute.xlu0 %505
      %509 = vset.pattern.permute.xlu0 0
      %510 = vperm.xlu0 %509, %v322
      %v511 = vpop.permute.xlu0 %510
      %514 = vset.pattern.permute.xlu0 0
      %515 = vperm.xlu0 %514, %v323
      %v516 = vpop.permute.xlu0 %515
      %519 = vset.pattern.permute.xlu0 0
      %520 = vperm.xlu0 %519, %v324
      %v521 = vpop.permute.xlu0 %520
      %524 = vset.pattern.permute.xlu0 0
      %525 = vperm.xlu0 %524, %v325
      %v526 = vpop.permute.xlu0 %525
      %529 = vset.pattern.permute.xlu0 0
      %530 = vperm.xlu0 %529, %v326
      %v531 = vpop.permute.xlu0 %530
      %v533 = vmul.f32 %v389, %v416
      %v534 = vmul.f32 %v390, %v421
      %v535 = vmul.f32 %v391, %v426
      %v536 = vmul.f32 %v392, %v431
      %v537 = vmul.f32 %v393, %v436
      %v538 = vmul.f32 %v394, %v441
      %v539 = vmul.f32 %v395, %v446
      %v540 = vmul.f32 %v396, %v451
      %v541 = vmul.f32 %v397, %v456
      %v542 = vmul.f32 %v398, %v461
      %v543 = vmul.f32 %v399, %v466
      %v544 = vmul.f32 %v400, %v471
      %v545 = vmul.f32 %v401, %v476
      %v546 = vmul.f32 %v402, %v481
      %v547 = vmul.f32 %v403, %v486
      %v548 = vmul.f32 %v404, %v491
      %v549 = vmul.f32 %v405, %v496
      %v550 = vmul.f32 %v406, %v501
      %v551 = vmul.f32 %v407, %v506
      %v552 = vmul.f32 %v408, %v511
      %v553 = vmul.f32 %v409, %v516
      %v554 = vmul.f32 %v410, %v521
      %v555 = vmul.f32 %v411, %v526
      %v556 = vmul.f32 %v412, %v531
      %v557 = vpack.c.bf16 %v534, %v533
      %v558 = vpack.c.bf16 %v536, %v535
      %v559 = vpack.c.bf16 %v538, %v537
      %v560 = vpack.c.bf16 %v540, %v539
      %v561 = vpack.c.bf16 %v542, %v541
      %v562 = vpack.c.bf16 %v544, %v543
      %v563 = vpack.c.bf16 %v546, %v545
      %v564 = vpack.c.bf16 %v548, %v547
      %v565 = vpack.c.bf16 %v550, %v549
      %v566 = vpack.c.bf16 %v552, %v551
      %v567 = vpack.c.bf16 %v554, %v553
      %v568 = vpack.c.bf16 %v556, %v555
      %v569 = vld [vmem:[%s5] sm:$0x1]
      %v571 = vlaneseq
      %v572 = vshrl.u32 %v571, 7
      %v573 = vsub.s32 0, %v572
      %v574 = vrot.slane %v569, %v573
      %v576 = vld [vmem:[%s4] sm:$0xf]
      %vm577 = vcmask 64512
      %v579 = vsel %vm577, %v557, 0
      %v582 = vsel %vm577, %v558, 0
      %v585 = vsel %vm577, %v559, 0
      %v588 = vsel %vm577, %v560, 0
      %v591 = vsel %vm577, %v561, 0
      %v594 = vsel %vm577, %v562, 0
      %v597 = vsel %vm577, %v563, 0
      %v600 = vsel %vm577, %v564, 0
      %v603 = vsel %vm577, %v565, 0
      %vm605 = vcmask 1043456
      %v607 = vsel %vm605, %v576, 0
      %609 = vmatprep.subr.bf16.mxu0 0
      %610 = vmatpush1.bf16.msra.mxu0 %v607
      %611 = vmatprep.subr.bf16.mxu0 0
      %612 = vmatpush1.bf16.msra.mxu0 0
      %613 = vmatprep.subr.bf16.mxu0 0
      %614 = vmatpush1.bf16.msra.mxu0 0
      %615 = vmatprep.subr.bf16.mxu0 0
      %616 = vmatpush1.bf16.msra.mxu0 0
      %617 = vmatprep.subr.bf16.mxu0 0
      %618 = vmatpush1.bf16.msra.mxu0 0
      %619 = vmatprep.subr.bf16.mxu0 0
      %620 = vmatpush1.bf16.msra.mxu0 0
      %621 = vmatprep.subr.bf16.mxu0 0
      %622 = vmatpush1.bf16.msra.mxu0 0
      %623 = vmatprep.subr.bf16.mxu0 0
      %624 = vmatpush1.bf16.msra.mxu0 0
      %625 = vmatprep.subr.bf16.mxu0 0
      %626 = vmatpush1.bf16.msra.mxu0 0
      %627 = vmatprep.subr.bf16.mxu0 0
      %628 = vmatpush1.bf16.msra.mxu0 0
      %629 = vmatprep.subr.bf16.mxu0 0
      %630 = vmatpush1.bf16.msra.mxu0 0
      %631 = vmatprep.subr.bf16.mxu0 0
      %632 = vmatpush1.bf16.msra.mxu0 0
      %633 = vmatprep.subr.bf16.mxu0 0
      %634 = vmatpush1.bf16.msra.mxu0 0
      %635 = vmatprep.subr.bf16.mxu0 0
      %636 = vmatpush1.bf16.msra.mxu0 0
      %637 = vmatprep.subr.bf16.mxu0 0
      %638 = vmatpush1.bf16.msra.mxu0 0
      %639 = vmatprep.subr.bf16.mxu0 0
      %640 = vmatpush1.bf16.msra.mxu0 0
      %641 = vmatprep.mubr.bf16.mxu0 0
      %642 = vmatmul.mubr.bf16.gmra.mrb[0].mxu0 %v579
      %v643 = vpop.f32.mrb[0].mxu0
      %v644 = vadd.f32 0.0, %v643
      %v645 = vpop.f32.mrb[0].mxu0
      %v646 = vpop.f32.mrb[0].mxu0
      %v647 = vadd.f32 0.0, %v646
      %v648 = vpop.f32.mrb[0].mxu0
      %649 = vmatprep.mubr.bf16.mxu0 0
      %650 = vmatmul.mubr.bf16.gmra.mrb[0].mxu0 %v582
      %v651 = vpop.f32.mrb[0].mxu0
      %v652 = vadd.f32 0.0, %v651
      %v653 = vpop.f32.mrb[0].mxu0
      %v654 = vpop.f32.mrb[0].mxu0
      %v655 = vadd.f32 0.0, %v654
      %v656 = vpop.f32.mrb[0].mxu0
      %657 = vmatprep.mubr.bf16.mxu0 0
      %658 = vmatmul.mubr.bf16.gmra.mrb[0].mxu0 %v585
      %v659 = vpop.f32.mrb[0].mxu0
      %v660 = vadd.f32 0.0, %v659
      %v661 = vpop.f32.mrb[0].mxu0
      %v662 = vpop.f32.mrb[0].mxu0
      %v663 = vadd.f32 0.0, %v662
      %v664 = vpop.f32.mrb[0].mxu0
      %665 = vmatprep.mubr.bf16.mxu0 0
      %666 = vmatmul.mubr.bf16.gmra.mrb[0].mxu0 %v588
      %v667 = vpop.f32.mrb[0].mxu0
      %v668 = vadd.f32 0.0, %v667
      %v669 = vpop.f32.mrb[0].mxu0
      %v670 = vpop.f32.mrb[0].mxu0
      %v671 = vadd.f32 0.0, %v670
      %v672 = vpop.f32.mrb[0].mxu0
      %673 = vmatprep.mubr.bf16.mxu0 0
      %674 = vmatmul.mubr.bf16.gmra.mrb[0].mxu0 %v591
      %v675 = vpop.f32.mrb[0].mxu0
      %v676 = vadd.f32 0.0, %v675
      %v677 = vpop.f32.mrb[0].mxu0
      %v678 = vpop.f32.mrb[0].mxu0
      %v679 = vadd.f32 0.0, %v678
      %v680 = vpop.f32.mrb[0].mxu0
      %681 = vmatprep.mubr.bf16.mxu0 0
      %682 = vmatmul.mubr.bf16.gmra.mrb[0].mxu0 %v594
      %v683 = vpop.f32.mrb[0].mxu0
      %v684 = vadd.f32 0.0, %v683
      %v685 = vpop.f32.mrb[0].mxu0
      %v686 = vpop.f32.mrb[0].mxu0
      %v687 = vadd.f32 0.0, %v686
      %v688 = vpop.f32.mrb[0].mxu0
      %689 = vmatprep.mubr.bf16.mxu0 0
      %690 = vmatmul.mubr.bf16.gmra.mrb[0].mxu0 %v597
      %v691 = vpop.f32.mrb[0].mxu0
      %v692 = vadd.f32 0.0, %v691
      %v693 = vpop.f32.mrb[0].mxu0
      %v694 = vpop.f32.mrb[0].mxu0
      %v695 = vadd.f32 0.0, %v694
      %v696 = vpop.f32.mrb[0].mxu0
      %697 = vmatprep.mubr.bf16.mxu0 0
      %698 = vmatmul.mubr.bf16.gmra.mrb[0].mxu0 %v600
      %v699 = vpop.f32.mrb[0].mxu0
      %v700 = vadd.f32 0.0, %v699
      %v701 = vpop.f32.mrb[0].mxu0
      %v702 = vpop.f32.mrb[0].mxu0
      %v703 = vadd.f32 0.0, %v702
      %v704 = vpop.f32.mrb[0].mxu0
      %705 = vmatprep.mubr.bf16.mxu0 0
      %706 = vmatmul.mubr.bf16.gmra.mrb[0].mxu0 %v603
      %v707 = vpop.f32.mrb[0].mxu0
      %v708 = vadd.f32 0.0, %v707
      %v709 = vpop.f32.mrb[0].mxu0
      %v710 = vpop.f32.mrb[0].mxu0
      %v711 = vadd.f32 0.0, %v710
      %v712 = vpop.f32.mrb[0].mxu0
      %713 = vdwg.mxu0
      %v714 = vadd.f32 %v574, %v644
      %v715 = vadd.f32 %v574, %v647
      %v716 = vadd.f32 %v574, %v652
      %v717 = vadd.f32 %v574, %v655
      %v718 = vadd.f32 %v574, %v660
      %v719 = vadd.f32 %v574, %v663
      %v720 = vadd.f32 %v574, %v668
      %v721 = vadd.f32 %v574, %v671
      %v722 = vadd.f32 %v574, %v676
      %v723 = vadd.f32 %v574, %v679
      %v724 = vadd.f32 %v574, %v684
      %v725 = vadd.f32 %v574, %v687
      %v726 = vadd.f32 %v574, %v692
      %v727 = vadd.f32 %v574, %v695
      %v728 = vadd.f32 %v574, %v700
      %v729 = vadd.f32 %v574, %v703
      %v730 = vadd.f32 %v574, %v708
      %v731 = vadd.f32 %v574, %v711
      %s732 = scalar_lea.vmem %s4, 4
      %v733 = vld [vmem:[%s732] sm:$0xf]
      %vm734 = vsmask.f32 7424
      %v735 = vshrl.u32 %v557, 16
      %v737 = vshll.u32 %v557, 16
      %v739 = vrot.slane %v737, 1
      %v740 = vor.u32 %v735, %v739
      %v741 = vshll.u32 %v558, 16
      %v743 = vrot.slane %v741, 1
      %v744 = vsel %vm734, %v740, %v743
      %v745 = vshrl.u32 %v558, 16
      %v747 = vor.u32 %v745, %v743
      %v748 = vshll.u32 %v559, 16
      %v750 = vrot.slane %v748, 1
      %v751 = vsel %vm734, %v747, %v750
      %v752 = vshrl.u32 %v559, 16
      %v754 = vor.u32 %v752, %v750
      %v755 = vshll.u32 %v560, 16
      %v757 = vrot.slane %v755, 1
      %v758 = vsel %vm734, %v754, %v757
      %v759 = vshrl.u32 %v560, 16
      %v761 = vor.u32 %v759, %v757
      %v762 = vshll.u32 %v561, 16
      %v764 = vrot.slane %v762, 1
      %v765 = vsel %vm734, %v761, %v764
      %v766 = vshrl.u32 %v561, 16
      %v768 = vor.u32 %v766, %v764
      %v769 = vshll.u32 %v562, 16
      %v771 = vrot.slane %v769, 1
      %v772 = vsel %vm734, %v768, %v771
      %v773 = vshrl.u32 %v562, 16
      %v775 = vor.u32 %v773, %v771
      %v776 = vshll.u32 %v563, 16
      %v778 = vrot.slane %v776, 1
      %v779 = vsel %vm734, %v775, %v778
      %v780 = vshrl.u32 %v563, 16
      %v782 = vor.u32 %v780, %v778
      %v783 = vshll.u32 %v564, 16
      %v785 = vrot.slane %v783, 1
      %v786 = vsel %vm734, %v782, %v785
      %v787 = vshrl.u32 %v564, 16
      %v789 = vor.u32 %v787, %v785
      %v790 = vshll.u32 %v565, 16
      %v792 = vrot.slane %v790, 1
      %v793 = vsel %vm734, %v789, %v792
      %v794 = vshrl.u32 %v565, 16
      %v796 = vor.u32 %v794, %v792
      %v798 = vshll.u32 %v566, 16
      %v800 = vrot.slane %v798, 1
      %v801 = vsel %vm734, %v796, %v800
      %v803 = vsel %vm577, %v744, 0
      %v806 = vsel %vm577, %v751, 0
      %v809 = vsel %vm577, %v758, 0
      %v812 = vsel %vm577, %v765, 0
      %v815 = vsel %vm577, %v772, 0
      %v818 = vsel %vm577, %v779, 0
      %v821 = vsel %vm577, %v786, 0
      %v824 = vsel %vm577, %v793, 0
      %v827 = vsel %vm577, %v801, 0
      %v830 = vsel %vm605, %v733, 0
      %832 = vmatprep.subr.bf16.mxu0 0
      %833 = vmatpush1.bf16.msra.mxu0 %v830
      %834 = vmatprep.subr.bf16.mxu0 0
      %835 = vmatpush1.bf16.msra.mxu0 0
      %836 = vmatprep.subr.bf16.mxu0 0
      %837 = vmatpush1.bf16.msra.mxu0 0
      %838 = vmatprep.subr.bf16.mxu0 0
      %839 = vmatpush1.bf16.msra.mxu0 0
      %840 = vmatprep.subr.bf16.mxu0 0
      %841 = vmatpush1.bf16.msra.mxu0 0
      %842 = vmatprep.subr.bf16.mxu0 0
      %843 = vmatpush1.bf16.msra.mxu0 0
      %844 = vmatprep.subr.bf16.mxu0 0
      %845 = vmatpush1.bf16.msra.mxu0 0
      %846 = vmatprep.subr.bf16.mxu0 0
      %847 = vmatpush1.bf16.msra.mxu0 0
      %848 = vmatprep.subr.bf16.mxu0 0
      %849 = vmatpush1.bf16.msra.mxu0 0
      %850 = vmatprep.subr.bf16.mxu0 0
      %851 = vmatpush1.bf16.msra.mxu0 0
      %852 = vmatprep.subr.bf16.mxu0 0
      %853 = vmatpush1.bf16.msra.mxu0 0
      %854 = vmatprep.subr.bf16.mxu0 0
      %855 = vmatpush1.bf16.msra.mxu0 0
      %856 = vmatprep.subr.bf16.mxu0 0
      %857 = vmatpush1.bf16.msra.mxu0 0
      %858 = vmatprep.subr.bf16.mxu0 0
      %859 = vmatpush1.bf16.msra.mxu0 0
      %860 = vmatprep.subr.bf16.mxu0 0
      %861 = vmatpush1.bf16.msra.mxu0 0
      %862 = vmatprep.subr.bf16.mxu0 0
      %863 = vmatpush1.bf16.msra.mxu0 0
      %864 = vmatprep.mubr.bf16.mxu0 0
      %865 = vmatmul.mubr.bf16.gmra.mrb[0].mxu0 %v803
      %v866 = vpop.f32.mrb[0].mxu0
      %v867 = vadd.f32 0.0, %v866
      %v868 = vpop.f32.mrb[0].mxu0
      %v869 = vpop.f32.mrb[0].mxu0
      %v870 = vadd.f32 0.0, %v869
      %v871 = vpop.f32.mrb[0].mxu0
      %872 = vmatprep.mubr.bf16.mxu0 0
      %873 = vmatmul.mubr.bf16.gmra.mrb[0].mxu0 %v806
      %v874 = vpop.f32.mrb[0].mxu0
      %v875 = vadd.f32 0.0, %v874
      %v876 = vpop.f32.mrb[0].mxu0
      %v877 = vpop.f32.mrb[0].mxu0
      %v878 = vadd.f32 0.0, %v877
      %v879 = vpop.f32.mrb[0].mxu0
      %880 = vmatprep.mubr.bf16.mxu0 0
      %881 = vmatmul.mubr.bf16.gmra.mrb[0].mxu0 %v809
      %v882 = vpop.f32.mrb[0].mxu0
      %v883 = vadd.f32 0.0, %v882
      %v884 = vpop.f32.mrb[0].mxu0
      %v885 = vpop.f32.mrb[0].mxu0
      %v886 = vadd.f32 0.0, %v885
      %v887 = vpop.f32.mrb[0].mxu0
      %888 = vmatprep.mubr.bf16.mxu0 0
      %889 = vmatmul.mubr.bf16.gmra.mrb[0].mxu0 %v812
      %v890 = vpop.f32.mrb[0].mxu0
      %v891 = vadd.f32 0.0, %v890
      %v892 = vpop.f32.mrb[0].mxu0
      %v893 = vpop.f32.mrb[0].mxu0
      %v894 = vadd.f32 0.0, %v893
      %v895 = vpop.f32.mrb[0].mxu0
      %896 = vmatprep.mubr.bf16.mxu0 0
      %897 = vmatmul.mubr.bf16.gmra.mrb[0].mxu0 %v815
      %v898 = vpop.f32.mrb[0].mxu0
      %v899 = vadd.f32 0.0, %v898
      %v900 = vpop.f32.mrb[0].mxu0
      %v901 = vpop.f32.mrb[0].mxu0
      %v902 = vadd.f32 0.0, %v901
      %v903 = vpop.f32.mrb[0].mxu0
      %904 = vmatprep.mubr.bf16.mxu0 0
      %905 = vmatmul.mubr.bf16.gmra.mrb[0].mxu0 %v818
      %v906 = vpop.f32.mrb[0].mxu0
      %v907 = vadd.f32 0.0, %v906
      %v908 = vpop.f32.mrb[0].mxu0
      %v909 = vpop.f32.mrb[0].mxu0
      %v910 = vadd.f32 0.0, %v909
      %v911 = vpop.f32.mrb[0].mxu0
      %912 = vmatprep.mubr.bf16.mxu0 0
      %913 = vmatmul.mubr.bf16.gmra.mrb[0].mxu0 %v821
      %v914 = vpop.f32.mrb[0].mxu0
      %v915 = vadd.f32 0.0, %v914
      %v916 = vpop.f32.mrb[0].mxu0
      %v917 = vpop.f32.mrb[0].mxu0
      %v918 = vadd.f32 0.0, %v917
      %v919 = vpop.f32.mrb[0].mxu0
      %920 = vmatprep.mubr.bf16.mxu0 0
      %921 = vmatmul.mubr.bf16.gmra.mrb[0].mxu0 %v824
      %v922 = vpop.f32.mrb[0].mxu0
      %v923 = vadd.f32 0.0, %v922
      %v924 = vpop.f32.mrb[0].mxu0
      %v925 = vpop.f32.mrb[0].mxu0
      %v926 = vadd.f32 0.0, %v925
      %v927 = vpop.f32.mrb[0].mxu0
      %928 = vmatprep.mubr.bf16.mxu0 0
      %929 = vmatmul.mubr.bf16.gmra.mrb[0].mxu0 %v827
      %v930 = vpop.f32.mrb[0].mxu0
      %v931 = vadd.f32 0.0, %v930
      %v932 = vpop.f32.mrb[0].mxu0
      %v933 = vpop.f32.mrb[0].mxu0
      %v934 = vadd.f32 0.0, %v933
      %v935 = vpop.f32.mrb[0].mxu0
      %936 = vdwg.mxu0
      %v937 = vadd.f32 %v714, %v867
      %v938 = vadd.f32 %v715, %v870
      %v939 = vadd.f32 %v716, %v875
      %v940 = vadd.f32 %v717, %v878
      %v941 = vadd.f32 %v718, %v883
      %v942 = vadd.f32 %v719, %v886
      %v943 = vadd.f32 %v720, %v891
      %v944 = vadd.f32 %v721, %v894
      %v945 = vadd.f32 %v722, %v899
      %v946 = vadd.f32 %v723, %v902
      %v947 = vadd.f32 %v724, %v907
      %v948 = vadd.f32 %v725, %v910
      %v949 = vadd.f32 %v726, %v915
      %v950 = vadd.f32 %v727, %v918
      %v951 = vadd.f32 %v728, %v923
      %v952 = vadd.f32 %v729, %v926
      %v953 = vadd.f32 %v730, %v931
      %v954 = vadd.f32 %v731, %v934
      %s955 = scalar_lea.vmem %s4, 8
      %v956 = vld [vmem:[%s955] sm:$0xf]
      %vm967 = vcmask 1046528
      %v968 = vrot.slane %v557, 1
      %v969 = vrot.slane %v558, 1
      %v970 = vsel %vm967, %v968, %v969
      %v971 = vrot.slane %v559, 1
      %v972 = vsel %vm967, %v969, %v971
      %v973 = vrot.slane %v560, 1
      %v974 = vsel %vm967, %v971, %v973
      %v975 = vrot.slane %v561, 1
      %v976 = vsel %vm967, %v973, %v975
      %v977 = vrot.slane %v562, 1
      %v978 = vsel %vm967, %v975, %v977
      %v979 = vrot.slane %v563, 1
      %v980 = vsel %vm967, %v977, %v979
      %v981 = vrot.slane %v564, 1
      %v982 = vsel %vm967, %v979, %v981
      %v983 = vrot.slane %v565, 1
      %v984 = vsel %vm967, %v981, %v983
      %v985 = vrot.slane %v566, 1
      %v986 = vsel %vm967, %v983, %v985
      %v988 = vsel %vm577, %v970, 0
      %v991 = vsel %vm577, %v972, 0
      %v994 = vsel %vm577, %v974, 0
      %v997 = vsel %vm577, %v976, 0
      %v1000 = vsel %vm577, %v978, 0
      %v1003 = vsel %vm577, %v980, 0
      %v1006 = vsel %vm577, %v982, 0
      %v1009 = vsel %vm577, %v984, 0
      %v1012 = vsel %vm577, %v986, 0
      %v1015 = vsel %vm605, %v956, 0
      %1017 = vmatprep.subr.bf16.mxu0 0
      %1018 = vmatpush1.bf16.msra.mxu0 %v1015
      %1019 = vmatprep.subr.bf16.mxu0 0
      %1020 = vmatpush1.bf16.msra.mxu0 0
      %1021 = vmatprep.subr.bf16.mxu0 0
      %1022 = vmatpush1.bf16.msra.mxu0 0
      %1023 = vmatprep.subr.bf16.mxu0 0
      %1024 = vmatpush1.bf16.msra.mxu0 0
      %1025 = vmatprep.subr.bf16.mxu0 0
      %1026 = vmatpush1.bf16.msra.mxu0 0
      %1027 = vmatprep.subr.bf16.mxu0 0
      %1028 = vmatpush1.bf16.msra.mxu0 0
      %1029 = vmatprep.subr.bf16.mxu0 0
      %1030 = vmatpush1.bf16.msra.mxu0 0
      %1031 = vmatprep.subr.bf16.mxu0 0
      %1032 = vmatpush1.bf16.msra.mxu0 0
      %1033 = vmatprep.subr.bf16.mxu0 0
      %1034 = vmatpush1.bf16.msra.mxu0 0
      %1035 = vmatprep.subr.bf16.mxu0 0
      %1036 = vmatpush1.bf16.msra.mxu0 0
      %1037 = vmatprep.subr.bf16.mxu0 0
      %1038 = vmatpush1.bf16.msra.mxu0 0
      %1039 = vmatprep.subr.bf16.mxu0 0
      %1040 = vmatpush1.bf16.msra.mxu0 0
      %1041 = vmatprep.subr.bf16.mxu0 0
      %1042 = vmatpush1.bf16.msra.mxu0 0
      %1043 = vmatprep.subr.bf16.mxu0 0
      %1044 = vmatpush1.bf16.msra.mxu0 0
      %1045 = vmatprep.subr.bf16.mxu0 0
      %1046 = vmatpush1.bf16.msra.mxu0 0
      %1047 = vmatprep.subr.bf16.mxu0 0
      %1048 = vmatpush1.bf16.msra.mxu0 0
      %1049 = vmatprep.mubr.bf16.mxu0 0
      %1050 = vmatmul.mubr.bf16.gmra.mrb[0].mxu0 %v988
      %v1051 = vpop.f32.mrb[0].mxu0
      %v1052 = vadd.f32 0.0, %v1051
      %v1053 = vpop.f32.mrb[0].mxu0
      %v1054 = vpop.f32.mrb[0].mxu0
      %v1055 = vadd.f32 0.0, %v1054
      %v1056 = vpop.f32.mrb[0].mxu0
      %1057 = vmatprep.mubr.bf16.mxu0 0
      %1058 = vmatmul.mubr.bf16.gmra.mrb[0].mxu0 %v991
      %v1059 = vpop.f32.mrb[0].mxu0
      %v1060 = vadd.f32 0.0, %v1059
      %v1061 = vpop.f32.mrb[0].mxu0
      %v1062 = vpop.f32.mrb[0].mxu0
      %v1063 = vadd.f32 0.0, %v1062
      %v1064 = vpop.f32.mrb[0].mxu0
      %1065 = vmatprep.mubr.bf16.mxu0 0
      %1066 = vmatmul.mubr.bf16.gmra.mrb[0].mxu0 %v994
      %v1067 = vpop.f32.mrb[0].mxu0
      %v1068 = vadd.f32 0.0, %v1067
      %v1069 = vpop.f32.mrb[0].mxu0
      %v1070 = vpop.f32.mrb[0].mxu0
      %v1071 = vadd.f32 0.0, %v1070
      %v1072 = vpop.f32.mrb[0].mxu0
      %1073 = vmatprep.mubr.bf16.mxu0 0
      %1074 = vmatmul.mubr.bf16.gmra.mrb[0].mxu0 %v997
      %v1075 = vpop.f32.mrb[0].mxu0
      %v1076 = vadd.f32 0.0, %v1075
      %v1077 = vpop.f32.mrb[0].mxu0
      %v1078 = vpop.f32.mrb[0].mxu0
      %v1079 = vadd.f32 0.0, %v1078
      %v1080 = vpop.f32.mrb[0].mxu0
      %1081 = vmatprep.mubr.bf16.mxu0 0
      %1082 = vmatmul.mubr.bf16.gmra.mrb[0].mxu0 %v1000
      %v1083 = vpop.f32.mrb[0].mxu0
      %v1084 = vadd.f32 0.0, %v1083
      %v1085 = vpop.f32.mrb[0].mxu0
      %v1086 = vpop.f32.mrb[0].mxu0
      %v1087 = vadd.f32 0.0, %v1086
      %v1088 = vpop.f32.mrb[0].mxu0
      %1089 = vmatprep.mubr.bf16.mxu0 0
      %1090 = vmatmul.mubr.bf16.gmra.mrb[0].mxu0 %v1003
      %v1091 = vpop.f32.mrb[0].mxu0
      %v1092 = vadd.f32 0.0, %v1091
      %v1093 = vpop.f32.mrb[0].mxu0
      %v1094 = vpop.f32.mrb[0].mxu0
      %v1095 = vadd.f32 0.0, %v1094
      %v1096 = vpop.f32.mrb[0].mxu0
      %1097 = vmatprep.mubr.bf16.mxu0 0
      %1098 = vmatmul.mubr.bf16.gmra.mrb[0].mxu0 %v1006
      %v1099 = vpop.f32.mrb[0].mxu0
      %v1100 = vadd.f32 0.0, %v1099
      %v1101 = vpop.f32.mrb[0].mxu0
      %v1102 = vpop.f32.mrb[0].mxu0
      %v1103 = vadd.f32 0.0, %v1102
      %v1104 = vpop.f32.mrb[0].mxu0
      %1105 = vmatprep.mubr.bf16.mxu0 0
      %1106 = vmatmul.mubr.bf16.gmra.mrb[0].mxu0 %v1009
      %v1107 = vpop.f32.mrb[0].mxu0
      %v1108 = vadd.f32 0.0, %v1107
      %v1109 = vpop.f32.mrb[0].mxu0
      %v1110 = vpop.f32.mrb[0].mxu0
      %v1111 = vadd.f32 0.0, %v1110
      %v1112 = vpop.f32.mrb[0].mxu0
      %1113 = vmatprep.mubr.bf16.mxu0 0
      %1114 = vmatmul.mubr.bf16.gmra.mrb[0].mxu0 %v1012
      %v1115 = vpop.f32.mrb[0].mxu0
      %v1116 = vadd.f32 0.0, %v1115
      %v1117 = vpop.f32.mrb[0].mxu0
      %v1118 = vpop.f32.mrb[0].mxu0
      %v1119 = vadd.f32 0.0, %v1118
      %v1120 = vpop.f32.mrb[0].mxu0
      %1121 = vdwg.mxu0
      %v1122 = vadd.f32 %v937, %v1052
      %v1123 = vadd.f32 %v938, %v1055
      %v1124 = vadd.f32 %v939, %v1060
      %v1125 = vadd.f32 %v940, %v1063
      %v1126 = vadd.f32 %v941, %v1068
      %v1127 = vadd.f32 %v942, %v1071
      %v1128 = vadd.f32 %v943, %v1076
      %v1129 = vadd.f32 %v944, %v1079
      %v1130 = vadd.f32 %v945, %v1084
      %v1131 = vadd.f32 %v946, %v1087
      %v1132 = vadd.f32 %v947, %v1092
      %v1133 = vadd.f32 %v948, %v1095
      %v1134 = vadd.f32 %v949, %v1100
      %v1135 = vadd.f32 %v950, %v1103
      %v1136 = vadd.f32 %v951, %v1108
      %v1137 = vadd.f32 %v952, %v1111
      %v1138 = vadd.f32 %v953, %v1116
      %v1139 = vadd.f32 %v954, %v1119
      %s1140 = scalar_lea.vmem %s4, 12
      %v1141 = vld [vmem:[%s1140] sm:$0xf]
      %v1143 = vrot.slane %v567, 1
      %v1144 = vsel %vm967, %v985, %v1143
      %v1146 = vsel %vm577, %v1144, 0
      %v1149 = vsel %vm605, %v1141, 0
      %1151 = vmatprep.subr.bf16.mxu0 0
      %1152 = vmatpush1.bf16.msra.mxu0 %v1149
      %1153 = vmatprep.subr.bf16.mxu0 0
      %1154 = vmatpush1.bf16.msra.mxu0 0
      %1155 = vmatprep.subr.bf16.mxu0 0
      %1156 = vmatpush1.bf16.msra.mxu0 0
      %1157 = vmatprep.subr.bf16.mxu0 0
      %1158 = vmatpush1.bf16.msra.mxu0 0
      %1159 = vmatprep.subr.bf16.mxu0 0
      %1160 = vmatpush1.bf16.msra.mxu0 0
      %1161 = vmatprep.subr.bf16.mxu0 0
      %1162 = vmatpush1.bf16.msra.mxu0 0
      %1163 = vmatprep.subr.bf16.mxu0 0
      %1164 = vmatpush1.bf16.msra.mxu0 0
      %1165 = vmatprep.subr.bf16.mxu0 0
      %1166 = vmatpush1.bf16.msra.mxu0 0
      %1167 = vmatprep.subr.bf16.mxu0 0
      %1168 = vmatpush1.bf16.msra.mxu0 0
      %1169 = vmatprep.subr.bf16.mxu0 0
      %1170 = vmatpush1.bf16.msra.mxu0 0
      %1171 = vmatprep.subr.bf16.mxu0 0
      %1172 = vmatpush1.bf16.msra.mxu0 0
      %1173 = vmatprep.subr.bf16.mxu0 0
      %1174 = vmatpush1.bf16.msra.mxu0 0
      %1175 = vmatprep.subr.bf16.mxu0 0
      %1176 = vmatpush1.bf16.msra.mxu0 0
      %1177 = vmatprep.subr.bf16.mxu0 0
      %1178 = vmatpush1.bf16.msra.mxu0 0
      %1179 = vmatprep.subr.bf16.mxu0 0
      %1180 = vmatpush1.bf16.msra.mxu0 0
      %1181 = vmatprep.subr.bf16.mxu0 0
      %1182 = vmatpush1.bf16.msra.mxu0 0
      %1183 = vmatprep.mubr.bf16.mxu0 0
      %1184 = vmatmul.mubr.bf16.gmra.mrb[0].mxu0 %v991
      %v1185 = vpop.f32.mrb[0].mxu0
      %v1186 = vadd.f32 0.0, %v1185
      %v1187 = vpop.f32.mrb[0].mxu0
      %v1188 = vpop.f32.mrb[0].mxu0
      %v1189 = vadd.f32 0.0, %v1188
      %v1190 = vpop.f32.mrb[0].mxu0
      %1191 = vmatprep.mubr.bf16.mxu0 0
      %1192 = vmatmul.mubr.bf16.gmra.mrb[0].mxu0 %v994
      %v1193 = vpop.f32.mrb[0].mxu0
      %v1194 = vadd.f32 0.0, %v1193
      %v1195 = vpop.f32.mrb[0].mxu0
      %v1196 = vpop.f32.mrb[0].mxu0
      %v1197 = vadd.f32 0.0, %v1196
      %v1198 = vpop.f32.mrb[0].mxu0
      %1199 = vmatprep.mubr.bf16.mxu0 0
      %1200 = vmatmul.mubr.bf16.gmra.mrb[0].mxu0 %v997
      %v1201 = vpop.f32.mrb[0].mxu0
      %v1202 = vadd.f32 0.0, %v1201
      %v1203 = vpop.f32.mrb[0].mxu0
      %v1204 = vpop.f32.mrb[0].mxu0
      %v1205 = vadd.f32 0.0, %v1204
      %v1206 = vpop.f32.mrb[0].mxu0
      %1207 = vmatprep.mubr.bf16.mxu0 0
      %1208 = vmatmul.mubr.bf16.gmra.mrb[0].mxu0 %v1000
      %v1209 = vpop.f32.mrb[0].mxu0
      %v1210 = vadd.f32 0.0, %v1209
      %v1211 = vpop.f32.mrb[0].mxu0
      %v1212 = vpop.f32.mrb[0].mxu0
      %v1213 = vadd.f32 0.0, %v1212
      %v1214 = vpop.f32.mrb[0].mxu0
      %1215 = vmatprep.mubr.bf16.mxu0 0
      %1216 = vmatmul.mubr.bf16.gmra.mrb[0].mxu0 %v1003
      %v1217 = vpop.f32.mrb[0].mxu0
      %v1218 = vadd.f32 0.0, %v1217
      %v1219 = vpop.f32.mrb[0].mxu0
      %v1220 = vpop.f32.mrb[0].mxu0
      %v1221 = vadd.f32 0.0, %v1220
      %v1222 = vpop.f32.mrb[0].mxu0
      %1223 = vmatprep.mubr.bf16.mxu0 0
      %1224 = vmatmul.mubr.bf16.gmra.mrb[0].mxu0 %v1006
      %v1225 = vpop.f32.mrb[0].mxu0
      %v1226 = vadd.f32 0.0, %v1225
      %v1227 = vpop.f32.mrb[0].mxu0
      %v1228 = vpop.f32.mrb[0].mxu0
      %v1229 = vadd.f32 0.0, %v1228
      %v1230 = vpop.f32.mrb[0].mxu0
      %1231 = vmatprep.mubr.bf16.mxu0 0
      %1232 = vmatmul.mubr.bf16.gmra.mrb[0].mxu0 %v1009
      %v1233 = vpop.f32.mrb[0].mxu0
      %v1234 = vadd.f32 0.0, %v1233
      %v1235 = vpop.f32.mrb[0].mxu0
      %v1236 = vpop.f32.mrb[0].mxu0
      %v1237 = vadd.f32 0.0, %v1236
      %v1238 = vpop.f32.mrb[0].mxu0
      %1239 = vmatprep.mubr.bf16.mxu0 0
      %1240 = vmatmul.mubr.bf16.gmra.mrb[0].mxu0 %v1012
      %v1241 = vpop.f32.mrb[0].mxu0
      %v1242 = vadd.f32 0.0, %v1241
      %v1243 = vpop.f32.mrb[0].mxu0
      %v1244 = vpop.f32.mrb[0].mxu0
      %v1245 = vadd.f32 0.0, %v1244
      %v1246 = vpop.f32.mrb[0].mxu0
      %1247 = vmatprep.mubr.bf16.mxu0 0
      %1248 = vmatmul.mubr.bf16.gmra.mrb[0].mxu0 %v1146
      %v1249 = vpop.f32.mrb[0].mxu0
      %v1250 = vadd.f32 0.0, %v1249
      %v1251 = vpop.f32.mrb[0].mxu0
      %v1252 = vpop.f32.mrb[0].mxu0
      %v1253 = vadd.f32 0.0, %v1252
      %v1254 = vpop.f32.mrb[0].mxu0
      %1255 = vdwg.mxu0
      %v1256 = vadd.f32 %v1122, %v1186
      %v1257 = vadd.f32 %v1123, %v1189
      %v1258 = vadd.f32 %v1124, %v1194
      %v1259 = vadd.f32 %v1125, %v1197
      %v1260 = vadd.f32 %v1126, %v1202
      %v1261 = vadd.f32 %v1127, %v1205
      %v1262 = vadd.f32 %v1128, %v1210
      %v1263 = vadd.f32 %v1129, %v1213
      %v1264 = vadd.f32 %v1130, %v1218
      %v1265 = vadd.f32 %v1131, %v1221
      %v1266 = vadd.f32 %v1132, %v1226
      %v1267 = vadd.f32 %v1133, %v1229
      %v1268 = vadd.f32 %v1134, %v1234
      %v1269 = vadd.f32 %v1135, %v1237
      %v1270 = vadd.f32 %v1136, %v1242
      %v1271 = vadd.f32 %v1137, %v1245
      %v1272 = vadd.f32 %v1138, %v1250
      %v1273 = vadd.f32 %v1139, %v1253
      %s1274 = scalar_lea.vmem %s4, 16
      %v1275 = vld [vmem:[%s1274] sm:$0xf]
      %vm1276 = vsmask.f32 6400
      %v1277 = vrot.slane %v745, 1
      %v1278 = vrot.slane %v741, 2
      %v1279 = vor.u32 %v1277, %v1278
      %v1280 = vrot.slane %v752, 1
      %v1281 = vrot.slane %v748, 2
      %v1282 = vor.u32 %v1280, %v1281
      %v1283 = vsel %vm1276, %v1279, %v1282
      %v1284 = vrot.slane %v759, 1
      %v1285 = vrot.slane %v755, 2
      %v1286 = vor.u32 %v1284, %v1285
      %v1287 = vsel %vm1276, %v1282, %v1286
      %v1288 = vrot.slane %v766, 1
      %v1289 = vrot.slane %v762, 2
      %v1290 = vor.u32 %v1288, %v1289
      %v1291 = vsel %vm1276, %v1286, %v1290
      %v1292 = vrot.slane %v773, 1
      %v1293 = vrot.slane %v769, 2
      %v1294 = vor.u32 %v1292, %v1293
      %v1295 = vsel %vm1276, %v1290, %v1294
      %v1296 = vrot.slane %v780, 1
      %v1297 = vrot.slane %v776, 2
      %v1298 = vor.u32 %v1296, %v1297
      %v1299 = vsel %vm1276, %v1294, %v1298
      %v1300 = vrot.slane %v787, 1
      %v1301 = vrot.slane %v783, 2
      %v1302 = vor.u32 %v1300, %v1301
      %v1303 = vsel %vm1276, %v1298, %v1302
      %v1304 = vrot.slane %v794, 1
      %v1305 = vrot.slane %v790, 2
      %v1306 = vor.u32 %v1304, %v1305
      %v1307 = vsel %vm1276, %v1302, %v1306
      %v1308 = vshrl.u32 %v566, 16
      %v1310 = vrot.slane %v1308, 1
      %v1311 = vrot.slane %v798, 2
      %v1312 = vor.u32 %v1310, %v1311
      %v1313 = vsel %vm1276, %v1306, %v1312
      %v1315 = vshrl.u32 %v567, 16
      %v1317 = vrot.slane %v1315, 1
      %v1318 = vshll.u32 %v567, 16
      %v1320 = vrot.slane %v1318, 2
      %v1321 = vor.u32 %v1317, %v1320
      %v1322 = vsel %vm1276, %v1312, %v1321
      %v1324 = vsel %vm577, %v1283, 0
      %v1327 = vsel %vm577, %v1287, 0
      %v1330 = vsel %vm577, %v1291, 0
      %v1333 = vsel %vm577, %v1295, 0
      %v1336 = vsel %vm577, %v1299, 0
      %v1339 = vsel %vm577, %v1303, 0
      %v1342 = vsel %vm577, %v1307, 0
      %v1345 = vsel %vm577, %v1313, 0
      %v1348 = vsel %vm577, %v1322, 0
      %v1351 = vsel %vm605, %v1275, 0
      %1353 = vmatprep.subr.bf16.mxu0 0
      %1354 = vmatpush1.bf16.msra.mxu0 %v1351
      %1355 = vmatprep.subr.bf16.mxu0 0
      %1356 = vmatpush1.bf16.msra.mxu0 0
      %1357 = vmatprep.subr.bf16.mxu0 0
      %1358 = vmatpush1.bf16.msra.mxu0 0
      %1359 = vmatprep.subr.bf16.mxu0 0
      %1360 = vmatpush1.bf16.msra.mxu0 0
      %1361 = vmatprep.subr.bf16.mxu0 0
      %1362 = vmatpush1.bf16.msra.mxu0 0
      %1363 = vmatprep.subr.bf16.mxu0 0
      %1364 = vmatpush1.bf16.msra.mxu0 0
      %1365 = vmatprep.subr.bf16.mxu0 0
      %1366 = vmatpush1.bf16.msra.mxu0 0
      %1367 = vmatprep.subr.bf16.mxu0 0
      %1368 = vmatpush1.bf16.msra.mxu0 0
      %1369 = vmatprep.subr.bf16.mxu0 0
      %1370 = vmatpush1.bf16.msra.mxu0 0
      %1371 = vmatprep.subr.bf16.mxu0 0
      %1372 = vmatpush1.bf16.msra.mxu0 0
      %1373 = vmatprep.subr.bf16.mxu0 0
      %1374 = vmatpush1.bf16.msra.mxu0 0
      %1375 = vmatprep.subr.bf16.mxu0 0
      %1376 = vmatpush1.bf16.msra.mxu0 0
      %1377 = vmatprep.subr.bf16.mxu0 0
      %1378 = vmatpush1.bf16.msra.mxu0 0
      %1379 = vmatprep.subr.bf16.mxu0 0
      %1380 = vmatpush1.bf16.msra.mxu0 0
      %1381 = vmatprep.subr.bf16.mxu0 0
      %1382 = vmatpush1.bf16.msra.mxu0 0
      %1383 = vmatprep.subr.bf16.mxu0 0
      %1384 = vmatpush1.bf16.msra.mxu0 0
      %1385 = vmatprep.mubr.bf16.mxu0 0
      %1386 = vmatmul.mubr.bf16.gmra.mrb[0].mxu0 %v1324
      %v1387 = vpop.f32.mrb[0].mxu0
      %v1388 = vadd.f32 0.0, %v1387
      %v1389 = vpop.f32.mrb[0].mxu0
      %v1390 = vpop.f32.mrb[0].mxu0
      %v1391 = vadd.f32 0.0, %v1390
      %v1392 = vpop.f32.mrb[0].mxu0
      %1393 = vmatprep.mubr.bf16.mxu0 0
      %1394 = vmatmul.mubr.bf16.gmra.mrb[0].mxu0 %v1327
      %v1395 = vpop.f32.mrb[0].mxu0
      %v1396 = vadd.f32 0.0, %v1395
      %v1397 = vpop.f32.mrb[0].mxu0
      %v1398 = vpop.f32.mrb[0].mxu0
      %v1399 = vadd.f32 0.0, %v1398
      %v1400 = vpop.f32.mrb[0].mxu0
      %1401 = vmatprep.mubr.bf16.mxu0 0
      %1402 = vmatmul.mubr.bf16.gmra.mrb[0].mxu0 %v1330
      %v1403 = vpop.f32.mrb[0].mxu0
      %v1404 = vadd.f32 0.0, %v1403
      %v1405 = vpop.f32.mrb[0].mxu0
      %v1406 = vpop.f32.mrb[0].mxu0
      %v1407 = vadd.f32 0.0, %v1406
      %v1408 = vpop.f32.mrb[0].mxu0
      %1409 = vmatprep.mubr.bf16.mxu0 0
      %1410 = vmatmul.mubr.bf16.gmra.mrb[0].mxu0 %v1333
      %v1411 = vpop.f32.mrb[0].mxu0
      %v1412 = vadd.f32 0.0, %v1411
      %v1413 = vpop.f32.mrb[0].mxu0
      %v1414 = vpop.f32.mrb[0].mxu0
      %v1415 = vadd.f32 0.0, %v1414
      %v1416 = vpop.f32.mrb[0].mxu0
      %1417 = vmatprep.mubr.bf16.mxu0 0
      %1418 = vmatmul.mubr.bf16.gmra.mrb[0].mxu0 %v1336
      %v1419 = vpop.f32.mrb[0].mxu0
      %v1420 = vadd.f32 0.0, %v1419
      %v1421 = vpop.f32.mrb[0].mxu0
      %v1422 = vpop.f32.mrb[0].mxu0
      %v1423 = vadd.f32 0.0, %v1422
      %v1424 = vpop.f32.mrb[0].mxu0
      %1425 = vmatprep.mubr.bf16.mxu0 0
      %1426 = vmatmul.mubr.bf16.gmra.mrb[0].mxu0 %v1339
      %v1427 = vpop.f32.mrb[0].mxu0
      %v1428 = vadd.f32 0.0, %v1427
      %v1429 = vpop.f32.mrb[0].mxu0
      %v1430 = vpop.f32.mrb[0].mxu0
      %v1431 = vadd.f32 0.0, %v1430
      %v1432 = vpop.f32.mrb[0].mxu0
      %1433 = vmatprep.mubr.bf16.mxu0 0
      %1434 = vmatmul.mubr.bf16.gmra.mrb[0].mxu0 %v1342
      %v1435 = vpop.f32.mrb[0].mxu0
      %v1436 = vadd.f32 0.0, %v1435
      %v1437 = vpop.f32.mrb[0].mxu0
      %v1438 = vpop.f32.mrb[0].mxu0
      %v1439 = vadd.f32 0.0, %v1438
      %v1440 = vpop.f32.mrb[0].mxu0
      %1441 = vmatprep.mubr.bf16.mxu0 0
      %1442 = vmatmul.mubr.bf16.gmra.mrb[0].mxu0 %v1345
      %v1443 = vpop.f32.mrb[0].mxu0
      %v1444 = vadd.f32 0.0, %v1443
      %v1445 = vpop.f32.mrb[0].mxu0
      %v1446 = vpop.f32.mrb[0].mxu0
      %v1447 = vadd.f32 0.0, %v1446
      %v1448 = vpop.f32.mrb[0].mxu0
      %1449 = vmatprep.mubr.bf16.mxu0 0
      %1450 = vmatmul.mubr.bf16.gmra.mrb[0].mxu0 %v1348
      %v1451 = vpop.f32.mrb[0].mxu0
      %v1452 = vadd.f32 0.0, %v1451
      %v1453 = vpop.f32.mrb[0].mxu0
      %v1454 = vpop.f32.mrb[0].mxu0
      %v1455 = vadd.f32 0.0, %v1454
      %v1456 = vpop.f32.mrb[0].mxu0
      %1457 = vdwg.mxu0
      %v1458 = vadd.f32 %v1256, %v1388
      %v1459 = vadd.f32 %v1257, %v1391
      %v1460 = vadd.f32 %v1258, %v1396
      %v1461 = vadd.f32 %v1259, %v1399
      %v1462 = vadd.f32 %v1260, %v1404
      %v1463 = vadd.f32 %v1261, %v1407
      %v1464 = vadd.f32 %v1262, %v1412
      %v1465 = vadd.f32 %v1263, %v1415
      %v1466 = vadd.f32 %v1264, %v1420
      %v1467 = vadd.f32 %v1265, %v1423
      %v1468 = vadd.f32 %v1266, %v1428
      %v1469 = vadd.f32 %v1267, %v1431
      %v1470 = vadd.f32 %v1268, %v1436
      %v1471 = vadd.f32 %v1269, %v1439
      %v1472 = vadd.f32 %v1270, %v1444
      %v1473 = vadd.f32 %v1271, %v1447
      %v1474 = vadd.f32 %v1272, %v1452
      %v1475 = vadd.f32 %v1273, %v1455
      %s1476 = scalar_lea.vmem %s4, 20
      %v1477 = vld [vmem:[%s1476] sm:$0xf]
      %vm1478 = vcmask 1045504
      %v1479 = vrot.slane %v558, 2
      %v1480 = vrot.slane %v559, 2
      %v1481 = vsel %vm1478, %v1479, %v1480
      %v1482 = vrot.slane %v560, 2
      %v1483 = vsel %vm1478, %v1480, %v1482
      %v1484 = vrot.slane %v561, 2
      %v1485 = vsel %vm1478, %v1482, %v1484
      %v1486 = vrot.slane %v562, 2
      %v1487 = vsel %vm1478, %v1484, %v1486
      %v1488 = vrot.slane %v563, 2
      %v1489 = vsel %vm1478, %v1486, %v1488
      %v1490 = vrot.slane %v564, 2
      %v1491 = vsel %vm1478, %v1488, %v1490
      %v1492 = vrot.slane %v565, 2
      %v1493 = vsel %vm1478, %v1490, %v1492
      %v1494 = vrot.slane %v566, 2
      %v1495 = vsel %vm1478, %v1492, %v1494
      %v1496 = vrot.slane %v567, 2
      %v1497 = vsel %vm1478, %v1494, %v1496
      %v1499 = vsel %vm577, %v1481, 0
      %v1502 = vsel %vm577, %v1483, 0
      %v1505 = vsel %vm577, %v1485, 0
      %v1508 = vsel %vm577, %v1487, 0
      %v1511 = vsel %vm577, %v1489, 0
      %v1514 = vsel %vm577, %v1491, 0
      %v1517 = vsel %vm577, %v1493, 0
      %v1520 = vsel %vm577, %v1495, 0
      %v1523 = vsel %vm577, %v1497, 0
      %v1526 = vsel %vm605, %v1477, 0
      %1528 = vmatprep.subr.bf16.mxu0 0
      %1529 = vmatpush1.bf16.msra.mxu0 %v1526
      %1530 = vmatprep.subr.bf16.mxu0 0
      %1531 = vmatpush1.bf16.msra.mxu0 0
      %1532 = vmatprep.subr.bf16.mxu0 0
      %1533 = vmatpush1.bf16.msra.mxu0 0
      %1534 = vmatprep.subr.bf16.mxu0 0
      %1535 = vmatpush1.bf16.msra.mxu0 0
      %1536 = vmatprep.subr.bf16.mxu0 0
      %1537 = vmatpush1.bf16.msra.mxu0 0
      %1538 = vmatprep.subr.bf16.mxu0 0
      %1539 = vmatpush1.bf16.msra.mxu0 0
      %1540 = vmatprep.subr.bf16.mxu0 0
      %1541 = vmatpush1.bf16.msra.mxu0 0
      %1542 = vmatprep.subr.bf16.mxu0 0
      %1543 = vmatpush1.bf16.msra.mxu0 0
      %1544 = vmatprep.subr.bf16.mxu0 0
      %1545 = vmatpush1.bf16.msra.mxu0 0
      %1546 = vmatprep.subr.bf16.mxu0 0
      %1547 = vmatpush1.bf16.msra.mxu0 0
      %1548 = vmatprep.subr.bf16.mxu0 0
      %1549 = vmatpush1.bf16.msra.mxu0 0
      %1550 = vmatprep.subr.bf16.mxu0 0
      %1551 = vmatpush1.bf16.msra.mxu0 0
      %1552 = vmatprep.subr.bf16.mxu0 0
      %1553 = vmatpush1.bf16.msra.mxu0 0
      %1554 = vmatprep.subr.bf16.mxu0 0
      %1555 = vmatpush1.bf16.msra.mxu0 0
      %1556 = vmatprep.subr.bf16.mxu0 0
      %1557 = vmatpush1.bf16.msra.mxu0 0
      %1558 = vmatprep.subr.bf16.mxu0 0
      %1559 = vmatpush1.bf16.msra.mxu0 0
      %1560 = vmatprep.mubr.bf16.mxu0 0
      %1561 = vmatmul.mubr.bf16.gmra.mrb[0].mxu0 %v1499
      %v1562 = vpop.f32.mrb[0].mxu0
      %v1563 = vadd.f32 0.0, %v1562
      %v1564 = vpop.f32.mrb[0].mxu0
      %v1565 = vpop.f32.mrb[0].mxu0
      %v1566 = vadd.f32 0.0, %v1565
      %v1567 = vpop.f32.mrb[0].mxu0
      %1568 = vmatprep.mubr.bf16.mxu0 0
      %1569 = vmatmul.mubr.bf16.gmra.mrb[0].mxu0 %v1502
      %v1570 = vpop.f32.mrb[0].mxu0
      %v1571 = vadd.f32 0.0, %v1570
      %v1572 = vpop.f32.mrb[0].mxu0
      %v1573 = vpop.f32.mrb[0].mxu0
      %v1574 = vadd.f32 0.0, %v1573
      %v1575 = vpop.f32.mrb[0].mxu0
      %1576 = vmatprep.mubr.bf16.mxu0 0
      %1577 = vmatmul.mubr.bf16.gmra.mrb[0].mxu0 %v1505
      %v1578 = vpop.f32.mrb[0].mxu0
      %v1579 = vadd.f32 0.0, %v1578
      %v1580 = vpop.f32.mrb[0].mxu0
      %v1581 = vpop.f32.mrb[0].mxu0
      %v1582 = vadd.f32 0.0, %v1581
      %v1583 = vpop.f32.mrb[0].mxu0
      %1584 = vmatprep.mubr.bf16.mxu0 0
      %1585 = vmatmul.mubr.bf16.gmra.mrb[0].mxu0 %v1508
      %v1586 = vpop.f32.mrb[0].mxu0
      %v1587 = vadd.f32 0.0, %v1586
      %v1588 = vpop.f32.mrb[0].mxu0
      %v1589 = vpop.f32.mrb[0].mxu0
      %v1590 = vadd.f32 0.0, %v1589
      %v1591 = vpop.f32.mrb[0].mxu0
      %1592 = vmatprep.mubr.bf16.mxu0 0
      %1593 = vmatmul.mubr.bf16.gmra.mrb[0].mxu0 %v1511
      %v1594 = vpop.f32.mrb[0].mxu0
      %v1595 = vadd.f32 0.0, %v1594
      %v1596 = vpop.f32.mrb[0].mxu0
      %v1597 = vpop.f32.mrb[0].mxu0
      %v1598 = vadd.f32 0.0, %v1597
      %v1599 = vpop.f32.mrb[0].mxu0
      %1600 = vmatprep.mubr.bf16.mxu0 0
      %1601 = vmatmul.mubr.bf16.gmra.mrb[0].mxu0 %v1514
      %v1602 = vpop.f32.mrb[0].mxu0
      %v1603 = vadd.f32 0.0, %v1602
      %v1604 = vpop.f32.mrb[0].mxu0
      %v1605 = vpop.f32.mrb[0].mxu0
      %v1606 = vadd.f32 0.0, %v1605
      %v1607 = vpop.f32.mrb[0].mxu0
      %1608 = vmatprep.mubr.bf16.mxu0 0
      %1609 = vmatmul.mubr.bf16.gmra.mrb[0].mxu0 %v1517
      %v1610 = vpop.f32.mrb[0].mxu0
      %v1611 = vadd.f32 0.0, %v1610
      %v1612 = vpop.f32.mrb[0].mxu0
      %v1613 = vpop.f32.mrb[0].mxu0
      %v1614 = vadd.f32 0.0, %v1613
      %v1615 = vpop.f32.mrb[0].mxu0
      %1616 = vmatprep.mubr.bf16.mxu0 0
      %1617 = vmatmul.mubr.bf16.gmra.mrb[0].mxu0 %v1520
      %v1618 = vpop.f32.mrb[0].mxu0
      %v1619 = vadd.f32 0.0, %v1618
      %v1620 = vpop.f32.mrb[0].mxu0
      %v1621 = vpop.f32.mrb[0].mxu0
      %v1622 = vadd.f32 0.0, %v1621
      %v1623 = vpop.f32.mrb[0].mxu0
      %1624 = vmatprep.mubr.bf16.mxu0 0
      %1625 = vmatmul.mubr.bf16.gmra.mrb[0].mxu0 %v1523
      %v1626 = vpop.f32.mrb[0].mxu0
      %v1627 = vadd.f32 0.0, %v1626
      %v1628 = vpop.f32.mrb[0].mxu0
      %v1629 = vpop.f32.mrb[0].mxu0
      %v1630 = vadd.f32 0.0, %v1629
      %v1631 = vpop.f32.mrb[0].mxu0
      %1632 = vdwg.mxu0
      %v1633 = vadd.f32 %v1458, %v1563
      %v1634 = vadd.f32 %v1459, %v1566
      %v1635 = vadd.f32 %v1460, %v1571
      %v1636 = vadd.f32 %v1461, %v1574
      %v1637 = vadd.f32 %v1462, %v1579
      %v1638 = vadd.f32 %v1463, %v1582
      %v1639 = vadd.f32 %v1464, %v1587
      %v1640 = vadd.f32 %v1465, %v1590
      %v1641 = vadd.f32 %v1466, %v1595
      %v1642 = vadd.f32 %v1467, %v1598
      %v1643 = vadd.f32 %v1468, %v1603
      %v1644 = vadd.f32 %v1469, %v1606
      %v1645 = vadd.f32 %v1470, %v1611
      %v1646 = vadd.f32 %v1471, %v1614
      %v1647 = vadd.f32 %v1472, %v1619
      %v1648 = vadd.f32 %v1473, %v1622
      %v1649 = vadd.f32 %v1474, %v1627
      %v1650 = vadd.f32 %v1475, %v1630
      %s1651 = scalar_lea.vmem %s4, 24
      %v1652 = vld [vmem:[%s1651] sm:$0xf]
      %v1654 = vrot.slane %v568, 2
      %v1655 = vsel %vm1478, %v1496, %v1654
      %v1657 = vsel %vm577, %v1655, 0
      %v1660 = vsel %vm605, %v1652, 0
      %1662 = vmatprep.subr.bf16.mxu0 0
      %1663 = vmatpush1.bf16.msra.mxu0 %v1660
      %1664 = vmatprep.subr.bf16.mxu0 0
      %1665 = vmatpush1.bf16.msra.mxu0 0
      %1666 = vmatprep.subr.bf16.mxu0 0
      %1667 = vmatpush1.bf16.msra.mxu0 0
      %1668 = vmatprep.subr.bf16.mxu0 0
      %1669 = vmatpush1.bf16.msra.mxu0 0
      %1670 = vmatprep.subr.bf16.mxu0 0
      %1671 = vmatpush1.bf16.msra.mxu0 0
      %1672 = vmatprep.subr.bf16.mxu0 0
      %1673 = vmatpush1.bf16.msra.mxu0 0
      %1674 = vmatprep.subr.bf16.mxu0 0
      %1675 = vmatpush1.bf16.msra.mxu0 0
      %1676 = vmatprep.subr.bf16.mxu0 0
      %1677 = vmatpush1.bf16.msra.mxu0 0
      %1678 = vmatprep.subr.bf16.mxu0 0
      %1679 = vmatpush1.bf16.msra.mxu0 0
      %1680 = vmatprep.subr.bf16.mxu0 0
      %1681 = vmatpush1.bf16.msra.mxu0 0
      %1682 = vmatprep.subr.bf16.mxu0 0
      %1683 = vmatpush1.bf16.msra.mxu0 0
      %1684 = vmatprep.subr.bf16.mxu0 0
      %1685 = vmatpush1.bf16.msra.mxu0 0
      %1686 = vmatprep.subr.bf16.mxu0 0
      %1687 = vmatpush1.bf16.msra.mxu0 0
      %1688 = vmatprep.subr.bf16.mxu0 0
      %1689 = vmatpush1.bf16.msra.mxu0 0
      %1690 = vmatprep.subr.bf16.mxu0 0
      %1691 = vmatpush1.bf16.msra.mxu0 0
      %1692 = vmatprep.subr.bf16.mxu0 0
      %1693 = vmatpush1.bf16.msra.mxu0 0
      %1694 = vmatprep.mubr.bf16.mxu0 0
      %1695 = vmatmul.mubr.bf16.gmra.mrb[0].mxu0 %v1502
      %v1696 = vpop.f32.mrb[0].mxu0
      %v1697 = vadd.f32 0.0, %v1696
      %v1698 = vpop.f32.mrb[0].mxu0
      %v1699 = vpop.f32.mrb[0].mxu0
      %v1700 = vadd.f32 0.0, %v1699
      %v1701 = vpop.f32.mrb[0].mxu0
      %1702 = vmatprep.mubr.bf16.mxu0 0
      %1703 = vmatmul.mubr.bf16.gmra.mrb[0].mxu0 %v1505
      %v1704 = vpop.f32.mrb[0].mxu0
      %v1705 = vadd.f32 0.0, %v1704
      %v1706 = vpop.f32.mrb[0].mxu0
      %v1707 = vpop.f32.mrb[0].mxu0
      %v1708 = vadd.f32 0.0, %v1707
      %v1709 = vpop.f32.mrb[0].mxu0
      %1710 = vmatprep.mubr.bf16.mxu0 0
      %1711 = vmatmul.mubr.bf16.gmra.mrb[0].mxu0 %v1508
      %v1712 = vpop.f32.mrb[0].mxu0
      %v1713 = vadd.f32 0.0, %v1712
      %v1714 = vpop.f32.mrb[0].mxu0
      %v1715 = vpop.f32.mrb[0].mxu0
      %v1716 = vadd.f32 0.0, %v1715
      %v1717 = vpop.f32.mrb[0].mxu0
      %1718 = vmatprep.mubr.bf16.mxu0 0
      %1719 = vmatmul.mubr.bf16.gmra.mrb[0].mxu0 %v1511
      %v1720 = vpop.f32.mrb[0].mxu0
      %v1721 = vadd.f32 0.0, %v1720
      %v1722 = vpop.f32.mrb[0].mxu0
      %v1723 = vpop.f32.mrb[0].mxu0
      %v1724 = vadd.f32 0.0, %v1723
      %v1725 = vpop.f32.mrb[0].mxu0
      %1726 = vmatprep.mubr.bf16.mxu0 0
      %1727 = vmatmul.mubr.bf16.gmra.mrb[0].mxu0 %v1514
      %v1728 = vpop.f32.mrb[0].mxu0
      %v1729 = vadd.f32 0.0, %v1728
      %v1730 = vpop.f32.mrb[0].mxu0
      %v1731 = vpop.f32.mrb[0].mxu0
      %v1732 = vadd.f32 0.0, %v1731
      %v1733 = vpop.f32.mrb[0].mxu0
      %1734 = vmatprep.mubr.bf16.mxu0 0
      %1735 = vmatmul.mubr.bf16.gmra.mrb[0].mxu0 %v1517
      %v1736 = vpop.f32.mrb[0].mxu0
      %v1737 = vadd.f32 0.0, %v1736
      %v1738 = vpop.f32.mrb[0].mxu0
      %v1739 = vpop.f32.mrb[0].mxu0
      %v1740 = vadd.f32 0.0, %v1739
      %v1741 = vpop.f32.mrb[0].mxu0
      %1742 = vmatprep.mubr.bf16.mxu0 0
      %1743 = vmatmul.mubr.bf16.gmra.mrb[0].mxu0 %v1520
      %v1744 = vpop.f32.mrb[0].mxu0
      %v1745 = vadd.f32 0.0, %v1744
      %v1746 = vpop.f32.mrb[0].mxu0
      %v1747 = vpop.f32.mrb[0].mxu0
      %v1748 = vadd.f32 0.0, %v1747
      %v1749 = vpop.f32.mrb[0].mxu0
      %1750 = vmatprep.mubr.bf16.mxu0 0
      %1751 = vmatmul.mubr.bf16.gmra.mrb[0].mxu0 %v1523
      %v1752 = vpop.f32.mrb[0].mxu0
      %v1753 = vadd.f32 0.0, %v1752
      %v1754 = vpop.f32.mrb[0].mxu0
      %v1755 = vpop.f32.mrb[0].mxu0
      %v1756 = vadd.f32 0.0, %v1755
      %v1757 = vpop.f32.mrb[0].mxu0
      %1758 = vmatprep.mubr.bf16.mxu0 0
      %1759 = vmatmul.mubr.bf16.gmra.mrb[0].mxu0 %v1657
      %v1760 = vpop.f32.mrb[0].mxu0
      %v1761 = vadd.f32 0.0, %v1760
      %v1762 = vpop.f32.mrb[0].mxu0
      %v1763 = vpop.f32.mrb[0].mxu0
      %v1764 = vadd.f32 0.0, %v1763
      %v1765 = vpop.f32.mrb[0].mxu0
      %1766 = vdwg.mxu0
      %v1767 = vadd.f32 %v1633, %v1697
      %v1768 = vadd.f32 %v1634, %v1700
      %v1769 = vadd.f32 %v1635, %v1705
      %v1770 = vadd.f32 %v1636, %v1708
      %v1771 = vadd.f32 %v1637, %v1713
      %v1772 = vadd.f32 %v1638, %v1716
      %v1773 = vadd.f32 %v1639, %v1721
      %v1774 = vadd.f32 %v1640, %v1724
      %v1775 = vadd.f32 %v1641, %v1729
      %v1776 = vadd.f32 %v1642, %v1732
      %v1777 = vadd.f32 %v1643, %v1737
      %v1778 = vadd.f32 %v1644, %v1740
      %v1779 = vadd.f32 %v1645, %v1745
      %v1780 = vadd.f32 %v1646, %v1748
      %v1781 = vadd.f32 %v1647, %v1753
      %v1782 = vadd.f32 %v1648, %v1756
      %v1783 = vadd.f32 %v1649, %v1761
      %v1784 = vadd.f32 %v1650, %v1764
      %s1785 = scalar_lea.vmem %s4, 28
      %v1786 = vld [vmem:[%s1785] sm:$0xf]
      %vm1787 = vsmask.f32 5376
      %v1788 = vrot.slane %v752, 2
      %v1789 = vrot.slane %v748, 3
      %v1790 = vor.u32 %v1788, %v1789
      %v1791 = vrot.slane %v759, 2
      %v1792 = vrot.slane %v755, 3
      %v1793 = vor.u32 %v1791, %v1792
      %v1794 = vsel %vm1787, %v1790, %v1793
      %v1795 = vrot.slane %v766, 2
      %v1796 = vrot.slane %v762, 3
      %v1797 = vor.u32 %v1795, %v1796
      %v1798 = vsel %vm1787, %v1793, %v1797
      %v1799 = vrot.slane %v773, 2
      %v1800 = vrot.slane %v769, 3
      %v1801 = vor.u32 %v1799, %v1800
      %v1802 = vsel %vm1787, %v1797, %v1801
      %v1803 = vrot.slane %v780, 2
      %v1804 = vrot.slane %v776, 3
      %v1805 = vor.u32 %v1803, %v1804
      %v1806 = vsel %vm1787, %v1801, %v1805
      %v1807 = vrot.slane %v787, 2
      %v1808 = vrot.slane %v783, 3
      %v1809 = vor.u32 %v1807, %v1808
      %v1810 = vsel %vm1787, %v1805, %v1809
      %v1811 = vrot.slane %v794, 2
      %v1812 = vrot.slane %v790, 3
      %v1813 = vor.u32 %v1811, %v1812
      %v1814 = vsel %vm1787, %v1809, %v1813
      %v1815 = vrot.slane %v1308, 2
      %v1816 = vrot.slane %v798, 3
      %v1817 = vor.u32 %v1815, %v1816
      %v1818 = vsel %vm1787, %v1813, %v1817
      %v1819 = vrot.slane %v1315, 2
      %v1820 = vrot.slane %v1318, 3
      %v1821 = vor.u32 %v1819, %v1820
      %v1822 = vsel %vm1787, %v1817, %v1821
      %v1824 = vshrl.u32 %v568, 16
      %v1826 = vrot.slane %v1824, 2
      %v1827 = vshll.u32 %v568, 16
      %v1829 = vrot.slane %v1827, 3
      %v1830 = vor.u32 %v1826, %v1829
      %v1831 = vsel %vm1787, %v1821, %v1830
      %v1833 = vsel %vm577, %v1794, 0
      %v1836 = vsel %vm577, %v1798, 0
      %v1839 = vsel %vm577, %v1802, 0
      %v1842 = vsel %vm577, %v1806, 0
      %v1845 = vsel %vm577, %v1810, 0
      %v1848 = vsel %vm577, %v1814, 0
      %v1851 = vsel %vm577, %v1818, 0
      %v1854 = vsel %vm577, %v1822, 0
      %v1857 = vsel %vm577, %v1831, 0
      %v1860 = vsel %vm605, %v1786, 0
      %1862 = vmatprep.subr.bf16.mxu0 0
      %1863 = vmatpush1.bf16.msra.mxu0 %v1860
      %1864 = vmatprep.subr.bf16.mxu0 0
      %1865 = vmatpush1.bf16.msra.mxu0 0
      %1866 = vmatprep.subr.bf16.mxu0 0
      %1867 = vmatpush1.bf16.msra.mxu0 0
      %1868 = vmatprep.subr.bf16.mxu0 0
      %1869 = vmatpush1.bf16.msra.mxu0 0
      %1870 = vmatprep.subr.bf16.mxu0 0
      %1871 = vmatpush1.bf16.msra.mxu0 0
      %1872 = vmatprep.subr.bf16.mxu0 0
      %1873 = vmatpush1.bf16.msra.mxu0 0
      %1874 = vmatprep.subr.bf16.mxu0 0
      %1875 = vmatpush1.bf16.msra.mxu0 0
      %1876 = vmatprep.subr.bf16.mxu0 0
      %1877 = vmatpush1.bf16.msra.mxu0 0
      %1878 = vmatprep.subr.bf16.mxu0 0
      %1879 = vmatpush1.bf16.msra.mxu0 0
      %1880 = vmatprep.subr.bf16.mxu0 0
      %1881 = vmatpush1.bf16.msra.mxu0 0
      %1882 = vmatprep.subr.bf16.mxu0 0
      %1883 = vmatpush1.bf16.msra.mxu0 0
      %1884 = vmatprep.subr.bf16.mxu0 0
      %1885 = vmatpush1.bf16.msra.mxu0 0
      %1886 = vmatprep.subr.bf16.mxu0 0
      %1887 = vmatpush1.bf16.msra.mxu0 0
      %1888 = vmatprep.subr.bf16.mxu0 0
      %1889 = vmatpush1.bf16.msra.mxu0 0
      %1890 = vmatprep.subr.bf16.mxu0 0
      %1891 = vmatpush1.bf16.msra.mxu0 0
      %1892 = vmatprep.subr.bf16.mxu0 0
      %1893 = vmatpush1.bf16.msra.mxu0 0
      %1894 = vmatprep.mubr.bf16.mxu0 0
      %1895 = vmatmul.mubr.bf16.gmra.mrb[0].mxu0 %v1833
      %v1896 = vpop.f32.mrb[0].mxu0
      %v1897 = vadd.f32 0.0, %v1896
      %v1898 = vpop.f32.mrb[0].mxu0
      %v1899 = vpop.f32.mrb[0].mxu0
      %v1900 = vadd.f32 0.0, %v1899
      %v1901 = vpop.f32.mrb[0].mxu0
      %1902 = vmatprep.mubr.bf16.mxu0 0
      %1903 = vmatmul.mubr.bf16.gmra.mrb[0].mxu0 %v1836
      %v1904 = vpop.f32.mrb[0].mxu0
      %v1905 = vadd.f32 0.0, %v1904
      %v1906 = vpop.f32.mrb[0].mxu0
      %v1907 = vpop.f32.mrb[0].mxu0
      %v1908 = vadd.f32 0.0, %v1907
      %v1909 = vpop.f32.mrb[0].mxu0
      %1910 = vmatprep.mubr.bf16.mxu0 0
      %1911 = vmatmul.mubr.bf16.gmra.mrb[0].mxu0 %v1839
      %v1912 = vpop.f32.mrb[0].mxu0
      %v1913 = vadd.f32 0.0, %v1912
      %v1914 = vpop.f32.mrb[0].mxu0
      %v1915 = vpop.f32.mrb[0].mxu0
      %v1916 = vadd.f32 0.0, %v1915
      %v1917 = vpop.f32.mrb[0].mxu0
      %1918 = vmatprep.mubr.bf16.mxu0 0
      %1919 = vmatmul.mubr.bf16.gmra.mrb[0].mxu0 %v1842
      %v1920 = vpop.f32.mrb[0].mxu0
      %v1921 = vadd.f32 0.0, %v1920
      %v1922 = vpop.f32.mrb[0].mxu0
      %v1923 = vpop.f32.mrb[0].mxu0
      %v1924 = vadd.f32 0.0, %v1923
      %v1925 = vpop.f32.mrb[0].mxu0
      %1926 = vmatprep.mubr.bf16.mxu0 0
      %1927 = vmatmul.mubr.bf16.gmra.mrb[0].mxu0 %v1845
      %v1928 = vpop.f32.mrb[0].mxu0
      %v1929 = vadd.f32 0.0, %v1928
      %v1930 = vpop.f32.mrb[0].mxu0
      %v1931 = vpop.f32.mrb[0].mxu0
      %v1932 = vadd.f32 0.0, %v1931
      %v1933 = vpop.f32.mrb[0].mxu0
      %1934 = vmatprep.mubr.bf16.mxu0 0
      %1935 = vmatmul.mubr.bf16.gmra.mrb[0].mxu0 %v1848
      %v1936 = vpop.f32.mrb[0].mxu0
      %v1937 = vadd.f32 0.0, %v1936
      %v1938 = vpop.f32.mrb[0].mxu0
      %v1939 = vpop.f32.mrb[0].mxu0
      %v1940 = vadd.f32 0.0, %v1939
      %v1941 = vpop.f32.mrb[0].mxu0
      %1942 = vmatprep.mubr.bf16.mxu0 0
      %1943 = vmatmul.mubr.bf16.gmra.mrb[0].mxu0 %v1851
      %v1944 = vpop.f32.mrb[0].mxu0
      %v1945 = vadd.f32 0.0, %v1944
      %v1946 = vpop.f32.mrb[0].mxu0
      %v1947 = vpop.f32.mrb[0].mxu0
      %v1948 = vadd.f32 0.0, %v1947
      %v1949 = vpop.f32.mrb[0].mxu0
      %1950 = vmatprep.mubr.bf16.mxu0 0
      %1951 = vmatmul.mubr.bf16.gmra.mrb[0].mxu0 %v1854
      %v1952 = vpop.f32.mrb[0].mxu0
      %v1953 = vadd.f32 0.0, %v1952
      %v1954 = vpop.f32.mrb[0].mxu0
      %v1955 = vpop.f32.mrb[0].mxu0
      %v1956 = vadd.f32 0.0, %v1955
      %v1957 = vpop.f32.mrb[0].mxu0
      %1958 = vmatprep.mubr.bf16.mxu0 0
      %1959 = vmatmul.mubr.bf16.gmra.mrb[0].mxu0 %v1857
      %v1960 = vpop.f32.mrb[0].mxu0
      %v1961 = vadd.f32 0.0, %v1960
      %v1962 = vpop.f32.mrb[0].mxu0
      %v1963 = vpop.f32.mrb[0].mxu0
      %v1964 = vadd.f32 0.0, %v1963
      %v1965 = vpop.f32.mrb[0].mxu0
      %1966 = vdwg.mxu0
      %v1967 = vadd.f32 %v1767, %v1897
      %v1968 = vadd.f32 %v1768, %v1900
      %v1969 = vadd.f32 %v1769, %v1905
      %v1970 = vadd.f32 %v1770, %v1908
      %v1971 = vadd.f32 %v1771, %v1913
      %v1972 = vadd.f32 %v1772, %v1916
      %v1973 = vadd.f32 %v1773, %v1921
      %v1974 = vadd.f32 %v1774, %v1924
      %v1975 = vadd.f32 %v1775, %v1929
      %v1976 = vadd.f32 %v1776, %v1932
      %v1977 = vadd.f32 %v1777, %v1937
      %v1978 = vadd.f32 %v1778, %v1940
      %v1979 = vadd.f32 %v1779, %v1945
      %v1980 = vadd.f32 %v1780, %v1948
      %v1981 = vadd.f32 %v1781, %v1953
      %v1982 = vadd.f32 %v1782, %v1956
      %v1983 = vadd.f32 %v1783, %v1961
      %v1984 = vadd.f32 %v1784, %v1964
      %s1985 = scalar_lea.vmem %s4, 32
      %v1986 = vld [vmem:[%s1985] sm:$0xf]
      %vm1987 = vcmask 1044480
      %v1988 = vrot.slane %v559, 3
      %v1989 = vrot.slane %v560, 3
      %v1990 = vsel %vm1987, %v1988, %v1989
      %v1991 = vrot.slane %v561, 3
      %v1992 = vsel %vm1987, %v1989, %v1991
      %v1993 = vrot.slane %v562, 3
      %v1994 = vsel %vm1987, %v1991, %v1993
      %v1995 = vrot.slane %v563, 3
      %v1996 = vsel %vm1987, %v1993, %v1995
      %v1997 = vrot.slane %v564, 3
      %v1998 = vsel %vm1987, %v1995, %v1997
      %v1999 = vrot.slane %v565, 3
      %v2000 = vsel %vm1987, %v1997, %v1999
      %v2001 = vrot.slane %v566, 3
      %v2002 = vsel %vm1987, %v1999, %v2001
      %v2003 = vrot.slane %v567, 3
      %v2004 = vsel %vm1987, %v2001, %v2003
      %v2005 = vrot.slane %v568, 3
      %v2006 = vsel %vm1987, %v2003, %v2005
      %v2008 = vsel %vm577, %v1990, 0
      %v2011 = vsel %vm577, %v1992, 0
      %v2014 = vsel %vm577, %v1994, 0
      %v2017 = vsel %vm577, %v1996, 0
      %v2020 = vsel %vm577, %v1998, 0
      %v2023 = vsel %vm577, %v2000, 0
      %v2026 = vsel %vm577, %v2002, 0
      %v2029 = vsel %vm577, %v2004, 0
      %v2032 = vsel %vm577, %v2006, 0
      %v2035 = vsel %vm605, %v1986, 0
      %2037 = vmatprep.subr.bf16.mxu0 0
      %2038 = vmatpush1.bf16.msra.mxu0 %v2035
      %2039 = vmatprep.subr.bf16.mxu0 0
      %2040 = vmatpush1.bf16.msra.mxu0 0
      %2041 = vmatprep.subr.bf16.mxu0 0
      %2042 = vmatpush1.bf16.msra.mxu0 0
      %2043 = vmatprep.subr.bf16.mxu0 0
      %2044 = vmatpush1.bf16.msra.mxu0 0
      %2045 = vmatprep.subr.bf16.mxu0 0
      %2046 = vmatpush1.bf16.msra.mxu0 0
      %2047 = vmatprep.subr.bf16.mxu0 0
      %2048 = vmatpush1.bf16.msra.mxu0 0
      %2049 = vmatprep.subr.bf16.mxu0 0
      %2050 = vmatpush1.bf16.msra.mxu0 0
      %2051 = vmatprep.subr.bf16.mxu0 0
      %2052 = vmatpush1.bf16.msra.mxu0 0
      %2053 = vmatprep.subr.bf16.mxu0 0
      %2054 = vmatpush1.bf16.msra.mxu0 0
      %2055 = vmatprep.subr.bf16.mxu0 0
      %2056 = vmatpush1.bf16.msra.mxu0 0
      %2057 = vmatprep.subr.bf16.mxu0 0
      %2058 = vmatpush1.bf16.msra.mxu0 0
      %2059 = vmatprep.subr.bf16.mxu0 0
      %2060 = vmatpush1.bf16.msra.mxu0 0
      %2061 = vmatprep.subr.bf16.mxu0 0
      %2062 = vmatpush1.bf16.msra.mxu0 0
      %2063 = vmatprep.subr.bf16.mxu0 0
      %2064 = vmatpush1.bf16.msra.mxu0 0
      %2065 = vmatprep.subr.bf16.mxu0 0
      %2066 = vmatpush1.bf16.msra.mxu0 0
      %2067 = vmatprep.subr.bf16.mxu0 0
      %2068 = vmatpush1.bf16.msra.mxu0 0
      %2069 = vmatprep.mubr.bf16.mxu0 0
      %2070 = vmatmul.mubr.bf16.gmra.mrb[0].mxu0 %v2008
      %v2071 = vpop.f32.mrb[0].mxu0
      %v2072 = vadd.f32 0.0, %v2071
      %v2073 = vpop.f32.mrb[0].mxu0
      %v2074 = vpop.f32.mrb[0].mxu0
      %v2075 = vadd.f32 0.0, %v2074
      %v2076 = vpop.f32.mrb[0].mxu0
      %2077 = vmatprep.mubr.bf16.mxu0 0
      %2078 = vmatmul.mubr.bf16.gmra.mrb[0].mxu0 %v2011
      %v2079 = vpop.f32.mrb[0].mxu0
      %v2080 = vadd.f32 0.0, %v2079
      %v2081 = vpop.f32.mrb[0].mxu0
      %v2082 = vpop.f32.mrb[0].mxu0
      %v2083 = vadd.f32 0.0, %v2082
      %v2084 = vpop.f32.mrb[0].mxu0
      %2085 = vmatprep.mubr.bf16.mxu0 0
      %2086 = vmatmul.mubr.bf16.gmra.mrb[0].mxu0 %v2014
      %v2087 = vpop.f32.mrb[0].mxu0
      %v2088 = vadd.f32 0.0, %v2087
      %v2089 = vpop.f32.mrb[0].mxu0
      %v2090 = vpop.f32.mrb[0].mxu0
      %v2091 = vadd.f32 0.0, %v2090
      %v2092 = vpop.f32.mrb[0].mxu0
      %2093 = vmatprep.mubr.bf16.mxu0 0
      %2094 = vmatmul.mubr.bf16.gmra.mrb[0].mxu0 %v2017
      %v2095 = vpop.f32.mrb[0].mxu0
      %v2096 = vadd.f32 0.0, %v2095
      %v2097 = vpop.f32.mrb[0].mxu0
      %v2098 = vpop.f32.mrb[0].mxu0
      %v2099 = vadd.f32 0.0, %v2098
      %v2100 = vpop.f32.mrb[0].mxu0
      %2101 = vmatprep.mubr.bf16.mxu0 0
      %2102 = vmatmul.mubr.bf16.gmra.mrb[0].mxu0 %v2020
      %v2103 = vpop.f32.mrb[0].mxu0
      %v2104 = vadd.f32 0.0, %v2103
      %v2105 = vpop.f32.mrb[0].mxu0
      %v2106 = vpop.f32.mrb[0].mxu0
      %v2107 = vadd.f32 0.0, %v2106
      %v2108 = vpop.f32.mrb[0].mxu0
      %2109 = vmatprep.mubr.bf16.mxu0 0
      %2110 = vmatmul.mubr.bf16.gmra.mrb[0].mxu0 %v2023
      %v2111 = vpop.f32.mrb[0].mxu0
      %v2112 = vadd.f32 0.0, %v2111
      %v2113 = vpop.f32.mrb[0].mxu0
      %v2114 = vpop.f32.mrb[0].mxu0
      %v2115 = vadd.f32 0.0, %v2114
      %v2116 = vpop.f32.mrb[0].mxu0
      %2117 = vmatprep.mubr.bf16.mxu0 0
      %2118 = vmatmul.mubr.bf16.gmra.mrb[0].mxu0 %v2026
      %v2119 = vpop.f32.mrb[0].mxu0
      %v2120 = vadd.f32 0.0, %v2119
      %v2121 = vpop.f32.mrb[0].mxu0
      %v2122 = vpop.f32.mrb[0].mxu0
      %v2123 = vadd.f32 0.0, %v2122
      %v2124 = vpop.f32.mrb[0].mxu0
      %2125 = vmatprep.mubr.bf16.mxu0 0
      %2126 = vmatmul.mubr.bf16.gmra.mrb[0].mxu0 %v2029
      %v2127 = vpop.f32.mrb[0].mxu0
      %v2128 = vadd.f32 0.0, %v2127
      %v2129 = vpop.f32.mrb[0].mxu0
      %v2130 = vpop.f32.mrb[0].mxu0
      %v2131 = vadd.f32 0.0, %v2130
      %v2132 = vpop.f32.mrb[0].mxu0
      %2133 = vmatprep.mubr.bf16.mxu0 0
      %2134 = vmatmul.mubr.bf16.gmra.mrb[0].mxu0 %v2032
      %v2135 = vpop.f32.mrb[0].mxu0
      %v2136 = vadd.f32 0.0, %v2135
      %v2137 = vpop.f32.mrb[0].mxu0
      %v2138 = vpop.f32.mrb[0].mxu0
      %v2139 = vadd.f32 0.0, %v2138
      %v2140 = vpop.f32.mrb[0].mxu0
      %2141 = vdwg.mxu0
      %v2142 = vadd.f32 %v1967, %v2072
      %v2143 = vadd.f32 %v1968, %v2075
      %v2144 = vadd.f32 %v1969, %v2080
      %v2145 = vadd.f32 %v1970, %v2083
      %v2146 = vadd.f32 %v1971, %v2088
      %v2147 = vadd.f32 %v1972, %v2091
      %v2148 = vadd.f32 %v1973, %v2096
      %v2149 = vadd.f32 %v1974, %v2099
      %v2150 = vadd.f32 %v1975, %v2104
      %v2151 = vadd.f32 %v1976, %v2107
      %v2152 = vadd.f32 %v1977, %v2112
      %v2153 = vadd.f32 %v1978, %v2115
      %v2154 = vadd.f32 %v1979, %v2120
      %v2155 = vadd.f32 %v1980, %v2123
      %v2156 = vadd.f32 %v1981, %v2128
      %v2157 = vadd.f32 %v1982, %v2131
      %v2158 = vadd.f32 %v1983, %v2136
      %v2159 = vadd.f32 %v1984, %v2139
      %2160 = vst [vmem:[%s273] sm:$0xff] %v2142
      %2161 = vst [vmem:[%s273 + $0x8] sm:$0xff] %v2143
      %2162 = vst [vmem:[%s273 + $0x10] sm:$0xff] %v2144
      %2163 = vst [vmem:[%s273 + $0x18] sm:$0xff] %v2145
      %2164 = vst [vmem:[%s273 + $0x20] sm:$0xff] %v2146
      %2165 = vst [vmem:[%s273 + $0x28] sm:$0xff] %v2147
      %2166 = vst [vmem:[%s273 + $0x30] sm:$0xff] %v2148
      %2167 = vst [vmem:[%s273 + $0x38] sm:$0xff] %v2149
      %2168 = vst [vmem:[%s273 + $0x40] sm:$0xff] %v2150
      %2169 = vst [vmem:[%s273 + $0x48] sm:$0xff] %v2151
      %2170 = vst [vmem:[%s273 + $0x50] sm:$0xff] %v2152
      %2171 = vst [vmem:[%s273 + $0x58] sm:$0xff] %v2153
      %2172 = vst [vmem:[%s273 + $0x60] sm:$0xff] %v2154
      %2173 = vst [vmem:[%s273 + $0x68] sm:$0xff] %v2155
      %2174 = vst [vmem:[%s273 + $0x70] sm:$0xff] %v2156
      %2175 = vst [vmem:[%s273 + $0x78] sm:$0xff] %v2157
      %2176 = vst [vmem:[%s273 + $0x80] sm:$0xff] %v2158
      %2177 = vst [vmem:[%s273 + $0x88] sm:$0xff] %v2159
      %s2178 = smul.u32 18, %s22
      %p2179 = scmp.lt.s32.totalorder %s21, 1
      %s2180 = scalar_select %p2179, %s21, 1
      %p2181 = scmp.lt.s32.totalorder %s2178, 35
      %s2182 = scalar_select %p2181, %s2178, 35
      %s2183 = smul.addr %s2180, 36
      %s2184 = sadd.s32 %s2182, %s2183
      %s2185 = smul.addr %s2184, 8
      %s2186 = scalar_lea.vmem %s6, %s2185
      // Predicated region
      $region45: #{dense_block_forward.4} parent=43 // pred_check
        %p2187 = pneg %p180
      $region46: #{dense_block_forward.4} parent=43 // pred_check_branch
        %2189 = sbr.rel (%p2187) target = $region48
      $region47: #{dense_block_forward.4} parent=43 // pred_region
        %s2190 = smul.u32 18, %s22
      $region48: #{dense_block_forward.4} parent=43 // pred_fallthru
        _
    $region44: #{dense_block_forward.4} parent=5 // pred_fallthru
      _
    %p2191 = scmp.le.s32.totalorder 2, %s12
    // Predicated region
    $region49: #{dense_block_forward.4} parent=5 // pred_check
      %p2192 = pneg %p2191
    $region50: #{dense_block_forward.4} parent=5 // pred_check_branch
      %2194 = sbr.rel (%p2192) target = $region52
    $region51: #{dense_block_forward.4} parent=5 // pred_region
      %s2195 = ssub.s32 %s12, 2
      // Predicated region
      $region53: #{dense_block_forward.4} parent=51 // pred_check
        %p2196 = pneg %p186
      $region54: #{dense_block_forward.4} parent=51 // pred_check_branch
        %2198 = sbr.rel (%p2196) target = $region56
      $region55: #{dense_block_forward.4} parent=51 // pred_region
        %s2199 = smul.u32 18, %s24
        %p2200 = scmp.lt.s32.totalorder %s23, 1
        %s2201 = scalar_select %p2200, %s23, 1
        %p2202 = scmp.lt.s32.totalorder %s2199, 35
        %s2203 = scalar_select %p2202, %s2199, 35
        %s2204 = smul.addr %s2201, 36
        %s2205 = sadd.s32 %s2203, %s2204
        %s2206 = smul.addr %s2205, 8
        %s2207 = scalar_lea.vmem %s6, %s2206
      $region56: #{dense_block_forward.4} parent=51 // pred_fallthru
        _
    $region52: #{dense_block_forward.4} parent=5 // pred_fallthru
      _
  $region6: #{dense_block_forward.4} parent=0 // loop_footer
    %s16 = sadd.s32 1, %s12
  $region7: #{dense_block_forward.4} parent=0 // loop_footer_branch
    %11 = sbr.rel target = $region3
  $region8: #{dense_block_forward.4} parent=0 // loop_exit
    _

// kernel: dense_block_forward.5
$region0: #{dense_block_forward.5}
  #allocation0 [shape = 'u32[]', space=smem, size = 0x4, offset = 0x4, fixed_abs, tag = 'smem constant byte address 0x4 - core index']
  #allocation1 [shape = 'u32[144,128]{1,0:T(1,128)}', space=vmem, size = 0x12000, scoped, tag = 'internal scratch']
  %s0 = inlined_call_operand.vmem [shape: f32[2,342,12], index: 0, kind: input, shape index: {}]
  %s1 = inlined_call_operand.vmem [shape: f32[342,1], index: 1, kind: input, shape index: {}]
  %s2 = inlined_call_operand.vmem [shape: f32[1,12], index: 2, kind: input, shape index: {}]
  %s3 = inlined_call_operand.vmem [shape: f32[1,12], index: 3, kind: input, shape index: {}]
  %s4 = inlined_call_operand.vmem [shape: bf16[9,12,128], index: 4, kind: input, shape index: {}]
  %s5 = inlined_call_operand.vmem [shape: f32[1,128], index: 5, kind: input, shape index: {}]
  %s6 = inlined_call_operand.vmem [shape: f32[2,288,128], index: 6, kind: output, shape index: {}]
  %s7 = sld [smem:[#allocation0]]
  $region57: #{dense_block_forward.5} parent=0
    _
  %s9 = ssub.s32 1, %s7
  %s10 = scalar_select 0, %s9, %s7
  loop: start=0, step=1, limit=6
  $region2: #{dense_block_forward.5} parent=0 // loop_pre_header
    _
  $region3: #{dense_block_forward.5} parent=0 // loop_header
    %s12 = sphi 0, %s16
    %p13 = scmp.ge.s32.totalorder %s12, 6
    %s19 = sphi 0, %s31
    %s20 = sphi 0, %s27
    %s21 = sphi 0, %s19
    %s22 = sphi 0, %s20
    %s23 = sphi 0, %s21
    %s24 = sphi 0, %s22
    %s34 = sphi 0, %s36
    %s37 = sphi 0, %s34
    %s38 = sphi 0, %s37
    %s54 = sphi 0, %s38
    %s58 = sphi 0, %s58
    %s60 = sphi 0, %s58
    %s61 = sphi 0, %s60
    %s75 = sphi 0, %s61
    %s79 = sphi 0, %s79
    %s81 = sphi 0, %s79
    %s82 = sphi 0, %s81
    %s96 = sphi 0, %s82
    %s100 = sphi 0, %s100
    %s102 = sphi 0, %s100
    %s103 = sphi 0, %s102
    %s117 = sphi 0, %s103
    %s121 = sphi 0, %s121
    %s123 = sphi 0, %s121
    %s124 = sphi 0, %s123
    %s138 = sphi 0, %s124
    %s142 = sphi 0, %s142
    %s144 = sphi 0, %s142
    %s145 = sphi 0, %s144
    %s159 = sphi 0, %s145
    %s167 = sphi 0, %s169
    %s170 = sphi 0, %s167
    %s171 = sphi 0, %s170
    %s187 = sphi 0, %s171
  $region4: #{dense_block_forward.5} parent=0 // loop_header_branch
    %15 = sbr.rel (%p13) target = $region8
  $region5: #{dense_block_forward.5} parent=0 // loop_body
    %s17 = ssub.s32 %s12, 1
    %s18 = ssub.s32 %s12, 2
    %s25 = sadd.s32 1, %s20
    %p26 = scmp.ge.s32.totalorder %s25, 2
    %s27 = scalar_select %p26, 0, %s25
    %s28 = sadd.s32 1, %s19
    %s29 = scalar_select %p26, %s28, %s19
    %p30 = scmp.ge.s32.totalorder %s29, 2
    %s31 = scalar_select %p30, 0, %s29
    %s32 = ssub.s32 %s19, %s31
    %p33 = scmp.eq.s32.totalorder %s32, 0
    %s35 = sadd.s32 %s34, 1
    %s36 = scalar_select %p33, %s34, %s35
    %p39 = pneg %p33
    %p40 = scmp.eq.s32.totalorder %s12, 3
    %p41 = por %p39, %p40
    %p42 = scmp.ne.s32.totalorder %s34, %s37
    %p43 = scmp.eq.s32.totalorder %s12, 0
    %p44 = por %p42, %p43
    %p45 = scmp.ne.s32.totalorder %s34, %s37
    %p46 = scmp.eq.s32.totalorder %s17, 3
    %p47 = por %p45, %p46
    %p48 = scmp.ne.s32.totalorder %s37, %s38
    %p49 = scmp.eq.s32.totalorder %s17, 0
    %p50 = por %p48, %p49
    %p51 = scmp.ne.s32.totalorder %s37, %s38
    %p52 = scmp.eq.s32.totalorder %s18, 3
    %p53 = por %p51, %p52
    %p55 = scmp.ne.s32.totalorder %s38, %s54
    %p56 = scmp.eq.s32.totalorder %s18, 0
    %p57 = por %p55, %p56
    %s59 = sadd.s32 %s58, 1
    %p62 = scmp.eq.s32.totalorder %s12, 3
    %p63 = scmp.ne.s32.totalorder %s58, %s60
    %p64 = scmp.eq.s32.totalorder %s12, 0
    %p65 = por %p63, %p64
    %p66 = scmp.ne.s32.totalorder %s58, %s60
    %p67 = scmp.eq.s32.totalorder %s17, 3
    %p68 = por %p66, %p67
    %p69 = scmp.ne.s32.totalorder %s60, %s61
    %p70 = scmp.eq.s32.totalorder %s17, 0
    %p71 = por %p69, %p70
    %p72 = scmp.ne.s32.totalorder %s60, %s61
    %p73 = scmp.eq.s32.totalorder %s18, 3
    %p74 = por %p72, %p73
    %p76 = scmp.ne.s32.totalorder %s61, %s75
    %p77 = scmp.eq.s32.totalorder %s18, 0
    %p78 = por %p76, %p77
    %s80 = sadd.s32 %s79, 1
    %p83 = scmp.eq.s32.totalorder %s12, 3
    %p84 = scmp.ne.s32.totalorder %s79, %s81
    %p85 = scmp.eq.s32.totalorder %s12, 0
    %p86 = por %p84, %p85
    %p87 = scmp.ne.s32.totalorder %s79, %s81
    %p88 = scmp.eq.s32.totalorder %s17, 3
    %p89 = por %p87, %p88
    %p90 = scmp.ne.s32.totalorder %s81, %s82
    %p91 = scmp.eq.s32.totalorder %s17, 0
    %p92 = por %p90, %p91
    %p93 = scmp.ne.s32.totalorder %s81, %s82
    %p94 = scmp.eq.s32.totalorder %s18, 3
    %p95 = por %p93, %p94
    %p97 = scmp.ne.s32.totalorder %s82, %s96
    %p98 = scmp.eq.s32.totalorder %s18, 0
    %p99 = por %p97, %p98
    %s101 = sadd.s32 %s100, 1
    %p104 = scmp.eq.s32.totalorder %s12, 3
    %p105 = scmp.ne.s32.totalorder %s100, %s102
    %p106 = scmp.eq.s32.totalorder %s12, 0
    %p107 = por %p105, %p106
    %p108 = scmp.ne.s32.totalorder %s100, %s102
    %p109 = scmp.eq.s32.totalorder %s17, 3
    %p110 = por %p108, %p109
    %p111 = scmp.ne.s32.totalorder %s102, %s103
    %p112 = scmp.eq.s32.totalorder %s17, 0
    %p113 = por %p111, %p112
    %p114 = scmp.ne.s32.totalorder %s102, %s103
    %p115 = scmp.eq.s32.totalorder %s18, 3
    %p116 = por %p114, %p115
    %p118 = scmp.ne.s32.totalorder %s103, %s117
    %p119 = scmp.eq.s32.totalorder %s18, 0
    %p120 = por %p118, %p119
    %s122 = sadd.s32 %s121, 1
    %p125 = scmp.eq.s32.totalorder %s12, 3
    %p126 = scmp.ne.s32.totalorder %s121, %s123
    %p127 = scmp.eq.s32.totalorder %s12, 0
    %p128 = por %p126, %p127
    %p129 = scmp.ne.s32.totalorder %s121, %s123
    %p130 = scmp.eq.s32.totalorder %s17, 3
    %p131 = por %p129, %p130
    %p132 = scmp.ne.s32.totalorder %s123, %s124
    %p133 = scmp.eq.s32.totalorder %s17, 0
    %p134 = por %p132, %p133
    %p135 = scmp.ne.s32.totalorder %s123, %s124
    %p136 = scmp.eq.s32.totalorder %s18, 3
    %p137 = por %p135, %p136
    %p139 = scmp.ne.s32.totalorder %s124, %s138
    %p140 = scmp.eq.s32.totalorder %s18, 0
    %p141 = por %p139, %p140
    %s143 = sadd.s32 %s142, 1
    %p146 = scmp.eq.s32.totalorder %s12, 3
    %p147 = scmp.ne.s32.totalorder %s142, %s144
    %p148 = scmp.eq.s32.totalorder %s12, 0
    %p149 = por %p147, %p148
    %p150 = scmp.ne.s32.totalorder %s142, %s144
    %p151 = scmp.eq.s32.totalorder %s17, 3
    %p152 = por %p150, %p151
    %p153 = scmp.ne.s32.totalorder %s144, %s145
    %p154 = scmp.eq.s32.totalorder %s17, 0
    %p155 = por %p153, %p154
    %p156 = scmp.ne.s32.totalorder %s144, %s145
    %p157 = scmp.eq.s32.totalorder %s18, 3
    %p158 = por %p156, %p157
    %p160 = scmp.ne.s32.totalorder %s145, %s159
    %p161 = scmp.eq.s32.totalorder %s18, 0
    %p162 = por %p160, %p161
    %s163 = ssub.s32 %s19, %s31
    %s164 = ssub.s32 %s20, %s27
    %s165 = sor.u32 %s163, %s164
    %p166 = scmp.eq.s32.totalorder %s165, 0
    %s168 = sadd.s32 %s167, 1
    %s169 = scalar_select %p166, %s167, %s168
    %p172 = pneg %p166
    %p173 = scmp.eq.s32.totalorder %s12, 3
    %p174 = por %p172, %p173
    %p175 = scmp.ne.s32.totalorder %s167, %s170
    %p176 = scmp.eq.s32.totalorder %s12, 0
    %p177 = por %p175, %p176
    %p178 = scmp.ne.s32.totalorder %s167, %s170
    %p179 = scmp.eq.s32.totalorder %s17, 3
    %p180 = por %p178, %p179
    %p181 = scmp.ne.s32.totalorder %s170, %s171
    %p182 = scmp.eq.s32.totalorder %s17, 0
    %p183 = por %p181, %p182
    %p184 = scmp.ne.s32.totalorder %s170, %s171
    %p185 = scmp.eq.s32.totalorder %s18, 3
    %p186 = por %p184, %p185
    %p188 = scmp.ne.s32.totalorder %s171, %s187
    %p189 = scmp.eq.s32.totalorder %s18, 0
    %p190 = por %p188, %p189
    %p191 = scmp.le.s32.totalorder 1, %s12
    %p192 = scmp.lt.s32.totalorder %s12, 5
    %p193 = pnand %p191, %p192
    %p194 = pneg %p193
    // Predicated region
    $region9: #{dense_block_forward.5} parent=5 // pred_check
      _
    $region10: #{dense_block_forward.5} parent=5 // pred_check_branch
      %196 = sbr.rel (%p193) target = $region12
    $region11: #{dense_block_forward.5} parent=5 // pred_region
      %s197 = ssub.s32 %s12, 1
      // Predicated region
      $region13: #{dense_block_forward.5} parent=11 // pred_check
        %p198 = pneg %p71
      $region14: #{dense_block_forward.5} parent=11 // pred_check_branch
        %200 = sbr.rel (%p198) target = $region16
      $region15: #{dense_block_forward.5} parent=11 // pred_region
        _
      $region16: #{dense_block_forward.5} parent=11 // pred_fallthru
        _
      // Predicated region
      $region17: #{dense_block_forward.5} parent=11 // pred_check
        %p201 = pneg %p92
      $region18: #{dense_block_forward.5} parent=11 // pred_check_branch
        %203 = sbr.rel (%p201) target = $region20
      $region19: #{dense_block_forward.5} parent=11 // pred_region
        _
      $region20: #{dense_block_forward.5} parent=11 // pred_fallthru
        _
      // Predicated region
      $region21: #{dense_block_forward.5} parent=11 // pred_check
        %p204 = pneg %p113
      $region22: #{dense_block_forward.5} parent=11 // pred_check_branch
        %206 = sbr.rel (%p204) target = $region24
      $region23: #{dense_block_forward.5} parent=11 // pred_region
        _
      $region24: #{dense_block_forward.5} parent=11 // pred_fallthru
        _
      // Predicated region
      $region25: #{dense_block_forward.5} parent=11 // pred_check
        %p207 = pneg %p134
      $region26: #{dense_block_forward.5} parent=11 // pred_check_branch
        %209 = sbr.rel (%p207) target = $region28
      $region27: #{dense_block_forward.5} parent=11 // pred_region
        _
      $region28: #{dense_block_forward.5} parent=11 // pred_fallthru
        _
      // Predicated region
      $region29: #{dense_block_forward.5} parent=11 // pred_check
        %p210 = pneg %p155
      $region30: #{dense_block_forward.5} parent=11 // pred_check_branch
        %212 = sbr.rel (%p210) target = $region32
      $region31: #{dense_block_forward.5} parent=11 // pred_region
        _
      $region32: #{dense_block_forward.5} parent=11 // pred_fallthru
        _
    $region12: #{dense_block_forward.5} parent=5 // pred_fallthru
      _
    %p213 = scmp.lt.s32.totalorder %s12, 4
    // Predicated region
    $region33: #{dense_block_forward.5} parent=5 // pred_check
      %p214 = pneg %p213
    $region34: #{dense_block_forward.5} parent=5 // pred_check_branch
      %216 = sbr.rel (%p214) target = $region36
    $region35: #{dense_block_forward.5} parent=5 // pred_region
      // Predicated region
      $region37: #{dense_block_forward.5} parent=35 // pred_check
        %p217 = pneg %p44
      $region38: #{dense_block_forward.5} parent=35 // pred_check_branch
        %219 = sbr.rel (%p217) target = $region40
      $region39: #{dense_block_forward.5} parent=35 // pred_region
        %p220 = scmp.lt.s32.totalorder %s19, 1
        %s221 = scalar_select %p220, %s19, 1
        %s222 = smul.addr %s221, 43
        %s223 = smul.addr %s222, 8
        %s224 = scalar_lea.vmem %s0, %s223
      $region40: #{dense_block_forward.5} parent=35 // pred_fallthru
        _
    $region36: #{dense_block_forward.5} parent=5 // pred_fallthru
      _
    %p225 = scmp.le.s32.totalorder 1, %s12
    %p226 = scmp.lt.s32.totalorder %s12, 5
    %p227 = pnand %p225, %p226
    %p228 = pneg %p227
    // Predicated region
    $region41: #{dense_block_forward.5} parent=5 // pred_check
      _
    $region42: #{dense_block_forward.5} parent=5 // pred_check_branch
      %230 = sbr.rel (%p227) target = $region44
    $region43: #{dense_block_forward.5} parent=5 // pred_region
      %s231 = ssub.s32 %s12, 1
      %p232 = scmp.lt.s32.totalorder %s21, 1
      %s233 = scalar_select %p232, %s21, 1
      %s234 = smul.addr %s233, 43
      %s235 = smul.addr %s234, 8
      %s236 = scalar_lea.vmem %s0, %s235
      %p237 = pneg %p50
      %p238 = pneg %p47
      %p239 = pneg %p71
      %p240 = pneg %p68
      %p241 = pneg %p92
      %p242 = pneg %p89
      %p243 = pneg %p113
      %p244 = pneg %p110
      %p245 = pneg %p134
      %p246 = pneg %p131
      %p247 = pneg %p155
      %p248 = pneg %p152
      %p249 = pneg %p183
      %p250 = pneg %p180
      %s251 = smul.u32 18, %s22
      %p252 = scmp.lt.s32.totalorder %s21, 1
      %s253 = scalar_select %p252, %s21, 1
      %p254 = scmp.lt.s32.totalorder %s251, 35
      %s255 = scalar_select %p254, %s251, 35
      %s256 = smul.addr %s253, 36
      %s257 = sadd.s32 %s255, %s256
      %s258 = smul.addr %s257, 8
      %s259 = scalar_lea.vmem %s6, %s258
      %p260 = scmp.lt.s32.totalorder %s21, 1
      %s261 = scalar_select %p260, %s21, 1
      %s262 = smul.addr %s261, 43
      %s263 = smul.addr %s262, 8
      %s264 = scalar_lea.vmem %s0, %s263
      %s265 = smul.u32 18, %s22
      %p266 = scmp.lt.s32.totalorder %s21, 1
      %s267 = scalar_select %p266, %s21, 1
      %p268 = scmp.lt.s32.totalorder %s265, 35
      %s269 = scalar_select %p268, %s265, 35
      %s270 = smul.addr %s267, 36
      %s271 = sadd.s32 %s269, %s270
      %s272 = smul.addr %s271, 8
      %s273 = scalar_lea.vmem %s6, %s272
      %s274 = smul.u32 18, %s22
      %s276 = smul.u32 %s22, 144
      %s277 = scalar_lea.vmem %s264, %s276
      %v278 = vld [vmem:[%s277] sm:$0xff]
      %v279 = vld [vmem:[%s277 + $0x8] sm:$0xff]
      %v280 = vld [vmem:[%s277 + $0x10] sm:$0xff]
      %v281 = vld [vmem:[%s277 + $0x18] sm:$0xff]
      %v282 = vld [vmem:[%s277 + $0x20] sm:$0xff]
      %v283 = vld [vmem:[%s277 + $0x28] sm:$0xff]
      %v284 = vld [vmem:[%s277 + $0x30] sm:$0xff]
      %v285 = vld [vmem:[%s277 + $0x38] sm:$0xff]
      %v286 = vld [vmem:[%s277 + $0x40] sm:$0xff]
      %v287 = vld [vmem:[%s277 + $0x48] sm:$0xff]
      %v288 = vld [vmem:[%s277 + $0x50] sm:$0xff]
      %v289 = vld [vmem:[%s277 + $0x58] sm:$0xff]
      %v290 = vld [vmem:[%s277 + $0x60] sm:$0xff]
      %v291 = vld [vmem:[%s277 + $0x68] sm:$0xff]
      %v292 = vld [vmem:[%s277 + $0x70] sm:$0xff]
      %v293 = vld [vmem:[%s277 + $0x78] sm:$0xff]
      %v294 = vld [vmem:[%s277 + $0x80] sm:$0xff]
      %v295 = vld [vmem:[%s277 + $0x88] sm:$0xff]
      %v296 = vld [vmem:[%s277 + $0x90] sm:$0xff]
      %v297 = vld [vmem:[%s277 + $0x98] sm:$0xff]
      %v298 = vld [vmem:[%s277 + $0xa0] sm:$0xff]
      %v299 = vld [vmem:[%s277 + $0xa8] sm:$0xff]
      %v300 = vld [vmem:[%s277 + $0xb0] sm:$0xff]
      %v301 = vld [vmem:[%s277 + $0xb8] sm:$0xff]
      %s302 = scalar_lea.vmem %s1, %s276
      %v303 = vld [vmem:[%s302] sm:$0xff]
      %v304 = vld [vmem:[%s302 + $0x8] sm:$0xff]
      %v305 = vld [vmem:[%s302 + $0x10] sm:$0xff]
      %v306 = vld [vmem:[%s302 + $0x18] sm:$0xff]
      %v307 = vld [vmem:[%s302 + $0x20] sm:$0xff]
      %v308 = vld [vmem:[%s302 + $0x28] sm:$0xff]
      %v309 = vld [vmem:[%s302 + $0x30] sm:$0xff]
      %v310 = vld [vmem:[%s302 + $0x38] sm:$0xff]
      %v311 = vld [vmem:[%s302 + $0x40] sm:$0xff]
      %v312 = vld [vmem:[%s302 + $0x48] sm:$0xff]
      %v313 = vld [vmem:[%s302 + $0x50] sm:$0xff]
      %v314 = vld [vmem:[%s302 + $0x58] sm:$0xff]
      %v315 = vld [vmem:[%s302 + $0x60] sm:$0xff]
      %v316 = vld [vmem:[%s302 + $0x68] sm:$0xff]
      %v317 = vld [vmem:[%s302 + $0x70] sm:$0xff]
      %v318 = vld [vmem:[%s302 + $0x78] sm:$0xff]
      %v319 = vld [vmem:[%s302 + $0x80] sm:$0xff]
      %v320 = vld [vmem:[%s302 + $0x88] sm:$0xff]
      %v321 = vld [vmem:[%s302 + $0x90] sm:$0xff]
      %v322 = vld [vmem:[%s302 + $0x98] sm:$0xff]
      %v323 = vld [vmem:[%s302 + $0xa0] sm:$0xff]
      %v324 = vld [vmem:[%s302 + $0xa8] sm:$0xff]
      %v325 = vld [vmem:[%s302 + $0xb0] sm:$0xff]
      %v326 = vld [vmem:[%s302 + $0xb8] sm:$0xff]
      %v327 = vld [vmem:[%s2] sm:$0x1]
      %v329 = vlaneseq
      %v330 = vshrl.u32 %v329, 7
      %v331 = vsub.s32 0, %v330
      %v332 = vrot.slane %v327, %v331
      %v334 = vmul.f32 %v278, %v332
      %v335 = vmul.f32 %v279, %v332
      %v336 = vmul.f32 %v280, %v332
      %v337 = vmul.f32 %v281, %v332
      %v338 = vmul.f32 %v282, %v332
      %v339 = vmul.f32 %v283, %v332
      %v340 = vmul.f32 %v284, %v332
      %v341 = vmul.f32 %v285, %v332
      %v342 = vmul.f32 %v286, %v332
      %v343 = vmul.f32 %v287, %v332
      %v344 = vmul.f32 %v288, %v332
      %v345 = vmul.f32 %v289, %v332
      %v346 = vmul.f32 %v290, %v332
      %v347 = vmul.f32 %v291, %v332
      %v348 = vmul.f32 %v292, %v332
      %v349 = vmul.f32 %v293, %v332
      %v350 = vmul.f32 %v294, %v332
      %v351 = vmul.f32 %v295, %v332
      %v352 = vmul.f32 %v296, %v332
      %v353 = vmul.f32 %v297, %v332
      %v354 = vmul.f32 %v298, %v332
      %v355 = vmul.f32 %v299, %v332
      %v356 = vmul.f32 %v300, %v332
      %v357 = vmul.f32 %v301, %v332
      %v358 = vld [vmem:[%s3] sm:$0x1]
      %v360 = vlaneseq
      %v361 = vshrl.u32 %v360, 7
      %v362 = vsub.s32 0, %v361
      %v363 = vrot.slane %v358, %v362
      %v365 = vadd.f32 %v334, %v363
      %v366 = vadd.f32 %v335, %v363
      %v367 = vadd.f32 %v336, %v363
      %v368 = vadd.f32 %v337, %v363
      %v369 = vadd.f32 %v338, %v363
      %v370 = vadd.f32 %v339, %v363
      %v371 = vadd.f32 %v340, %v363
      %v372 = vadd.f32 %v341, %v363
      %v373 = vadd.f32 %v342, %v363
      %v374 = vadd.f32 %v343, %v363
      %v375 = vadd.f32 %v344, %v363
      %v376 = vadd.f32 %v345, %v363
      %v377 = vadd.f32 %v346, %v363
      %v378 = vadd.f32 %v347, %v363
      %v379 = vadd.f32 %v348, %v363
      %v380 = vadd.f32 %v349, %v363
      %v381 = vadd.f32 %v350, %v363
      %v382 = vadd.f32 %v351, %v363
      %v383 = vadd.f32 %v352, %v363
      %v384 = vadd.f32 %v353, %v363
      %v385 = vadd.f32 %v354, %v363
      %v386 = vadd.f32 %v355, %v363
      %v387 = vadd.f32 %v356, %v363
      %v388 = vadd.f32 %v357, %v363
      %v389 = vmax.f32 %v365, 0.0
      %v390 = vmax.f32 %v366, 0.0
      %v391 = vmax.f32 %v367, 0.0
      %v392 = vmax.f32 %v368, 0.0
      %v393 = vmax.f32 %v369, 0.0
      %v394 = vmax.f32 %v370, 0.0
      %v395 = vmax.f32 %v371, 0.0
      %v396 = vmax.f32 %v372, 0.0
      %v397 = vmax.f32 %v373, 0.0
      %v398 = vmax.f32 %v374, 0.0
      %v399 = vmax.f32 %v375, 0.0
      %v400 = vmax.f32 %v376, 0.0
      %v401 = vmax.f32 %v377, 0.0
      %v402 = vmax.f32 %v378, 0.0
      %v403 = vmax.f32 %v379, 0.0
      %v404 = vmax.f32 %v380, 0.0
      %v405 = vmax.f32 %v381, 0.0
      %v406 = vmax.f32 %v382, 0.0
      %v407 = vmax.f32 %v383, 0.0
      %v408 = vmax.f32 %v384, 0.0
      %v409 = vmax.f32 %v385, 0.0
      %v410 = vmax.f32 %v386, 0.0
      %v411 = vmax.f32 %v387, 0.0
      %v412 = vmax.f32 %v388, 0.0
      %414 = vset.pattern.permute.xlu0 0
      %415 = vperm.xlu0 %414, %v303
      %v416 = vpop.permute.xlu0 %415
      %419 = vset.pattern.permute.xlu0 0
      %420 = vperm.xlu0 %419, %v304
      %v421 = vpop.permute.xlu0 %420
      %424 = vset.pattern.permute.xlu0 0
      %425 = vperm.xlu0 %424, %v305
      %v426 = vpop.permute.xlu0 %425
      %429 = vset.pattern.permute.xlu0 0
      %430 = vperm.xlu0 %429, %v306
      %v431 = vpop.permute.xlu0 %430
      %434 = vset.pattern.permute.xlu0 0
      %435 = vperm.xlu0 %434, %v307
      %v436 = vpop.permute.xlu0 %435
      %439 = vset.pattern.permute.xlu0 0
      %440 = vperm.xlu0 %439, %v308
      %v441 = vpop.permute.xlu0 %440
      %444 = vset.pattern.permute.xlu0 0
      %445 = vperm.xlu0 %444, %v309
      %v446 = vpop.permute.xlu0 %445
      %449 = vset.pattern.permute.xlu0 0
      %450 = vperm.xlu0 %449, %v310
      %v451 = vpop.permute.xlu0 %450
      %454 = vset.pattern.permute.xlu0 0
      %455 = vperm.xlu0 %454, %v311
      %v456 = vpop.permute.xlu0 %455
      %459 = vset.pattern.permute.xlu0 0
      %460 = vperm.xlu0 %459, %v312
      %v461 = vpop.permute.xlu0 %460
      %464 = vset.pattern.permute.xlu0 0
      %465 = vperm.xlu0 %464, %v313
      %v466 = vpop.permute.xlu0 %465
      %469 = vset.pattern.permute.xlu0 0
      %470 = vperm.xlu0 %469, %v314
      %v471 = vpop.permute.xlu0 %470
      %474 = vset.pattern.permute.xlu0 0
      %475 = vperm.xlu0 %474, %v315
      %v476 = vpop.permute.xlu0 %475
      %479 = vset.pattern.permute.xlu0 0
      %480 = vperm.xlu0 %479, %v316
      %v481 = vpop.permute.xlu0 %480
      %484 = vset.pattern.permute.xlu0 0
      %485 = vperm.xlu0 %484, %v317
      %v486 = vpop.permute.xlu0 %485
      %489 = vset.pattern.permute.xlu0 0
      %490 = vperm.xlu0 %489, %v318
      %v491 = vpop.permute.xlu0 %490
      %494 = vset.pattern.permute.xlu0 0
      %495 = vperm.xlu0 %494, %v319
      %v496 = vpop.permute.xlu0 %495
      %499 = vset.pattern.permute.xlu0 0
      %500 = vperm.xlu0 %499, %v320
      %v501 = vpop.permute.xlu0 %500
      %504 = vset.pattern.permute.xlu0 0
      %505 = vperm.xlu0 %504, %v321
      %v506 = vpop.permute.xlu0 %505
      %509 = vset.pattern.permute.xlu0 0
      %510 = vperm.xlu0 %509, %v322
      %v511 = vpop.permute.xlu0 %510
      %514 = vset.pattern.permute.xlu0 0
      %515 = vperm.xlu0 %514, %v323
      %v516 = vpop.permute.xlu0 %515
      %519 = vset.pattern.permute.xlu0 0
      %520 = vperm.xlu0 %519, %v324
      %v521 = vpop.permute.xlu0 %520
      %524 = vset.pattern.permute.xlu0 0
      %525 = vperm.xlu0 %524, %v325
      %v526 = vpop.permute.xlu0 %525
      %529 = vset.pattern.permute.xlu0 0
      %530 = vperm.xlu0 %529, %v326
      %v531 = vpop.permute.xlu0 %530
      %v533 = vmul.f32 %v389, %v416
      %v534 = vmul.f32 %v390, %v421
      %v535 = vmul.f32 %v391, %v426
      %v536 = vmul.f32 %v392, %v431
      %v537 = vmul.f32 %v393, %v436
      %v538 = vmul.f32 %v394, %v441
      %v539 = vmul.f32 %v395, %v446
      %v540 = vmul.f32 %v396, %v451
      %v541 = vmul.f32 %v397, %v456
      %v542 = vmul.f32 %v398, %v461
      %v543 = vmul.f32 %v399, %v466
      %v544 = vmul.f32 %v400, %v471
      %v545 = vmul.f32 %v401, %v476
      %v546 = vmul.f32 %v402, %v481
      %v547 = vmul.f32 %v403, %v486
      %v548 = vmul.f32 %v404, %v491
      %v549 = vmul.f32 %v405, %v496
      %v550 = vmul.f32 %v406, %v501
      %v551 = vmul.f32 %v407, %v506
      %v552 = vmul.f32 %v408, %v511
      %v553 = vmul.f32 %v409, %v516
      %v554 = vmul.f32 %v410, %v521
      %v555 = vmul.f32 %v411, %v526
      %v556 = vmul.f32 %v412, %v531
      %v557 = vpack.c.bf16 %v534, %v533
      %v558 = vpack.c.bf16 %v536, %v535
      %v559 = vpack.c.bf16 %v538, %v537
      %v560 = vpack.c.bf16 %v540, %v539
      %v561 = vpack.c.bf16 %v542, %v541
      %v562 = vpack.c.bf16 %v544, %v543
      %v563 = vpack.c.bf16 %v546, %v545
      %v564 = vpack.c.bf16 %v548, %v547
      %v565 = vpack.c.bf16 %v550, %v549
      %v566 = vpack.c.bf16 %v552, %v551
      %v567 = vpack.c.bf16 %v554, %v553
      %v568 = vpack.c.bf16 %v556, %v555
      %v569 = vld [vmem:[%s5] sm:$0x1]
      %v571 = vlaneseq
      %v572 = vshrl.u32 %v571, 7
      %v573 = vsub.s32 0, %v572
      %v574 = vrot.slane %v569, %v573
      %v576 = vld [vmem:[%s4] sm:$0xf]
      %v577 = vld [vmem:[%s4 + $0x4] sm:$0x3]
      %v580 = vunpack.c.l.b16 %v576
      %v581 = vunpack.c.l.b16 %v577
      %v582 = vpack.c.b16 %v581, %v580
      %vm583 = vcmask 97280
      %v585 = vsel %vm583, %v557, 0
      %v588 = vsel %vm583, %v558, 0
      %v591 = vsel %vm583, %v559, 0
      %v594 = vsel %vm583, %v560, 0
      %v597 = vsel %vm583, %v561, 0
      %v600 = vsel %vm583, %v562, 0
      %v603 = vsel %vm583, %v563, 0
      %v606 = vsel %vm583, %v564, 0
      %v609 = vsel %vm583, %v565, 0
      %vm611 = vcmask 1045504
      %v613 = vsel %vm611, %v582, 0
      %615 = vmatprep.subr.bf16.mxu0 0
      %616 = vmatpush1.bf16.msra.mxu0 %v613
      %617 = vmatprep.subr.bf16.mxu0 0
      %618 = vmatpush1.bf16.msra.mxu0 0
      %619 = vmatprep.subr.bf16.mxu0 0
      %620 = vmatpush1.bf16.msra.mxu0 0
      %621 = vmatprep.subr.bf16.mxu0 0
      %622 = vmatpush1.bf16.msra.mxu0 0
      %623 = vmatprep.subr.bf16.mxu0 0
      %624 = vmatpush1.bf16.msra.mxu0 0
      %625 = vmatprep.subr.bf16.mxu0 0
      %626 = vmatpush1.bf16.msra.mxu0 0
      %627 = vmatprep.subr.bf16.mxu0 0
      %628 = vmatpush1.bf16.msra.mxu0 0
      %629 = vmatprep.subr.bf16.mxu0 0
      %630 = vmatpush1.bf16.msra.mxu0 0
      %631 = vmatprep.subr.bf16.mxu0 0
      %632 = vmatpush1.bf16.msra.mxu0 0
      %633 = vmatprep.subr.bf16.mxu0 0
      %634 = vmatpush1.bf16.msra.mxu0 0
      %635 = vmatprep.subr.bf16.mxu0 0
      %636 = vmatpush1.bf16.msra.mxu0 0
      %637 = vmatprep.subr.bf16.mxu0 0
      %638 = vmatpush1.bf16.msra.mxu0 0
      %639 = vmatprep.subr.bf16.mxu0 0
      %640 = vmatpush1.bf16.msra.mxu0 0
      %641 = vmatprep.subr.bf16.mxu0 0
      %642 = vmatpush1.bf16.msra.mxu0 0
      %643 = vmatprep.subr.bf16.mxu0 0
      %644 = vmatpush1.bf16.msra.mxu0 0
      %645 = vmatprep.subr.bf16.mxu0 0
      %646 = vmatpush1.bf16.msra.mxu0 0
      %647 = vmatprep.mubr.bf16.mxu0 0
      %648 = vmatmul.mubr.bf16.gmra.mrb[0].mxu0 %v585
      %v649 = vpop.f32.mrb[0].mxu0
      %v650 = vadd.f32 0.0, %v649
      %v651 = vpop.f32.mrb[0].mxu0
      %v652 = vpop.f32.mrb[0].mxu0
      %v653 = vadd.f32 0.0, %v652
      %v654 = vpop.f32.mrb[0].mxu0
      %655 = vmatprep.mubr.bf16.mxu0 0
      %656 = vmatmul.mubr.bf16.gmra.mrb[0].mxu0 %v588
      %v657 = vpop.f32.mrb[0].mxu0
      %v658 = vadd.f32 0.0, %v657
      %v659 = vpop.f32.mrb[0].mxu0
      %v660 = vpop.f32.mrb[0].mxu0
      %v661 = vadd.f32 0.0, %v660
      %v662 = vpop.f32.mrb[0].mxu0
      %663 = vmatprep.mubr.bf16.mxu0 0
      %664 = vmatmul.mubr.bf16.gmra.mrb[0].mxu0 %v591
      %v665 = vpop.f32.mrb[0].mxu0
      %v666 = vadd.f32 0.0, %v665
      %v667 = vpop.f32.mrb[0].mxu0
      %v668 = vpop.f32.mrb[0].mxu0
      %v669 = vadd.f32 0.0, %v668
      %v670 = vpop.f32.mrb[0].mxu0
      %671 = vmatprep.mubr.bf16.mxu0 0
      %672 = vmatmul.mubr.bf16.gmra.mrb[0].mxu0 %v594
      %v673 = vpop.f32.mrb[0].mxu0
      %v674 = vadd.f32 0.0, %v673
      %v675 = vpop.f32.mrb[0].mxu0
      %v676 = vpop.f32.mrb[0].mxu0
      %v677 = vadd.f32 0.0, %v676
      %v678 = vpop.f32.mrb[0].mxu0
      %679 = vmatprep.mubr.bf16.mxu0 0
      %680 = vmatmul.mubr.bf16.gmra.mrb[0].mxu0 %v597
      %v681 = vpop.f32.mrb[0].mxu0
      %v682 = vadd.f32 0.0, %v681
      %v683 = vpop.f32.mrb[0].mxu0
      %v684 = vpop.f32.mrb[0].mxu0
      %v685 = vadd.f32 0.0, %v684
      %v686 = vpop.f32.mrb[0].mxu0
      %687 = vmatprep.mubr.bf16.mxu0 0
      %688 = vmatmul.mubr.bf16.gmra.mrb[0].mxu0 %v600
      %v689 = vpop.f32.mrb[0].mxu0
      %v690 = vadd.f32 0.0, %v689
      %v691 = vpop.f32.mrb[0].mxu0
      %v692 = vpop.f32.mrb[0].mxu0
      %v693 = vadd.f32 0.0, %v692
      %v694 = vpop.f32.mrb[0].mxu0
      %695 = vmatprep.mubr.bf16.mxu0 0
      %696 = vmatmul.mubr.bf16.gmra.mrb[0].mxu0 %v603
      %v697 = vpop.f32.mrb[0].mxu0
      %v698 = vadd.f32 0.0, %v697
      %v699 = vpop.f32.mrb[0].mxu0
      %v700 = vpop.f32.mrb[0].mxu0
      %v701 = vadd.f32 0.0, %v700
      %v702 = vpop.f32.mrb[0].mxu0
      %703 = vmatprep.mubr.bf16.mxu0 0
      %704 = vmatmul.mubr.bf16.gmra.mrb[0].mxu0 %v606
      %v705 = vpop.f32.mrb[0].mxu0
      %v706 = vadd.f32 0.0, %v705
      %v707 = vpop.f32.mrb[0].mxu0
      %v708 = vpop.f32.mrb[0].mxu0
      %v709 = vadd.f32 0.0, %v708
      %v710 = vpop.f32.mrb[0].mxu0
      %711 = vmatprep.mubr.bf16.mxu0 0
      %712 = vmatmul.mubr.bf16.gmra.mrb[0].mxu0 %v609
      %v713 = vpop.f32.mrb[0].mxu0
      %v714 = vadd.f32 0.0, %v713
      %v715 = vpop.f32.mrb[0].mxu0
      %v716 = vpop.f32.mrb[0].mxu0
      %v717 = vadd.f32 0.0, %v716
      %v718 = vpop.f32.mrb[0].mxu0
      %719 = vdwg.mxu0
      %v720 = vadd.f32 %v574, %v650
      %v721 = vadd.f32 %v574, %v653
      %v722 = vadd.f32 %v574, %v658
      %v723 = vadd.f32 %v574, %v661
      %v724 = vadd.f32 %v574, %v666
      %v725 = vadd.f32 %v574, %v669
      %v726 = vadd.f32 %v574, %v674
      %v727 = vadd.f32 %v574, %v677
      %v728 = vadd.f32 %v574, %v682
      %v729 = vadd.f32 %v574, %v685
      %v730 = vadd.f32 %v574, %v690
      %v731 = vadd.f32 %v574, %v693
      %v732 = vadd.f32 %v574, %v698
      %v733 = vadd.f32 %v574, %v701
      %v734 = vadd.f32 %v574, %v706
      %v735 = vadd.f32 %v574, %v709
      %v736 = vadd.f32 %v574, %v714
      %v737 = vadd.f32 %v574, %v717
      %s738 = scalar_lea.vmem %s4, 8
      %v739 = vld [vmem:[%s738] sm:$0xf]
      %v740 = vld [vmem:[%s738 + $0x4] sm:$0x3]
      %vm741 = vsmask.f32 7424
      %v742 = vshrl.u32 %v557, 16
      %v744 = vshll.u32 %v557, 16
      %v746 = vrot.slane %v744, 1
      %v747 = vor.u32 %v742, %v746
      %v748 = vshll.u32 %v558, 16
      %v750 = vrot.slane %v748, 1
      %v751 = vsel %vm741, %v747, %v750
      %v752 = vshrl.u32 %v558, 16
      %v754 = vor.u32 %v752, %v750
      %v755 = vshll.u32 %v559, 16
      %v757 = vrot.slane %v755, 1
      %v758 = vsel %vm741, %v754, %v757
      %v759 = vshrl.u32 %v559, 16
      %v761 = vor.u32 %v759, %v757
      %v762 = vshll.u32 %v560, 16
      %v764 = vrot.slane %v762, 1
      %v765 = vsel %vm741, %v761, %v764
      %v766 = vshrl.u32 %v560, 16
      %v768 = vor.u32 %v766, %v764
      %v769 = vshll.u32 %v561, 16
      %v771 = vrot.slane %v769, 1
      %v772 = vsel %vm741, %v768, %v771
      %v773 = vshrl.u32 %v561, 16
      %v775 = vor.u32 %v773, %v771
      %v776 = vshll.u32 %v562, 16
      %v778 = vrot.slane %v776, 1
      %v779 = vsel %vm741, %v775, %v778
      %v780 = vshrl.u32 %v562, 16
      %v782 = vor.u32 %v780, %v778
      %v783 = vshll.u32 %v563, 16
      %v785 = vrot.slane %v783, 1
      %v786 = vsel %vm741, %v782, %v785
      %v787 = vshrl.u32 %v563, 16
      %v789 = vor.u32 %v787, %v785
      %v790 = vshll.u32 %v564, 16
      %v792 = vrot.slane %v790, 1
      %v793 = vsel %vm741, %v789, %v792
      %v794 = vshrl.u32 %v564, 16
      %v796 = vor.u32 %v794, %v792
      %v797 = vshll.u32 %v565, 16
      %v799 = vrot.slane %v797, 1
      %v800 = vsel %vm741, %v796, %v799
      %v801 = vshrl.u32 %v565, 16
      %v803 = vor.u32 %v801, %v799
      %v805 = vshll.u32 %v566, 16
      %v807 = vrot.slane %v805, 1
      %v808 = vsel %vm741, %v803, %v807
      %v811 = vunpack.c.l.b16 %v739
      %v812 = vunpack.c.l.b16 %v740
      %v813 = vpack.c.b16 %v812, %v811
      %v815 = vsel %vm583, %v751, 0
      %v818 = vsel %vm583, %v758, 0
      %v821 = vsel %vm583, %v765, 0
      %v824 = vsel %vm583, %v772, 0
      %v827 = vsel %vm583, %v779, 0
      %v830 = vsel %vm583, %v786, 0
      %v833 = vsel %vm583, %v793, 0
      %v836 = vsel %vm583, %v800, 0
      %v839 = vsel %vm583, %v808, 0
      %v842 = vsel %vm611, %v813, 0
      %844 = vmatprep.subr.bf16.mxu0 0
      %845 = vmatpush1.bf16.msra.mxu0 %v842
      %846 = vmatprep.subr.bf16.mxu0 0
      %847 = vmatpush1.bf16.msra.mxu0 0
      %848 = vmatprep.subr.bf16.mxu0 0
      %849 = vmatpush1.bf16.msra.mxu0 0
      %850 = vmatprep.subr.bf16.mxu0 0
      %851 = vmatpush1.bf16.msra.mxu0 0
      %852 = vmatprep.subr.bf16.mxu0 0
      %853 = vmatpush1.bf16.msra.mxu0 0
      %854 = vmatprep.subr.bf16.mxu0 0
      %855 = vmatpush1.bf16.msra.mxu0 0
      %856 = vmatprep.subr.bf16.mxu0 0
      %857 = vmatpush1.bf16.msra.mxu0 0
      %858 = vmatprep.subr.bf16.mxu0 0
      %859 = vmatpush1.bf16.msra.mxu0 0
      %860 = vmatprep.subr.bf16.mxu0 0
      %861 = vmatpush1.bf16.msra.mxu0 0
      %862 = vmatprep.subr.bf16.mxu0 0
      %863 = vmatpush1.bf16.msra.mxu0 0
      %864 = vmatprep.subr.bf16.mxu0 0
      %865 = vmatpush1.bf16.msra.mxu0 0
      %866 = vmatprep.subr.bf16.mxu0 0
      %867 = vmatpush1.bf16.msra.mxu0 0
      %868 = vmatprep.subr.bf16.mxu0 0
      %869 = vmatpush1.bf16.msra.mxu0 0
      %870 = vmatprep.subr.bf16.mxu0 0
      %871 = vmatpush1.bf16.msra.mxu0 0
      %872 = vmatprep.subr.bf16.mxu0 0
      %873 = vmatpush1.bf16.msra.mxu0 0
      %874 = vmatprep.subr.bf16.mxu0 0
      %875 = vmatpush1.bf16.msra.mxu0 0
      %876 = vmatprep.mubr.bf16.mxu0 0
      %877 = vmatmul.mubr.bf16.gmra.mrb[0].mxu0 %v815
      %v878 = vpop.f32.mrb[0].mxu0
      %v879 = vadd.f32 0.0, %v878
      %v880 = vpop.f32.mrb[0].mxu0
      %v881 = vpop.f32.mrb[0].mxu0
      %v882 = vadd.f32 0.0, %v881
      %v883 = vpop.f32.mrb[0].mxu0
      %884 = vmatprep.mubr.bf16.mxu0 0
      %885 = vmatmul.mubr.bf16.gmra.mrb[0].mxu0 %v818
      %v886 = vpop.f32.mrb[0].mxu0
      %v887 = vadd.f32 0.0, %v886
      %v888 = vpop.f32.mrb[0].mxu0
      %v889 = vpop.f32.mrb[0].mxu0
      %v890 = vadd.f32 0.0, %v889
      %v891 = vpop.f32.mrb[0].mxu0
      %892 = vmatprep.mubr.bf16.mxu0 0
      %893 = vmatmul.mubr.bf16.gmra.mrb[0].mxu0 %v821
      %v894 = vpop.f32.mrb[0].mxu0
      %v895 = vadd.f32 0.0, %v894
      %v896 = vpop.f32.mrb[0].mxu0
      %v897 = vpop.f32.mrb[0].mxu0
      %v898 = vadd.f32 0.0, %v897
      %v899 = vpop.f32.mrb[0].mxu0
      %900 = vmatprep.mubr.bf16.mxu0 0
      %901 = vmatmul.mubr.bf16.gmra.mrb[0].mxu0 %v824
      %v902 = vpop.f32.mrb[0].mxu0
      %v903 = vadd.f32 0.0, %v902
      %v904 = vpop.f32.mrb[0].mxu0
      %v905 = vpop.f32.mrb[0].mxu0
      %v906 = vadd.f32 0.0, %v905
      %v907 = vpop.f32.mrb[0].mxu0
      %908 = vmatprep.mubr.bf16.mxu0 0
      %909 = vmatmul.mubr.bf16.gmra.mrb[0].mxu0 %v827
      %v910 = vpop.f32.mrb[0].mxu0
      %v911 = vadd.f32 0.0, %v910
      %v912 = vpop.f32.mrb[0].mxu0
      %v913 = vpop.f32.mrb[0].mxu0
      %v914 = vadd.f32 0.0, %v913
      %v915 = vpop.f32.mrb[0].mxu0
      %916 = vmatprep.mubr.bf16.mxu0 0
      %917 = vmatmul.mubr.bf16.gmra.mrb[0].mxu0 %v830
      %v918 = vpop.f32.mrb[0].mxu0
      %v919 = vadd.f32 0.0, %v918
      %v920 = vpop.f32.mrb[0].mxu0
      %v921 = vpop.f32.mrb[0].mxu0
      %v922 = vadd.f32 0.0, %v921
      %v923 = vpop.f32.mrb[0].mxu0
      %924 = vmatprep.mubr.bf16.mxu0 0
      %925 = vmatmul.mubr.bf16.gmra.mrb[0].mxu0 %v833
      %v926 = vpop.f32.mrb[0].mxu0
      %v927 = vadd.f32 0.0, %v926
      %v928 = vpop.f32.mrb[0].mxu0
      %v929 = vpop.f32.mrb[0].mxu0
      %v930 = vadd.f32 0.0, %v929
      %v931 = vpop.f32.mrb[0].mxu0
      %932 = vmatprep.mubr.bf16.mxu0 0
      %933 = vmatmul.mubr.bf16.gmra.mrb[0].mxu0 %v836
      %v934 = vpop.f32.mrb[0].mxu0
      %v935 = vadd.f32 0.0, %v934
      %v936 = vpop.f32.mrb[0].mxu0
      %v937 = vpop.f32.mrb[0].mxu0
      %v938 = vadd.f32 0.0, %v937
      %v939 = vpop.f32.mrb[0].mxu0
      %940 = vmatprep.mubr.bf16.mxu0 0
      %941 = vmatmul.mubr.bf16.gmra.mrb[0].mxu0 %v839
      %v942 = vpop.f32.mrb[0].mxu0
      %v943 = vadd.f32 0.0, %v942
      %v944 = vpop.f32.mrb[0].mxu0
      %v945 = vpop.f32.mrb[0].mxu0
      %v946 = vadd.f32 0.0, %v945
      %v947 = vpop.f32.mrb[0].mxu0
      %948 = vdwg.mxu0
      %v949 = vadd.f32 %v720, %v879
      %v950 = vadd.f32 %v721, %v882
      %v951 = vadd.f32 %v722, %v887
      %v952 = vadd.f32 %v723, %v890
      %v953 = vadd.f32 %v724, %v895
      %v954 = vadd.f32 %v725, %v898
      %v955 = vadd.f32 %v726, %v903
      %v956 = vadd.f32 %v727, %v906
      %v957 = vadd.f32 %v728, %v911
      %v958 = vadd.f32 %v729, %v914
      %v959 = vadd.f32 %v730, %v919
      %v960 = vadd.f32 %v731, %v922
      %v961 = vadd.f32 %v732, %v927
      %v962 = vadd.f32 %v733, %v930
      %v963 = vadd.f32 %v734, %v935
      %v964 = vadd.f32 %v735, %v938
      %v965 = vadd.f32 %v736, %v943
      %v966 = vadd.f32 %v737, %v946
      %s967 = scalar_lea.vmem %s4, 16
      %v968 = vld [vmem:[%s967] sm:$0xf]
      %v969 = vld [vmem:[%s967 + $0x4] sm:$0x3]
      %vm980 = vcmask 1046528
      %v981 = vrot.slane %v557, 1
      %v982 = vrot.slane %v558, 1
      %v983 = vsel %vm980, %v981, %v982
      %v984 = vrot.slane %v559, 1
      %v985 = vsel %vm980, %v982, %v984
      %v986 = vrot.slane %v560, 1
      %v987 = vsel %vm980, %v984, %v986
      %v988 = vrot.slane %v561, 1
      %v989 = vsel %vm980, %v986, %v988
      %v990 = vrot.slane %v562, 1
      %v991 = vsel %vm980, %v988, %v990
      %v992 = vrot.slane %v563, 1
      %v993 = vsel %vm980, %v990, %v992
      %v994 = vrot.slane %v564, 1
      %v995 = vsel %vm980, %v992, %v994
      %v996 = vrot.slane %v565, 1
      %v997 = vsel %vm980, %v994, %v996
      %v998 = vrot.slane %v566, 1
      %v999 = vsel %vm980, %v996, %v998
      %v1002 = vunpack.c.l.b16 %v968
      %v1003 = vunpack.c.l.b16 %v969
      %v1004 = vpack.c.b16 %v1003, %v1002
      %v1006 = vsel %vm583, %v983, 0
      %v1009 = vsel %vm583, %v985, 0
      %v1012 = vsel %vm583, %v987, 0
      %v1015 = vsel %vm583, %v989, 0
      %v1018 = vsel %vm583, %v991, 0
      %v1021 = vsel %vm583, %v993, 0
      %v1024 = vsel %vm583, %v995, 0
      %v1027 = vsel %vm583, %v997, 0
      %v1030 = vsel %vm583, %v999, 0
      %v1033 = vsel %vm611, %v1004, 0
      %1035 = vmatprep.subr.bf16.mxu0 0
      %1036 = vmatpush1.bf16.msra.mxu0 %v1033
      %1037 = vmatprep.subr.bf16.mxu0 0
      %1038 = vmatpush1.bf16.msra.mxu0 0
      %1039 = vmatprep.subr.bf16.mxu0 0
      %1040 = vmatpush1.bf16.msra.mxu0 0
      %1041 = vmatprep.subr.bf16.mxu0 0
      %1042 = vmatpush1.bf16.msra.mxu0 0
      %1043 = vmatprep.subr.bf16.mxu0 0
      %1044 = vmatpush1.bf16.msra.mxu0 0
      %1045 = vmatprep.subr.bf16.mxu0 0
      %1046 = vmatpush1.bf16.msra.mxu0 0
      %1047 = vmatprep.subr.bf16.mxu0 0
      %1048 = vmatpush1.bf16.msra.mxu0 0
      %1049 = vmatprep.subr.bf16.mxu0 0
      %1050 = vmatpush1.bf16.msra.mxu0 0
      %1051 = vmatprep.subr.bf16.mxu0 0
      %1052 = vmatpush1.bf16.msra.mxu0 0
      %1053 = vmatprep.subr.bf16.mxu0 0
      %1054 = vmatpush1.bf16.msra.mxu0 0
      %1055 = vmatprep.subr.bf16.mxu0 0
      %1056 = vmatpush1.bf16.msra.mxu0 0
      %1057 = vmatprep.subr.bf16.mxu0 0
      %1058 = vmatpush1.bf16.msra.mxu0 0
      %1059 = vmatprep.subr.bf16.mxu0 0
      %1060 = vmatpush1.bf16.msra.mxu0 0
      %1061 = vmatprep.subr.bf16.mxu0 0
      %1062 = vmatpush1.bf16.msra.mxu0 0
      %1063 = vmatprep.subr.bf16.mxu0 0
      %1064 = vmatpush1.bf16.msra.mxu0 0
      %1065 = vmatprep.subr.bf16.mxu0 0
      %1066 = vmatpush1.bf16.msra.mxu0 0
      %1067 = vmatprep.mubr.bf16.mxu0 0
      %1068 = vmatmul.mubr.bf16.gmra.mrb[0].mxu0 %v1006
      %v1069 = vpop.f32.mrb[0].mxu0
      %v1070 = vadd.f32 0.0, %v1069
      %v1071 = vpop.f32.mrb[0].mxu0
      %v1072 = vpop.f32.mrb[0].mxu0
      %v1073 = vadd.f32 0.0, %v1072
      %v1074 = vpop.f32.mrb[0].mxu0
      %1075 = vmatprep.mubr.bf16.mxu0 0
      %1076 = vmatmul.mubr.bf16.gmra.mrb[0].mxu0 %v1009
      %v1077 = vpop.f32.mrb[0].mxu0
      %v1078 = vadd.f32 0.0, %v1077
      %v1079 = vpop.f32.mrb[0].mxu0
      %v1080 = vpop.f32.mrb[0].mxu0
      %v1081 = vadd.f32 0.0, %v1080
      %v1082 = vpop.f32.mrb[0].mxu0
      %1083 = vmatprep.mubr.bf16.mxu0 0
      %1084 = vmatmul.mubr.bf16.gmra.mrb[0].mxu0 %v1012
      %v1085 = vpop.f32.mrb[0].mxu0
      %v1086 = vadd.f32 0.0, %v1085
      %v1087 = vpop.f32.mrb[0].mxu0
      %v1088 = vpop.f32.mrb[0].mxu0
      %v1089 = vadd.f32 0.0, %v1088
      %v1090 = vpop.f32.mrb[0].mxu0
      %1091 = vmatprep.mubr.bf16.mxu0 0
      %1092 = vmatmul.mubr.bf16.gmra.mrb[0].mxu0 %v1015
      %v1093 = vpop.f32.mrb[0].mxu0
      %v1094 = vadd.f32 0.0, %v1093
      %v1095 = vpop.f32.mrb[0].mxu0
      %v1096 = vpop.f32.mrb[0].mxu0
      %v1097 = vadd.f32 0.0, %v1096
      %v1098 = vpop.f32.mrb[0].mxu0
      %1099 = vmatprep.mubr.bf16.mxu0 0
      %1100 = vmatmul.mubr.bf16.gmra.mrb[0].mxu0 %v1018
      %v1101 = vpop.f32.mrb[0].mxu0
      %v1102 = vadd.f32 0.0, %v1101
      %v1103 = vpop.f32.mrb[0].mxu0
      %v1104 = vpop.f32.mrb[0].mxu0
      %v1105 = vadd.f32 0.0, %v1104
      %v1106 = vpop.f32.mrb[0].mxu0
      %1107 = vmatprep.mubr.bf16.mxu0 0
      %1108 = vmatmul.mubr.bf16.gmra.mrb[0].mxu0 %v1021
      %v1109 = vpop.f32.mrb[0].mxu0
      %v1110 = vadd.f32 0.0, %v1109
      %v1111 = vpop.f32.mrb[0].mxu0
      %v1112 = vpop.f32.mrb[0].mxu0
      %v1113 = vadd.f32 0.0, %v1112
      %v1114 = vpop.f32.mrb[0].mxu0
      %1115 = vmatprep.mubr.bf16.mxu0 0
      %1116 = vmatmul.mubr.bf16.gmra.mrb[0].mxu0 %v1024
      %v1117 = vpop.f32.mrb[0].mxu0
      %v1118 = vadd.f32 0.0, %v1117
      %v1119 = vpop.f32.mrb[0].mxu0
      %v1120 = vpop.f32.mrb[0].mxu0
      %v1121 = vadd.f32 0.0, %v1120
      %v1122 = vpop.f32.mrb[0].mxu0
      %1123 = vmatprep.mubr.bf16.mxu0 0
      %1124 = vmatmul.mubr.bf16.gmra.mrb[0].mxu0 %v1027
      %v1125 = vpop.f32.mrb[0].mxu0
      %v1126 = vadd.f32 0.0, %v1125
      %v1127 = vpop.f32.mrb[0].mxu0
      %v1128 = vpop.f32.mrb[0].mxu0
      %v1129 = vadd.f32 0.0, %v1128
      %v1130 = vpop.f32.mrb[0].mxu0
      %1131 = vmatprep.mubr.bf16.mxu0 0
      %1132 = vmatmul.mubr.bf16.gmra.mrb[0].mxu0 %v1030
      %v1133 = vpop.f32.mrb[0].mxu0
      %v1134 = vadd.f32 0.0, %v1133
      %v1135 = vpop.f32.mrb[0].mxu0
      %v1136 = vpop.f32.mrb[0].mxu0
      %v1137 = vadd.f32 0.0, %v1136
      %v1138 = vpop.f32.mrb[0].mxu0
      %1139 = vdwg.mxu0
      %v1140 = vadd.f32 %v949, %v1070
      %v1141 = vadd.f32 %v950, %v1073
      %v1142 = vadd.f32 %v951, %v1078
      %v1143 = vadd.f32 %v952, %v1081
      %v1144 = vadd.f32 %v953, %v1086
      %v1145 = vadd.f32 %v954, %v1089
      %v1146 = vadd.f32 %v955, %v1094
      %v1147 = vadd.f32 %v956, %v1097
      %v1148 = vadd.f32 %v957, %v1102
      %v1149 = vadd.f32 %v958, %v1105
      %v1150 = vadd.f32 %v959, %v1110
      %v1151 = vadd.f32 %v960, %v1113
      %v1152 = vadd.f32 %v961, %v1118
      %v1153 = vadd.f32 %v962, %v1121
      %v1154 = vadd.f32 %v963, %v1126
      %v1155 = vadd.f32 %v964, %v1129
      %v1156 = vadd.f32 %v965, %v1134
      %v1157 = vadd.f32 %v966, %v1137
      %s1158 = scalar_lea.vmem %s4, 24
      %v1159 = vld [vmem:[%s1158] sm:$0xf]
      %v1160 = vld [vmem:[%s1158 + $0x4] sm:$0x3]
      %v1162 = vrot.slane %v567, 1
      %v1163 = vsel %vm980, %v998, %v1162
      %v1166 = vunpack.c.l.b16 %v1159
      %v1167 = vunpack.c.l.b16 %v1160
      %v1168 = vpack.c.b16 %v1167, %v1166
      %v1170 = vsel %vm583, %v1163, 0
      %v1173 = vsel %vm611, %v1168, 0
      %1175 = vmatprep.subr.bf16.mxu0 0
      %1176 = vmatpush1.bf16.msra.mxu0 %v1173
      %1177 = vmatprep.subr.bf16.mxu0 0
      %1178 = vmatpush1.bf16.msra.mxu0 0
      %1179 = vmatprep.subr.bf16.mxu0 0
      %1180 = vmatpush1.bf16.msra.mxu0 0
      %1181 = vmatprep.subr.bf16.mxu0 0
      %1182 = vmatpush1.bf16.msra.mxu0 0
      %1183 = vmatprep.subr.bf16.mxu0 0
      %1184 = vmatpush1.bf16.msra.mxu0 0
      %1185 = vmatprep.subr.bf16.mxu0 0
      %1186 = vmatpush1.bf16.msra.mxu0 0
      %1187 = vmatprep.subr.bf16.mxu0 0
      %1188 = vmatpush1.bf16.msra.mxu0 0
      %1189 = vmatprep.subr.bf16.mxu0 0
      %1190 = vmatpush1.bf16.msra.mxu0 0
      %1191 = vmatprep.subr.bf16.mxu0 0
      %1192 = vmatpush1.bf16.msra.mxu0 0
      %1193 = vmatprep.subr.bf16.mxu0 0
      %1194 = vmatpush1.bf16.msra.mxu0 0
      %1195 = vmatprep.subr.bf16.mxu0 0
      %1196 = vmatpush1.bf16.msra.mxu0 0
      %1197 = vmatprep.subr.bf16.mxu0 0
      %1198 = vmatpush1.bf16.msra.mxu0 0
      %1199 = vmatprep.subr.bf16.mxu0 0
      %1200 = vmatpush1.bf16.msra.mxu0 0
      %1201 = vmatprep.subr.bf16.mxu0 0
      %1202 = vmatpush1.bf16.msra.mxu0 0
      %1203 = vmatprep.subr.bf16.mxu0 0
      %1204 = vmatpush1.bf16.msra.mxu0 0
      %1205 = vmatprep.subr.bf16.mxu0 0
      %1206 = vmatpush1.bf16.msra.mxu0 0
      %1207 = vmatprep.mubr.bf16.mxu0 0
      %1208 = vmatmul.mubr.bf16.gmra.mrb[0].mxu0 %v1009
      %v1209 = vpop.f32.mrb[0].mxu0
      %v1210 = vadd.f32 0.0, %v1209
      %v1211 = vpop.f32.mrb[0].mxu0
      %v1212 = vpop.f32.mrb[0].mxu0
      %v1213 = vadd.f32 0.0, %v1212
      %v1214 = vpop.f32.mrb[0].mxu0
      %1215 = vmatprep.mubr.bf16.mxu0 0
      %1216 = vmatmul.mubr.bf16.gmra.mrb[0].mxu0 %v1012
      %v1217 = vpop.f32.mrb[0].mxu0
      %v1218 = vadd.f32 0.0, %v1217
      %v1219 = vpop.f32.mrb[0].mxu0
      %v1220 = vpop.f32.mrb[0].mxu0
      %v1221 = vadd.f32 0.0, %v1220
      %v1222 = vpop.f32.mrb[0].mxu0
      %1223 = vmatprep.mubr.bf16.mxu0 0
      %1224 = vmatmul.mubr.bf16.gmra.mrb[0].mxu0 %v1015
      %v1225 = vpop.f32.mrb[0].mxu0
      %v1226 = vadd.f32 0.0, %v1225
      %v1227 = vpop.f32.mrb[0].mxu0
      %v1228 = vpop.f32.mrb[0].mxu0
      %v1229 = vadd.f32 0.0, %v1228
      %v1230 = vpop.f32.mrb[0].mxu0
      %1231 = vmatprep.mubr.bf16.mxu0 0
      %1232 = vmatmul.mubr.bf16.gmra.mrb[0].mxu0 %v1018
      %v1233 = vpop.f32.mrb[0].mxu0
      %v1234 = vadd.f32 0.0, %v1233
      %v1235 = vpop.f32.mrb[0].mxu0
      %v1236 = vpop.f32.mrb[0].mxu0
      %v1237 = vadd.f32 0.0, %v1236
      %v1238 = vpop.f32.mrb[0].mxu0
      %1239 = vmatprep.mubr.bf16.mxu0 0
      %1240 = vmatmul.mubr.bf16.gmra.mrb[0].mxu0 %v1021
      %v1241 = vpop.f32.mrb[0].mxu0
      %v1242 = vadd.f32 0.0, %v1241
      %v1243 = vpop.f32.mrb[0].mxu0
      %v1244 = vpop.f32.mrb[0].mxu0
      %v1245 = vadd.f32 0.0, %v1244
      %v1246 = vpop.f32.mrb[0].mxu0
      %1247 = vmatprep.mubr.bf16.mxu0 0
      %1248 = vmatmul.mubr.bf16.gmra.mrb[0].mxu0 %v1024
      %v1249 = vpop.f32.mrb[0].mxu0
      %v1250 = vadd.f32 0.0, %v1249
      %v1251 = vpop.f32.mrb[0].mxu0
      %v1252 = vpop.f32.mrb[0].mxu0
      %v1253 = vadd.f32 0.0, %v1252
      %v1254 = vpop.f32.mrb[0].mxu0
      %1255 = vmatprep.mubr.bf16.mxu0 0
      %1256 = vmatmul.mubr.bf16.gmra.mrb[0].mxu0 %v1027
      %v1257 = vpop.f32.mrb[0].mxu0
      %v1258 = vadd.f32 0.0, %v1257
      %v1259 = vpop.f32.mrb[0].mxu0
      %v1260 = vpop.f32.mrb[0].mxu0
      %v1261 = vadd.f32 0.0, %v1260
      %v1262 = vpop.f32.mrb[0].mxu0
      %1263 = vmatprep.mubr.bf16.mxu0 0
      %1264 = vmatmul.mubr.bf16.gmra.mrb[0].mxu0 %v1030
      %v1265 = vpop.f32.mrb[0].mxu0
      %v1266 = vadd.f32 0.0, %v1265
      %v1267 = vpop.f32.mrb[0].mxu0
      %v1268 = vpop.f32.mrb[0].mxu0
      %v1269 = vadd.f32 0.0, %v1268
      %v1270 = vpop.f32.mrb[0].mxu0
      %1271 = vmatprep.mubr.bf16.mxu0 0
      %1272 = vmatmul.mubr.bf16.gmra.mrb[0].mxu0 %v1170
      %v1273 = vpop.f32.mrb[0].mxu0
      %v1274 = vadd.f32 0.0, %v1273
      %v1275 = vpop.f32.mrb[0].mxu0
      %v1276 = vpop.f32.mrb[0].mxu0
      %v1277 = vadd.f32 0.0, %v1276
      %v1278 = vpop.f32.mrb[0].mxu0
      %1279 = vdwg.mxu0
      %v1280 = vadd.f32 %v1140, %v1210
      %v1281 = vadd.f32 %v1141, %v1213
      %v1282 = vadd.f32 %v1142, %v1218
      %v1283 = vadd.f32 %v1143, %v1221
      %v1284 = vadd.f32 %v1144, %v1226
      %v1285 = vadd.f32 %v1145, %v1229
      %v1286 = vadd.f32 %v1146, %v1234
      %v1287 = vadd.f32 %v1147, %v1237
      %v1288 = vadd.f32 %v1148, %v1242
      %v1289 = vadd.f32 %v1149, %v1245
      %v1290 = vadd.f32 %v1150, %v1250
      %v1291 = vadd.f32 %v1151, %v1253
      %v1292 = vadd.f32 %v1152, %v1258
      %v1293 = vadd.f32 %v1153, %v1261
      %v1294 = vadd.f32 %v1154, %v1266
      %v1295 = vadd.f32 %v1155, %v1269
      %v1296 = vadd.f32 %v1156, %v1274
      %v1297 = vadd.f32 %v1157, %v1277
      %s1298 = scalar_lea.vmem %s4, 32
      %v1299 = vld [vmem:[%s1298] sm:$0xf]
      %v1300 = vld [vmem:[%s1298 + $0x4] sm:$0x3]
      %vm1301 = vsmask.f32 6400
      %v1302 = vrot.slane %v752, 1
      %v1303 = vrot.slane %v748, 2
      %v1304 = vor.u32 %v1302, %v1303
      %v1305 = vrot.slane %v759, 1
      %v1306 = vrot.slane %v755, 2
      %v1307 = vor.u32 %v1305, %v1306
      %v1308 = vsel %vm1301, %v1304, %v1307
      %v1309 = vrot.slane %v766, 1
      %v1310 = vrot.slane %v762, 2
      %v1311 = vor.u32 %v1309, %v1310
      %v1312 = vsel %vm1301, %v1307, %v1311
      %v1313 = vrot.slane %v773, 1
      %v1314 = vrot.slane %v769, 2
      %v1315 = vor.u32 %v1313, %v1314
      %v1316 = vsel %vm1301, %v1311, %v1315
      %v1317 = vrot.slane %v780, 1
      %v1318 = vrot.slane %v776, 2
      %v1319 = vor.u32 %v1317, %v1318
      %v1320 = vsel %vm1301, %v1315, %v1319
      %v1321 = vrot.slane %v787, 1
      %v1322 = vrot.slane %v783, 2
      %v1323 = vor.u32 %v1321, %v1322
      %v1324 = vsel %vm1301, %v1319, %v1323
      %v1325 = vrot.slane %v794, 1
      %v1326 = vrot.slane %v790, 2
      %v1327 = vor.u32 %v1325, %v1326
      %v1328 = vsel %vm1301, %v1323, %v1327
      %v1329 = vrot.slane %v801, 1
      %v1330 = vrot.slane %v797, 2
      %v1331 = vor.u32 %v1329, %v1330
      %v1332 = vsel %vm1301, %v1327, %v1331
      %v1333 = vshrl.u32 %v566, 16
      %v1335 = vrot.slane %v1333, 1
      %v1336 = vrot.slane %v805, 2
      %v1337 = vor.u32 %v1335, %v1336
      %v1338 = vsel %vm1301, %v1331, %v1337
      %v1340 = vshrl.u32 %v567, 16
      %v1342 = vrot.slane %v1340, 1
      %v1343 = vshll.u32 %v567, 16
      %v1345 = vrot.slane %v1343, 2
      %v1346 = vor.u32 %v1342, %v1345
      %v1347 = vsel %vm1301, %v1337, %v1346
      %v1350 = vunpack.c.l.b16 %v1299
      %v1351 = vunpack.c.l.b16 %v1300
      %v1352 = vpack.c.b16 %v1351, %v1350
      %v1354 = vsel %vm583, %v1308, 0
      %v1357 = vsel %vm583, %v1312, 0
      %v1360 = vsel %vm583, %v1316, 0
      %v1363 = vsel %vm583, %v1320, 0
      %v1366 = vsel %vm583, %v1324, 0
      %v1369 = vsel %vm583, %v1328, 0
      %v1372 = vsel %vm583, %v1332, 0
      %v1375 = vsel %vm583, %v1338, 0
      %v1378 = vsel %vm583, %v1347, 0
      %v1381 = vsel %vm611, %v1352, 0
      %1383 = vmatprep.subr.bf16.mxu0 0
      %1384 = vmatpush1.bf16.msra.mxu0 %v1381
      %1385 = vmatprep.subr.bf16.mxu0 0
      %1386 = vmatpush1.bf16.msra.mxu0 0
      %1387 = vmatprep.subr.bf16.mxu0 0
      %1388 = vmatpush1.bf16.msra.mxu0 0
      %1389 = vmatprep.subr.bf16.mxu0 0
      %1390 = vmatpush1.bf16.msra.mxu0 0
      %1391 = vmatprep.subr.bf16.mxu0 0
      %1392 = vmatpush1.bf16.msra.mxu0 0
      %1393 = vmatprep.subr.bf16.mxu0 0
      %1394 = vmatpush1.bf16.msra.mxu0 0
      %1395 = vmatprep.subr.bf16.mxu0 0
      %1396 = vmatpush1.bf16.msra.mxu0 0
      %1397 = vmatprep.subr.bf16.mxu0 0
      %1398 = vmatpush1.bf16.msra.mxu0 0
      %1399 = vmatprep.subr.bf16.mxu0 0
      %1400 = vmatpush1.bf16.msra.mxu0 0
      %1401 = vmatprep.subr.bf16.mxu0 0
      %1402 = vmatpush1.bf16.msra.mxu0 0
      %1403 = vmatprep.subr.bf16.mxu0 0
      %1404 = vmatpush1.bf16.msra.mxu0 0
      %1405 = vmatprep.subr.bf16.mxu0 0
      %1406 = vmatpush1.bf16.msra.mxu0 0
      %1407 = vmatprep.subr.bf16.mxu0 0
      %1408 = vmatpush1.bf16.msra.mxu0 0
      %1409 = vmatprep.subr.bf16.mxu0 0
      %1410 = vmatpush1.bf16.msra.mxu0 0
      %1411 = vmatprep.subr.bf16.mxu0 0
      %1412 = vmatpush1.bf16.msra.mxu0 0
      %1413 = vmatprep.subr.bf16.mxu0 0
      %1414 = vmatpush1.bf16.msra.mxu0 0
      %1415 = vmatprep.mubr.bf16.mxu0 0
      %1416 = vmatmul.mubr.bf16.gmra.mrb[0].mxu0 %v1354
      %v1417 = vpop.f32.mrb[0].mxu0
      %v1418 = vadd.f32 0.0, %v1417
      %v1419 = vpop.f32.mrb[0].mxu0
      %v1420 = vpop.f32.mrb[0].mxu0
      %v1421 = vadd.f32 0.0, %v1420
      %v1422 = vpop.f32.mrb[0].mxu0
      %1423 = vmatprep.mubr.bf16.mxu0 0
      %1424 = vmatmul.mubr.bf16.gmra.mrb[0].mxu0 %v1357
      %v1425 = vpop.f32.mrb[0].mxu0
      %v1426 = vadd.f32 0.0, %v1425
      %v1427 = vpop.f32.mrb[0].mxu0
      %v1428 = vpop.f32.mrb[0].mxu0
      %v1429 = vadd.f32 0.0, %v1428
      %v1430 = vpop.f32.mrb[0].mxu0
      %1431 = vmatprep.mubr.bf16.mxu0 0
      %1432 = vmatmul.mubr.bf16.gmra.mrb[0].mxu0 %v1360
      %v1433 = vpop.f32.mrb[0].mxu0
      %v1434 = vadd.f32 0.0, %v1433
      %v1435 = vpop.f32.mrb[0].mxu0
      %v1436 = vpop.f32.mrb[0].mxu0
      %v1437 = vadd.f32 0.0, %v1436
      %v1438 = vpop.f32.mrb[0].mxu0
      %1439 = vmatprep.mubr.bf16.mxu0 0
      %1440 = vmatmul.mubr.bf16.gmra.mrb[0].mxu0 %v1363
      %v1441 = vpop.f32.mrb[0].mxu0
      %v1442 = vadd.f32 0.0, %v1441
      %v1443 = vpop.f32.mrb[0].mxu0
      %v1444 = vpop.f32.mrb[0].mxu0
      %v1445 = vadd.f32 0.0, %v1444
      %v1446 = vpop.f32.mrb[0].mxu0
      %1447 = vmatprep.mubr.bf16.mxu0 0
      %1448 = vmatmul.mubr.bf16.gmra.mrb[0].mxu0 %v1366
      %v1449 = vpop.f32.mrb[0].mxu0
      %v1450 = vadd.f32 0.0, %v1449
      %v1451 = vpop.f32.mrb[0].mxu0
      %v1452 = vpop.f32.mrb[0].mxu0
      %v1453 = vadd.f32 0.0, %v1452
      %v1454 = vpop.f32.mrb[0].mxu0
      %1455 = vmatprep.mubr.bf16.mxu0 0
      %1456 = vmatmul.mubr.bf16.gmra.mrb[0].mxu0 %v1369
      %v1457 = vpop.f32.mrb[0].mxu0
      %v1458 = vadd.f32 0.0, %v1457
      %v1459 = vpop.f32.mrb[0].mxu0
      %v1460 = vpop.f32.mrb[0].mxu0
      %v1461 = vadd.f32 0.0, %v1460
      %v1462 = vpop.f32.mrb[0].mxu0
      %1463 = vmatprep.mubr.bf16.mxu0 0
      %1464 = vmatmul.mubr.bf16.gmra.mrb[0].mxu0 %v1372
      %v1465 = vpop.f32.mrb[0].mxu0
      %v1466 = vadd.f32 0.0, %v1465
      %v1467 = vpop.f32.mrb[0].mxu0
      %v1468 = vpop.f32.mrb[0].mxu0
      %v1469 = vadd.f32 0.0, %v1468
      %v1470 = vpop.f32.mrb[0].mxu0
      %1471 = vmatprep.mubr.bf16.mxu0 0
      %1472 = vmatmul.mubr.bf16.gmra.mrb[0].mxu0 %v1375
      %v1473 = vpop.f32.mrb[0].mxu0
      %v1474 = vadd.f32 0.0, %v1473
      %v1475 = vpop.f32.mrb[0].mxu0
      %v1476 = vpop.f32.mrb[0].mxu0
      %v1477 = vadd.f32 0.0, %v1476
      %v1478 = vpop.f32.mrb[0].mxu0
      %1479 = vmatprep.mubr.bf16.mxu0 0
      %1480 = vmatmul.mubr.bf16.gmra.mrb[0].mxu0 %v1378
      %v1481 = vpop.f32.mrb[0].mxu0
      %v1482 = vadd.f32 0.0, %v1481
      %v1483 = vpop.f32.mrb[0].mxu0
      %v1484 = vpop.f32.mrb[0].mxu0
      %v1485 = vadd.f32 0.0, %v1484
      %v1486 = vpop.f32.mrb[0].mxu0
      %1487 = vdwg.mxu0
      %v1488 = vadd.f32 %v1280, %v1418
      %v1489 = vadd.f32 %v1281, %v1421
      %v1490 = vadd.f32 %v1282, %v1426
      %v1491 = vadd.f32 %v1283, %v1429
      %v1492 = vadd.f32 %v1284, %v1434
      %v1493 = vadd.f32 %v1285, %v1437
      %v1494 = vadd.f32 %v1286, %v1442
      %v1495 = vadd.f32 %v1287, %v1445
      %v1496 = vadd.f32 %v1288, %v1450
      %v1497 = vadd.f32 %v1289, %v1453
      %v1498 = vadd.f32 %v1290, %v1458
      %v1499 = vadd.f32 %v1291, %v1461
      %v1500 = vadd.f32 %v1292, %v1466
      %v1501 = vadd.f32 %v1293, %v1469
      %v1502 = vadd.f32 %v1294, %v1474
      %v1503 = vadd.f32 %v1295, %v1477
      %v1504 = vadd.f32 %v1296, %v1482
      %v1505 = vadd.f32 %v1297, %v1485
      %s1506 = scalar_lea.vmem %s4, 40
      %v1507 = vld [vmem:[%s1506] sm:$0xf]
      %v1508 = vld [vmem:[%s1506 + $0x4] sm:$0x3]
      %vm1509 = vcmask 1045504
      %v1510 = vrot.slane %v558, 2
      %v1511 = vrot.slane %v559, 2
      %v1512 = vsel %vm1509, %v1510, %v1511
      %v1513 = vrot.slane %v560, 2
      %v1514 = vsel %vm1509, %v1511, %v1513
      %v1515 = vrot.slane %v561, 2
      %v1516 = vsel %vm1509, %v1513, %v1515
      %v1517 = vrot.slane %v562, 2
      %v1518 = vsel %vm1509, %v1515, %v1517
      %v1519 = vrot.slane %v563, 2
      %v1520 = vsel %vm1509, %v1517, %v1519
      %v1521 = vrot.slane %v564, 2
      %v1522 = vsel %vm1509, %v1519, %v1521
      %v1523 = vrot.slane %v565, 2
      %v1524 = vsel %vm1509, %v1521, %v1523
      %v1525 = vrot.slane %v566, 2
      %v1526 = vsel %vm1509, %v1523, %v1525
      %v1527 = vrot.slane %v567, 2
      %v1528 = vsel %vm1509, %v1525, %v1527
      %v1531 = vunpack.c.l.b16 %v1507
      %v1532 = vunpack.c.l.b16 %v1508
      %v1533 = vpack.c.b16 %v1532, %v1531
      %v1535 = vsel %vm583, %v1512, 0
      %v1538 = vsel %vm583, %v1514, 0
      %v1541 = vsel %vm583, %v1516, 0
      %v1544 = vsel %vm583, %v1518, 0
      %v1547 = vsel %vm583, %v1520, 0
      %v1550 = vsel %vm583, %v1522, 0
      %v1553 = vsel %vm583, %v1524, 0
      %v1556 = vsel %vm583, %v1526, 0
      %v1559 = vsel %vm583, %v1528, 0
      %v1562 = vsel %vm611, %v1533, 0
      %1564 = vmatprep.subr.bf16.mxu0 0
      %1565 = vmatpush1.bf16.msra.mxu0 %v1562
      %1566 = vmatprep.subr.bf16.mxu0 0
      %1567 = vmatpush1.bf16.msra.mxu0 0
      %1568 = vmatprep.subr.bf16.mxu0 0
      %1569 = vmatpush1.bf16.msra.mxu0 0
      %1570 = vmatprep.subr.bf16.mxu0 0
      %1571 = vmatpush1.bf16.msra.mxu0 0
      %1572 = vmatprep.subr.bf16.mxu0 0
      %1573 = vmatpush1.bf16.msra.mxu0 0
      %1574 = vmatprep.subr.bf16.mxu0 0
      %1575 = vmatpush1.bf16.msra.mxu0 0
      %1576 = vmatprep.subr.bf16.mxu0 0
      %1577 = vmatpush1.bf16.msra.mxu0 0
      %1578 = vmatprep.subr.bf16.mxu0 0
      %1579 = vmatpush1.bf16.msra.mxu0 0
      %1580 = vmatprep.subr.bf16.mxu0 0
      %1581 = vmatpush1.bf16.msra.mxu0 0
      %1582 = vmatprep.subr.bf16.mxu0 0
      %1583 = vmatpush1.bf16.msra.mxu0 0
      %1584 = vmatprep.subr.bf16.mxu0 0
      %1585 = vmatpush1.bf16.msra.mxu0 0
      %1586 = vmatprep.subr.bf16.mxu0 0
      %1587 = vmatpush1.bf16.msra.mxu0 0
      %1588 = vmatprep.subr.bf16.mxu0 0
      %1589 = vmatpush1.bf16.msra.mxu0 0
      %1590 = vmatprep.subr.bf16.mxu0 0
      %1591 = vmatpush1.bf16.msra.mxu0 0
      %1592 = vmatprep.subr.bf16.mxu0 0
      %1593 = vmatpush1.bf16.msra.mxu0 0
      %1594 = vmatprep.subr.bf16.mxu0 0
      %1595 = vmatpush1.bf16.msra.mxu0 0
      %1596 = vmatprep.mubr.bf16.mxu0 0
      %1597 = vmatmul.mubr.bf16.gmra.mrb[0].mxu0 %v1535
      %v1598 = vpop.f32.mrb[0].mxu0
      %v1599 = vadd.f32 0.0, %v1598
      %v1600 = vpop.f32.mrb[0].mxu0
      %v1601 = vpop.f32.mrb[0].mxu0
      %v1602 = vadd.f32 0.0, %v1601
      %v1603 = vpop.f32.mrb[0].mxu0
      %1604 = vmatprep.mubr.bf16.mxu0 0
      %1605 = vmatmul.mubr.bf16.gmra.mrb[0].mxu0 %v1538
      %v1606 = vpop.f32.mrb[0].mxu0
      %v1607 = vadd.f32 0.0, %v1606
      %v1608 = vpop.f32.mrb[0].mxu0
      %v1609 = vpop.f32.mrb[0].mxu0
      %v1610 = vadd.f32 0.0, %v1609
      %v1611 = vpop.f32.mrb[0].mxu0
      %1612 = vmatprep.mubr.bf16.mxu0 0
      %1613 = vmatmul.mubr.bf16.gmra.mrb[0].mxu0 %v1541
      %v1614 = vpop.f32.mrb[0].mxu0
      %v1615 = vadd.f32 0.0, %v1614
      %v1616 = vpop.f32.mrb[0].mxu0
      %v1617 = vpop.f32.mrb[0].mxu0
      %v1618 = vadd.f32 0.0, %v1617
      %v1619 = vpop.f32.mrb[0].mxu0
      %1620 = vmatprep.mubr.bf16.mxu0 0
      %1621 = vmatmul.mubr.bf16.gmra.mrb[0].mxu0 %v1544
      %v1622 = vpop.f32.mrb[0].mxu0
      %v1623 = vadd.f32 0.0, %v1622
      %v1624 = vpop.f32.mrb[0].mxu0
      %v1625 = vpop.f32.mrb[0].mxu0
      %v1626 = vadd.f32 0.0, %v1625
      %v1627 = vpop.f32.mrb[0].mxu0
      %1628 = vmatprep.mubr.bf16.mxu0 0
      %1629 = vmatmul.mubr.bf16.gmra.mrb[0].mxu0 %v1547
      %v1630 = vpop.f32.mrb[0].mxu0
      %v1631 = vadd.f32 0.0, %v1630
      %v1632 = vpop.f32.mrb[0].mxu0
      %v1633 = vpop.f32.mrb[0].mxu0
      %v1634 = vadd.f32 0.0, %v1633
      %v1635 = vpop.f32.mrb[0].mxu0
      %1636 = vmatprep.mubr.bf16.mxu0 0
      %1637 = vmatmul.mubr.bf16.gmra.mrb[0].mxu0 %v1550
      %v1638 = vpop.f32.mrb[0].mxu0
      %v1639 = vadd.f32 0.0, %v1638
      %v1640 = vpop.f32.mrb[0].mxu0
      %v1641 = vpop.f32.mrb[0].mxu0
      %v1642 = vadd.f32 0.0, %v1641
      %v1643 = vpop.f32.mrb[0].mxu0
      %1644 = vmatprep.mubr.bf16.mxu0 0
      %1645 = vmatmul.mubr.bf16.gmra.mrb[0].mxu0 %v1553
      %v1646 = vpop.f32.mrb[0].mxu0
      %v1647 = vadd.f32 0.0, %v1646
      %v1648 = vpop.f32.mrb[0].mxu0
      %v1649 = vpop.f32.mrb[0].mxu0
      %v1650 = vadd.f32 0.0, %v1649
      %v1651 = vpop.f32.mrb[0].mxu0
      %1652 = vmatprep.mubr.bf16.mxu0 0
      %1653 = vmatmul.mubr.bf16.gmra.mrb[0].mxu0 %v1556
      %v1654 = vpop.f32.mrb[0].mxu0
      %v1655 = vadd.f32 0.0, %v1654
      %v1656 = vpop.f32.mrb[0].mxu0
      %v1657 = vpop.f32.mrb[0].mxu0
      %v1658 = vadd.f32 0.0, %v1657
      %v1659 = vpop.f32.mrb[0].mxu0
      %1660 = vmatprep.mubr.bf16.mxu0 0
      %1661 = vmatmul.mubr.bf16.gmra.mrb[0].mxu0 %v1559
      %v1662 = vpop.f32.mrb[0].mxu0
      %v1663 = vadd.f32 0.0, %v1662
      %v1664 = vpop.f32.mrb[0].mxu0
      %v1665 = vpop.f32.mrb[0].mxu0
      %v1666 = vadd.f32 0.0, %v1665
      %v1667 = vpop.f32.mrb[0].mxu0
      %1668 = vdwg.mxu0
      %v1669 = vadd.f32 %v1488, %v1599
      %v1670 = vadd.f32 %v1489, %v1602
      %v1671 = vadd.f32 %v1490, %v1607
      %v1672 = vadd.f32 %v1491, %v1610
      %v1673 = vadd.f32 %v1492, %v1615
      %v1674 = vadd.f32 %v1493, %v1618
      %v1675 = vadd.f32 %v1494, %v1623
      %v1676 = vadd.f32 %v1495, %v1626
      %v1677 = vadd.f32 %v1496, %v1631
      %v1678 = vadd.f32 %v1497, %v1634
      %v1679 = vadd.f32 %v1498, %v1639
      %v1680 = vadd.f32 %v1499, %v1642
      %v1681 = vadd.f32 %v1500, %v1647
      %v1682 = vadd.f32 %v1501, %v1650
      %v1683 = vadd.f32 %v1502, %v1655
      %v1684 = vadd.f32 %v1503, %v1658
      %v1685 = vadd.f32 %v1504, %v1663
      %v1686 = vadd.f32 %v1505, %v1666
      %s1687 = scalar_lea.vmem %s4, 48
      %v1688 = vld [vmem:[%s1687] sm:$0xf]
      %v1689 = vld [vmem:[%s1687 + $0x4] sm:$0x3]
      %v1691 = vrot.slane %v568, 2
      %v1692 = vsel %vm1509, %v1527, %v1691
      %v1695 = vunpack.c.l.b16 %v1688
      %v1696 = vunpack.c.l.b16 %v1689
      %v1697 = vpack.c.b16 %v1696, %v1695
      %v1699 = vsel %vm583, %v1692, 0
      %v1702 = vsel %vm611, %v1697, 0
      %1704 = vmatprep.subr.bf16.mxu0 0
      %1705 = vmatpush1.bf16.msra.mxu0 %v1702
      %1706 = vmatprep.subr.bf16.mxu0 0
      %1707 = vmatpush1.bf16.msra.mxu0 0
      %1708 = vmatprep.subr.bf16.mxu0 0
      %1709 = vmatpush1.bf16.msra.mxu0 0
      %1710 = vmatprep.subr.bf16.mxu0 0
      %1711 = vmatpush1.bf16.msra.mxu0 0
      %1712 = vmatprep.subr.bf16.mxu0 0
      %1713 = vmatpush1.bf16.msra.mxu0 0
      %1714 = vmatprep.subr.bf16.mxu0 0
      %1715 = vmatpush1.bf16.msra.mxu0 0
      %1716 = vmatprep.subr.bf16.mxu0 0
      %1717 = vmatpush1.bf16.msra.mxu0 0
      %1718 = vmatprep.subr.bf16.mxu0 0
      %1719 = vmatpush1.bf16.msra.mxu0 0
      %1720 = vmatprep.subr.bf16.mxu0 0
      %1721 = vmatpush1.bf16.msra.mxu0 0
      %1722 = vmatprep.subr.bf16.mxu0 0
      %1723 = vmatpush1.bf16.msra.mxu0 0
      %1724 = vmatprep.subr.bf16.mxu0 0
      %1725 = vmatpush1.bf16.msra.mxu0 0
      %1726 = vmatprep.subr.bf16.mxu0 0
      %1727 = vmatpush1.bf16.msra.mxu0 0
      %1728 = vmatprep.subr.bf16.mxu0 0
      %1729 = vmatpush1.bf16.msra.mxu0 0
      %1730 = vmatprep.subr.bf16.mxu0 0
      %1731 = vmatpush1.bf16.msra.mxu0 0
      %1732 = vmatprep.subr.bf16.mxu0 0
      %1733 = vmatpush1.bf16.msra.mxu0 0
      %1734 = vmatprep.subr.bf16.mxu0 0
      %1735 = vmatpush1.bf16.msra.mxu0 0
      %1736 = vmatprep.mubr.bf16.mxu0 0
      %1737 = vmatmul.mubr.bf16.gmra.mrb[0].mxu0 %v1538
      %v1738 = vpop.f32.mrb[0].mxu0
      %v1739 = vadd.f32 0.0, %v1738
      %v1740 = vpop.f32.mrb[0].mxu0
      %v1741 = vpop.f32.mrb[0].mxu0
      %v1742 = vadd.f32 0.0, %v1741
      %v1743 = vpop.f32.mrb[0].mxu0
      %1744 = vmatprep.mubr.bf16.mxu0 0
      %1745 = vmatmul.mubr.bf16.gmra.mrb[0].mxu0 %v1541
      %v1746 = vpop.f32.mrb[0].mxu0
      %v1747 = vadd.f32 0.0, %v1746
      %v1748 = vpop.f32.mrb[0].mxu0
      %v1749 = vpop.f32.mrb[0].mxu0
      %v1750 = vadd.f32 0.0, %v1749
      %v1751 = vpop.f32.mrb[0].mxu0
      %1752 = vmatprep.mubr.bf16.mxu0 0
      %1753 = vmatmul.mubr.bf16.gmra.mrb[0].mxu0 %v1544
      %v1754 = vpop.f32.mrb[0].mxu0
      %v1755 = vadd.f32 0.0, %v1754
      %v1756 = vpop.f32.mrb[0].mxu0
      %v1757 = vpop.f32.mrb[0].mxu0
      %v1758 = vadd.f32 0.0, %v1757
      %v1759 = vpop.f32.mrb[0].mxu0
      %1760 = vmatprep.mubr.bf16.mxu0 0
      %1761 = vmatmul.mubr.bf16.gmra.mrb[0].mxu0 %v1547
      %v1762 = vpop.f32.mrb[0].mxu0
      %v1763 = vadd.f32 0.0, %v1762
      %v1764 = vpop.f32.mrb[0].mxu0
      %v1765 = vpop.f32.mrb[0].mxu0
      %v1766 = vadd.f32 0.0, %v1765
      %v1767 = vpop.f32.mrb[0].mxu0
      %1768 = vmatprep.mubr.bf16.mxu0 0
      %1769 = vmatmul.mubr.bf16.gmra.mrb[0].mxu0 %v1550
      %v1770 = vpop.f32.mrb[0].mxu0
      %v1771 = vadd.f32 0.0, %v1770
      %v1772 = vpop.f32.mrb[0].mxu0
      %v1773 = vpop.f32.mrb[0].mxu0
      %v1774 = vadd.f32 0.0, %v1773
      %v1775 = vpop.f32.mrb[0].mxu0
      %1776 = vmatprep.mubr.bf16.mxu0 0
      %1777 = vmatmul.mubr.bf16.gmra.mrb[0].mxu0 %v1553
      %v1778 = vpop.f32.mrb[0].mxu0
      %v1779 = vadd.f32 0.0, %v1778
      %v1780 = vpop.f32.mrb[0].mxu0
      %v1781 = vpop.f32.mrb[0].mxu0
      %v1782 = vadd.f32 0.0, %v1781
      %v1783 = vpop.f32.mrb[0].mxu0
      %1784 = vmatprep.mubr.bf16.mxu0 0
      %1785 = vmatmul.mubr.bf16.gmra.mrb[0].mxu0 %v1556
      %v1786 = vpop.f32.mrb[0].mxu0
      %v1787 = vadd.f32 0.0, %v1786
      %v1788 = vpop.f32.mrb[0].mxu0
      %v1789 = vpop.f32.mrb[0].mxu0
      %v1790 = vadd.f32 0.0, %v1789
      %v1791 = vpop.f32.mrb[0].mxu0
      %1792 = vmatprep.mubr.bf16.mxu0 0
      %1793 = vmatmul.mubr.bf16.gmra.mrb[0].mxu0 %v1559
      %v1794 = vpop.f32.mrb[0].mxu0
      %v1795 = vadd.f32 0.0, %v1794
      %v1796 = vpop.f32.mrb[0].mxu0
      %v1797 = vpop.f32.mrb[0].mxu0
      %v1798 = vadd.f32 0.0, %v1797
      %v1799 = vpop.f32.mrb[0].mxu0
      %1800 = vmatprep.mubr.bf16.mxu0 0
      %1801 = vmatmul.mubr.bf16.gmra.mrb[0].mxu0 %v1699
      %v1802 = vpop.f32.mrb[0].mxu0
      %v1803 = vadd.f32 0.0, %v1802
      %v1804 = vpop.f32.mrb[0].mxu0
      %v1805 = vpop.f32.mrb[0].mxu0
      %v1806 = vadd.f32 0.0, %v1805
      %v1807 = vpop.f32.mrb[0].mxu0
      %1808 = vdwg.mxu0
      %v1809 = vadd.f32 %v1669, %v1739
      %v1810 = vadd.f32 %v1670, %v1742
      %v1811 = vadd.f32 %v1671, %v1747
      %v1812 = vadd.f32 %v1672, %v1750
      %v1813 = vadd.f32 %v1673, %v1755
      %v1814 = vadd.f32 %v1674, %v1758
      %v1815 = vadd.f32 %v1675, %v1763
      %v1816 = vadd.f32 %v1676, %v1766
      %v1817 = vadd.f32 %v1677, %v1771
      %v1818 = vadd.f32 %v1678, %v1774
      %v1819 = vadd.f32 %v1679, %v1779
      %v1820 = vadd.f32 %v1680, %v1782
      %v1821 = vadd.f32 %v1681, %v1787
      %v1822 = vadd.f32 %v1682, %v1790
      %v1823 = vadd.f32 %v1683, %v1795
      %v1824 = vadd.f32 %v1684, %v1798
      %v1825 = vadd.f32 %v1685, %v1803
      %v1826 = vadd.f32 %v1686, %v1806
      %s1827 = scalar_lea.vmem %s4, 56
      %v1828 = vld [vmem:[%s1827] sm:$0xf]
      %v1829 = vld [vmem:[%s1827 + $0x4] sm:$0x3]
      %vm1830 = vsmask.f32 5376
      %v1831 = vrot.slane %v759, 2
      %v1832 = vrot.slane %v755, 3
      %v1833 = vor.u32 %v1831, %v1832
      %v1834 = vrot.slane %v766, 2
      %v1835 = vrot.slane %v762, 3
      %v1836 = vor.u32 %v1834, %v1835
      %v1837 = vsel %vm1830, %v1833, %v1836
      %v1838 = vrot.slane %v773, 2
      %v1839 = vrot.slane %v769, 3
      %v1840 = vor.u32 %v1838, %v1839
      %v1841 = vsel %vm1830, %v1836, %v1840
      %v1842 = vrot.slane %v780, 2
      %v1843 = vrot.slane %v776, 3
      %v1844 = vor.u32 %v1842, %v1843
      %v1845 = vsel %vm1830, %v1840, %v1844
      %v1846 = vrot.slane %v787, 2
      %v1847 = vrot.slane %v783, 3
      %v1848 = vor.u32 %v1846, %v1847
      %v1849 = vsel %vm1830, %v1844, %v1848
      %v1850 = vrot.slane %v794, 2
      %v1851 = vrot.slane %v790, 3
      %v1852 = vor.u32 %v1850, %v1851
      %v1853 = vsel %vm1830, %v1848, %v1852
      %v1854 = vrot.slane %v801, 2
      %v1855 = vrot.slane %v797, 3
      %v1856 = vor.u32 %v1854, %v1855
      %v1857 = vsel %vm1830, %v1852, %v1856
      %v1858 = vrot.slane %v1333, 2
      %v1859 = vrot.slane %v805, 3
      %v1860 = vor.u32 %v1858, %v1859
      %v1861 = vsel %vm1830, %v1856, %v1860
      %v1862 = vrot.slane %v1340, 2
      %v1863 = vrot.slane %v1343, 3
      %v1864 = vor.u32 %v1862, %v1863
      %v1865 = vsel %vm1830, %v1860, %v1864
      %v1867 = vshrl.u32 %v568, 16
      %v1869 = vrot.slane %v1867, 2
      %v1870 = vshll.u32 %v568, 16
      %v1872 = vrot.slane %v1870, 3
      %v1873 = vor.u32 %v1869, %v1872
      %v1874 = vsel %vm1830, %v1864, %v1873
      %v1877 = vunpack.c.l.b16 %v1828
      %v1878 = vunpack.c.l.b16 %v1829
      %v1879 = vpack.c.b16 %v1878, %v1877
      %v1881 = vsel %vm583, %v1837, 0
      %v1884 = vsel %vm583, %v1841, 0
      %v1887 = vsel %vm583, %v1845, 0
      %v1890 = vsel %vm583, %v1849, 0
      %v1893 = vsel %vm583, %v1853, 0
      %v1896 = vsel %vm583, %v1857, 0
      %v1899 = vsel %vm583, %v1861, 0
      %v1902 = vsel %vm583, %v1865, 0
      %v1905 = vsel %vm583, %v1874, 0
      %v1908 = vsel %vm611, %v1879, 0
      %1910 = vmatprep.subr.bf16.mxu0 0
      %1911 = vmatpush1.bf16.msra.mxu0 %v1908
      %1912 = vmatprep.subr.bf16.mxu0 0
      %1913 = vmatpush1.bf16.msra.mxu0 0
      %1914 = vmatprep.subr.bf16.mxu0 0
      %1915 = vmatpush1.bf16.msra.mxu0 0
      %1916 = vmatprep.subr.bf16.mxu0 0
      %1917 = vmatpush1.bf16.msra.mxu0 0
      %1918 = vmatprep.subr.bf16.mxu0 0
      %1919 = vmatpush1.bf16.msra.mxu0 0
      %1920 = vmatprep.subr.bf16.mxu0 0
      %1921 = vmatpush1.bf16.msra.mxu0 0
      %1922 = vmatprep.subr.bf16.mxu0 0
      %1923 = vmatpush1.bf16.msra.mxu0 0
      %1924 = vmatprep.subr.bf16.mxu0 0
      %1925 = vmatpush1.bf16.msra.mxu0 0
      %1926 = vmatprep.subr.bf16.mxu0 0
      %1927 = vmatpush1.bf16.msra.mxu0 0
      %1928 = vmatprep.subr.bf16.mxu0 0
      %1929 = vmatpush1.bf16.msra.mxu0 0
      %1930 = vmatprep.subr.bf16.mxu0 0
      %1931 = vmatpush1.bf16.msra.mxu0 0
      %1932 = vmatprep.subr.bf16.mxu0 0
      %1933 = vmatpush1.bf16.msra.mxu0 0
      %1934 = vmatprep.subr.bf16.mxu0 0
      %1935 = vmatpush1.bf16.msra.mxu0 0
      %1936 = vmatprep.subr.bf16.mxu0 0
      %1937 = vmatpush1.bf16.msra.mxu0 0
      %1938 = vmatprep.subr.bf16.mxu0 0
      %1939 = vmatpush1.bf16.msra.mxu0 0
      %1940 = vmatprep.subr.bf16.mxu0 0
      %1941 = vmatpush1.bf16.msra.mxu0 0
      %1942 = vmatprep.mubr.bf16.mxu0 0
      %1943 = vmatmul.mubr.bf16.gmra.mrb[0].mxu0 %v1881
      %v1944 = vpop.f32.mrb[0].mxu0
      %v1945 = vadd.f32 0.0, %v1944
      %v1946 = vpop.f32.mrb[0].mxu0
      %v1947 = vpop.f32.mrb[0].mxu0
      %v1948 = vadd.f32 0.0, %v1947
      %v1949 = vpop.f32.mrb[0].mxu0
      %1950 = vmatprep.mubr.bf16.mxu0 0
      %1951 = vmatmul.mubr.bf16.gmra.mrb[0].mxu0 %v1884
      %v1952 = vpop.f32.mrb[0].mxu0
      %v1953 = vadd.f32 0.0, %v1952
      %v1954 = vpop.f32.mrb[0].mxu0
      %v1955 = vpop.f32.mrb[0].mxu0
      %v1956 = vadd.f32 0.0, %v1955
      %v1957 = vpop.f32.mrb[0].mxu0
      %1958 = vmatprep.mubr.bf16.mxu0 0
      %1959 = vmatmul.mubr.bf16.gmra.mrb[0].mxu0 %v1887
      %v1960 = vpop.f32.mrb[0].mxu0
      %v1961 = vadd.f32 0.0, %v1960
      %v1962 = vpop.f32.mrb[0].mxu0
      %v1963 = vpop.f32.mrb[0].mxu0
      %v1964 = vadd.f32 0.0, %v1963
      %v1965 = vpop.f32.mrb[0].mxu0
      %1966 = vmatprep.mubr.bf16.mxu0 0
      %1967 = vmatmul.mubr.bf16.gmra.mrb[0].mxu0 %v1890
      %v1968 = vpop.f32.mrb[0].mxu0
      %v1969 = vadd.f32 0.0, %v1968
      %v1970 = vpop.f32.mrb[0].mxu0
      %v1971 = vpop.f32.mrb[0].mxu0
      %v1972 = vadd.f32 0.0, %v1971
      %v1973 = vpop.f32.mrb[0].mxu0
      %1974 = vmatprep.mubr.bf16.mxu0 0
      %1975 = vmatmul.mubr.bf16.gmra.mrb[0].mxu0 %v1893
      %v1976 = vpop.f32.mrb[0].mxu0
      %v1977 = vadd.f32 0.0, %v1976
      %v1978 = vpop.f32.mrb[0].mxu0
      %v1979 = vpop.f32.mrb[0].mxu0
      %v1980 = vadd.f32 0.0, %v1979
      %v1981 = vpop.f32.mrb[0].mxu0
      %1982 = vmatprep.mubr.bf16.mxu0 0
      %1983 = vmatmul.mubr.bf16.gmra.mrb[0].mxu0 %v1896
      %v1984 = vpop.f32.mrb[0].mxu0
      %v1985 = vadd.f32 0.0, %v1984
      %v1986 = vpop.f32.mrb[0].mxu0
      %v1987 = vpop.f32.mrb[0].mxu0
      %v1988 = vadd.f32 0.0, %v1987
      %v1989 = vpop.f32.mrb[0].mxu0
      %1990 = vmatprep.mubr.bf16.mxu0 0
      %1991 = vmatmul.mubr.bf16.gmra.mrb[0].mxu0 %v1899
      %v1992 = vpop.f32.mrb[0].mxu0
      %v1993 = vadd.f32 0.0, %v1992
      %v1994 = vpop.f32.mrb[0].mxu0
      %v1995 = vpop.f32.mrb[0].mxu0
      %v1996 = vadd.f32 0.0, %v1995
      %v1997 = vpop.f32.mrb[0].mxu0
      %1998 = vmatprep.mubr.bf16.mxu0 0
      %1999 = vmatmul.mubr.bf16.gmra.mrb[0].mxu0 %v1902
      %v2000 = vpop.f32.mrb[0].mxu0
      %v2001 = vadd.f32 0.0, %v2000
      %v2002 = vpop.f32.mrb[0].mxu0
      %v2003 = vpop.f32.mrb[0].mxu0
      %v2004 = vadd.f32 0.0, %v2003
      %v2005 = vpop.f32.mrb[0].mxu0
      %2006 = vmatprep.mubr.bf16.mxu0 0
      %2007 = vmatmul.mubr.bf16.gmra.mrb[0].mxu0 %v1905
      %v2008 = vpop.f32.mrb[0].mxu0
      %v2009 = vadd.f32 0.0, %v2008
      %v2010 = vpop.f32.mrb[0].mxu0
      %v2011 = vpop.f32.mrb[0].mxu0
      %v2012 = vadd.f32 0.0, %v2011
      %v2013 = vpop.f32.mrb[0].mxu0
      %2014 = vdwg.mxu0
      %v2015 = vadd.f32 %v1809, %v1945
      %v2016 = vadd.f32 %v1810, %v1948
      %v2017 = vadd.f32 %v1811, %v1953
      %v2018 = vadd.f32 %v1812, %v1956
      %v2019 = vadd.f32 %v1813, %v1961
      %v2020 = vadd.f32 %v1814, %v1964
      %v2021 = vadd.f32 %v1815, %v1969
      %v2022 = vadd.f32 %v1816, %v1972
      %v2023 = vadd.f32 %v1817, %v1977
      %v2024 = vadd.f32 %v1818, %v1980
      %v2025 = vadd.f32 %v1819, %v1985
      %v2026 = vadd.f32 %v1820, %v1988
      %v2027 = vadd.f32 %v1821, %v1993
      %v2028 = vadd.f32 %v1822, %v1996
      %v2029 = vadd.f32 %v1823, %v2001
      %v2030 = vadd.f32 %v1824, %v2004
      %v2031 = vadd.f32 %v1825, %v2009
      %v2032 = vadd.f32 %v1826, %v2012
      %s2033 = scalar_lea.vmem %s4, 64
      %v2034 = vld [vmem:[%s2033] sm:$0xf]
      %v2035 = vld [vmem:[%s2033 + $0x4] sm:$0x3]
      %vm2036 = vcmask 1044480
      %v2037 = vrot.slane %v559, 3
      %v2038 = vrot.slane %v560, 3
      %v2039 = vsel %vm2036, %v2037, %v2038
      %v2040 = vrot.slane %v561, 3
      %v2041 = vsel %vm2036, %v2038, %v2040
      %v2042 = vrot.slane %v562, 3
      %v2043 = vsel %vm2036, %v2040, %v2042
      %v2044 = vrot.slane %v563, 3
      %v2045 = vsel %vm2036, %v2042, %v2044
      %v2046 = vrot.slane %v564, 3
      %v2047 = vsel %vm2036, %v2044, %v2046
      %v2048 = vrot.slane %v565, 3
      %v2049 = vsel %vm2036, %v2046, %v2048
      %v2050 = vrot.slane %v566, 3
      %v2051 = vsel %vm2036, %v2048, %v2050
      %v2052 = vrot.slane %v567, 3
      %v2053 = vsel %vm2036, %v2050, %v2052
      %v2054 = vrot.slane %v568, 3
      %v2055 = vsel %vm2036, %v2052, %v2054
      %v2058 = vunpack.c.l.b16 %v2034
      %v2059 = vunpack.c.l.b16 %v2035
      %v2060 = vpack.c.b16 %v2059, %v2058
      %v2062 = vsel %vm583, %v2039, 0
      %v2065 = vsel %vm583, %v2041, 0
      %v2068 = vsel %vm583, %v2043, 0
      %v2071 = vsel %vm583, %v2045, 0
      %v2074 = vsel %vm583, %v2047, 0
      %v2077 = vsel %vm583, %v2049, 0
      %v2080 = vsel %vm583, %v2051, 0
      %v2083 = vsel %vm583, %v2053, 0
      %v2086 = vsel %vm583, %v2055, 0
      %v2089 = vsel %vm611, %v2060, 0
      %2091 = vmatprep.subr.bf16.mxu0 0
      %2092 = vmatpush1.bf16.msra.mxu0 %v2089
      %2093 = vmatprep.subr.bf16.mxu0 0
      %2094 = vmatpush1.bf16.msra.mxu0 0
      %2095 = vmatprep.subr.bf16.mxu0 0
      %2096 = vmatpush1.bf16.msra.mxu0 0
      %2097 = vmatprep.subr.bf16.mxu0 0
      %2098 = vmatpush1.bf16.msra.mxu0 0
      %2099 = vmatprep.subr.bf16.mxu0 0
      %2100 = vmatpush1.bf16.msra.mxu0 0
      %2101 = vmatprep.subr.bf16.mxu0 0
      %2102 = vmatpush1.bf16.msra.mxu0 0
      %2103 = vmatprep.subr.bf16.mxu0 0
      %2104 = vmatpush1.bf16.msra.mxu0 0
      %2105 = vmatprep.subr.bf16.mxu0 0
      %2106 = vmatpush1.bf16.msra.mxu0 0
      %2107 = vmatprep.subr.bf16.mxu0 0
      %2108 = vmatpush1.bf16.msra.mxu0 0
      %2109 = vmatprep.subr.bf16.mxu0 0
      %2110 = vmatpush1.bf16.msra.mxu0 0
      %2111 = vmatprep.subr.bf16.mxu0 0
      %2112 = vmatpush1.bf16.msra.mxu0 0
      %2113 = vmatprep.subr.bf16.mxu0 0
      %2114 = vmatpush1.bf16.msra.mxu0 0
      %2115 = vmatprep.subr.bf16.mxu0 0
      %2116 = vmatpush1.bf16.msra.mxu0 0
      %2117 = vmatprep.subr.bf16.mxu0 0
      %2118 = vmatpush1.bf16.msra.mxu0 0
      %2119 = vmatprep.subr.bf16.mxu0 0
      %2120 = vmatpush1.bf16.msra.mxu0 0
      %2121 = vmatprep.subr.bf16.mxu0 0
      %2122 = vmatpush1.bf16.msra.mxu0 0
      %2123 = vmatprep.mubr.bf16.mxu0 0
      %2124 = vmatmul.mubr.bf16.gmra.mrb[0].mxu0 %v2062
      %v2125 = vpop.f32.mrb[0].mxu0
      %v2126 = vadd.f32 0.0, %v2125
      %v2127 = vpop.f32.mrb[0].mxu0
      %v2128 = vpop.f32.mrb[0].mxu0
      %v2129 = vadd.f32 0.0, %v2128
      %v2130 = vpop.f32.mrb[0].mxu0
      %2131 = vmatprep.mubr.bf16.mxu0 0
      %2132 = vmatmul.mubr.bf16.gmra.mrb[0].mxu0 %v2065
      %v2133 = vpop.f32.mrb[0].mxu0
      %v2134 = vadd.f32 0.0, %v2133
      %v2135 = vpop.f32.mrb[0].mxu0
      %v2136 = vpop.f32.mrb[0].mxu0
      %v2137 = vadd.f32 0.0, %v2136
      %v2138 = vpop.f32.mrb[0].mxu0
      %2139 = vmatprep.mubr.bf16.mxu0 0
      %2140 = vmatmul.mubr.bf16.gmra.mrb[0].mxu0 %v2068
      %v2141 = vpop.f32.mrb[0].mxu0
      %v2142 = vadd.f32 0.0, %v2141
      %v2143 = vpop.f32.mrb[0].mxu0
      %v2144 = vpop.f32.mrb[0].mxu0
      %v2145 = vadd.f32 0.0, %v2144
      %v2146 = vpop.f32.mrb[0].mxu0
      %2147 = vmatprep.mubr.bf16.mxu0 0
      %2148 = vmatmul.mubr.bf16.gmra.mrb[0].mxu0 %v2071
      %v2149 = vpop.f32.mrb[0].mxu0
      %v2150 = vadd.f32 0.0, %v2149
      %v2151 = vpop.f32.mrb[0].mxu0
      %v2152 = vpop.f32.mrb[0].mxu0
      %v2153 = vadd.f32 0.0, %v2152
      %v2154 = vpop.f32.mrb[0].mxu0
      %2155 = vmatprep.mubr.bf16.mxu0 0
      %2156 = vmatmul.mubr.bf16.gmra.mrb[0].mxu0 %v2074
      %v2157 = vpop.f32.mrb[0].mxu0
      %v2158 = vadd.f32 0.0, %v2157
      %v2159 = vpop.f32.mrb[0].mxu0
      %v2160 = vpop.f32.mrb[0].mxu0
      %v2161 = vadd.f32 0.0, %v2160
      %v2162 = vpop.f32.mrb[0].mxu0
      %2163 = vmatprep.mubr.bf16.mxu0 0
      %2164 = vmatmul.mubr.bf16.gmra.mrb[0].mxu0 %v2077
      %v2165 = vpop.f32.mrb[0].mxu0
      %v2166 = vadd.f32 0.0, %v2165
      %v2167 = vpop.f32.mrb[0].mxu0
      %v2168 = vpop.f32.mrb[0].mxu0
      %v2169 = vadd.f32 0.0, %v2168
      %v2170 = vpop.f32.mrb[0].mxu0
      %2171 = vmatprep.mubr.bf16.mxu0 0
      %2172 = vmatmul.mubr.bf16.gmra.mrb[0].mxu0 %v2080
      %v2173 = vpop.f32.mrb[0].mxu0
      %v2174 = vadd.f32 0.0, %v2173
      %v2175 = vpop.f32.mrb[0].mxu0
      %v2176 = vpop.f32.mrb[0].mxu0
      %v2177 = vadd.f32 0.0, %v2176
      %v2178 = vpop.f32.mrb[0].mxu0
      %2179 = vmatprep.mubr.bf16.mxu0 0
      %2180 = vmatmul.mubr.bf16.gmra.mrb[0].mxu0 %v2083
      %v2181 = vpop.f32.mrb[0].mxu0
      %v2182 = vadd.f32 0.0, %v2181
      %v2183 = vpop.f32.mrb[0].mxu0
      %v2184 = vpop.f32.mrb[0].mxu0
      %v2185 = vadd.f32 0.0, %v2184
      %v2186 = vpop.f32.mrb[0].mxu0
      %2187 = vmatprep.mubr.bf16.mxu0 0
      %2188 = vmatmul.mubr.bf16.gmra.mrb[0].mxu0 %v2086
      %v2189 = vpop.f32.mrb[0].mxu0
      %v2190 = vadd.f32 0.0, %v2189
      %v2191 = vpop.f32.mrb[0].mxu0
      %v2192 = vpop.f32.mrb[0].mxu0
      %v2193 = vadd.f32 0.0, %v2192
      %v2194 = vpop.f32.mrb[0].mxu0
      %2195 = vdwg.mxu0
      %v2196 = vadd.f32 %v2015, %v2126
      %v2197 = vadd.f32 %v2016, %v2129
      %v2198 = vadd.f32 %v2017, %v2134
      %v2199 = vadd.f32 %v2018, %v2137
      %v2200 = vadd.f32 %v2019, %v2142
      %v2201 = vadd.f32 %v2020, %v2145
      %v2202 = vadd.f32 %v2021, %v2150
      %v2203 = vadd.f32 %v2022, %v2153
      %v2204 = vadd.f32 %v2023, %v2158
      %v2205 = vadd.f32 %v2024, %v2161
      %v2206 = vadd.f32 %v2025, %v2166
      %v2207 = vadd.f32 %v2026, %v2169
      %v2208 = vadd.f32 %v2027, %v2174
      %v2209 = vadd.f32 %v2028, %v2177
      %v2210 = vadd.f32 %v2029, %v2182
      %v2211 = vadd.f32 %v2030, %v2185
      %v2212 = vadd.f32 %v2031, %v2190
      %v2213 = vadd.f32 %v2032, %v2193
      %2214 = vst [vmem:[%s273] sm:$0xff] %v2196
      %2215 = vst [vmem:[%s273 + $0x8] sm:$0xff] %v2197
      %2216 = vst [vmem:[%s273 + $0x10] sm:$0xff] %v2198
      %2217 = vst [vmem:[%s273 + $0x18] sm:$0xff] %v2199
      %2218 = vst [vmem:[%s273 + $0x20] sm:$0xff] %v2200
      %2219 = vst [vmem:[%s273 + $0x28] sm:$0xff] %v2201
      %2220 = vst [vmem:[%s273 + $0x30] sm:$0xff] %v2202
      %2221 = vst [vmem:[%s273 + $0x38] sm:$0xff] %v2203
      %2222 = vst [vmem:[%s273 + $0x40] sm:$0xff] %v2204
      %2223 = vst [vmem:[%s273 + $0x48] sm:$0xff] %v2205
      %2224 = vst [vmem:[%s273 + $0x50] sm:$0xff] %v2206
      %2225 = vst [vmem:[%s273 + $0x58] sm:$0xff] %v2207
      %2226 = vst [vmem:[%s273 + $0x60] sm:$0xff] %v2208
      %2227 = vst [vmem:[%s273 + $0x68] sm:$0xff] %v2209
      %2228 = vst [vmem:[%s273 + $0x70] sm:$0xff] %v2210
      %2229 = vst [vmem:[%s273 + $0x78] sm:$0xff] %v2211
      %2230 = vst [vmem:[%s273 + $0x80] sm:$0xff] %v2212
      %2231 = vst [vmem:[%s273 + $0x88] sm:$0xff] %v2213
      %s2232 = smul.u32 18, %s22
      %p2233 = scmp.lt.s32.totalorder %s21, 1
      %s2234 = scalar_select %p2233, %s21, 1
      %p2235 = scmp.lt.s32.totalorder %s2232, 35
      %s2236 = scalar_select %p2235, %s2232, 35
      %s2237 = smul.addr %s2234, 36
      %s2238 = sadd.s32 %s2236, %s2237
      %s2239 = smul.addr %s2238, 8
      %s2240 = scalar_lea.vmem %s6, %s2239
      // Predicated region
      $region45: #{dense_block_forward.5} parent=43 // pred_check
        %p2241 = pneg %p180
      $region46: #{dense_block_forward.5} parent=43 // pred_check_branch
        %2243 = sbr.rel (%p2241) target = $region48
      $region47: #{dense_block_forward.5} parent=43 // pred_region
        %s2244 = smul.u32 18, %s22
      $region48: #{dense_block_forward.5} parent=43 // pred_fallthru
        _
    $region44: #{dense_block_forward.5} parent=5 // pred_fallthru
      _
    %p2245 = scmp.le.s32.totalorder 2, %s12
    // Predicated region
    $region49: #{dense_block_forward.5} parent=5 // pred_check
      %p2246 = pneg %p2245
    $region50: #{dense_block_forward.5} parent=5 // pred_check_branch
      %2248 = sbr.rel (%p2246) target = $region52
    $region51: #{dense_block_forward.5} parent=5 // pred_region
      %s2249 = ssub.s32 %s12, 2
      // Predicated region
      $region53: #{dense_block_forward.5} parent=51 // pred_check
        %p2250 = pneg %p186
      $region54: #{dense_block_forward.5} parent=51 // pred_check_branch
        %2252 = sbr.rel (%p2250) target = $region56
      $region55: #{dense_block_forward.5} parent=51 // pred_region
        %s2253 = smul.u32 18, %s24
        %p2254 = scmp.lt.s32.totalorder %s23, 1
        %s2255 = scalar_select %p2254, %s23, 1
        %p2256 = scmp.lt.s32.totalorder %s2253, 35
        %s2257 = scalar_select %p2256, %s2253, 35
        %s2258 = smul.addr %s2255, 36
        %s2259 = sadd.s32 %s2257, %s2258
        %s2260 = smul.addr %s2259, 8
        %s2261 = scalar_lea.vmem %s6, %s2260
      $region56: #{dense_block_forward.5} parent=51 // pred_fallthru
        _
    $region52: #{dense_block_forward.5} parent=5 // pred_fallthru
      _
  $region6: #{dense_block_forward.5} parent=0 // loop_footer
    %s16 = sadd.s32 1, %s12
  $region7: #{dense_block_forward.5} parent=0 // loop_footer_branch
    %11 = sbr.rel target = $region3
  $region8: #{dense_block_forward.5} parent=0 // loop_exit
    _

</llo_original>
